<compile_context>
chip_gen: v7x
topology: tpu7x:2x2x1
jax: 0.10.0
libtpu: 0.0.40
codegen_flags: <defaults>
</compile_context>

<pallas_src>
import functools
import math

import jax
import jax.numpy as jnp
from jax import lax
from jax.experimental import pallas as pl
from jax.experimental.pallas import tpu as pltpu

D_MODEL = 50
N_HEAD = 8
D_K = 50
D_V = 50
D_INNER = 50
LS = 2          # encoder (source) length
LT = 3          # decoder (target) length
NEG_INF = -1e9


# ----------------------------- in-kernel blocks -----------------------------


def _layer_norm(x, gamma, beta, eps=1e-6):
    # Reference repo uses nn.LayerNorm(d_model, eps=1e-6).
    mu = jnp.mean(x, axis=-1, keepdims=True)
    var = jnp.mean((x - mu) ** 2, axis=-1, keepdims=True)
    return (x - mu) * lax.rsqrt(var + eps) * gamma + beta


def _mha_block(x_q, x_kv, keep, w_qkv, w_o, b_qkv, vec, *, self_attn):
    """Multi-head attention + residual + post-LayerNorm.

    x_q:   (Lq, d_model) f32      x_kv: (Lk, d_model) f32
    keep:  (Lq, Lk) bool          True = attend
    w_qkv: (H, d_model, 3*d_k) bf16  -- [Wq | Wk | Wv] lane-concatenated
    w_o:   (H, d_v, d_model) bf16
    b_qkv: (H, 3*d_k) f32            -- [bq | bk | bv]
    vec:   (8, d_model) f32          -- rows: [bo, gamma, beta, ...]
    """
    h = N_HEAD
    lq = x_q.shape[0]
    lk = x_kv.shape[0]
    scale = 1.0 / math.sqrt(D_K)

    bias = b_qkv[:, None, :]                                   # (H, 1, 150)
    xq_b = jnp.broadcast_to(x_q.astype(jnp.bfloat16)[None], (h, lq, D_MODEL))

    if self_attn:
        # One fused 150-wide projection per head (8 pushes, was 24).
        qkv = jnp.einsum("hld,hdk->hlk", xq_b, w_qkv,
                         preferred_element_type=jnp.float32) + bias
        q = qkv[..., :D_K]
        k = qkv[..., D_K:2 * D_K]
        v = qkv[..., 2 * D_K:]
    else:
        # Cross-attention: Q from x_q, fused K|V from the encoder output.
        xk_b = jnp.broadcast_to(x_kv.astype(jnp.bfloat16)[None],
                                (h, lk, D_MODEL))
        q = jnp.einsum("hld,hdk->hlk", xq_b, w_qkv[..., :D_K],
                       preferred_element_type=jnp.float32) + bias[..., :D_K]
        kv = jnp.einsum("hld,hdk->hlk", xk_b, w_qkv[..., D_K:],
                        preferred_element_type=jnp.float32) + bias[..., D_K:]
        k = kv[..., :D_K]
        v = kv[..., D_K:]

    # Cast to bf16 right away; the f32 projections drop out of liveness.
    q_b = (q * scale).astype(jnp.bfloat16)                     # fold 1/sqrt(dk)
    k_b = k.astype(jnp.bfloat16)
    v_b = v.astype(jnp.bfloat16)

    s = jnp.einsum("hqk,hlk->hql", q_b, k_b,
                   preferred_element_type=jnp.float32)          # (H, Lq, Lk)
    s = jnp.where(keep[None], s, NEG_INF)

    # Softmax in f32; exact normalization (no approx reciprocal).
    s = s - jnp.max(s, axis=-1, keepdims=True)
    p = jnp.exp(s)
    p = p / jnp.sum(p, axis=-1, keepdims=True)

    ctx = jnp.einsum("hql,hlk->hqk", p.astype(jnp.bfloat16), v_b,
                     preferred_element_type=jnp.float32)        # (H, Lq, d_v)
    # Output projection: batched contraction + leading-axis sum
    # (== concat(heads) @ Wo).  Multi-contracting 'hqk,hkm->qm' avoided for
    # Mosaic lowering safety; the sum is a few VPU adds.
    proj = jnp.einsum("hqk,hkm->hqm", ctx.astype(jnp.bfloat16), w_o,
                      preferred_element_type=jnp.float32)       # (H, Lq, d_model)
    out = jnp.sum(proj, axis=0) + vec[0:1] + x_q   # + bo + residual (eval: no dropout)
    return _layer_norm(out, vec[1:2], vec[2:3])


def _ffn_block(x, w_ffn, vec):
    """Position-wise FFN + residual + post-LayerNorm.

    w_ffn: (2, 50, 50) bf16  -- [W1 (d_model,d_inner), W2 (d_inner,d_model)]
    vec:   (8, 50) f32       -- rows: [b1, b2, gamma, beta, ...]
    """
    hid = jnp.dot(x.astype(jnp.bfloat16), w_ffn[0],
                  preferred_element_type=jnp.float32) + vec[0:1]
    hid = jnp.maximum(hid, 0.0)
    out = jnp.dot(hid.astype(jnp.bfloat16), w_ffn[1],
                  preferred_element_type=jnp.float32) + vec[1:2] + x
    return _layer_norm(out, vec[2:3], vec[3:4])


# ----------------------------- fused kernel ---------------------------------


def transformer_kernel(act_ref, w_qkv_ref, w_o_ref, w_ffn_ref, b_qkv_ref,
                       vec_ref, o_ref):
    # --- load activations / seqs once, slice locally ---
    acts = act_ref[...]                             # (8, 50) f32
    src_keep = acts[0:1, 0:LS] != 0.0               # (1, Ls) bool
    tgt_keep = acts[1:2, 0:LT] != 0.0               # (1, Lt) bool
    enc_x = acts[2:2 + LS, :]                       # (Ls, 50)
    dec_x = acts[2 + LS:2 + LS + LT, :]             # (Lt, 50)

    # --- masks built ONCE, as bool (no repeated compares) ---
    enc_self_mask = jnp.broadcast_to(src_keep, (LS, LS))
    causal = (lax.broadcasted_iota(jnp.int32, (LT, LT), 0) >=
              lax.broadcasted_iota(jnp.int32, (LT, LT), 1))
    dec_self_mask = jnp.logical_and(causal, jnp.broadcast_to(tgt_keep, (LT, LT)))
    cross_mask = jnp.broadcast_to(src_keep, (LT, LS))

    vecs = vec_ref[...]                             # (5, 8, 50) f32

    # Encoder layer.
    enc = _mha_block(enc_x, enc_x, enc_self_mask,
                     w_qkv_ref[0], w_o_ref[0], b_qkv_ref[0], vecs[0],
                     self_attn=True)
    enc = _ffn_block(enc, w_ffn_ref[0], vecs[1])

    # Decoder layer (self-attn, cross-attn on encoder output, FFN).
    dec = _mha_block(dec_x, dec_x, dec_self_mask,
                     w_qkv_ref[1], w_o_ref[1], b_qkv_ref[1], vecs[2],
                     self_attn=True)
    dec = _mha_block(dec, enc, cross_mask,
                     w_qkv_ref[2], w_o_ref[2], b_qkv_ref[2], vecs[3],
                     self_attn=False)
    dec = _ffn_block(dec, w_ffn_ref[1], vecs[4])

    # Single tiny (3, 50) store; lane-padding not worth it at this size.
    o_ref[...] = dec


def fused_transformer(act_slab, w_qkv_all, w_o_all, w_ffn_all, b_qkv_all,
                      vec_all):
    args = (act_slab, w_qkv_all, w_o_all, w_ffn_all, b_qkv_all, vec_all)
    return pl.pallas_call(
        transformer_kernel,
        out_shape=jax.ShapeDtypeStruct((LT, D_MODEL), jnp.float32),
        in_specs=[pl.BlockSpec(memory_space=pltpu.MemorySpace.VMEM)
                  for _ in args],
        out_specs=pl.BlockSpec(memory_space=pltpu.MemorySpace.VMEM),
    )(*args)


# --------------------------- params & glue ----------------------------------


def init_params(key, scale=0.1):
    """Packs all parameters into 5 slabs (3 bf16 weight slabs + 2 f32 slabs).

    MHA block order: 0 = enc self-attn, 1 = dec self-attn, 2 = dec cross-attn.
    FFN block order: 0 = enc, 1 = dec.
    Vector slab order: 0=enc_sa, 1=enc_ffn, 2=dec_sa, 3=dec_ca, 4=dec_ffn.
    """
    k_esa, k_eff, k_dsa, k_dca, k_dff = jax.random.split(key, 5)

    def mha_params(k):
        kq, kk, kv, ko = jax.random.split(k, 4)
        wq = scale * jax.random.normal(kq, (N_HEAD, D_MODEL, D_K), jnp.float32)
        wk = scale * jax.random.normal(kk, (N_HEAD, D_MODEL, D_K), jnp.float32)
        wv = scale * jax.random.normal(kv, (N_HEAD, D_MODEL, D_V), jnp.float32)
        wo = scale * jax.random.normal(ko, (N_HEAD, D_V, D_MODEL), jnp.float32)
        w_qkv = jnp.concatenate([wq, wk, wv], axis=-1)        # (H, 50, 150)
        b_qkv = jnp.zeros((N_HEAD, 3 * D_K), jnp.float32)     # [bq|bk|bv] = 0
        vec = jnp.zeros((8, D_MODEL), jnp.float32)
        vec = vec.at[1].set(1.0)                              # rows: bo,gamma,beta
        return w_qkv, wo, b_qkv, vec

    def ffn_params(k):
        k1, k2 = jax.random.split(k)
        w1 = scale * jax.random.normal(k1, (D_MODEL, D_INNER), jnp.float32)
        w2 = scale * jax.random.normal(k2, (D_INNER, D_MODEL), jnp.float32)
        w = jnp.stack([w1, w2])                               # (2, 50, 50)
        vec = jnp.zeros((8, D_MODEL), jnp.float32)
        vec = vec.at[2].set(1.0)                              # rows: b1,b2,gamma,beta
        return w, vec

    esa = mha_params(k_esa)
    eff = ffn_params(k_eff)
    dsa = mha_params(k_dsa)
    dca = mha_params(k_dca)
    dff = ffn_params(k_dff)

    w_qkv_all = jnp.stack([esa[0], dsa[0], dca[0]]).astype(jnp.bfloat16)  # (3,H,50,150)
    w_o_all = jnp.stack([esa[1], dsa[1], dca[1]]).astype(jnp.bfloat16)    # (3,H,50,50)
    w_ffn_all = jnp.stack([eff[0], dff[0]]).astype(jnp.bfloat16)          # (2,2,50,50)
    b_qkv_all = jnp.stack([esa[2], dsa[2], dca[2]])                       # (3,H,150) f32
    vec_all = jnp.stack([esa[3], eff[1], dsa[3], dca[3], dff[1]])         # (5,8,50) f32
    return w_qkv_all, w_o_all, w_ffn_all, b_qkv_all, vec_all


def sinusoid_pe(length, d_model):
    # TODO(synk): exact input-embedding layer of the reference repo unknown;
    # using the standard sinusoidal positional-encoding add (positions 1..L).
    pos = jnp.arange(1, length + 1, dtype=jnp.float32)[:, None]     # (L, 1)
    i = jnp.arange(d_model, dtype=jnp.float32)[None, :]             # (1, D)
    rates = jnp.power(10000.0, -(2.0 * jnp.floor(i / 2.0)) / d_model)
    angles = pos * rates
    return jnp.where(jnp.arange(d_model)[None, :] % 2 == 0,
                     jnp.sin(angles), jnp.cos(angles)).astype(jnp.float32)


def build_act_slab(src_seq, tgt_seq, enc_x, dec_x):
    """One f32 (8, 50) slab: row0 src_seq, row1 tgt_seq, rows2:4 enc_x,
    rows4:7 dec_x (row 7 unused).  Single DMA instead of 4."""
    slab = jnp.zeros((8, D_MODEL), jnp.float32)
    slab = slab.at[0, :LS].set(src_seq[0])
    slab = slab.at[1, :LT].set(tgt_seq[0])
    slab = slab.at[2:2 + LS, :].set(enc_x)
    slab = slab.at[2 + LS:2 + LS + LT, :].set(dec_x)
    return slab


def net_forward(key):
    """Replicates Net.forward(): generates the internal random features,
    runs the fused encoder+decoder kernel, returns (1, 3, 50)."""
    k_img, k_obj, k_params = jax.random.split(key, 3)
    img_feats = jax.random.normal(k_img, (1, LS, D_MODEL), jnp.float32)
    src_seq = jnp.ones((1, LS), jnp.float32)
    obj_feats = jax.random.normal(k_obj, (1, LT, D_MODEL), jnp.float32)
    tgt_seq = jnp.ones((1, LT), jnp.float32)

    params = init_params(k_params)

    # Positional encoding folded into the inputs (tiny XLA adds).
    enc_x = img_feats[0] + sinusoid_pe(LS, D_MODEL)     # (2, 50)
    dec_x = obj_feats[0] + sinusoid_pe(LT, D_MODEL)     # (3, 50)
    act_slab = build_act_slab(src_seq, tgt_seq, enc_x, dec_x)

    out = fused_transformer(act_slab, *params)          # (3, 50)
    return out[None]                                    # (1, 3, 50)


if __name__ == "__main__":
    key = jax.random.PRNGKey(0)
    out = net_forward(key)
    out = jax.block_until_ready(out)
    assert out.shape == (1, LT, D_MODEL), out.shape
    assert out.dtype == jnp.float32
    assert bool(jnp.all(jnp.isfinite(out)))
    print("KERNEL_OK")
</pallas_src>

<mosaic_0001>
module attributes {stable_mosaic.version = 11 : i64} {
  func.func @transformer_kernel(%arg0: memref<8x50xf32, #tpu.memory_space<vmem>>, %arg1: memref<3x8x50x150xbf16, #tpu.memory_space<vmem>>, %arg2: memref<3x8x50x50xbf16, #tpu.memory_space<vmem>>, %arg3: memref<2x2x50x50xbf16, #tpu.memory_space<vmem>>, %arg4: memref<3x8x150xf32, #tpu.memory_space<vmem>>, %arg5: memref<5x8x50xf32, #tpu.memory_space<vmem>>, %arg6: memref<3x50xf32, #tpu.memory_space<vmem>>) attributes {dimension_semantics = [], scalar_prefetch = 0 : i64, scratch_operands = 0 : i64, tpu.core_type = #tpu.core_type<tc>} {
    %c0 = arith.constant 0 : index
    %c0_0 = arith.constant 0 : index
    %0 = vector.load %arg0[%c0, %c0_0] : memref<8x50xf32, #tpu.memory_space<vmem>>, vector<8x50xf32>
    %1 = vector.extract_strided_slice %0 {offsets = [0, 0], sizes = [1, 2], strides = [1, 1]} : vector<8x50xf32> to vector<1x2xf32>
    %cst = arith.constant 0.000000e+00 : f32
    %2 = vector.broadcast %cst : f32 to vector<1x2xf32>
    %3 = arith.cmpf one, %1, %2 : vector<1x2xf32>
    %4 = vector.extract_strided_slice %0 {offsets = [1, 0], sizes = [1, 3], strides = [1, 1]} : vector<8x50xf32> to vector<1x3xf32>
    %cst_1 = arith.constant 0.000000e+00 : f32
    %5 = vector.broadcast %cst_1 : f32 to vector<1x3xf32>
    %6 = arith.cmpf one, %4, %5 : vector<1x3xf32>
    %7 = vector.extract_strided_slice %0 {offsets = [2, 0], sizes = [2, 50], strides = [1, 1]} : vector<8x50xf32> to vector<2x50xf32>
    %8 = vector.extract_strided_slice %0 {offsets = [4, 0], sizes = [3, 50], strides = [1, 1]} : vector<8x50xf32> to vector<3x50xf32>
    %9 = vector.shape_cast %3 : vector<1x2xi1> to vector<1x2xi1>
    %10 = vector.broadcast %9 : vector<1x2xi1> to vector<2x2xi1>
    %11 = tpu.iota {dimensions = array<i32: 0>} : vector<3x3xi32>
    %12 = tpu.iota {dimensions = array<i32: 1>} : vector<3x3xi32>
    %13 = arith.cmpi sge, %11, %12 : vector<3x3xi32>
    %14 = vector.shape_cast %6 : vector<1x3xi1> to vector<1x3xi1>
    %15 = vector.broadcast %14 : vector<1x3xi1> to vector<3x3xi1>
    %16 = arith.andi %13, %15 : vector<3x3xi1>
    %17 = vector.shape_cast %3 : vector<1x2xi1> to vector<1x2xi1>
    %18 = vector.broadcast %17 : vector<1x2xi1> to vector<3x2xi1>
    %c0_2 = arith.constant 0 : index
    %c0_3 = arith.constant 0 : index
    %c0_4 = arith.constant 0 : index
    %19 = vector.load %arg5[%c0_2, %c0_3, %c0_4] : memref<5x8x50xf32, #tpu.memory_space<vmem>>, vector<5x8x50xf32>
    %c0_5 = arith.constant 0 : index
    %c0_6 = arith.constant 0 : index
    %c0_7 = arith.constant 0 : index
    %c0_8 = arith.constant 0 : index
    %20 = vector.load %arg1[%c0_5, %c0_6, %c0_7, %c0_8] : memref<3x8x50x150xbf16, #tpu.memory_space<vmem>>, vector<1x8x50x150xbf16>
    %21 = vector.shape_cast %20 : vector<1x8x50x150xbf16> to vector<8x50x150xbf16>
    %c0_9 = arith.constant 0 : index
    %c0_10 = arith.constant 0 : index
    %c0_11 = arith.constant 0 : index
    %c0_12 = arith.constant 0 : index
    %22 = vector.load %arg2[%c0_9, %c0_10, %c0_11, %c0_12] : memref<3x8x50x50xbf16, #tpu.memory_space<vmem>>, vector<1x8x50x50xbf16>
    %23 = vector.shape_cast %22 : vector<1x8x50x50xbf16> to vector<8x50x50xbf16>
    %c0_13 = arith.constant 0 : index
    %c0_14 = arith.constant 0 : index
    %c0_15 = arith.constant 0 : index
    %24 = vector.load %arg4[%c0_13, %c0_14, %c0_15] : memref<3x8x150xf32, #tpu.memory_space<vmem>>, vector<1x8x150xf32>
    %25 = vector.shape_cast %24 : vector<1x8x150xf32> to vector<8x150xf32>
    %26 = vector.extract_strided_slice %19 {offsets = [0, 0, 0], sizes = [1, 8, 50], strides = [1, 1, 1]} : vector<5x8x50xf32> to vector<1x8x50xf32>
    %27 = vector.shape_cast %26 : vector<1x8x50xf32> to vector<8x50xf32>
    %28 = vector.shape_cast %25 : vector<8x150xf32> to vector<8x1x150xf32>
    %29 = arith.truncf %7 : vector<2x50xf32> to vector<2x50xbf16>
    %30 = vector.shape_cast %29 : vector<2x50xbf16> to vector<1x2x50xbf16>
    %31 = vector.shape_cast %30 : vector<1x2x50xbf16> to vector<1x2x50xbf16>
    %32 = vector.broadcast %31 : vector<1x2x50xbf16> to vector<8x2x50xbf16>
    "tpu.trace_start"() <{level = 10 : i32, message = "hld,hdk->hlk"}> : () -> ()
    %cst_16 = arith.constant dense<0.000000e+00> : vector<8x2x150xf32>
    %33 = tpu.matmul %32, %21, %cst_16 {dimension_numbers = #tpu.dot_dimension_numbers<[2], [1], [1], [2], [0, 0, 0, 1, 1, 2], [0], [0]>} : vector<8x2x50xbf16>, vector<8x50x150xbf16>, vector<8x2x150xf32> -> vector<8x2x150xf32>
    "tpu.trace_stop"() : () -> ()
    %34 = vector.broadcast %28 : vector<8x1x150xf32> to vector<8x2x150xf32>
    %35 = arith.addf %33, %34 : vector<8x2x150xf32>
    %36 = vector.extract_strided_slice %35 {offsets = [0, 0, 0], sizes = [8, 2, 50], strides = [1, 1, 1]} : vector<8x2x150xf32> to vector<8x2x50xf32>
    %37 = vector.extract_strided_slice %35 {offsets = [0, 0, 50], sizes = [8, 2, 50], strides = [1, 1, 1]} : vector<8x2x150xf32> to vector<8x2x50xf32>
    %38 = vector.extract_strided_slice %35 {offsets = [0, 0, 100], sizes = [8, 2, 50], strides = [1, 1, 1]} : vector<8x2x150xf32> to vector<8x2x50xf32>
    %cst_17 = arith.constant 0.141421363 : f32
    %39 = vector.broadcast %cst_17 : f32 to vector<8x2x50xf32>
    %40 = arith.mulf %36, %39 : vector<8x2x50xf32>
    %41 = arith.truncf %40 : vector<8x2x50xf32> to vector<8x2x50xbf16>
    %42 = arith.truncf %37 : vector<8x2x50xf32> to vector<8x2x50xbf16>
    %43 = arith.truncf %38 : vector<8x2x50xf32> to vector<8x2x50xbf16>
    "tpu.trace_start"() <{level = 10 : i32, message = "hqk,hlk->hql"}> : () -> ()
    %cst_18 = arith.constant dense<0.000000e+00> : vector<8x2x2xf32>
    %44 = tpu.matmul %41, %42, %cst_18 {dimension_numbers = #tpu.dot_dimension_numbers<[2], [2], [1], [1], [0, 0, 0, 1, 1, 1], [0], [0]>} : vector<8x2x50xbf16>, vector<8x2x50xbf16>, vector<8x2x2xf32> -> vector<8x2x2xf32>
    "tpu.trace_stop"() : () -> ()
    %45 = vector.shape_cast %10 : vector<2x2xi1> to vector<1x2x2xi1>
    %cst_19 = arith.constant -1.000000e+09 : f32
    %46 = vector.shape_cast %45 : vector<1x2x2xi1> to vector<1x2x2xi1>
    %47 = vector.broadcast %46 : vector<1x2x2xi1> to vector<8x2x2xi1>
    %48 = vector.broadcast %cst_19 : f32 to vector<8x2x2xf32>
    %49 = arith.select %47, %44, %48 : vector<8x2x2xi1>, vector<8x2x2xf32>
    %cst_20 = arith.constant dense<0xFF800000> : vector<8x2xf32>
    %50 = vector.multi_reduction <maximumf>, %49, %cst_20 [2] : vector<8x2x2xf32> to vector<8x2xf32>
    %51 = vector.shape_cast %50 : vector<8x2xf32> to vector<8x2x1xf32>
    %52 = vector.broadcast %51 : vector<8x2x1xf32> to vector<8x2x2xf32>
    %53 = arith.subf %49, %52 : vector<8x2x2xf32>
    %54 = math.exp %53 : vector<8x2x2xf32>
    %cst_21 = arith.constant dense<0.000000e+00> : vector<8x2xf32>
    %55 = vector.multi_reduction <add>, %54, %cst_21 [2] : vector<8x2x2xf32> to vector<8x2xf32>
    %56 = vector.shape_cast %55 : vector<8x2xf32> to vector<8x2x1xf32>
    %57 = vector.broadcast %56 : vector<8x2x1xf32> to vector<8x2x2xf32>
    %58 = arith.divf %54, %57 : vector<8x2x2xf32>
    %59 = arith.truncf %58 : vector<8x2x2xf32> to vector<8x2x2xbf16>
    "tpu.trace_start"() <{level = 10 : i32, message = "hql,hlk->hqk"}> : () -> ()
    %cst_22 = arith.constant dense<0.000000e+00> : vector<8x2x50xf32>
    %60 = tpu.matmul %59, %43, %cst_22 {dimension_numbers = #tpu.dot_dimension_numbers<[2], [1], [1], [2], [0, 0, 0, 1, 1, 2], [0], [0]>} : vector<8x2x2xbf16>, vector<8x2x50xbf16>, vector<8x2x50xf32> -> vector<8x2x50xf32>
    "tpu.trace_stop"() : () -> ()
    %61 = arith.truncf %60 : vector<8x2x50xf32> to vector<8x2x50xbf16>
    "tpu.trace_start"() <{level = 10 : i32, message = "hqk,hkm->hqm"}> : () -> ()
    %cst_23 = arith.constant dense<0.000000e+00> : vector<8x2x50xf32>
    %62 = tpu.matmul %61, %23, %cst_23 {dimension_numbers = #tpu.dot_dimension_numbers<[2], [1], [1], [2], [0, 0, 0, 1, 1, 2], [0], [0]>} : vector<8x2x50xbf16>, vector<8x50x50xbf16>, vector<8x2x50xf32> -> vector<8x2x50xf32>
    "tpu.trace_stop"() : () -> ()
    %cst_24 = arith.constant dense<0.000000e+00> : vector<2x50xf32>
    %63 = vector.multi_reduction <add>, %62, %cst_24 [0] : vector<8x2x50xf32> to vector<2x50xf32>
    %64 = vector.extract_strided_slice %27 {offsets = [0, 0], sizes = [1, 50], strides = [1, 1]} : vector<8x50xf32> to vector<1x50xf32>
    %65 = vector.broadcast %64 : vector<1x50xf32> to vector<2x50xf32>
    %66 = arith.addf %63, %65 : vector<2x50xf32>
    %67 = arith.addf %66, %7 : vector<2x50xf32>
    %68 = vector.extract_strided_slice %27 {offsets = [1, 0], sizes = [1, 50], strides = [1, 1]} : vector<8x50xf32> to vector<1x50xf32>
    %69 = vector.extract_strided_slice %27 {offsets = [2, 0], sizes = [1, 50], strides = [1, 1]} : vector<8x50xf32> to vector<1x50xf32>
    %cst_25 = arith.constant dense<0.000000e+00> : vector<2xf32>
    %70 = vector.multi_reduction <add>, %67, %cst_25 [1] : vector<2x50xf32> to vector<2xf32>
    %71 = vector.shape_cast %70 : vector<2xf32> to vector<2x1xf32>
    %cst_26 = arith.constant 5.000000e+01 : f32
    %72 = vector.broadcast %cst_26 : f32 to vector<2x1xf32>
    %73 = arith.divf %71, %72 : vector<2x1xf32>
    %74 = vector.broadcast %73 : vector<2x1xf32> to vector<2x50xf32>
    %75 = arith.subf %67, %74 : vector<2x50xf32>
    %76 = arith.mulf %75, %75 : vector<2x50xf32>
    %cst_27 = arith.constant dense<0.000000e+00> : vector<2xf32>
    %77 = vector.multi_reduction <add>, %76, %cst_27 [1] : vector<2x50xf32> to vector<2xf32>
    %78 = vector.shape_cast %77 : vector<2xf32> to vector<2x1xf32>
    %cst_28 = arith.constant 5.000000e+01 : f32
    %79 = vector.broadcast %cst_28 : f32 to vector<2x1xf32>
    %80 = arith.divf %78, %79 : vector<2x1xf32>
    %81 = vector.broadcast %73 : vector<2x1xf32> to vector<2x50xf32>
    %82 = arith.subf %67, %81 : vector<2x50xf32>
    %cst_29 = arith.constant 9.99999997E-7 : f32
    %83 = vector.broadcast %cst_29 : f32 to vector<2x1xf32>
    %84 = arith.addf %80, %83 : vector<2x1xf32>
    %85 = math.rsqrt %84 : vector<2x1xf32>
    %86 = vector.broadcast %85 : vector<2x1xf32> to vector<2x50xf32>
    %87 = arith.mulf %82, %86 : vector<2x50xf32>
    %88 = vector.broadcast %68 : vector<1x50xf32> to vector<2x50xf32>
    %89 = arith.mulf %87, %88 : vector<2x50xf32>
    %90 = vector.broadcast %69 : vector<1x50xf32> to vector<2x50xf32>
    %91 = arith.addf %89, %90 : vector<2x50xf32>
    %c0_30 = arith.constant 0 : index
    %c0_31 = arith.constant 0 : index
    %c0_32 = arith.constant 0 : index
    %c0_33 = arith.constant 0 : index
    %92 = vector.load %arg3[%c0_30, %c0_31, %c0_32, %c0_33] : memref<2x2x50x50xbf16, #tpu.memory_space<vmem>>, vector<1x2x50x50xbf16>
    %93 = vector.shape_cast %92 : vector<1x2x50x50xbf16> to vector<2x50x50xbf16>
    %94 = vector.extract_strided_slice %19 {offsets = [1, 0, 0], sizes = [1, 8, 50], strides = [1, 1, 1]} : vector<5x8x50xf32> to vector<1x8x50xf32>
    %95 = vector.shape_cast %94 : vector<1x8x50xf32> to vector<8x50xf32>
    %96 = arith.truncf %91 : vector<2x50xf32> to vector<2x50xbf16>
    %97 = vector.extract_strided_slice %93 {offsets = [0, 0, 0], sizes = [1, 50, 50], strides = [1, 1, 1]} : vector<2x50x50xbf16> to vector<1x50x50xbf16>
    %98 = vector.shape_cast %97 : vector<1x50x50xbf16> to vector<50x50xbf16>
    %cst_34 = arith.constant dense<0.000000e+00> : vector<2x50xf32>
    %99 = tpu.matmul %96, %98, %cst_34 {dimension_numbers = #tpu.dot_dimension_numbers<[1], [0], [0], [1], [0, 0, 1, 1], [], []>} : vector<2x50xbf16>, vector<50x50xbf16>, vector<2x50xf32> -> vector<2x50xf32>
    %100 = vector.extract_strided_slice %95 {offsets = [0, 0], sizes = [1, 50], strides = [1, 1]} : vector<8x50xf32> to vector<1x50xf32>
    %101 = vector.broadcast %100 : vector<1x50xf32> to vector<2x50xf32>
    %102 = arith.addf %99, %101 : vector<2x50xf32>
    %cst_35 = arith.constant 0.000000e+00 : f32
    %103 = vector.broadcast %cst_35 : f32 to vector<2x50xf32>
    %104 = arith.maximumf %102, %103 : vector<2x50xf32>
    %105 = arith.truncf %104 : vector<2x50xf32> to vector<2x50xbf16>
    %106 = vector.extract_strided_slice %93 {offsets = [1, 0, 0], sizes = [1, 50, 50], strides = [1, 1, 1]} : vector<2x50x50xbf16> to vector<1x50x50xbf16>
    %107 = vector.shape_cast %106 : vector<1x50x50xbf16> to vector<50x50xbf16>
    %cst_36 = arith.constant dense<0.000000e+00> : vector<2x50xf32>
    %108 = tpu.matmul %105, %107, %cst_36 {dimension_numbers = #tpu.dot_dimension_numbers<[1], [0], [0], [1], [0, 0, 1, 1], [], []>} : vector<2x50xbf16>, vector<50x50xbf16>, vector<2x50xf32> -> vector<2x50xf32>
    %109 = vector.extract_strided_slice %95 {offsets = [1, 0], sizes = [1, 50], strides = [1, 1]} : vector<8x50xf32> to vector<1x50xf32>
    %110 = vector.broadcast %109 : vector<1x50xf32> to vector<2x50xf32>
    %111 = arith.addf %108, %110 : vector<2x50xf32>
    %112 = arith.addf %111, %91 : vector<2x50xf32>
    %113 = vector.extract_strided_slice %95 {offsets = [2, 0], sizes = [1, 50], strides = [1, 1]} : vector<8x50xf32> to vector<1x50xf32>
    %114 = vector.extract_strided_slice %95 {offsets = [3, 0], sizes = [1, 50], strides = [1, 1]} : vector<8x50xf32> to vector<1x50xf32>
    %cst_37 = arith.constant dense<0.000000e+00> : vector<2xf32>
    %115 = vector.multi_reduction <add>, %112, %cst_37 [1] : vector<2x50xf32> to vector<2xf32>
    %116 = vector.shape_cast %115 : vector<2xf32> to vector<2x1xf32>
    %cst_38 = arith.constant 5.000000e+01 : f32
    %117 = vector.broadcast %cst_38 : f32 to vector<2x1xf32>
    %118 = arith.divf %116, %117 : vector<2x1xf32>
    %119 = vector.broadcast %118 : vector<2x1xf32> to vector<2x50xf32>
    %120 = arith.subf %112, %119 : vector<2x50xf32>
    %121 = arith.mulf %120, %120 : vector<2x50xf32>
    %cst_39 = arith.constant dense<0.000000e+00> : vector<2xf32>
    %122 = vector.multi_reduction <add>, %121, %cst_39 [1] : vector<2x50xf32> to vector<2xf32>
    %123 = vector.shape_cast %122 : vector<2xf32> to vector<2x1xf32>
    %cst_40 = arith.constant 5.000000e+01 : f32
    %124 = vector.broadcast %cst_40 : f32 to vector<2x1xf32>
    %125 = arith.divf %123, %124 : vector<2x1xf32>
    %126 = vector.broadcast %118 : vector<2x1xf32> to vector<2x50xf32>
    %127 = arith.subf %112, %126 : vector<2x50xf32>
    %cst_41 = arith.constant 9.99999997E-7 : f32
    %128 = vector.broadcast %cst_41 : f32 to vector<2x1xf32>
    %129 = arith.addf %125, %128 : vector<2x1xf32>
    %130 = math.rsqrt %129 : vector<2x1xf32>
    %131 = vector.broadcast %130 : vector<2x1xf32> to vector<2x50xf32>
    %132 = arith.mulf %127, %131 : vector<2x50xf32>
    %133 = vector.broadcast %113 : vector<1x50xf32> to vector<2x50xf32>
    %134 = arith.mulf %132, %133 : vector<2x50xf32>
    %135 = vector.broadcast %114 : vector<1x50xf32> to vector<2x50xf32>
    %136 = arith.addf %134, %135 : vector<2x50xf32>
    %c1 = arith.constant 1 : index
    %c0_42 = arith.constant 0 : index
    %c0_43 = arith.constant 0 : index
    %c0_44 = arith.constant 0 : index
    %137 = vector.load %arg1[%c1, %c0_42, %c0_43, %c0_44] : memref<3x8x50x150xbf16, #tpu.memory_space<vmem>>, vector<1x8x50x150xbf16>
    %138 = vector.shape_cast %137 : vector<1x8x50x150xbf16> to vector<8x50x150xbf16>
    %c1_45 = arith.constant 1 : index
    %c0_46 = arith.constant 0 : index
    %c0_47 = arith.constant 0 : index
    %c0_48 = arith.constant 0 : index
    %139 = vector.load %arg2[%c1_45, %c0_46, %c0_47, %c0_48] : memref<3x8x50x50xbf16, #tpu.memory_space<vmem>>, vector<1x8x50x50xbf16>
    %140 = vector.shape_cast %139 : vector<1x8x50x50xbf16> to vector<8x50x50xbf16>
    %c1_49 = arith.constant 1 : index
    %c0_50 = arith.constant 0 : index
    %c0_51 = arith.constant 0 : index
    %141 = vector.load %arg4[%c1_49, %c0_50, %c0_51] : memref<3x8x150xf32, #tpu.memory_space<vmem>>, vector<1x8x150xf32>
    %142 = vector.shape_cast %141 : vector<1x8x150xf32> to vector<8x150xf32>
    %143 = vector.extract_strided_slice %19 {offsets = [2, 0, 0], sizes = [1, 8, 50], strides = [1, 1, 1]} : vector<5x8x50xf32> to vector<1x8x50xf32>
    %144 = vector.shape_cast %143 : vector<1x8x50xf32> to vector<8x50xf32>
    %145 = vector.shape_cast %142 : vector<8x150xf32> to vector<8x1x150xf32>
    %146 = arith.truncf %8 : vector<3x50xf32> to vector<3x50xbf16>
    %147 = vector.shape_cast %146 : vector<3x50xbf16> to vector<1x3x50xbf16>
    %148 = vector.shape_cast %147 : vector<1x3x50xbf16> to vector<1x3x50xbf16>
    %149 = vector.broadcast %148 : vector<1x3x50xbf16> to vector<8x3x50xbf16>
    "tpu.trace_start"() <{level = 10 : i32, message = "hld,hdk->hlk"}> : () -> ()
    %cst_52 = arith.constant dense<0.000000e+00> : vector<8x3x150xf32>
    %150 = tpu.matmul %149, %138, %cst_52 {dimension_numbers = #tpu.dot_dimension_numbers<[2], [1], [1], [2], [0, 0, 0, 1, 1, 2], [0], [0]>} : vector<8x3x50xbf16>, vector<8x50x150xbf16>, vector<8x3x150xf32> -> vector<8x3x150xf32>
    "tpu.trace_stop"() : () -> ()
    %151 = vector.broadcast %145 : vector<8x1x150xf32> to vector<8x3x150xf32>
    %152 = arith.addf %150, %151 : vector<8x3x150xf32>
    %153 = vector.extract_strided_slice %152 {offsets = [0, 0, 0], sizes = [8, 3, 50], strides = [1, 1, 1]} : vector<8x3x150xf32> to vector<8x3x50xf32>
    %154 = vector.extract_strided_slice %152 {offsets = [0, 0, 50], sizes = [8, 3, 50], strides = [1, 1, 1]} : vector<8x3x150xf32> to vector<8x3x50xf32>
    %155 = vector.extract_strided_slice %152 {offsets = [0, 0, 100], sizes = [8, 3, 50], strides = [1, 1, 1]} : vector<8x3x150xf32> to vector<8x3x50xf32>
    %cst_53 = arith.constant 0.141421363 : f32
    %156 = vector.broadcast %cst_53 : f32 to vector<8x3x50xf32>
    %157 = arith.mulf %153, %156 : vector<8x3x50xf32>
    %158 = arith.truncf %157 : vector<8x3x50xf32> to vector<8x3x50xbf16>
    %159 = arith.truncf %154 : vector<8x3x50xf32> to vector<8x3x50xbf16>
    %160 = arith.truncf %155 : vector<8x3x50xf32> to vector<8x3x50xbf16>
    "tpu.trace_start"() <{level = 10 : i32, message = "hqk,hlk->hql"}> : () -> ()
    %cst_54 = arith.constant dense<0.000000e+00> : vector<8x3x3xf32>
    %161 = tpu.matmul %158, %159, %cst_54 {dimension_numbers = #tpu.dot_dimension_numbers<[2], [2], [1], [1], [0, 0, 0, 1, 1, 1], [0], [0]>} : vector<8x3x50xbf16>, vector<8x3x50xbf16>, vector<8x3x3xf32> -> vector<8x3x3xf32>
    "tpu.trace_stop"() : () -> ()
    %162 = vector.shape_cast %16 : vector<3x3xi1> to vector<1x3x3xi1>
    %cst_55 = arith.constant -1.000000e+09 : f32
    %163 = vector.shape_cast %162 : vector<1x3x3xi1> to vector<1x3x3xi1>
    %164 = vector.broadcast %163 : vector<1x3x3xi1> to vector<8x3x3xi1>
    %165 = vector.broadcast %cst_55 : f32 to vector<8x3x3xf32>
    %166 = arith.select %164, %161, %165 : vector<8x3x3xi1>, vector<8x3x3xf32>
    %cst_56 = arith.constant dense<0xFF800000> : vector<8x3xf32>
    %167 = vector.multi_reduction <maximumf>, %166, %cst_56 [2] : vector<8x3x3xf32> to vector<8x3xf32>
    %168 = vector.shape_cast %167 : vector<8x3xf32> to vector<8x3x1xf32>
    %169 = vector.broadcast %168 : vector<8x3x1xf32> to vector<8x3x3xf32>
    %170 = arith.subf %166, %169 : vector<8x3x3xf32>
    %171 = math.exp %170 : vector<8x3x3xf32>
    %cst_57 = arith.constant dense<0.000000e+00> : vector<8x3xf32>
    %172 = vector.multi_reduction <add>, %171, %cst_57 [2] : vector<8x3x3xf32> to vector<8x3xf32>
    %173 = vector.shape_cast %172 : vector<8x3xf32> to vector<8x3x1xf32>
    %174 = vector.broadcast %173 : vector<8x3x1xf32> to vector<8x3x3xf32>
    %175 = arith.divf %171, %174 : vector<8x3x3xf32>
    %176 = arith.truncf %175 : vector<8x3x3xf32> to vector<8x3x3xbf16>
    "tpu.trace_start"() <{level = 10 : i32, message = "hql,hlk->hqk"}> : () -> ()
    %cst_58 = arith.constant dense<0.000000e+00> : vector<8x3x50xf32>
    %177 = tpu.matmul %176, %160, %cst_58 {dimension_numbers = #tpu.dot_dimension_numbers<[2], [1], [1], [2], [0, 0, 0, 1, 1, 2], [0], [0]>} : vector<8x3x3xbf16>, vector<8x3x50xbf16>, vector<8x3x50xf32> -> vector<8x3x50xf32>
    "tpu.trace_stop"() : () -> ()
    %178 = arith.truncf %177 : vector<8x3x50xf32> to vector<8x3x50xbf16>
    "tpu.trace_start"() <{level = 10 : i32, message = "hqk,hkm->hqm"}> : () -> ()
    %cst_59 = arith.constant dense<0.000000e+00> : vector<8x3x50xf32>
    %179 = tpu.matmul %178, %140, %cst_59 {dimension_numbers = #tpu.dot_dimension_numbers<[2], [1], [1], [2], [0, 0, 0, 1, 1, 2], [0], [0]>} : vector<8x3x50xbf16>, vector<8x50x50xbf16>, vector<8x3x50xf32> -> vector<8x3x50xf32>
    "tpu.trace_stop"() : () -> ()
    %cst_60 = arith.constant dense<0.000000e+00> : vector<3x50xf32>
    %180 = vector.multi_reduction <add>, %179, %cst_60 [0] : vector<8x3x50xf32> to vector<3x50xf32>
    %181 = vector.extract_strided_slice %144 {offsets = [0, 0], sizes = [1, 50], strides = [1, 1]} : vector<8x50xf32> to vector<1x50xf32>
    %182 = vector.broadcast %181 : vector<1x50xf32> to vector<3x50xf32>
    %183 = arith.addf %180, %182 : vector<3x50xf32>
    %184 = arith.addf %183, %8 : vector<3x50xf32>
    %185 = vector.extract_strided_slice %144 {offsets = [1, 0], sizes = [1, 50], strides = [1, 1]} : vector<8x50xf32> to vector<1x50xf32>
    %186 = vector.extract_strided_slice %144 {offsets = [2, 0], sizes = [1, 50], strides = [1, 1]} : vector<8x50xf32> to vector<1x50xf32>
    %cst_61 = arith.constant dense<0.000000e+00> : vector<3xf32>
    %187 = vector.multi_reduction <add>, %184, %cst_61 [1] : vector<3x50xf32> to vector<3xf32>
    %188 = vector.shape_cast %187 : vector<3xf32> to vector<3x1xf32>
    %cst_62 = arith.constant 5.000000e+01 : f32
    %189 = vector.broadcast %cst_62 : f32 to vector<3x1xf32>
    %190 = arith.divf %188, %189 : vector<3x1xf32>
    %191 = vector.broadcast %190 : vector<3x1xf32> to vector<3x50xf32>
    %192 = arith.subf %184, %191 : vector<3x50xf32>
    %193 = arith.mulf %192, %192 : vector<3x50xf32>
    %cst_63 = arith.constant dense<0.000000e+00> : vector<3xf32>
    %194 = vector.multi_reduction <add>, %193, %cst_63 [1] : vector<3x50xf32> to vector<3xf32>
    %195 = vector.shape_cast %194 : vector<3xf32> to vector<3x1xf32>
    %cst_64 = arith.constant 5.000000e+01 : f32
    %196 = vector.broadcast %cst_64 : f32 to vector<3x1xf32>
    %197 = arith.divf %195, %196 : vector<3x1xf32>
    %198 = vector.broadcast %190 : vector<3x1xf32> to vector<3x50xf32>
    %199 = arith.subf %184, %198 : vector<3x50xf32>
    %cst_65 = arith.constant 9.99999997E-7 : f32
    %200 = vector.broadcast %cst_65 : f32 to vector<3x1xf32>
    %201 = arith.addf %197, %200 : vector<3x1xf32>
    %202 = math.rsqrt %201 : vector<3x1xf32>
    %203 = vector.broadcast %202 : vector<3x1xf32> to vector<3x50xf32>
    %204 = arith.mulf %199, %203 : vector<3x50xf32>
    %205 = vector.broadcast %185 : vector<1x50xf32> to vector<3x50xf32>
    %206 = arith.mulf %204, %205 : vector<3x50xf32>
    %207 = vector.broadcast %186 : vector<1x50xf32> to vector<3x50xf32>
    %208 = arith.addf %206, %207 : vector<3x50xf32>
    %c2 = arith.constant 2 : index
    %c0_66 = arith.constant 0 : index
    %c0_67 = arith.constant 0 : index
    %c0_68 = arith.constant 0 : index
    %209 = vector.load %arg1[%c2, %c0_66, %c0_67, %c0_68] : memref<3x8x50x150xbf16, #tpu.memory_space<vmem>>, vector<1x8x50x150xbf16>
    %210 = vector.shape_cast %209 : vector<1x8x50x150xbf16> to vector<8x50x150xbf16>
    %c2_69 = arith.constant 2 : index
    %c0_70 = arith.constant 0 : index
    %c0_71 = arith.constant 0 : index
    %c0_72 = arith.constant 0 : index
    %211 = vector.load %arg2[%c2_69, %c0_70, %c0_71, %c0_72] : memref<3x8x50x50xbf16, #tpu.memory_space<vmem>>, vector<1x8x50x50xbf16>
    %212 = vector.shape_cast %211 : vector<1x8x50x50xbf16> to vector<8x50x50xbf16>
    %c2_73 = arith.constant 2 : index
    %c0_74 = arith.constant 0 : index
    %c0_75 = arith.constant 0 : index
    %213 = vector.load %arg4[%c2_73, %c0_74, %c0_75] : memref<3x8x150xf32, #tpu.memory_space<vmem>>, vector<1x8x150xf32>
    %214 = vector.shape_cast %213 : vector<1x8x150xf32> to vector<8x150xf32>
    %215 = vector.extract_strided_slice %19 {offsets = [3, 0, 0], sizes = [1, 8, 50], strides = [1, 1, 1]} : vector<5x8x50xf32> to vector<1x8x50xf32>
    %216 = vector.shape_cast %215 : vector<1x8x50xf32> to vector<8x50xf32>
    %217 = vector.shape_cast %214 : vector<8x150xf32> to vector<8x1x150xf32>
    %218 = arith.truncf %208 : vector<3x50xf32> to vector<3x50xbf16>
    %219 = vector.shape_cast %218 : vector<3x50xbf16> to vector<1x3x50xbf16>
    %220 = vector.shape_cast %219 : vector<1x3x50xbf16> to vector<1x3x50xbf16>
    %221 = vector.broadcast %220 : vector<1x3x50xbf16> to vector<8x3x50xbf16>
    %222 = arith.truncf %136 : vector<2x50xf32> to vector<2x50xbf16>
    %223 = vector.shape_cast %222 : vector<2x50xbf16> to vector<1x2x50xbf16>
    %224 = vector.shape_cast %223 : vector<1x2x50xbf16> to vector<1x2x50xbf16>
    %225 = vector.broadcast %224 : vector<1x2x50xbf16> to vector<8x2x50xbf16>
    %226 = vector.extract_strided_slice %210 {offsets = [0, 0, 0], sizes = [8, 50, 50], strides = [1, 1, 1]} : vector<8x50x150xbf16> to vector<8x50x50xbf16>
    "tpu.trace_start"() <{level = 10 : i32, message = "hld,hdk->hlk"}> : () -> ()
    %cst_76 = arith.constant dense<0.000000e+00> : vector<8x3x50xf32>
    %227 = tpu.matmul %221, %226, %cst_76 {dimension_numbers = #tpu.dot_dimension_numbers<[2], [1], [1], [2], [0, 0, 0, 1, 1, 2], [0], [0]>} : vector<8x3x50xbf16>, vector<8x50x50xbf16>, vector<8x3x50xf32> -> vector<8x3x50xf32>
    "tpu.trace_stop"() : () -> ()
    %228 = vector.extract_strided_slice %217 {offsets = [0, 0, 0], sizes = [8, 1, 50], strides = [1, 1, 1]} : vector<8x1x150xf32> to vector<8x1x50xf32>
    %229 = vector.broadcast %228 : vector<8x1x50xf32> to vector<8x3x50xf32>
    %230 = arith.addf %227, %229 : vector<8x3x50xf32>
    %231 = vector.extract_strided_slice %210 {offsets = [0, 0, 50], sizes = [8, 50, 100], strides = [1, 1, 1]} : vector<8x50x150xbf16> to vector<8x50x100xbf16>
    "tpu.trace_start"() <{level = 10 : i32, message = "hld,hdk->hlk"}> : () -> ()
    %cst_77 = arith.constant dense<0.000000e+00> : vector<8x2x100xf32>
    %232 = tpu.matmul %225, %231, %cst_77 {dimension_numbers = #tpu.dot_dimension_numbers<[2], [1], [1], [2], [0, 0, 0, 1, 1, 2], [0], [0]>} : vector<8x2x50xbf16>, vector<8x50x100xbf16>, vector<8x2x100xf32> -> vector<8x2x100xf32>
    "tpu.trace_stop"() : () -> ()
    %233 = vector.extract_strided_slice %217 {offsets = [0, 0, 50], sizes = [8, 1, 100], strides = [1, 1, 1]} : vector<8x1x150xf32> to vector<8x1x100xf32>
    %234 = vector.broadcast %233 : vector<8x1x100xf32> to vector<8x2x100xf32>
    %235 = arith.addf %232, %234 : vector<8x2x100xf32>
    %236 = vector.extract_strided_slice %235 {offsets = [0, 0, 0], sizes = [8, 2, 50], strides = [1, 1, 1]} : vector<8x2x100xf32> to vector<8x2x50xf32>
    %237 = vector.extract_strided_slice %235 {offsets = [0, 0, 50], sizes = [8, 2, 50], strides = [1, 1, 1]} : vector<8x2x100xf32> to vector<8x2x50xf32>
    %cst_78 = arith.constant 0.141421363 : f32
    %238 = vector.broadcast %cst_78 : f32 to vector<8x3x50xf32>
    %239 = arith.mulf %230, %238 : vector<8x3x50xf32>
    %240 = arith.truncf %239 : vector<8x3x50xf32> to vector<8x3x50xbf16>
    %241 = arith.truncf %236 : vector<8x2x50xf32> to vector<8x2x50xbf16>
    %242 = arith.truncf %237 : vector<8x2x50xf32> to vector<8x2x50xbf16>
    "tpu.trace_start"() <{level = 10 : i32, message = "hqk,hlk->hql"}> : () -> ()
    %cst_79 = arith.constant dense<0.000000e+00> : vector<8x3x2xf32>
    %243 = tpu.matmul %240, %241, %cst_79 {dimension_numbers = #tpu.dot_dimension_numbers<[2], [2], [1], [1], [0, 0, 0, 1, 1, 1], [0], [0]>} : vector<8x3x50xbf16>, vector<8x2x50xbf16>, vector<8x3x2xf32> -> vector<8x3x2xf32>
    "tpu.trace_stop"() : () -> ()
    %244 = vector.shape_cast %18 : vector<3x2xi1> to vector<1x3x2xi1>
    %cst_80 = arith.constant -1.000000e+09 : f32
    %245 = vector.shape_cast %244 : vector<1x3x2xi1> to vector<1x3x2xi1>
    %246 = vector.broadcast %245 : vector<1x3x2xi1> to vector<8x3x2xi1>
    %247 = vector.broadcast %cst_80 : f32 to vector<8x3x2xf32>
    %248 = arith.select %246, %243, %247 : vector<8x3x2xi1>, vector<8x3x2xf32>
    %cst_81 = arith.constant dense<0xFF800000> : vector<8x3xf32>
    %249 = vector.multi_reduction <maximumf>, %248, %cst_81 [2] : vector<8x3x2xf32> to vector<8x3xf32>
    %250 = vector.shape_cast %249 : vector<8x3xf32> to vector<8x3x1xf32>
    %251 = vector.broadcast %250 : vector<8x3x1xf32> to vector<8x3x2xf32>
    %252 = arith.subf %248, %251 : vector<8x3x2xf32>
    %253 = math.exp %252 : vector<8x3x2xf32>
    %cst_82 = arith.constant dense<0.000000e+00> : vector<8x3xf32>
    %254 = vector.multi_reduction <add>, %253, %cst_82 [2] : vector<8x3x2xf32> to vector<8x3xf32>
    %255 = vector.shape_cast %254 : vector<8x3xf32> to vector<8x3x1xf32>
    %256 = vector.broadcast %255 : vector<8x3x1xf32> to vector<8x3x2xf32>
    %257 = arith.divf %253, %256 : vector<8x3x2xf32>
    %258 = arith.truncf %257 : vector<8x3x2xf32> to vector<8x3x2xbf16>
    "tpu.trace_start"() <{level = 10 : i32, message = "hql,hlk->hqk"}> : () -> ()
    %cst_83 = arith.constant dense<0.000000e+00> : vector<8x3x50xf32>
    %259 = tpu.matmul %258, %242, %cst_83 {dimension_numbers = #tpu.dot_dimension_numbers<[2], [1], [1], [2], [0, 0, 0, 1, 1, 2], [0], [0]>} : vector<8x3x2xbf16>, vector<8x2x50xbf16>, vector<8x3x50xf32> -> vector<8x3x50xf32>
    "tpu.trace_stop"() : () -> ()
    %260 = arith.truncf %259 : vector<8x3x50xf32> to vector<8x3x50xbf16>
    "tpu.trace_start"() <{level = 10 : i32, message = "hqk,hkm->hqm"}> : () -> ()
    %cst_84 = arith.constant dense<0.000000e+00> : vector<8x3x50xf32>
    %261 = tpu.matmul %260, %212, %cst_84 {dimension_numbers = #tpu.dot_dimension_numbers<[2], [1], [1], [2], [0, 0, 0, 1, 1, 2], [0], [0]>} : vector<8x3x50xbf16>, vector<8x50x50xbf16>, vector<8x3x50xf32> -> vector<8x3x50xf32>
    "tpu.trace_stop"() : () -> ()
    %cst_85 = arith.constant dense<0.000000e+00> : vector<3x50xf32>
    %262 = vector.multi_reduction <add>, %261, %cst_85 [0] : vector<8x3x50xf32> to vector<3x50xf32>
    %263 = vector.extract_strided_slice %216 {offsets = [0, 0], sizes = [1, 50], strides = [1, 1]} : vector<8x50xf32> to vector<1x50xf32>
    %264 = vector.broadcast %263 : vector<1x50xf32> to vector<3x50xf32>
    %265 = arith.addf %262, %264 : vector<3x50xf32>
    %266 = arith.addf %265, %208 : vector<3x50xf32>
    %267 = vector.extract_strided_slice %216 {offsets = [1, 0], sizes = [1, 50], strides = [1, 1]} : vector<8x50xf32> to vector<1x50xf32>
    %268 = vector.extract_strided_slice %216 {offsets = [2, 0], sizes = [1, 50], strides = [1, 1]} : vector<8x50xf32> to vector<1x50xf32>
    %cst_86 = arith.constant dense<0.000000e+00> : vector<3xf32>
    %269 = vector.multi_reduction <add>, %266, %cst_86 [1] : vector<3x50xf32> to vector<3xf32>
    %270 = vector.shape_cast %269 : vector<3xf32> to vector<3x1xf32>
    %cst_87 = arith.constant 5.000000e+01 : f32
    %271 = vector.broadcast %cst_87 : f32 to vector<3x1xf32>
    %272 = arith.divf %270, %271 : vector<3x1xf32>
    %273 = vector.broadcast %272 : vector<3x1xf32> to vector<3x50xf32>
    %274 = arith.subf %266, %273 : vector<3x50xf32>
    %275 = arith.mulf %274, %274 : vector<3x50xf32>
    %cst_88 = arith.constant dense<0.000000e+00> : vector<3xf32>
    %276 = vector.multi_reduction <add>, %275, %cst_88 [1] : vector<3x50xf32> to vector<3xf32>
    %277 = vector.shape_cast %276 : vector<3xf32> to vector<3x1xf32>
    %cst_89 = arith.constant 5.000000e+01 : f32
    %278 = vector.broadcast %cst_89 : f32 to vector<3x1xf32>
    %279 = arith.divf %277, %278 : vector<3x1xf32>
    %280 = vector.broadcast %272 : vector<3x1xf32> to vector<3x50xf32>
    %281 = arith.subf %266, %280 : vector<3x50xf32>
    %cst_90 = arith.constant 9.99999997E-7 : f32
    %282 = vector.broadcast %cst_90 : f32 to vector<3x1xf32>
    %283 = arith.addf %279, %282 : vector<3x1xf32>
    %284 = math.rsqrt %283 : vector<3x1xf32>
    %285 = vector.broadcast %284 : vector<3x1xf32> to vector<3x50xf32>
    %286 = arith.mulf %281, %285 : vector<3x50xf32>
    %287 = vector.broadcast %267 : vector<1x50xf32> to vector<3x50xf32>
    %288 = arith.mulf %286, %287 : vector<3x50xf32>
    %289 = vector.broadcast %268 : vector<1x50xf32> to vector<3x50xf32>
    %290 = arith.addf %288, %289 : vector<3x50xf32>
    %c1_91 = arith.constant 1 : index
    %c0_92 = arith.constant 0 : index
    %c0_93 = arith.constant 0 : index
    %c0_94 = arith.constant 0 : index
    %291 = vector.load %arg3[%c1_91, %c0_92, %c0_93, %c0_94] : memref<2x2x50x50xbf16, #tpu.memory_space<vmem>>, vector<1x2x50x50xbf16>
    %292 = vector.shape_cast %291 : vector<1x2x50x50xbf16> to vector<2x50x50xbf16>
    %293 = vector.extract_strided_slice %19 {offsets = [4, 0, 0], sizes = [1, 8, 50], strides = [1, 1, 1]} : vector<5x8x50xf32> to vector<1x8x50xf32>
    %294 = vector.shape_cast %293 : vector<1x8x50xf32> to vector<8x50xf32>
    %295 = arith.truncf %290 : vector<3x50xf32> to vector<3x50xbf16>
    %296 = vector.extract_strided_slice %292 {offsets = [0, 0, 0], sizes = [1, 50, 50], strides = [1, 1, 1]} : vector<2x50x50xbf16> to vector<1x50x50xbf16>
    %297 = vector.shape_cast %296 : vector<1x50x50xbf16> to vector<50x50xbf16>
    %cst_95 = arith.constant dense<0.000000e+00> : vector<3x50xf32>
    %298 = tpu.matmul %295, %297, %cst_95 {dimension_numbers = #tpu.dot_dimension_numbers<[1], [0], [0], [1], [0, 0, 1, 1], [], []>} : vector<3x50xbf16>, vector<50x50xbf16>, vector<3x50xf32> -> vector<3x50xf32>
    %299 = vector.extract_strided_slice %294 {offsets = [0, 0], sizes = [1, 50], strides = [1, 1]} : vector<8x50xf32> to vector<1x50xf32>
    %300 = vector.broadcast %299 : vector<1x50xf32> to vector<3x50xf32>
    %301 = arith.addf %298, %300 : vector<3x50xf32>
    %cst_96 = arith.constant 0.000000e+00 : f32
    %302 = vector.broadcast %cst_96 : f32 to vector<3x50xf32>
    %303 = arith.maximumf %301, %302 : vector<3x50xf32>
    %304 = arith.truncf %303 : vector<3x50xf32> to vector<3x50xbf16>
    %305 = vector.extract_strided_slice %292 {offsets = [1, 0, 0], sizes = [1, 50, 50], strides = [1, 1, 1]} : vector<2x50x50xbf16> to vector<1x50x50xbf16>
    %306 = vector.shape_cast %305 : vector<1x50x50xbf16> to vector<50x50xbf16>
    %cst_97 = arith.constant dense<0.000000e+00> : vector<3x50xf32>
    %307 = tpu.matmul %304, %306, %cst_97 {dimension_numbers = #tpu.dot_dimension_numbers<[1], [0], [0], [1], [0, 0, 1, 1], [], []>} : vector<3x50xbf16>, vector<50x50xbf16>, vector<3x50xf32> -> vector<3x50xf32>
    %308 = vector.extract_strided_slice %294 {offsets = [1, 0], sizes = [1, 50], strides = [1, 1]} : vector<8x50xf32> to vector<1x50xf32>
    %309 = vector.broadcast %308 : vector<1x50xf32> to vector<3x50xf32>
    %310 = arith.addf %307, %309 : vector<3x50xf32>
    %311 = arith.addf %310, %290 : vector<3x50xf32>
    %312 = vector.extract_strided_slice %294 {offsets = [2, 0], sizes = [1, 50], strides = [1, 1]} : vector<8x50xf32> to vector<1x50xf32>
    %313 = vector.extract_strided_slice %294 {offsets = [3, 0], sizes = [1, 50], strides = [1, 1]} : vector<8x50xf32> to vector<1x50xf32>
    %cst_98 = arith.constant dense<0.000000e+00> : vector<3xf32>
    %314 = vector.multi_reduction <add>, %311, %cst_98 [1] : vector<3x50xf32> to vector<3xf32>
    %315 = vector.shape_cast %314 : vector<3xf32> to vector<3x1xf32>
    %cst_99 = arith.constant 5.000000e+01 : f32
    %316 = vector.broadcast %cst_99 : f32 to vector<3x1xf32>
    %317 = arith.divf %315, %316 : vector<3x1xf32>
    %318 = vector.broadcast %317 : vector<3x1xf32> to vector<3x50xf32>
    %319 = arith.subf %311, %318 : vector<3x50xf32>
    %320 = arith.mulf %319, %319 : vector<3x50xf32>
    %cst_100 = arith.constant dense<0.000000e+00> : vector<3xf32>
    %321 = vector.multi_reduction <add>, %320, %cst_100 [1] : vector<3x50xf32> to vector<3xf32>
    %322 = vector.shape_cast %321 : vector<3xf32> to vector<3x1xf32>
    %cst_101 = arith.constant 5.000000e+01 : f32
    %323 = vector.broadcast %cst_101 : f32 to vector<3x1xf32>
    %324 = arith.divf %322, %323 : vector<3x1xf32>
    %325 = vector.broadcast %317 : vector<3x1xf32> to vector<3x50xf32>
    %326 = arith.subf %311, %325 : vector<3x50xf32>
    %cst_102 = arith.constant 9.99999997E-7 : f32
    %327 = vector.broadcast %cst_102 : f32 to vector<3x1xf32>
    %328 = arith.addf %324, %327 : vector<3x1xf32>
    %329 = math.rsqrt %328 : vector<3x1xf32>
    %330 = vector.broadcast %329 : vector<3x1xf32> to vector<3x50xf32>
    %331 = arith.mulf %326, %330 : vector<3x50xf32>
    %332 = vector.broadcast %312 : vector<1x50xf32> to vector<3x50xf32>
    %333 = arith.mulf %331, %332 : vector<3x50xf32>
    %334 = vector.broadcast %313 : vector<1x50xf32> to vector<3x50xf32>
    %335 = arith.addf %333, %334 : vector<3x50xf32>
    %c0_103 = arith.constant 0 : index
    %c0_104 = arith.constant 0 : index
    %336 = vector.load %arg6[%c0_103, %c0_104] : memref<3x50xf32, #tpu.memory_space<vmem>>, vector<3x50xf32>
    tpu.vector_store %arg6[%c0_103, %c0_104], %335 {strides = array<i32>} : memref<3x50xf32, #tpu.memory_space<vmem>>, vector<3x50xf32>,
    return
  }
}

</mosaic_0001>

<llo_original>
// kernel: tpu_custom_call.1
$region0: #{tpu_custom_call.1}
  #allocation0 [shape = 'u32[]', space=smem, size = 0x4, offset = 0x4, fixed_abs, tag = 'smem constant byte address 0x4 - core index']
  #allocation1 [shape = 'u32[144,128]{1,0:T(1,128)}', space=vmem, size = 0x12000, scoped, tag = 'internal scratch']
  %s0 = inlined_call_operand.vmem [shape: f32[8,50], index: 0, kind: input, shape index: {}]
  %s1 = inlined_call_operand.vmem [shape: bf16[3,8,50,150], index: 1, kind: input, shape index: {}]
  %s2 = inlined_call_operand.vmem [shape: bf16[3,8,50,50], index: 2, kind: input, shape index: {}]
  %s3 = inlined_call_operand.vmem [shape: bf16[2,2,50,50], index: 3, kind: input, shape index: {}]
  %s4 = inlined_call_operand.vmem [shape: f32[3,8,150], index: 4, kind: input, shape index: {}]
  %s5 = inlined_call_operand.vmem [shape: f32[5,8,50], index: 5, kind: input, shape index: {}]
  %s6 = inlined_call_operand.hbm [shape: f32[3,50], index: 6, kind: output, shape index: {}]
  %s7 = sld [smem:[#allocation0]]
  $region34: #{tpu_custom_call.1} parent=0
    _
  %s9 = ssub.s32 1, %s7
  %s10 = scalar_select 0, %s9, %s7
  $region1: #{tpu_custom_call.1} parent=0
    #allocation2 [shape = 'u8[2048]{0}', space=vmem, size = 0x800, scoped, tag = 'output window, operand 0, single buffered']
    #allocation3 [shape = 's32[1]{0}', space=sflag, size = 0x4, scoped, tag = 'scoped memory for tpu_custom_call.1']
    %11 = vsyncpa [#allocation3], 0
    // Predicated region
    $region2: #{tpu_custom_call.1} parent=1 // pred_check
      _
    $region3: #{tpu_custom_call.1} parent=1 // pred_check_branch
      %13 = sbr.rel (0) target = $region5
    $region4: #{tpu_custom_call.1} parent=1 // pred_region
      _
    $region5: #{tpu_custom_call.1} parent=1 // pred_fallthru
      _
    // Predicated region
    $region6: #{tpu_custom_call.1} parent=1 // pred_check
      _
    $region7: #{tpu_custom_call.1} parent=1 // pred_check_branch
      %15 = sbr.rel (0) target = $region9
    $region8: #{tpu_custom_call.1} parent=1 // pred_region
      _
    $region9: #{tpu_custom_call.1} parent=1 // pred_fallthru
      _
    // Predicated region
    $region10: #{tpu_custom_call.1} parent=1 // pred_check
      _
    $region11: #{tpu_custom_call.1} parent=1 // pred_check_branch
      %17 = sbr.rel (0) target = $region13
    $region12: #{tpu_custom_call.1} parent=1 // pred_region
      _
    $region13: #{tpu_custom_call.1} parent=1 // pred_fallthru
      _
    // Predicated region
    $region14: #{tpu_custom_call.1} parent=1 // pred_check
      _
    $region15: #{tpu_custom_call.1} parent=1 // pred_check_branch
      %19 = sbr.rel (0) target = $region17
    $region16: #{tpu_custom_call.1} parent=1 // pred_region
      _
    $region17: #{tpu_custom_call.1} parent=1 // pred_fallthru
      _
    // Predicated region
    $region18: #{tpu_custom_call.1} parent=1 // pred_check
      _
    $region19: #{tpu_custom_call.1} parent=1 // pred_check_branch
      %21 = sbr.rel (0) target = $region21
    $region20: #{tpu_custom_call.1} parent=1 // pred_region
      _
    $region21: #{tpu_custom_call.1} parent=1 // pred_fallthru
      _
    // Predicated region
    $region22: #{tpu_custom_call.1} parent=1 // pred_check
      _
    $region23: #{tpu_custom_call.1} parent=1 // pred_check_branch
      %23 = sbr.rel (0) target = $region25
    $region24: #{tpu_custom_call.1} parent=1 // pred_region
      _
    $region25: #{tpu_custom_call.1} parent=1 // pred_fallthru
      _
    %v25 = vld [vmem:[%s0] sm:$0xff]
    %vm26 = vcmp.ne.f32.partialorder %v25, 0.0
    %v27 = vlaneseq
    %v28 = vshrl.u32 %v27, 7
    %v29 = vlaneseq
    %v30 = vand.u32 %v29, 127
    %vm31 = vcmp.ge.s32.totalorder %v28, %v30
    %v32 = vsel %vm26, 1, 0
    %v33 = vlaneseq
    %v34 = vshrl.u32 %v33, 7
    %v35 = vsub.s32 1, %v34
    %v36 = vrot.slane %v32, %v35
    %vm37 = vcmp.eq.s32.totalorder %v36, 1
    %vm38 = vmand %vm31, %vm37
    %v39 = vld [vmem:[%s5] sm:$0xff]
    %v40 = vld [vmem:[%s5 + $0x8] sm:$0xff]
    %v41 = vld [vmem:[%s5 + $0x10] sm:$0xff]
    %v42 = vld [vmem:[%s5 + $0x18] sm:$0xff]
    %v43 = vld [vmem:[%s5 + $0x20] sm:$0xff]
    %v44 = vld [vmem:[%s1] sm:$0xff]
    %v45 = vld [vmem:[%s1 + $0x8] sm:$0xff]
    %v46 = vld [vmem:[%s1 + $0x10] sm:$0xff]
    %v47 = vld [vmem:[%s1 + $0x18] sm:$0xff]
    %v48 = vld [vmem:[%s1 + $0x20] sm:$0xff]
    %v49 = vld [vmem:[%s1 + $0x28] sm:$0xff]
    %v50 = vld [vmem:[%s1 + $0x30] sm:$0x11]
    %v51 = vld [vmem:[%s1 + $0x38] sm:$0xff]
    %v52 = vld [vmem:[%s1 + $0x40] sm:$0xff]
    %v53 = vld [vmem:[%s1 + $0x48] sm:$0xff]
    %v54 = vld [vmem:[%s1 + $0x50] sm:$0xff]
    %v55 = vld [vmem:[%s1 + $0x58] sm:$0xff]
    %v56 = vld [vmem:[%s1 + $0x60] sm:$0xff]
    %v57 = vld [vmem:[%s1 + $0x68] sm:$0x11]
    %v58 = vld [vmem:[%s1 + $0x70] sm:$0xff]
    %v59 = vld [vmem:[%s1 + $0x78] sm:$0xff]
    %v60 = vld [vmem:[%s1 + $0x80] sm:$0xff]
    %v61 = vld [vmem:[%s1 + $0x88] sm:$0xff]
    %v62 = vld [vmem:[%s1 + $0x90] sm:$0xff]
    %v63 = vld [vmem:[%s1 + $0x98] sm:$0xff]
    %v64 = vld [vmem:[%s1 + $0xa0] sm:$0x11]
    %v65 = vld [vmem:[%s1 + $0xa8] sm:$0xff]
    %v66 = vld [vmem:[%s1 + $0xb0] sm:$0xff]
    %v67 = vld [vmem:[%s1 + $0xb8] sm:$0xff]
    %v68 = vld [vmem:[%s1 + $0xc0] sm:$0xff]
    %v69 = vld [vmem:[%s1 + $0xc8] sm:$0xff]
    %v70 = vld [vmem:[%s1 + $0xd0] sm:$0xff]
    %v71 = vld [vmem:[%s1 + $0xd8] sm:$0x11]
    %v72 = vld [vmem:[%s1 + $0xe0] sm:$0xff]
    %v73 = vld [vmem:[%s1 + $0xe8] sm:$0xff]
    %v74 = vld [vmem:[%s1 + $0xf0] sm:$0xff]
    %v75 = vld [vmem:[%s1 + $0xf8] sm:$0xff]
    %v76 = vld [vmem:[%s1 + $0x100] sm:$0xff]
    %v77 = vld [vmem:[%s1 + $0x108] sm:$0xff]
    %v78 = vld [vmem:[%s1 + $0x110] sm:$0x11]
    %v79 = vld [vmem:[%s1 + $0x118] sm:$0xff]
    %v80 = vld [vmem:[%s1 + $0x120] sm:$0xff]
    %v81 = vld [vmem:[%s1 + $0x128] sm:$0xff]
    %v82 = vld [vmem:[%s1 + $0x130] sm:$0xff]
    %v83 = vld [vmem:[%s1 + $0x138] sm:$0xff]
    %v84 = vld [vmem:[%s1 + $0x140] sm:$0xff]
    %v85 = vld [vmem:[%s1 + $0x148] sm:$0x11]
    %v86 = vld [vmem:[%s1 + $0x150] sm:$0xff]
    %v87 = vld [vmem:[%s1 + $0x158] sm:$0xff]
    %v88 = vld [vmem:[%s1 + $0x160] sm:$0xff]
    %v89 = vld [vmem:[%s1 + $0x168] sm:$0xff]
    %v90 = vld [vmem:[%s1 + $0x170] sm:$0xff]
    %v91 = vld [vmem:[%s1 + $0x178] sm:$0xff]
    %v92 = vld [vmem:[%s1 + $0x180] sm:$0x11]
    %v93 = vld [vmem:[%s1 + $0x188] sm:$0xff]
    %v94 = vld [vmem:[%s1 + $0x190] sm:$0xff]
    %v95 = vld [vmem:[%s1 + $0x198] sm:$0xff]
    %v96 = vld [vmem:[%s1 + $0x1a0] sm:$0xff]
    %v97 = vld [vmem:[%s1 + $0x1a8] sm:$0xff]
    %v98 = vld [vmem:[%s1 + $0x1b0] sm:$0xff]
    %v99 = vld [vmem:[%s1 + $0x1b8] sm:$0x11]
    %v100 = vld [vmem:[%s2] sm:$0xf]
    %v101 = vld [vmem:[%s2 + $0x4] sm:$0xf]
    %v102 = vld [vmem:[%s2 + $0x8] sm:$0xf]
    %v103 = vld [vmem:[%s2 + $0xc] sm:$0xf]
    %v104 = vld [vmem:[%s2 + $0x10] sm:$0xf]
    %v105 = vld [vmem:[%s2 + $0x14] sm:$0xf]
    %v106 = vld [vmem:[%s2 + $0x18] sm:$0x1]
    %v107 = vld [vmem:[%s2 + $0x1c] sm:$0xf]
    %v108 = vld [vmem:[%s2 + $0x20] sm:$0xf]
    %v109 = vld [vmem:[%s2 + $0x24] sm:$0xf]
    %v110 = vld [vmem:[%s2 + $0x28] sm:$0xf]
    %v111 = vld [vmem:[%s2 + $0x2c] sm:$0xf]
    %v112 = vld [vmem:[%s2 + $0x30] sm:$0xf]
    %v113 = vld [vmem:[%s2 + $0x34] sm:$0x1]
    %v114 = vld [vmem:[%s2 + $0x38] sm:$0xf]
    %v115 = vld [vmem:[%s2 + $0x3c] sm:$0xf]
    %v116 = vld [vmem:[%s2 + $0x40] sm:$0xf]
    %v117 = vld [vmem:[%s2 + $0x44] sm:$0xf]
    %v118 = vld [vmem:[%s2 + $0x48] sm:$0xf]
    %v119 = vld [vmem:[%s2 + $0x4c] sm:$0xf]
    %v120 = vld [vmem:[%s2 + $0x50] sm:$0x1]
    %v121 = vld [vmem:[%s2 + $0x54] sm:$0xf]
    %v122 = vld [vmem:[%s2 + $0x58] sm:$0xf]
    %v123 = vld [vmem:[%s2 + $0x5c] sm:$0xf]
    %v124 = vld [vmem:[%s2 + $0x60] sm:$0xf]
    %v125 = vld [vmem:[%s2 + $0x64] sm:$0xf]
    %v126 = vld [vmem:[%s2 + $0x68] sm:$0xf]
    %v127 = vld [vmem:[%s2 + $0x6c] sm:$0x1]
    %v128 = vld [vmem:[%s2 + $0x70] sm:$0xf]
    %v129 = vld [vmem:[%s2 + $0x74] sm:$0xf]
    %v130 = vld [vmem:[%s2 + $0x78] sm:$0xf]
    %v131 = vld [vmem:[%s2 + $0x7c] sm:$0xf]
    %v132 = vld [vmem:[%s2 + $0x80] sm:$0xf]
    %v133 = vld [vmem:[%s2 + $0x84] sm:$0xf]
    %v134 = vld [vmem:[%s2 + $0x88] sm:$0x1]
    %v135 = vld [vmem:[%s2 + $0x8c] sm:$0xf]
    %v136 = vld [vmem:[%s2 + $0x90] sm:$0xf]
    %v137 = vld [vmem:[%s2 + $0x94] sm:$0xf]
    %v138 = vld [vmem:[%s2 + $0x98] sm:$0xf]
    %v139 = vld [vmem:[%s2 + $0x9c] sm:$0xf]
    %v140 = vld [vmem:[%s2 + $0xa0] sm:$0xf]
    %v141 = vld [vmem:[%s2 + $0xa4] sm:$0x1]
    %v142 = vld [vmem:[%s2 + $0xa8] sm:$0xf]
    %v143 = vld [vmem:[%s2 + $0xac] sm:$0xf]
    %v144 = vld [vmem:[%s2 + $0xb0] sm:$0xf]
    %v145 = vld [vmem:[%s2 + $0xb4] sm:$0xf]
    %v146 = vld [vmem:[%s2 + $0xb8] sm:$0xf]
    %v147 = vld [vmem:[%s2 + $0xbc] sm:$0xf]
    %v148 = vld [vmem:[%s2 + $0xc0] sm:$0x1]
    %v149 = vld [vmem:[%s2 + $0xc4] sm:$0xf]
    %v150 = vld [vmem:[%s2 + $0xc8] sm:$0xf]
    %v151 = vld [vmem:[%s2 + $0xcc] sm:$0xf]
    %v152 = vld [vmem:[%s2 + $0xd0] sm:$0xf]
    %v153 = vld [vmem:[%s2 + $0xd4] sm:$0xf]
    %v154 = vld [vmem:[%s2 + $0xd8] sm:$0xf]
    %v155 = vld [vmem:[%s2 + $0xdc] sm:$0x1]
    %v156 = vld [vmem:[%s4] sm:$0xff]
    %v157 = vld [vmem:[%s4 + $0x8] sm:$0xff]
    %v160 = vcombine.low %v156, %v157
    %v161 = vcombine.high %v156, %v157
    %v163 = vunpack.c.l.s4 1966171168
    %v164 = vunpack.c.0.s8 %v163
    %v165 = vlaneseq
    %v166 = vshrl.u32 %v165, 7
    %v167 = vsub.s32 %v164, %v166
    %v168 = vrot.slane %v160, %v167
    %v170 = vunpack.c.l.s4 1966171168
    %v171 = vunpack.c.0.s8 %v170
    %v172 = vlaneseq
    %v173 = vshrl.u32 %v172, 7
    %v174 = vsub.s32 %v171, %v173
    %v175 = vrot.slane %v161, %v174
    %v176 = vcombine.high %v168, %v168
    %v177 = vcombine.high %v175, %v175
    %v179 = vunpack.c.l.s4 1966171168
    %v180 = vunpack.c.0.s8 %v179
    %v181 = vlaneseq
    %v182 = vshrl.u32 %v181, 7
    %v183 = vsub.s32 %v180, %v182
    %v184 = vrot.slane %v168, %v183
    %v186 = vunpack.c.l.s4 1966171168
    %v187 = vunpack.c.0.s8 %v186
    %v188 = vlaneseq
    %v189 = vshrl.u32 %v188, 7
    %v190 = vsub.s32 %v187, %v189
    %v191 = vrot.slane %v175, %v190
    %v193 = vunpack.c.l.s4 1966171168
    %v194 = vunpack.c.0.s8 %v193
    %v195 = vlaneseq
    %v196 = vshrl.u32 %v195, 7
    %v197 = vsub.s32 %v194, %v196
    %v198 = vrot.slane %v176, %v197
    %v200 = vunpack.c.l.s4 1966171168
    %v201 = vunpack.c.0.s8 %v200
    %v202 = vlaneseq
    %v203 = vshrl.u32 %v202, 7
    %v204 = vsub.s32 %v201, %v203
    %v205 = vrot.slane %v177, %v204
    %v206 = vcombine.high %v184, %v184
    %v207 = vcombine.high %v191, %v191
    %v208 = vcombine.high %v198, %v198
    %v209 = vcombine.high %v205, %v205
    %v210 = vpack.c.bf16 %v25, %v25
    %v211 = vlaneseq
    %v212 = vshrl.u32 %v211, 7
    %v213 = vsub.s32 0, %v212
    %v214 = vrot.slane %v184, %v213
    %v215 = vlaneseq
    %v216 = vshrl.u32 %v215, 7
    %v217 = vsub.s32 1, %v216
    %v218 = vrot.slane %v184, %v217
    %v219 = vlaneseq
    %v220 = vshrl.u32 %v219, 7
    %v221 = vsub.s32 0, %v220
    %v222 = vrot.slane %v198, %v221
    %v223 = vlaneseq
    %v224 = vshrl.u32 %v223, 7
    %v225 = vsub.s32 1, %v224
    %v226 = vrot.slane %v198, %v225
    %v227 = vlaneseq
    %v228 = vshrl.u32 %v227, 7
    %v229 = vsub.s32 0, %v228
    %v230 = vrot.slane %v206, %v229
    %v231 = vlaneseq
    %v232 = vshrl.u32 %v231, 7
    %v233 = vsub.s32 1, %v232
    %v234 = vrot.slane %v206, %v233
    %v235 = vlaneseq
    %v236 = vshrl.u32 %v235, 7
    %v237 = vsub.s32 0, %v236
    %v238 = vrot.slane %v208, %v237
    %v239 = vlaneseq
    %v240 = vshrl.u32 %v239, 7
    %v241 = vsub.s32 1, %v240
    %v242 = vrot.slane %v208, %v241
    %v243 = vlaneseq
    %v244 = vshrl.u32 %v243, 7
    %v245 = vsub.s32 0, %v244
    %v246 = vrot.slane %v191, %v245
    %v247 = vlaneseq
    %v248 = vshrl.u32 %v247, 7
    %v249 = vsub.s32 1, %v248
    %v250 = vrot.slane %v191, %v249
    %v251 = vlaneseq
    %v252 = vshrl.u32 %v251, 7
    %v253 = vsub.s32 0, %v252
    %v254 = vrot.slane %v205, %v253
    %v255 = vlaneseq
    %v256 = vshrl.u32 %v255, 7
    %v257 = vsub.s32 1, %v256
    %v258 = vrot.slane %v205, %v257
    %v259 = vlaneseq
    %v260 = vshrl.u32 %v259, 7
    %v261 = vsub.s32 0, %v260
    %v262 = vrot.slane %v207, %v261
    %v263 = vlaneseq
    %v264 = vshrl.u32 %v263, 7
    %v265 = vsub.s32 1, %v264
    %v266 = vrot.slane %v207, %v265
    %v267 = vlaneseq
    %v268 = vshrl.u32 %v267, 7
    %v269 = vsub.s32 0, %v268
    %v270 = vrot.slane %v209, %v269
    %v271 = vlaneseq
    %v272 = vshrl.u32 %v271, 7
    %v273 = vsub.s32 1, %v272
    %v274 = vrot.slane %v209, %v273
    %v292 = vrot.slane %v210, 1
    %v300 = vunpack.c.l.b16 %v44
    %v301 = vunpack.c.h.b16 %v44
    %v302 = vunpack.c.l.b16 %v45
    %v303 = vunpack.c.h.b16 %v45
    %v304 = vunpack.c.l.b16 %v46
    %v305 = vunpack.c.h.b16 %v46
    %v306 = vunpack.c.l.b16 %v47
    %v307 = vunpack.c.h.b16 %v47
    %v308 = vunpack.c.l.b16 %v48
    %v309 = vunpack.c.h.b16 %v48
    %v310 = vunpack.c.l.b16 %v49
    %v311 = vunpack.c.h.b16 %v49
    %v312 = vunpack.c.l.b16 %v50
    %v313 = vunpack.c.h.b16 %v50
    %v314 = vpack.c.b16 %v302, %v300
    %v315 = vpack.c.b16 %v303, %v301
    %v316 = vpack.c.b16 %v306, %v304
    %v317 = vpack.c.b16 %v307, %v305
    %v318 = vpack.c.b16 %v310, %v308
    %v319 = vpack.c.b16 %v311, %v309
    %v320 = vpack.c.b16 %v312, %v312
    %v321 = vpack.c.b16 %v313, %v313
    %vm328 = vcmask 408576
    %v330 = vsel %vm328, %v292, 0
    %vm332 = vcmask 1040384
    %v334 = vsel %vm332, %v320, 0
    %v337 = vsel %vm332, %v321, 0
    %339 = vmatprep.subr.bf16.mxu0 %v315
    %340 = vmatpush1.bf16.msra.mxu0 %v314
    %341 = vmatprep.subr.bf16.mxu0 %v317
    %342 = vmatpush1.bf16.msra.mxu0 %v316
    %343 = vmatprep.subr.bf16.mxu0 %v319
    %344 = vmatpush1.bf16.msra.mxu0 %v318
    %345 = vmatprep.subr.bf16.mxu0 %v337
    %346 = vmatpush1.bf16.msra.mxu0 %v334
    %347 = vmatprep.subr.bf16.mxu0 0
    %348 = vmatpush1.bf16.msra.mxu0 0
    %349 = vmatprep.subr.bf16.mxu0 0
    %350 = vmatpush1.bf16.msra.mxu0 0
    %351 = vmatprep.subr.bf16.mxu0 0
    %352 = vmatpush1.bf16.msra.mxu0 0
    %353 = vmatprep.subr.bf16.mxu0 0
    %354 = vmatpush1.bf16.msra.mxu0 0
    %355 = vmatprep.subr.bf16.mxu0 0
    %356 = vmatpush1.bf16.msra.mxu0 0
    %357 = vmatprep.subr.bf16.mxu0 0
    %358 = vmatpush1.bf16.msra.mxu0 0
    %359 = vmatprep.subr.bf16.mxu0 0
    %360 = vmatpush1.bf16.msra.mxu0 0
    %361 = vmatprep.subr.bf16.mxu0 0
    %362 = vmatpush1.bf16.msra.mxu0 0
    %363 = vmatprep.subr.bf16.mxu0 0
    %364 = vmatpush1.bf16.msra.mxu0 0
    %365 = vmatprep.subr.bf16.mxu0 0
    %366 = vmatpush1.bf16.msra.mxu0 0
    %367 = vmatprep.subr.bf16.mxu0 0
    %368 = vmatpush1.bf16.msra.mxu0 0
    %369 = vmatprep.subr.bf16.mxu0 0
    %370 = vmatpush1.bf16.msra.mxu0 0
    %371 = vmatprep.mubr.bf16.mxu0 0
    %372 = vmatmul.mubr.bf16.gmra.mrb[0].mxu0 %v330
    %v373 = vpop.f32.mrb[0].mxu0
    %v374 = vadd.f32 %v214, %v373
    %v375 = vpop.f32.mrb[0].mxu0
    %v376 = vadd.f32 %v218, %v375
    %v377 = vpop.f32.mrb[0].mxu0
    %v378 = vpop.f32.mrb[0].mxu0
    %379 = vdwg.mxu0
    %v387 = vunpack.c.l.b16 %v51
    %v388 = vunpack.c.h.b16 %v51
    %v389 = vunpack.c.l.b16 %v52
    %v390 = vunpack.c.h.b16 %v52
    %v391 = vunpack.c.l.b16 %v53
    %v392 = vunpack.c.h.b16 %v53
    %v393 = vunpack.c.l.b16 %v54
    %v394 = vunpack.c.h.b16 %v54
    %v395 = vunpack.c.l.b16 %v55
    %v396 = vunpack.c.h.b16 %v55
    %v397 = vunpack.c.l.b16 %v56
    %v398 = vunpack.c.h.b16 %v56
    %v399 = vunpack.c.l.b16 %v57
    %v400 = vunpack.c.h.b16 %v57
    %v401 = vpack.c.b16 %v389, %v387
    %v402 = vpack.c.b16 %v390, %v388
    %v403 = vpack.c.b16 %v393, %v391
    %v404 = vpack.c.b16 %v394, %v392
    %v405 = vpack.c.b16 %v397, %v395
    %v406 = vpack.c.b16 %v398, %v396
    %v407 = vpack.c.b16 %v399, %v399
    %v408 = vpack.c.b16 %v400, %v400
    %v416 = vsel %vm332, %v407, 0
    %v419 = vsel %vm332, %v408, 0
    %421 = vmatprep.subr.bf16.mxu0 %v402
    %422 = vmatpush1.bf16.msra.mxu0 %v401
    %423 = vmatprep.subr.bf16.mxu0 %v404
    %424 = vmatpush1.bf16.msra.mxu0 %v403
    %425 = vmatprep.subr.bf16.mxu0 %v406
    %426 = vmatpush1.bf16.msra.mxu0 %v405
    %427 = vmatprep.subr.bf16.mxu0 %v419
    %428 = vmatpush1.bf16.msra.mxu0 %v416
    %429 = vmatprep.subr.bf16.mxu0 0
    %430 = vmatpush1.bf16.msra.mxu0 0
    %431 = vmatprep.subr.bf16.mxu0 0
    %432 = vmatpush1.bf16.msra.mxu0 0
    %433 = vmatprep.subr.bf16.mxu0 0
    %434 = vmatpush1.bf16.msra.mxu0 0
    %435 = vmatprep.subr.bf16.mxu0 0
    %436 = vmatpush1.bf16.msra.mxu0 0
    %437 = vmatprep.subr.bf16.mxu0 0
    %438 = vmatpush1.bf16.msra.mxu0 0
    %439 = vmatprep.subr.bf16.mxu0 0
    %440 = vmatpush1.bf16.msra.mxu0 0
    %441 = vmatprep.subr.bf16.mxu0 0
    %442 = vmatpush1.bf16.msra.mxu0 0
    %443 = vmatprep.subr.bf16.mxu0 0
    %444 = vmatpush1.bf16.msra.mxu0 0
    %445 = vmatprep.subr.bf16.mxu0 0
    %446 = vmatpush1.bf16.msra.mxu0 0
    %447 = vmatprep.subr.bf16.mxu0 0
    %448 = vmatpush1.bf16.msra.mxu0 0
    %449 = vmatprep.subr.bf16.mxu0 0
    %450 = vmatpush1.bf16.msra.mxu0 0
    %451 = vmatprep.subr.bf16.mxu0 0
    %452 = vmatpush1.bf16.msra.mxu0 0
    %453 = vmatprep.mubr.bf16.mxu0 0
    %454 = vmatmul.mubr.bf16.gmra.mrb[0].mxu0 %v330
    %v455 = vpop.f32.mrb[0].mxu0
    %v456 = vadd.f32 %v222, %v455
    %v457 = vpop.f32.mrb[0].mxu0
    %v458 = vadd.f32 %v226, %v457
    %v459 = vpop.f32.mrb[0].mxu0
    %v460 = vpop.f32.mrb[0].mxu0
    %461 = vdwg.mxu0
    %v469 = vunpack.c.l.b16 %v58
    %v470 = vunpack.c.h.b16 %v58
    %v471 = vunpack.c.l.b16 %v59
    %v472 = vunpack.c.h.b16 %v59
    %v473 = vunpack.c.l.b16 %v60
    %v474 = vunpack.c.h.b16 %v60
    %v475 = vunpack.c.l.b16 %v61
    %v476 = vunpack.c.h.b16 %v61
    %v477 = vunpack.c.l.b16 %v62
    %v478 = vunpack.c.h.b16 %v62
    %v479 = vunpack.c.l.b16 %v63
    %v480 = vunpack.c.h.b16 %v63
    %v481 = vunpack.c.l.b16 %v64
    %v482 = vunpack.c.h.b16 %v64
    %v483 = vpack.c.b16 %v471, %v469
    %v484 = vpack.c.b16 %v472, %v470
    %v485 = vpack.c.b16 %v475, %v473
    %v486 = vpack.c.b16 %v476, %v474
    %v487 = vpack.c.b16 %v479, %v477
    %v488 = vpack.c.b16 %v480, %v478
    %v489 = vpack.c.b16 %v481, %v481
    %v490 = vpack.c.b16 %v482, %v482
    %v498 = vsel %vm332, %v489, 0
    %v501 = vsel %vm332, %v490, 0
    %503 = vmatprep.subr.bf16.mxu0 %v484
    %504 = vmatpush1.bf16.msra.mxu0 %v483
    %505 = vmatprep.subr.bf16.mxu0 %v486
    %506 = vmatpush1.bf16.msra.mxu0 %v485
    %507 = vmatprep.subr.bf16.mxu0 %v488
    %508 = vmatpush1.bf16.msra.mxu0 %v487
    %509 = vmatprep.subr.bf16.mxu0 %v501
    %510 = vmatpush1.bf16.msra.mxu0 %v498
    %511 = vmatprep.subr.bf16.mxu0 0
    %512 = vmatpush1.bf16.msra.mxu0 0
    %513 = vmatprep.subr.bf16.mxu0 0
    %514 = vmatpush1.bf16.msra.mxu0 0
    %515 = vmatprep.subr.bf16.mxu0 0
    %516 = vmatpush1.bf16.msra.mxu0 0
    %517 = vmatprep.subr.bf16.mxu0 0
    %518 = vmatpush1.bf16.msra.mxu0 0
    %519 = vmatprep.subr.bf16.mxu0 0
    %520 = vmatpush1.bf16.msra.mxu0 0
    %521 = vmatprep.subr.bf16.mxu0 0
    %522 = vmatpush1.bf16.msra.mxu0 0
    %523 = vmatprep.subr.bf16.mxu0 0
    %524 = vmatpush1.bf16.msra.mxu0 0
    %525 = vmatprep.subr.bf16.mxu0 0
    %526 = vmatpush1.bf16.msra.mxu0 0
    %527 = vmatprep.subr.bf16.mxu0 0
    %528 = vmatpush1.bf16.msra.mxu0 0
    %529 = vmatprep.subr.bf16.mxu0 0
    %530 = vmatpush1.bf16.msra.mxu0 0
    %531 = vmatprep.subr.bf16.mxu0 0
    %532 = vmatpush1.bf16.msra.mxu0 0
    %533 = vmatprep.subr.bf16.mxu0 0
    %534 = vmatpush1.bf16.msra.mxu0 0
    %535 = vmatprep.mubr.bf16.mxu0 0
    %536 = vmatmul.mubr.bf16.gmra.mrb[0].mxu0 %v330
    %v537 = vpop.f32.mrb[0].mxu0
    %v538 = vadd.f32 %v230, %v537
    %v539 = vpop.f32.mrb[0].mxu0
    %v540 = vadd.f32 %v234, %v539
    %v541 = vpop.f32.mrb[0].mxu0
    %v542 = vpop.f32.mrb[0].mxu0
    %543 = vdwg.mxu0
    %v551 = vunpack.c.l.b16 %v65
    %v552 = vunpack.c.h.b16 %v65
    %v553 = vunpack.c.l.b16 %v66
    %v554 = vunpack.c.h.b16 %v66
    %v555 = vunpack.c.l.b16 %v67
    %v556 = vunpack.c.h.b16 %v67
    %v557 = vunpack.c.l.b16 %v68
    %v558 = vunpack.c.h.b16 %v68
    %v559 = vunpack.c.l.b16 %v69
    %v560 = vunpack.c.h.b16 %v69
    %v561 = vunpack.c.l.b16 %v70
    %v562 = vunpack.c.h.b16 %v70
    %v563 = vunpack.c.l.b16 %v71
    %v564 = vunpack.c.h.b16 %v71
    %v565 = vpack.c.b16 %v553, %v551
    %v566 = vpack.c.b16 %v554, %v552
    %v567 = vpack.c.b16 %v557, %v555
    %v568 = vpack.c.b16 %v558, %v556
    %v569 = vpack.c.b16 %v561, %v559
    %v570 = vpack.c.b16 %v562, %v560
    %v571 = vpack.c.b16 %v563, %v563
    %v572 = vpack.c.b16 %v564, %v564
    %v580 = vsel %vm332, %v571, 0
    %v583 = vsel %vm332, %v572, 0
    %585 = vmatprep.subr.bf16.mxu0 %v566
    %586 = vmatpush1.bf16.msra.mxu0 %v565
    %587 = vmatprep.subr.bf16.mxu0 %v568
    %588 = vmatpush1.bf16.msra.mxu0 %v567
    %589 = vmatprep.subr.bf16.mxu0 %v570
    %590 = vmatpush1.bf16.msra.mxu0 %v569
    %591 = vmatprep.subr.bf16.mxu0 %v583
    %592 = vmatpush1.bf16.msra.mxu0 %v580
    %593 = vmatprep.subr.bf16.mxu0 0
    %594 = vmatpush1.bf16.msra.mxu0 0
    %595 = vmatprep.subr.bf16.mxu0 0
    %596 = vmatpush1.bf16.msra.mxu0 0
    %597 = vmatprep.subr.bf16.mxu0 0
    %598 = vmatpush1.bf16.msra.mxu0 0
    %599 = vmatprep.subr.bf16.mxu0 0
    %600 = vmatpush1.bf16.msra.mxu0 0
    %601 = vmatprep.subr.bf16.mxu0 0
    %602 = vmatpush1.bf16.msra.mxu0 0
    %603 = vmatprep.subr.bf16.mxu0 0
    %604 = vmatpush1.bf16.msra.mxu0 0
    %605 = vmatprep.subr.bf16.mxu0 0
    %606 = vmatpush1.bf16.msra.mxu0 0
    %607 = vmatprep.subr.bf16.mxu0 0
    %608 = vmatpush1.bf16.msra.mxu0 0
    %609 = vmatprep.subr.bf16.mxu0 0
    %610 = vmatpush1.bf16.msra.mxu0 0
    %611 = vmatprep.subr.bf16.mxu0 0
    %612 = vmatpush1.bf16.msra.mxu0 0
    %613 = vmatprep.subr.bf16.mxu0 0
    %614 = vmatpush1.bf16.msra.mxu0 0
    %615 = vmatprep.subr.bf16.mxu0 0
    %616 = vmatpush1.bf16.msra.mxu0 0
    %617 = vmatprep.mubr.bf16.mxu0 0
    %618 = vmatmul.mubr.bf16.gmra.mrb[0].mxu0 %v330
    %v619 = vpop.f32.mrb[0].mxu0
    %v620 = vadd.f32 %v238, %v619
    %v621 = vpop.f32.mrb[0].mxu0
    %v622 = vadd.f32 %v242, %v621
    %v623 = vpop.f32.mrb[0].mxu0
    %v624 = vpop.f32.mrb[0].mxu0
    %625 = vdwg.mxu0
    %v633 = vunpack.c.l.b16 %v72
    %v634 = vunpack.c.h.b16 %v72
    %v635 = vunpack.c.l.b16 %v73
    %v636 = vunpack.c.h.b16 %v73
    %v637 = vunpack.c.l.b16 %v74
    %v638 = vunpack.c.h.b16 %v74
    %v639 = vunpack.c.l.b16 %v75
    %v640 = vunpack.c.h.b16 %v75
    %v641 = vunpack.c.l.b16 %v76
    %v642 = vunpack.c.h.b16 %v76
    %v643 = vunpack.c.l.b16 %v77
    %v644 = vunpack.c.h.b16 %v77
    %v645 = vunpack.c.l.b16 %v78
    %v646 = vunpack.c.h.b16 %v78
    %v647 = vpack.c.b16 %v635, %v633
    %v648 = vpack.c.b16 %v636, %v634
    %v649 = vpack.c.b16 %v639, %v637
    %v650 = vpack.c.b16 %v640, %v638
    %v651 = vpack.c.b16 %v643, %v641
    %v652 = vpack.c.b16 %v644, %v642
    %v653 = vpack.c.b16 %v645, %v645
    %v654 = vpack.c.b16 %v646, %v646
    %v662 = vsel %vm332, %v653, 0
    %v665 = vsel %vm332, %v654, 0
    %667 = vmatprep.subr.bf16.mxu0 %v648
    %668 = vmatpush1.bf16.msra.mxu0 %v647
    %669 = vmatprep.subr.bf16.mxu0 %v650
    %670 = vmatpush1.bf16.msra.mxu0 %v649
    %671 = vmatprep.subr.bf16.mxu0 %v652
    %672 = vmatpush1.bf16.msra.mxu0 %v651
    %673 = vmatprep.subr.bf16.mxu0 %v665
    %674 = vmatpush1.bf16.msra.mxu0 %v662
    %675 = vmatprep.subr.bf16.mxu0 0
    %676 = vmatpush1.bf16.msra.mxu0 0
    %677 = vmatprep.subr.bf16.mxu0 0
    %678 = vmatpush1.bf16.msra.mxu0 0
    %679 = vmatprep.subr.bf16.mxu0 0
    %680 = vmatpush1.bf16.msra.mxu0 0
    %681 = vmatprep.subr.bf16.mxu0 0
    %682 = vmatpush1.bf16.msra.mxu0 0
    %683 = vmatprep.subr.bf16.mxu0 0
    %684 = vmatpush1.bf16.msra.mxu0 0
    %685 = vmatprep.subr.bf16.mxu0 0
    %686 = vmatpush1.bf16.msra.mxu0 0
    %687 = vmatprep.subr.bf16.mxu0 0
    %688 = vmatpush1.bf16.msra.mxu0 0
    %689 = vmatprep.subr.bf16.mxu0 0
    %690 = vmatpush1.bf16.msra.mxu0 0
    %691 = vmatprep.subr.bf16.mxu0 0
    %692 = vmatpush1.bf16.msra.mxu0 0
    %693 = vmatprep.subr.bf16.mxu0 0
    %694 = vmatpush1.bf16.msra.mxu0 0
    %695 = vmatprep.subr.bf16.mxu0 0
    %696 = vmatpush1.bf16.msra.mxu0 0
    %697 = vmatprep.subr.bf16.mxu0 0
    %698 = vmatpush1.bf16.msra.mxu0 0
    %699 = vmatprep.mubr.bf16.mxu0 0
    %700 = vmatmul.mubr.bf16.gmra.mrb[0].mxu0 %v330
    %v701 = vpop.f32.mrb[0].mxu0
    %v702 = vadd.f32 %v246, %v701
    %v703 = vpop.f32.mrb[0].mxu0
    %v704 = vadd.f32 %v250, %v703
    %v705 = vpop.f32.mrb[0].mxu0
    %v706 = vpop.f32.mrb[0].mxu0
    %707 = vdwg.mxu0
    %v715 = vunpack.c.l.b16 %v79
    %v716 = vunpack.c.h.b16 %v79
    %v717 = vunpack.c.l.b16 %v80
    %v718 = vunpack.c.h.b16 %v80
    %v719 = vunpack.c.l.b16 %v81
    %v720 = vunpack.c.h.b16 %v81
    %v721 = vunpack.c.l.b16 %v82
    %v722 = vunpack.c.h.b16 %v82
    %v723 = vunpack.c.l.b16 %v83
    %v724 = vunpack.c.h.b16 %v83
    %v725 = vunpack.c.l.b16 %v84
    %v726 = vunpack.c.h.b16 %v84
    %v727 = vunpack.c.l.b16 %v85
    %v728 = vunpack.c.h.b16 %v85
    %v729 = vpack.c.b16 %v717, %v715
    %v730 = vpack.c.b16 %v718, %v716
    %v731 = vpack.c.b16 %v721, %v719
    %v732 = vpack.c.b16 %v722, %v720
    %v733 = vpack.c.b16 %v725, %v723
    %v734 = vpack.c.b16 %v726, %v724
    %v735 = vpack.c.b16 %v727, %v727
    %v736 = vpack.c.b16 %v728, %v728
    %v744 = vsel %vm332, %v735, 0
    %v747 = vsel %vm332, %v736, 0
    %749 = vmatprep.subr.bf16.mxu0 %v730
    %750 = vmatpush1.bf16.msra.mxu0 %v729
    %751 = vmatprep.subr.bf16.mxu0 %v732
    %752 = vmatpush1.bf16.msra.mxu0 %v731
    %753 = vmatprep.subr.bf16.mxu0 %v734
    %754 = vmatpush1.bf16.msra.mxu0 %v733
    %755 = vmatprep.subr.bf16.mxu0 %v747
    %756 = vmatpush1.bf16.msra.mxu0 %v744
    %757 = vmatprep.subr.bf16.mxu0 0
    %758 = vmatpush1.bf16.msra.mxu0 0
    %759 = vmatprep.subr.bf16.mxu0 0
    %760 = vmatpush1.bf16.msra.mxu0 0
    %761 = vmatprep.subr.bf16.mxu0 0
    %762 = vmatpush1.bf16.msra.mxu0 0
    %763 = vmatprep.subr.bf16.mxu0 0
    %764 = vmatpush1.bf16.msra.mxu0 0
    %765 = vmatprep.subr.bf16.mxu0 0
    %766 = vmatpush1.bf16.msra.mxu0 0
    %767 = vmatprep.subr.bf16.mxu0 0
    %768 = vmatpush1.bf16.msra.mxu0 0
    %769 = vmatprep.subr.bf16.mxu0 0
    %770 = vmatpush1.bf16.msra.mxu0 0
    %771 = vmatprep.subr.bf16.mxu0 0
    %772 = vmatpush1.bf16.msra.mxu0 0
    %773 = vmatprep.subr.bf16.mxu0 0
    %774 = vmatpush1.bf16.msra.mxu0 0
    %775 = vmatprep.subr.bf16.mxu0 0
    %776 = vmatpush1.bf16.msra.mxu0 0
    %777 = vmatprep.subr.bf16.mxu0 0
    %778 = vmatpush1.bf16.msra.mxu0 0
    %779 = vmatprep.subr.bf16.mxu0 0
    %780 = vmatpush1.bf16.msra.mxu0 0
    %781 = vmatprep.mubr.bf16.mxu0 0
    %782 = vmatmul.mubr.bf16.gmra.mrb[0].mxu0 %v330
    %v783 = vpop.f32.mrb[0].mxu0
    %v784 = vadd.f32 %v254, %v783
    %v785 = vpop.f32.mrb[0].mxu0
    %v786 = vadd.f32 %v258, %v785
    %v787 = vpop.f32.mrb[0].mxu0
    %v788 = vpop.f32.mrb[0].mxu0
    %789 = vdwg.mxu0
    %v797 = vunpack.c.l.b16 %v86
    %v798 = vunpack.c.h.b16 %v86
    %v799 = vunpack.c.l.b16 %v87
    %v800 = vunpack.c.h.b16 %v87
    %v801 = vunpack.c.l.b16 %v88
    %v802 = vunpack.c.h.b16 %v88
    %v803 = vunpack.c.l.b16 %v89
    %v804 = vunpack.c.h.b16 %v89
    %v805 = vunpack.c.l.b16 %v90
    %v806 = vunpack.c.h.b16 %v90
    %v807 = vunpack.c.l.b16 %v91
    %v808 = vunpack.c.h.b16 %v91
    %v809 = vunpack.c.l.b16 %v92
    %v810 = vunpack.c.h.b16 %v92
    %v811 = vpack.c.b16 %v799, %v797
    %v812 = vpack.c.b16 %v800, %v798
    %v813 = vpack.c.b16 %v803, %v801
    %v814 = vpack.c.b16 %v804, %v802
    %v815 = vpack.c.b16 %v807, %v805
    %v816 = vpack.c.b16 %v808, %v806
    %v817 = vpack.c.b16 %v809, %v809
    %v818 = vpack.c.b16 %v810, %v810
    %v826 = vsel %vm332, %v817, 0
    %v829 = vsel %vm332, %v818, 0
    %831 = vmatprep.subr.bf16.mxu0 %v812
    %832 = vmatpush1.bf16.msra.mxu0 %v811
    %833 = vmatprep.subr.bf16.mxu0 %v814
    %834 = vmatpush1.bf16.msra.mxu0 %v813
    %835 = vmatprep.subr.bf16.mxu0 %v816
    %836 = vmatpush1.bf16.msra.mxu0 %v815
    %837 = vmatprep.subr.bf16.mxu0 %v829
    %838 = vmatpush1.bf16.msra.mxu0 %v826
    %839 = vmatprep.subr.bf16.mxu0 0
    %840 = vmatpush1.bf16.msra.mxu0 0
    %841 = vmatprep.subr.bf16.mxu0 0
    %842 = vmatpush1.bf16.msra.mxu0 0
    %843 = vmatprep.subr.bf16.mxu0 0
    %844 = vmatpush1.bf16.msra.mxu0 0
    %845 = vmatprep.subr.bf16.mxu0 0
    %846 = vmatpush1.bf16.msra.mxu0 0
    %847 = vmatprep.subr.bf16.mxu0 0
    %848 = vmatpush1.bf16.msra.mxu0 0
    %849 = vmatprep.subr.bf16.mxu0 0
    %850 = vmatpush1.bf16.msra.mxu0 0
    %851 = vmatprep.subr.bf16.mxu0 0
    %852 = vmatpush1.bf16.msra.mxu0 0
    %853 = vmatprep.subr.bf16.mxu0 0
    %854 = vmatpush1.bf16.msra.mxu0 0
    %855 = vmatprep.subr.bf16.mxu0 0
    %856 = vmatpush1.bf16.msra.mxu0 0
    %857 = vmatprep.subr.bf16.mxu0 0
    %858 = vmatpush1.bf16.msra.mxu0 0
    %859 = vmatprep.subr.bf16.mxu0 0
    %860 = vmatpush1.bf16.msra.mxu0 0
    %861 = vmatprep.subr.bf16.mxu0 0
    %862 = vmatpush1.bf16.msra.mxu0 0
    %863 = vmatprep.mubr.bf16.mxu0 0
    %864 = vmatmul.mubr.bf16.gmra.mrb[0].mxu0 %v330
    %v865 = vpop.f32.mrb[0].mxu0
    %v866 = vadd.f32 %v262, %v865
    %v867 = vpop.f32.mrb[0].mxu0
    %v868 = vadd.f32 %v266, %v867
    %v869 = vpop.f32.mrb[0].mxu0
    %v870 = vpop.f32.mrb[0].mxu0
    %871 = vdwg.mxu0
    %v879 = vunpack.c.l.b16 %v93
    %v880 = vunpack.c.h.b16 %v93
    %v881 = vunpack.c.l.b16 %v94
    %v882 = vunpack.c.h.b16 %v94
    %v883 = vunpack.c.l.b16 %v95
    %v884 = vunpack.c.h.b16 %v95
    %v885 = vunpack.c.l.b16 %v96
    %v886 = vunpack.c.h.b16 %v96
    %v887 = vunpack.c.l.b16 %v97
    %v888 = vunpack.c.h.b16 %v97
    %v889 = vunpack.c.l.b16 %v98
    %v890 = vunpack.c.h.b16 %v98
    %v891 = vunpack.c.l.b16 %v99
    %v892 = vunpack.c.h.b16 %v99
    %v893 = vpack.c.b16 %v881, %v879
    %v894 = vpack.c.b16 %v882, %v880
    %v895 = vpack.c.b16 %v885, %v883
    %v896 = vpack.c.b16 %v886, %v884
    %v897 = vpack.c.b16 %v889, %v887
    %v898 = vpack.c.b16 %v890, %v888
    %v899 = vpack.c.b16 %v891, %v891
    %v900 = vpack.c.b16 %v892, %v892
    %v908 = vsel %vm332, %v899, 0
    %v911 = vsel %vm332, %v900, 0
    %913 = vmatprep.subr.bf16.mxu0 %v894
    %914 = vmatpush1.bf16.msra.mxu0 %v893
    %915 = vmatprep.subr.bf16.mxu0 %v896
    %916 = vmatpush1.bf16.msra.mxu0 %v895
    %917 = vmatprep.subr.bf16.mxu0 %v898
    %918 = vmatpush1.bf16.msra.mxu0 %v897
    %919 = vmatprep.subr.bf16.mxu0 %v911
    %920 = vmatpush1.bf16.msra.mxu0 %v908
    %921 = vmatprep.subr.bf16.mxu0 0
    %922 = vmatpush1.bf16.msra.mxu0 0
    %923 = vmatprep.subr.bf16.mxu0 0
    %924 = vmatpush1.bf16.msra.mxu0 0
    %925 = vmatprep.subr.bf16.mxu0 0
    %926 = vmatpush1.bf16.msra.mxu0 0
    %927 = vmatprep.subr.bf16.mxu0 0
    %928 = vmatpush1.bf16.msra.mxu0 0
    %929 = vmatprep.subr.bf16.mxu0 0
    %930 = vmatpush1.bf16.msra.mxu0 0
    %931 = vmatprep.subr.bf16.mxu0 0
    %932 = vmatpush1.bf16.msra.mxu0 0
    %933 = vmatprep.subr.bf16.mxu0 0
    %934 = vmatpush1.bf16.msra.mxu0 0
    %935 = vmatprep.subr.bf16.mxu0 0
    %936 = vmatpush1.bf16.msra.mxu0 0
    %937 = vmatprep.subr.bf16.mxu0 0
    %938 = vmatpush1.bf16.msra.mxu0 0
    %939 = vmatprep.subr.bf16.mxu0 0
    %940 = vmatpush1.bf16.msra.mxu0 0
    %941 = vmatprep.subr.bf16.mxu0 0
    %942 = vmatpush1.bf16.msra.mxu0 0
    %943 = vmatprep.subr.bf16.mxu0 0
    %944 = vmatpush1.bf16.msra.mxu0 0
    %945 = vmatprep.mubr.bf16.mxu0 0
    %946 = vmatmul.mubr.bf16.gmra.mrb[0].mxu0 %v330
    %v947 = vpop.f32.mrb[0].mxu0
    %v948 = vadd.f32 %v270, %v947
    %v949 = vpop.f32.mrb[0].mxu0
    %v950 = vadd.f32 %v274, %v949
    %v951 = vpop.f32.mrb[0].mxu0
    %v952 = vpop.f32.mrb[0].mxu0
    %953 = vdwg.mxu0
    %v954 = vmul.f32 %v374, 0.14142136
    %v955 = vmul.f32 %v456, 0.14142136
    %v956 = vmul.f32 %v538, 0.14142136
    %v957 = vmul.f32 %v620, 0.14142136
    %v958 = vmul.f32 %v702, 0.14142136
    %v959 = vmul.f32 %v784, 0.14142136
    %v960 = vmul.f32 %v866, 0.14142136
    %v961 = vmul.f32 %v948, 0.14142136
    %v962 = vpack.c.bf16 %v954, %v954
    %v963 = vpack.c.bf16 %v955, %v955
    %v964 = vpack.c.bf16 %v956, %v956
    %v965 = vpack.c.bf16 %v957, %v957
    %v966 = vpack.c.bf16 %v958, %v958
    %v967 = vpack.c.bf16 %v959, %v959
    %v968 = vpack.c.bf16 %v960, %v960
    %v969 = vpack.c.bf16 %v961, %v961
    %v970 = vpack.c.bf16 %v374, %v374
    %v971 = vpack.c.bf16 %v456, %v456
    %v972 = vpack.c.bf16 %v538, %v538
    %v973 = vpack.c.bf16 %v620, %v620
    %v974 = vpack.c.bf16 %v702, %v702
    %v975 = vpack.c.bf16 %v784, %v784
    %v976 = vpack.c.bf16 %v866, %v866
    %v977 = vpack.c.bf16 %v948, %v948
    %v978 = vpack.c.bf16 %v376, %v376
    %v979 = vpack.c.bf16 %v458, %v458
    %v980 = vpack.c.bf16 %v540, %v540
    %v981 = vpack.c.bf16 %v622, %v622
    %v982 = vpack.c.bf16 %v704, %v704
    %v983 = vpack.c.bf16 %v786, %v786
    %v984 = vpack.c.bf16 %v868, %v868
    %v985 = vpack.c.bf16 %v950, %v950
    %987 = vrot.lane.b32.xlu0 %v970, 78
    %v988 = vpop.permute.xlu0 %987
    %v990 = vsel %vm328, %v962, 0
    %v993 = vsel %vm328, %v988, 0
    %995 = vmatprep.subr.bf16.mxu0 0
    %996 = vmatpush1.bf16.xpose.msra.mxu0 %v993
    %997 = vmatprep.subr.bf16.mxu0 0
    %998 = vmatpush1.bf16.xpose.msra.mxu0 0
    %999 = vmatprep.subr.bf16.mxu0 0
    %1000 = vmatpush1.bf16.xpose.msra.mxu0 0
    %1001 = vmatprep.subr.bf16.mxu0 0
    %1002 = vmatpush1.bf16.xpose.msra.mxu0 0
    %1003 = vmatprep.subr.bf16.mxu0 0
    %1004 = vmatpush1.bf16.xpose.msra.mxu0 0
    %1005 = vmatprep.subr.bf16.mxu0 0
    %1006 = vmatpush1.bf16.xpose.msra.mxu0 0
    %1007 = vmatprep.subr.bf16.mxu0 0
    %1008 = vmatpush1.bf16.xpose.msra.mxu0 0
    %1009 = vmatprep.subr.bf16.mxu0 0
    %1010 = vmatpush1.bf16.xpose.msra.mxu0 0
    %1011 = vmatprep.subr.bf16.mxu0 0
    %1012 = vmatpush1.bf16.xpose.msra.mxu0 0
    %1013 = vmatprep.subr.bf16.mxu0 0
    %1014 = vmatpush1.bf16.xpose.msra.mxu0 0
    %1015 = vmatprep.subr.bf16.mxu0 0
    %1016 = vmatpush1.bf16.xpose.msra.mxu0 0
    %1017 = vmatprep.subr.bf16.mxu0 0
    %1018 = vmatpush1.bf16.xpose.msra.mxu0 0
    %1019 = vmatprep.subr.bf16.mxu0 0
    %1020 = vmatpush1.bf16.xpose.msra.mxu0 0
    %1021 = vmatprep.subr.bf16.mxu0 0
    %1022 = vmatpush1.bf16.xpose.msra.mxu0 0
    %1023 = vmatprep.subr.bf16.mxu0 0
    %1024 = vmatpush1.bf16.xpose.msra.mxu0 0
    %1025 = vmatprep.subr.bf16.mxu0 0
    %1026 = vmatpush1.bf16.xpose.msra.mxu0 0
    %1027 = vmatprep.mubr.bf16.mxu0 0
    %1028 = vmatmul.mubr.bf16.gmra.mrb[0].mxu0 %v990
    %v1029 = vpop.f32.mrb[0].mxu0
    %v1030 = vadd.f32 0.0, %v1029
    %v1031 = vpop.f32.mrb[0].mxu0
    %v1032 = vpop.f32.mrb[0].mxu0
    %v1033 = vpop.f32.mrb[0].mxu0
    %1034 = vdwg.mxu0
    %1036 = vrot.lane.b32.xlu0 %v971, 78
    %v1037 = vpop.permute.xlu0 %1036
    %v1039 = vsel %vm328, %v963, 0
    %v1042 = vsel %vm328, %v1037, 0
    %1044 = vmatprep.subr.bf16.mxu0 0
    %1045 = vmatpush1.bf16.xpose.msra.mxu0 %v1042
    %1046 = vmatprep.subr.bf16.mxu0 0
    %1047 = vmatpush1.bf16.xpose.msra.mxu0 0
    %1048 = vmatprep.subr.bf16.mxu0 0
    %1049 = vmatpush1.bf16.xpose.msra.mxu0 0
    %1050 = vmatprep.subr.bf16.mxu0 0
    %1051 = vmatpush1.bf16.xpose.msra.mxu0 0
    %1052 = vmatprep.subr.bf16.mxu0 0
    %1053 = vmatpush1.bf16.xpose.msra.mxu0 0
    %1054 = vmatprep.subr.bf16.mxu0 0
    %1055 = vmatpush1.bf16.xpose.msra.mxu0 0
    %1056 = vmatprep.subr.bf16.mxu0 0
    %1057 = vmatpush1.bf16.xpose.msra.mxu0 0
    %1058 = vmatprep.subr.bf16.mxu0 0
    %1059 = vmatpush1.bf16.xpose.msra.mxu0 0
    %1060 = vmatprep.subr.bf16.mxu0 0
    %1061 = vmatpush1.bf16.xpose.msra.mxu0 0
    %1062 = vmatprep.subr.bf16.mxu0 0
    %1063 = vmatpush1.bf16.xpose.msra.mxu0 0
    %1064 = vmatprep.subr.bf16.mxu0 0
    %1065 = vmatpush1.bf16.xpose.msra.mxu0 0
    %1066 = vmatprep.subr.bf16.mxu0 0
    %1067 = vmatpush1.bf16.xpose.msra.mxu0 0
    %1068 = vmatprep.subr.bf16.mxu0 0
    %1069 = vmatpush1.bf16.xpose.msra.mxu0 0
    %1070 = vmatprep.subr.bf16.mxu0 0
    %1071 = vmatpush1.bf16.xpose.msra.mxu0 0
    %1072 = vmatprep.subr.bf16.mxu0 0
    %1073 = vmatpush1.bf16.xpose.msra.mxu0 0
    %1074 = vmatprep.subr.bf16.mxu0 0
    %1075 = vmatpush1.bf16.xpose.msra.mxu0 0
    %1076 = vmatprep.mubr.bf16.mxu0 0
    %1077 = vmatmul.mubr.bf16.gmra.mrb[0].mxu0 %v1039
    %v1078 = vpop.f32.mrb[0].mxu0
    %v1079 = vadd.f32 0.0, %v1078
    %v1080 = vpop.f32.mrb[0].mxu0
    %v1081 = vpop.f32.mrb[0].mxu0
    %v1082 = vpop.f32.mrb[0].mxu0
    %1083 = vdwg.mxu0
    %1085 = vrot.lane.b32.xlu0 %v972, 78
    %v1086 = vpop.permute.xlu0 %1085
    %v1088 = vsel %vm328, %v964, 0
    %v1091 = vsel %vm328, %v1086, 0
    %1093 = vmatprep.subr.bf16.mxu0 0
    %1094 = vmatpush1.bf16.xpose.msra.mxu0 %v1091
    %1095 = vmatprep.subr.bf16.mxu0 0
    %1096 = vmatpush1.bf16.xpose.msra.mxu0 0
    %1097 = vmatprep.subr.bf16.mxu0 0
    %1098 = vmatpush1.bf16.xpose.msra.mxu0 0
    %1099 = vmatprep.subr.bf16.mxu0 0
    %1100 = vmatpush1.bf16.xpose.msra.mxu0 0
    %1101 = vmatprep.subr.bf16.mxu0 0
    %1102 = vmatpush1.bf16.xpose.msra.mxu0 0
    %1103 = vmatprep.subr.bf16.mxu0 0
    %1104 = vmatpush1.bf16.xpose.msra.mxu0 0
    %1105 = vmatprep.subr.bf16.mxu0 0
    %1106 = vmatpush1.bf16.xpose.msra.mxu0 0
    %1107 = vmatprep.subr.bf16.mxu0 0
    %1108 = vmatpush1.bf16.xpose.msra.mxu0 0
    %1109 = vmatprep.subr.bf16.mxu0 0
    %1110 = vmatpush1.bf16.xpose.msra.mxu0 0
    %1111 = vmatprep.subr.bf16.mxu0 0
    %1112 = vmatpush1.bf16.xpose.msra.mxu0 0
    %1113 = vmatprep.subr.bf16.mxu0 0
    %1114 = vmatpush1.bf16.xpose.msra.mxu0 0
    %1115 = vmatprep.subr.bf16.mxu0 0
    %1116 = vmatpush1.bf16.xpose.msra.mxu0 0
    %1117 = vmatprep.subr.bf16.mxu0 0
    %1118 = vmatpush1.bf16.xpose.msra.mxu0 0
    %1119 = vmatprep.subr.bf16.mxu0 0
    %1120 = vmatpush1.bf16.xpose.msra.mxu0 0
    %1121 = vmatprep.subr.bf16.mxu0 0
    %1122 = vmatpush1.bf16.xpose.msra.mxu0 0
    %1123 = vmatprep.subr.bf16.mxu0 0
    %1124 = vmatpush1.bf16.xpose.msra.mxu0 0
    %1125 = vmatprep.mubr.bf16.mxu0 0
    %1126 = vmatmul.mubr.bf16.gmra.mrb[0].mxu0 %v1088
    %v1127 = vpop.f32.mrb[0].mxu0
    %v1128 = vadd.f32 0.0, %v1127
    %v1129 = vpop.f32.mrb[0].mxu0
    %v1130 = vpop.f32.mrb[0].mxu0
    %v1131 = vpop.f32.mrb[0].mxu0
    %1132 = vdwg.mxu0
    %1134 = vrot.lane.b32.xlu0 %v973, 78
    %v1135 = vpop.permute.xlu0 %1134
    %v1137 = vsel %vm328, %v965, 0
    %v1140 = vsel %vm328, %v1135, 0
    %1142 = vmatprep.subr.bf16.mxu0 0
    %1143 = vmatpush1.bf16.xpose.msra.mxu0 %v1140
    %1144 = vmatprep.subr.bf16.mxu0 0
    %1145 = vmatpush1.bf16.xpose.msra.mxu0 0
    %1146 = vmatprep.subr.bf16.mxu0 0
    %1147 = vmatpush1.bf16.xpose.msra.mxu0 0
    %1148 = vmatprep.subr.bf16.mxu0 0
    %1149 = vmatpush1.bf16.xpose.msra.mxu0 0
    %1150 = vmatprep.subr.bf16.mxu0 0
    %1151 = vmatpush1.bf16.xpose.msra.mxu0 0
    %1152 = vmatprep.subr.bf16.mxu0 0
    %1153 = vmatpush1.bf16.xpose.msra.mxu0 0
    %1154 = vmatprep.subr.bf16.mxu0 0
    %1155 = vmatpush1.bf16.xpose.msra.mxu0 0
    %1156 = vmatprep.subr.bf16.mxu0 0
    %1157 = vmatpush1.bf16.xpose.msra.mxu0 0
    %1158 = vmatprep.subr.bf16.mxu0 0
    %1159 = vmatpush1.bf16.xpose.msra.mxu0 0
    %1160 = vmatprep.subr.bf16.mxu0 0
    %1161 = vmatpush1.bf16.xpose.msra.mxu0 0
    %1162 = vmatprep.subr.bf16.mxu0 0
    %1163 = vmatpush1.bf16.xpose.msra.mxu0 0
    %1164 = vmatprep.subr.bf16.mxu0 0
    %1165 = vmatpush1.bf16.xpose.msra.mxu0 0
    %1166 = vmatprep.subr.bf16.mxu0 0
    %1167 = vmatpush1.bf16.xpose.msra.mxu0 0
    %1168 = vmatprep.subr.bf16.mxu0 0
    %1169 = vmatpush1.bf16.xpose.msra.mxu0 0
    %1170 = vmatprep.subr.bf16.mxu0 0
    %1171 = vmatpush1.bf16.xpose.msra.mxu0 0
    %1172 = vmatprep.subr.bf16.mxu0 0
    %1173 = vmatpush1.bf16.xpose.msra.mxu0 0
    %1174 = vmatprep.mubr.bf16.mxu0 0
    %1175 = vmatmul.mubr.bf16.gmra.mrb[0].mxu0 %v1137
    %v1176 = vpop.f32.mrb[0].mxu0
    %v1177 = vadd.f32 0.0, %v1176
    %v1178 = vpop.f32.mrb[0].mxu0
    %v1179 = vpop.f32.mrb[0].mxu0
    %v1180 = vpop.f32.mrb[0].mxu0
    %1181 = vdwg.mxu0
    %1183 = vrot.lane.b32.xlu0 %v974, 78
    %v1184 = vpop.permute.xlu0 %1183
    %v1186 = vsel %vm328, %v966, 0
    %v1189 = vsel %vm328, %v1184, 0
    %1191 = vmatprep.subr.bf16.mxu0 0
    %1192 = vmatpush1.bf16.xpose.msra.mxu0 %v1189
    %1193 = vmatprep.subr.bf16.mxu0 0
    %1194 = vmatpush1.bf16.xpose.msra.mxu0 0
    %1195 = vmatprep.subr.bf16.mxu0 0
    %1196 = vmatpush1.bf16.xpose.msra.mxu0 0
    %1197 = vmatprep.subr.bf16.mxu0 0
    %1198 = vmatpush1.bf16.xpose.msra.mxu0 0
    %1199 = vmatprep.subr.bf16.mxu0 0
    %1200 = vmatpush1.bf16.xpose.msra.mxu0 0
    %1201 = vmatprep.subr.bf16.mxu0 0
    %1202 = vmatpush1.bf16.xpose.msra.mxu0 0
    %1203 = vmatprep.subr.bf16.mxu0 0
    %1204 = vmatpush1.bf16.xpose.msra.mxu0 0
    %1205 = vmatprep.subr.bf16.mxu0 0
    %1206 = vmatpush1.bf16.xpose.msra.mxu0 0
    %1207 = vmatprep.subr.bf16.mxu0 0
    %1208 = vmatpush1.bf16.xpose.msra.mxu0 0
    %1209 = vmatprep.subr.bf16.mxu0 0
    %1210 = vmatpush1.bf16.xpose.msra.mxu0 0
    %1211 = vmatprep.subr.bf16.mxu0 0
    %1212 = vmatpush1.bf16.xpose.msra.mxu0 0
    %1213 = vmatprep.subr.bf16.mxu0 0
    %1214 = vmatpush1.bf16.xpose.msra.mxu0 0
    %1215 = vmatprep.subr.bf16.mxu0 0
    %1216 = vmatpush1.bf16.xpose.msra.mxu0 0
    %1217 = vmatprep.subr.bf16.mxu0 0
    %1218 = vmatpush1.bf16.xpose.msra.mxu0 0
    %1219 = vmatprep.subr.bf16.mxu0 0
    %1220 = vmatpush1.bf16.xpose.msra.mxu0 0
    %1221 = vmatprep.subr.bf16.mxu0 0
    %1222 = vmatpush1.bf16.xpose.msra.mxu0 0
    %1223 = vmatprep.mubr.bf16.mxu0 0
    %1224 = vmatmul.mubr.bf16.gmra.mrb[0].mxu0 %v1186
    %v1225 = vpop.f32.mrb[0].mxu0
    %v1226 = vadd.f32 0.0, %v1225
    %v1227 = vpop.f32.mrb[0].mxu0
    %v1228 = vpop.f32.mrb[0].mxu0
    %v1229 = vpop.f32.mrb[0].mxu0
    %1230 = vdwg.mxu0
    %1232 = vrot.lane.b32.xlu0 %v975, 78
    %v1233 = vpop.permute.xlu0 %1232
    %v1235 = vsel %vm328, %v967, 0
    %v1238 = vsel %vm328, %v1233, 0
    %1240 = vmatprep.subr.bf16.mxu0 0
    %1241 = vmatpush1.bf16.xpose.msra.mxu0 %v1238
    %1242 = vmatprep.subr.bf16.mxu0 0
    %1243 = vmatpush1.bf16.xpose.msra.mxu0 0
    %1244 = vmatprep.subr.bf16.mxu0 0
    %1245 = vmatpush1.bf16.xpose.msra.mxu0 0
    %1246 = vmatprep.subr.bf16.mxu0 0
    %1247 = vmatpush1.bf16.xpose.msra.mxu0 0
    %1248 = vmatprep.subr.bf16.mxu0 0
    %1249 = vmatpush1.bf16.xpose.msra.mxu0 0
    %1250 = vmatprep.subr.bf16.mxu0 0
    %1251 = vmatpush1.bf16.xpose.msra.mxu0 0
    %1252 = vmatprep.subr.bf16.mxu0 0
    %1253 = vmatpush1.bf16.xpose.msra.mxu0 0
    %1254 = vmatprep.subr.bf16.mxu0 0
    %1255 = vmatpush1.bf16.xpose.msra.mxu0 0
    %1256 = vmatprep.subr.bf16.mxu0 0
    %1257 = vmatpush1.bf16.xpose.msra.mxu0 0
    %1258 = vmatprep.subr.bf16.mxu0 0
    %1259 = vmatpush1.bf16.xpose.msra.mxu0 0
    %1260 = vmatprep.subr.bf16.mxu0 0
    %1261 = vmatpush1.bf16.xpose.msra.mxu0 0
    %1262 = vmatprep.subr.bf16.mxu0 0
    %1263 = vmatpush1.bf16.xpose.msra.mxu0 0
    %1264 = vmatprep.subr.bf16.mxu0 0
    %1265 = vmatpush1.bf16.xpose.msra.mxu0 0
    %1266 = vmatprep.subr.bf16.mxu0 0
    %1267 = vmatpush1.bf16.xpose.msra.mxu0 0
    %1268 = vmatprep.subr.bf16.mxu0 0
    %1269 = vmatpush1.bf16.xpose.msra.mxu0 0
    %1270 = vmatprep.subr.bf16.mxu0 0
    %1271 = vmatpush1.bf16.xpose.msra.mxu0 0
    %1272 = vmatprep.mubr.bf16.mxu0 0
    %1273 = vmatmul.mubr.bf16.gmra.mrb[0].mxu0 %v1235
    %v1274 = vpop.f32.mrb[0].mxu0
    %v1275 = vadd.f32 0.0, %v1274
    %v1276 = vpop.f32.mrb[0].mxu0
    %v1277 = vpop.f32.mrb[0].mxu0
    %v1278 = vpop.f32.mrb[0].mxu0
    %1279 = vdwg.mxu0
    %1281 = vrot.lane.b32.xlu0 %v976, 78
    %v1282 = vpop.permute.xlu0 %1281
    %v1284 = vsel %vm328, %v968, 0
    %v1287 = vsel %vm328, %v1282, 0
    %1289 = vmatprep.subr.bf16.mxu0 0
    %1290 = vmatpush1.bf16.xpose.msra.mxu0 %v1287
    %1291 = vmatprep.subr.bf16.mxu0 0
    %1292 = vmatpush1.bf16.xpose.msra.mxu0 0
    %1293 = vmatprep.subr.bf16.mxu0 0
    %1294 = vmatpush1.bf16.xpose.msra.mxu0 0
    %1295 = vmatprep.subr.bf16.mxu0 0
    %1296 = vmatpush1.bf16.xpose.msra.mxu0 0
    %1297 = vmatprep.subr.bf16.mxu0 0
    %1298 = vmatpush1.bf16.xpose.msra.mxu0 0
    %1299 = vmatprep.subr.bf16.mxu0 0
    %1300 = vmatpush1.bf16.xpose.msra.mxu0 0
    %1301 = vmatprep.subr.bf16.mxu0 0
    %1302 = vmatpush1.bf16.xpose.msra.mxu0 0
    %1303 = vmatprep.subr.bf16.mxu0 0
    %1304 = vmatpush1.bf16.xpose.msra.mxu0 0
    %1305 = vmatprep.subr.bf16.mxu0 0
    %1306 = vmatpush1.bf16.xpose.msra.mxu0 0
    %1307 = vmatprep.subr.bf16.mxu0 0
    %1308 = vmatpush1.bf16.xpose.msra.mxu0 0
    %1309 = vmatprep.subr.bf16.mxu0 0
    %1310 = vmatpush1.bf16.xpose.msra.mxu0 0
    %1311 = vmatprep.subr.bf16.mxu0 0
    %1312 = vmatpush1.bf16.xpose.msra.mxu0 0
    %1313 = vmatprep.subr.bf16.mxu0 0
    %1314 = vmatpush1.bf16.xpose.msra.mxu0 0
    %1315 = vmatprep.subr.bf16.mxu0 0
    %1316 = vmatpush1.bf16.xpose.msra.mxu0 0
    %1317 = vmatprep.subr.bf16.mxu0 0
    %1318 = vmatpush1.bf16.xpose.msra.mxu0 0
    %1319 = vmatprep.subr.bf16.mxu0 0
    %1320 = vmatpush1.bf16.xpose.msra.mxu0 0
    %1321 = vmatprep.mubr.bf16.mxu0 0
    %1322 = vmatmul.mubr.bf16.gmra.mrb[0].mxu0 %v1284
    %v1323 = vpop.f32.mrb[0].mxu0
    %v1324 = vadd.f32 0.0, %v1323
    %v1325 = vpop.f32.mrb[0].mxu0
    %v1326 = vpop.f32.mrb[0].mxu0
    %v1327 = vpop.f32.mrb[0].mxu0
    %1328 = vdwg.mxu0
    %1330 = vrot.lane.b32.xlu0 %v977, 78
    %v1331 = vpop.permute.xlu0 %1330
    %v1333 = vsel %vm328, %v969, 0
    %v1336 = vsel %vm328, %v1331, 0
    %1338 = vmatprep.subr.bf16.mxu0 0
    %1339 = vmatpush1.bf16.xpose.msra.mxu0 %v1336
    %1340 = vmatprep.subr.bf16.mxu0 0
    %1341 = vmatpush1.bf16.xpose.msra.mxu0 0
    %1342 = vmatprep.subr.bf16.mxu0 0
    %1343 = vmatpush1.bf16.xpose.msra.mxu0 0
    %1344 = vmatprep.subr.bf16.mxu0 0
    %1345 = vmatpush1.bf16.xpose.msra.mxu0 0
    %1346 = vmatprep.subr.bf16.mxu0 0
    %1347 = vmatpush1.bf16.xpose.msra.mxu0 0
    %1348 = vmatprep.subr.bf16.mxu0 0
    %1349 = vmatpush1.bf16.xpose.msra.mxu0 0
    %1350 = vmatprep.subr.bf16.mxu0 0
    %1351 = vmatpush1.bf16.xpose.msra.mxu0 0
    %1352 = vmatprep.subr.bf16.mxu0 0
    %1353 = vmatpush1.bf16.xpose.msra.mxu0 0
    %1354 = vmatprep.subr.bf16.mxu0 0
    %1355 = vmatpush1.bf16.xpose.msra.mxu0 0
    %1356 = vmatprep.subr.bf16.mxu0 0
    %1357 = vmatpush1.bf16.xpose.msra.mxu0 0
    %1358 = vmatprep.subr.bf16.mxu0 0
    %1359 = vmatpush1.bf16.xpose.msra.mxu0 0
    %1360 = vmatprep.subr.bf16.mxu0 0
    %1361 = vmatpush1.bf16.xpose.msra.mxu0 0
    %1362 = vmatprep.subr.bf16.mxu0 0
    %1363 = vmatpush1.bf16.xpose.msra.mxu0 0
    %1364 = vmatprep.subr.bf16.mxu0 0
    %1365 = vmatpush1.bf16.xpose.msra.mxu0 0
    %1366 = vmatprep.subr.bf16.mxu0 0
    %1367 = vmatpush1.bf16.xpose.msra.mxu0 0
    %1368 = vmatprep.subr.bf16.mxu0 0
    %1369 = vmatpush1.bf16.xpose.msra.mxu0 0
    %1370 = vmatprep.mubr.bf16.mxu0 0
    %1371 = vmatmul.mubr.bf16.gmra.mrb[0].mxu0 %v1333
    %v1372 = vpop.f32.mrb[0].mxu0
    %v1373 = vadd.f32 0.0, %v1372
    %v1374 = vpop.f32.mrb[0].mxu0
    %v1375 = vpop.f32.mrb[0].mxu0
    %v1376 = vpop.f32.mrb[0].mxu0
    %1377 = vdwg.mxu0
    %v1378 = vlaneseq
    %v1379 = vshrl.u32 %v1378, 7
    %v1380 = vsub.s32 0, %v1379
    %v1381 = vrot.slane %v32, %v1380
    %vm1382 = vcmp.eq.s32.totalorder %v1381, 1
    %v1383 = vsel %vm1382, %v1030, -1e+09
    %v1384 = vsel %vm1382, %v1079, -1e+09
    %v1385 = vsel %vm1382, %v1128, -1e+09
    %v1386 = vsel %vm1382, %v1177, -1e+09
    %v1387 = vsel %vm1382, %v1226, -1e+09
    %v1388 = vsel %vm1382, %v1275, -1e+09
    %v1389 = vsel %vm1382, %v1324, -1e+09
    %v1390 = vsel %vm1382, %v1373, -1e+09
    %vm1391 = vcmask 9216
    %v1392 = vsel %vm1391, %v1383, -inf
    %1393 = vmax.xlane.f32.xlu0 %v1392
    %v1394 = vpop.xlane.xlu0 %1393
    %v1395 = vsel %vm1391, %v1384, -inf
    %1396 = vmax.xlane.f32.xlu0 %v1395
    %v1397 = vpop.xlane.xlu0 %1396
    %v1398 = vsel %vm1391, %v1385, -inf
    %1399 = vmax.xlane.f32.xlu0 %v1398
    %v1400 = vpop.xlane.xlu0 %1399
    %v1401 = vsel %vm1391, %v1386, -inf
    %1402 = vmax.xlane.f32.xlu0 %v1401
    %v1403 = vpop.xlane.xlu0 %1402
    %v1404 = vsel %vm1391, %v1387, -inf
    %1405 = vmax.xlane.f32.xlu0 %v1404
    %v1406 = vpop.xlane.xlu0 %1405
    %v1407 = vsel %vm1391, %v1388, -inf
    %1408 = vmax.xlane.f32.xlu0 %v1407
    %v1409 = vpop.xlane.xlu0 %1408
    %v1410 = vsel %vm1391, %v1389, -inf
    %1411 = vmax.xlane.f32.xlu0 %v1410
    %v1412 = vpop.xlane.xlu0 %1411
    %v1413 = vsel %vm1391, %v1390, -inf
    %1414 = vmax.xlane.f32.xlu0 %v1413
    %v1415 = vpop.xlane.xlu0 %1414
    %v1416 = vsub.f32 %v1383, %v1394
    %v1417 = vsub.f32 %v1384, %v1397
    %v1418 = vsub.f32 %v1385, %v1400
    %v1419 = vsub.f32 %v1386, %v1403
    %v1420 = vsub.f32 %v1387, %v1406
    %v1421 = vsub.f32 %v1388, %v1409
    %v1422 = vsub.f32 %v1389, %v1412
    %v1423 = vsub.f32 %v1390, %v1415
    %v1424 = vmul.f32 %v1416, 1.442695
    %v1425 = vpow.pop %v1424
    %v1426 = vmul.f32 %v1417, 1.442695
    %v1427 = vpow.pop %v1426
    %v1428 = vmul.f32 %v1418, 1.442695
    %v1429 = vpow.pop %v1428
    %v1430 = vmul.f32 %v1419, 1.442695
    %v1431 = vpow.pop %v1430
    %v1432 = vmul.f32 %v1420, 1.442695
    %v1433 = vpow.pop %v1432
    %v1434 = vmul.f32 %v1421, 1.442695
    %v1435 = vpow.pop %v1434
    %v1436 = vmul.f32 %v1422, 1.442695
    %v1437 = vpow.pop %v1436
    %v1438 = vmul.f32 %v1423, 1.442695
    %v1439 = vpow.pop %v1438
    %v1440 = vsel %vm1391, %v1425, 0.0
    %1441 = vadd.xlane.f32.xlu0 %v1440
    %v1442 = vpop.xlane.xlu0 %1441
    %v1443 = vsel %vm1391, %v1427, 0.0
    %1444 = vadd.xlane.f32.xlu0 %v1443
    %v1445 = vpop.xlane.xlu0 %1444
    %v1446 = vsel %vm1391, %v1429, 0.0
    %1447 = vadd.xlane.f32.xlu0 %v1446
    %v1448 = vpop.xlane.xlu0 %1447
    %v1449 = vsel %vm1391, %v1431, 0.0
    %1450 = vadd.xlane.f32.xlu0 %v1449
    %v1451 = vpop.xlane.xlu0 %1450
    %v1452 = vsel %vm1391, %v1433, 0.0
    %1453 = vadd.xlane.f32.xlu0 %v1452
    %v1454 = vpop.xlane.xlu0 %1453
    %v1455 = vsel %vm1391, %v1435, 0.0
    %1456 = vadd.xlane.f32.xlu0 %v1455
    %v1457 = vpop.xlane.xlu0 %1456
    %v1458 = vsel %vm1391, %v1437, 0.0
    %1459 = vadd.xlane.f32.xlu0 %v1458
    %v1460 = vpop.xlane.xlu0 %1459
    %v1461 = vsel %vm1391, %v1439, 0.0
    %1462 = vadd.xlane.f32.xlu0 %v1461
    %v1463 = vpop.xlane.xlu0 %1462
    %v1464 = vrcp.pop %v1442
    %v1465 = vmul.f32 %v1425, %v1464
    %v1466 = vrcp.pop %v1445
    %v1467 = vmul.f32 %v1427, %v1466
    %v1468 = vrcp.pop %v1448
    %v1469 = vmul.f32 %v1429, %v1468
    %v1470 = vrcp.pop %v1451
    %v1471 = vmul.f32 %v1431, %v1470
    %v1472 = vrcp.pop %v1454
    %v1473 = vmul.f32 %v1433, %v1472
    %v1474 = vrcp.pop %v1457
    %v1475 = vmul.f32 %v1435, %v1474
    %v1476 = vrcp.pop %v1460
    %v1477 = vmul.f32 %v1437, %v1476
    %v1478 = vrcp.pop %v1463
    %v1479 = vmul.f32 %v1439, %v1478
    %v1480 = vpack.c.bf16 %v1465, %v1465
    %v1481 = vpack.c.bf16 %v1467, %v1467
    %v1482 = vpack.c.bf16 %v1469, %v1469
    %v1483 = vpack.c.bf16 %v1471, %v1471
    %v1484 = vpack.c.bf16 %v1473, %v1473
    %v1485 = vpack.c.bf16 %v1475, %v1475
    %v1486 = vpack.c.bf16 %v1477, %v1477
    %v1487 = vpack.c.bf16 %v1479, %v1479
    %1489 = vrot.lane.b32.xlu0 %v970, 28
    %v1490 = vpop.permute.xlu0 %1489
    %1491 = vrot.lane.b32.xlu0 %v978, 28
    %v1492 = vpop.permute.xlu0 %1491
    %vm1493 = vcmask 228352
    %v1494 = vsel %vm1493, %v1490, %v1492
    %vm1495 = vcmask 15360
    %v1497 = vsel %vm1495, %v1480, 0
    %v1500 = vsel %vm332, %v1494, 0
    %1502 = vmatprep.subr.bf16.mxu0 0
    %1503 = vmatpush1.bf16.msra.mxu0 %v1500
    %1504 = vmatprep.subr.bf16.mxu0 0
    %1505 = vmatpush1.bf16.msra.mxu0 0
    %1506 = vmatprep.subr.bf16.mxu0 0
    %1507 = vmatpush1.bf16.msra.mxu0 0
    %1508 = vmatprep.subr.bf16.mxu0 0
    %1509 = vmatpush1.bf16.msra.mxu0 0
    %1510 = vmatprep.subr.bf16.mxu0 0
    %1511 = vmatpush1.bf16.msra.mxu0 0
    %1512 = vmatprep.subr.bf16.mxu0 0
    %1513 = vmatpush1.bf16.msra.mxu0 0
    %1514 = vmatprep.subr.bf16.mxu0 0
    %1515 = vmatpush1.bf16.msra.mxu0 0
    %1516 = vmatprep.subr.bf16.mxu0 0
    %1517 = vmatpush1.bf16.msra.mxu0 0
    %1518 = vmatprep.subr.bf16.mxu0 0
    %1519 = vmatpush1.bf16.msra.mxu0 0
    %1520 = vmatprep.subr.bf16.mxu0 0
    %1521 = vmatpush1.bf16.msra.mxu0 0
    %1522 = vmatprep.subr.bf16.mxu0 0
    %1523 = vmatpush1.bf16.msra.mxu0 0
    %1524 = vmatprep.subr.bf16.mxu0 0
    %1525 = vmatpush1.bf16.msra.mxu0 0
    %1526 = vmatprep.subr.bf16.mxu0 0
    %1527 = vmatpush1.bf16.msra.mxu0 0
    %1528 = vmatprep.subr.bf16.mxu0 0
    %1529 = vmatpush1.bf16.msra.mxu0 0
    %1530 = vmatprep.subr.bf16.mxu0 0
    %1531 = vmatpush1.bf16.msra.mxu0 0
    %1532 = vmatprep.subr.bf16.mxu0 0
    %1533 = vmatpush1.bf16.msra.mxu0 0
    %1534 = vmatprep.mubr.bf16.mxu0 0
    %1535 = vmatmul.mubr.bf16.gmra.mrb[0].mxu0 %v1497
    %v1536 = vpop.f32.mrb[0].mxu0
    %v1537 = vadd.f32 0.0, %v1536
    %v1538 = vpop.f32.mrb[0].mxu0
    %v1539 = vpop.f32.mrb[0].mxu0
    %v1540 = vpop.f32.mrb[0].mxu0
    %1541 = vdwg.mxu0
    %1543 = vrot.lane.b32.xlu0 %v971, 28
    %v1544 = vpop.permute.xlu0 %1543
    %1545 = vrot.lane.b32.xlu0 %v979, 28
    %v1546 = vpop.permute.xlu0 %1545
    %v1547 = vsel %vm1493, %v1544, %v1546
    %v1549 = vsel %vm1495, %v1481, 0
    %v1552 = vsel %vm332, %v1547, 0
    %1554 = vmatprep.subr.bf16.mxu0 0
    %1555 = vmatpush1.bf16.msra.mxu0 %v1552
    %1556 = vmatprep.subr.bf16.mxu0 0
    %1557 = vmatpush1.bf16.msra.mxu0 0
    %1558 = vmatprep.subr.bf16.mxu0 0
    %1559 = vmatpush1.bf16.msra.mxu0 0
    %1560 = vmatprep.subr.bf16.mxu0 0
    %1561 = vmatpush1.bf16.msra.mxu0 0
    %1562 = vmatprep.subr.bf16.mxu0 0
    %1563 = vmatpush1.bf16.msra.mxu0 0
    %1564 = vmatprep.subr.bf16.mxu0 0
    %1565 = vmatpush1.bf16.msra.mxu0 0
    %1566 = vmatprep.subr.bf16.mxu0 0
    %1567 = vmatpush1.bf16.msra.mxu0 0
    %1568 = vmatprep.subr.bf16.mxu0 0
    %1569 = vmatpush1.bf16.msra.mxu0 0
    %1570 = vmatprep.subr.bf16.mxu0 0
    %1571 = vmatpush1.bf16.msra.mxu0 0
    %1572 = vmatprep.subr.bf16.mxu0 0
    %1573 = vmatpush1.bf16.msra.mxu0 0
    %1574 = vmatprep.subr.bf16.mxu0 0
    %1575 = vmatpush1.bf16.msra.mxu0 0
    %1576 = vmatprep.subr.bf16.mxu0 0
    %1577 = vmatpush1.bf16.msra.mxu0 0
    %1578 = vmatprep.subr.bf16.mxu0 0
    %1579 = vmatpush1.bf16.msra.mxu0 0
    %1580 = vmatprep.subr.bf16.mxu0 0
    %1581 = vmatpush1.bf16.msra.mxu0 0
    %1582 = vmatprep.subr.bf16.mxu0 0
    %1583 = vmatpush1.bf16.msra.mxu0 0
    %1584 = vmatprep.subr.bf16.mxu0 0
    %1585 = vmatpush1.bf16.msra.mxu0 0
    %1586 = vmatprep.mubr.bf16.mxu0 0
    %1587 = vmatmul.mubr.bf16.gmra.mrb[0].mxu0 %v1549
    %v1588 = vpop.f32.mrb[0].mxu0
    %v1589 = vadd.f32 0.0, %v1588
    %v1590 = vpop.f32.mrb[0].mxu0
    %v1591 = vpop.f32.mrb[0].mxu0
    %v1592 = vpop.f32.mrb[0].mxu0
    %1593 = vdwg.mxu0
    %1595 = vrot.lane.b32.xlu0 %v972, 28
    %v1596 = vpop.permute.xlu0 %1595
    %1597 = vrot.lane.b32.xlu0 %v980, 28
    %v1598 = vpop.permute.xlu0 %1597
    %v1599 = vsel %vm1493, %v1596, %v1598
    %v1601 = vsel %vm1495, %v1482, 0
    %v1604 = vsel %vm332, %v1599, 0
    %1606 = vmatprep.subr.bf16.mxu0 0
    %1607 = vmatpush1.bf16.msra.mxu0 %v1604
    %1608 = vmatprep.subr.bf16.mxu0 0
    %1609 = vmatpush1.bf16.msra.mxu0 0
    %1610 = vmatprep.subr.bf16.mxu0 0
    %1611 = vmatpush1.bf16.msra.mxu0 0
    %1612 = vmatprep.subr.bf16.mxu0 0
    %1613 = vmatpush1.bf16.msra.mxu0 0
    %1614 = vmatprep.subr.bf16.mxu0 0
    %1615 = vmatpush1.bf16.msra.mxu0 0
    %1616 = vmatprep.subr.bf16.mxu0 0
    %1617 = vmatpush1.bf16.msra.mxu0 0
    %1618 = vmatprep.subr.bf16.mxu0 0
    %1619 = vmatpush1.bf16.msra.mxu0 0
    %1620 = vmatprep.subr.bf16.mxu0 0
    %1621 = vmatpush1.bf16.msra.mxu0 0
    %1622 = vmatprep.subr.bf16.mxu0 0
    %1623 = vmatpush1.bf16.msra.mxu0 0
    %1624 = vmatprep.subr.bf16.mxu0 0
    %1625 = vmatpush1.bf16.msra.mxu0 0
    %1626 = vmatprep.subr.bf16.mxu0 0
    %1627 = vmatpush1.bf16.msra.mxu0 0
    %1628 = vmatprep.subr.bf16.mxu0 0
    %1629 = vmatpush1.bf16.msra.mxu0 0
    %1630 = vmatprep.subr.bf16.mxu0 0
    %1631 = vmatpush1.bf16.msra.mxu0 0
    %1632 = vmatprep.subr.bf16.mxu0 0
    %1633 = vmatpush1.bf16.msra.mxu0 0
    %1634 = vmatprep.subr.bf16.mxu0 0
    %1635 = vmatpush1.bf16.msra.mxu0 0
    %1636 = vmatprep.subr.bf16.mxu0 0
    %1637 = vmatpush1.bf16.msra.mxu0 0
    %1638 = vmatprep.mubr.bf16.mxu0 0
    %1639 = vmatmul.mubr.bf16.gmra.mrb[0].mxu0 %v1601
    %v1640 = vpop.f32.mrb[0].mxu0
    %v1641 = vadd.f32 0.0, %v1640
    %v1642 = vpop.f32.mrb[0].mxu0
    %v1643 = vpop.f32.mrb[0].mxu0
    %v1644 = vpop.f32.mrb[0].mxu0
    %1645 = vdwg.mxu0
    %1647 = vrot.lane.b32.xlu0 %v973, 28
    %v1648 = vpop.permute.xlu0 %1647
    %1649 = vrot.lane.b32.xlu0 %v981, 28
    %v1650 = vpop.permute.xlu0 %1649
    %v1651 = vsel %vm1493, %v1648, %v1650
    %v1653 = vsel %vm1495, %v1483, 0
    %v1656 = vsel %vm332, %v1651, 0
    %1658 = vmatprep.subr.bf16.mxu0 0
    %1659 = vmatpush1.bf16.msra.mxu0 %v1656
    %1660 = vmatprep.subr.bf16.mxu0 0
    %1661 = vmatpush1.bf16.msra.mxu0 0
    %1662 = vmatprep.subr.bf16.mxu0 0
    %1663 = vmatpush1.bf16.msra.mxu0 0
    %1664 = vmatprep.subr.bf16.mxu0 0
    %1665 = vmatpush1.bf16.msra.mxu0 0
    %1666 = vmatprep.subr.bf16.mxu0 0
    %1667 = vmatpush1.bf16.msra.mxu0 0
    %1668 = vmatprep.subr.bf16.mxu0 0
    %1669 = vmatpush1.bf16.msra.mxu0 0
    %1670 = vmatprep.subr.bf16.mxu0 0
    %1671 = vmatpush1.bf16.msra.mxu0 0
    %1672 = vmatprep.subr.bf16.mxu0 0
    %1673 = vmatpush1.bf16.msra.mxu0 0
    %1674 = vmatprep.subr.bf16.mxu0 0
    %1675 = vmatpush1.bf16.msra.mxu0 0
    %1676 = vmatprep.subr.bf16.mxu0 0
    %1677 = vmatpush1.bf16.msra.mxu0 0
    %1678 = vmatprep.subr.bf16.mxu0 0
    %1679 = vmatpush1.bf16.msra.mxu0 0
    %1680 = vmatprep.subr.bf16.mxu0 0
    %1681 = vmatpush1.bf16.msra.mxu0 0
    %1682 = vmatprep.subr.bf16.mxu0 0
    %1683 = vmatpush1.bf16.msra.mxu0 0
    %1684 = vmatprep.subr.bf16.mxu0 0
    %1685 = vmatpush1.bf16.msra.mxu0 0
    %1686 = vmatprep.subr.bf16.mxu0 0
    %1687 = vmatpush1.bf16.msra.mxu0 0
    %1688 = vmatprep.subr.bf16.mxu0 0
    %1689 = vmatpush1.bf16.msra.mxu0 0
    %1690 = vmatprep.mubr.bf16.mxu0 0
    %1691 = vmatmul.mubr.bf16.gmra.mrb[0].mxu0 %v1653
    %v1692 = vpop.f32.mrb[0].mxu0
    %v1693 = vadd.f32 0.0, %v1692
    %v1694 = vpop.f32.mrb[0].mxu0
    %v1695 = vpop.f32.mrb[0].mxu0
    %v1696 = vpop.f32.mrb[0].mxu0
    %1697 = vdwg.mxu0
    %1699 = vrot.lane.b32.xlu0 %v974, 28
    %v1700 = vpop.permute.xlu0 %1699
    %1701 = vrot.lane.b32.xlu0 %v982, 28
    %v1702 = vpop.permute.xlu0 %1701
    %v1703 = vsel %vm1493, %v1700, %v1702
    %v1705 = vsel %vm1495, %v1484, 0
    %v1708 = vsel %vm332, %v1703, 0
    %1710 = vmatprep.subr.bf16.mxu0 0
    %1711 = vmatpush1.bf16.msra.mxu0 %v1708
    %1712 = vmatprep.subr.bf16.mxu0 0
    %1713 = vmatpush1.bf16.msra.mxu0 0
    %1714 = vmatprep.subr.bf16.mxu0 0
    %1715 = vmatpush1.bf16.msra.mxu0 0
    %1716 = vmatprep.subr.bf16.mxu0 0
    %1717 = vmatpush1.bf16.msra.mxu0 0
    %1718 = vmatprep.subr.bf16.mxu0 0
    %1719 = vmatpush1.bf16.msra.mxu0 0
    %1720 = vmatprep.subr.bf16.mxu0 0
    %1721 = vmatpush1.bf16.msra.mxu0 0
    %1722 = vmatprep.subr.bf16.mxu0 0
    %1723 = vmatpush1.bf16.msra.mxu0 0
    %1724 = vmatprep.subr.bf16.mxu0 0
    %1725 = vmatpush1.bf16.msra.mxu0 0
    %1726 = vmatprep.subr.bf16.mxu0 0
    %1727 = vmatpush1.bf16.msra.mxu0 0
    %1728 = vmatprep.subr.bf16.mxu0 0
    %1729 = vmatpush1.bf16.msra.mxu0 0
    %1730 = vmatprep.subr.bf16.mxu0 0
    %1731 = vmatpush1.bf16.msra.mxu0 0
    %1732 = vmatprep.subr.bf16.mxu0 0
    %1733 = vmatpush1.bf16.msra.mxu0 0
    %1734 = vmatprep.subr.bf16.mxu0 0
    %1735 = vmatpush1.bf16.msra.mxu0 0
    %1736 = vmatprep.subr.bf16.mxu0 0
    %1737 = vmatpush1.bf16.msra.mxu0 0
    %1738 = vmatprep.subr.bf16.mxu0 0
    %1739 = vmatpush1.bf16.msra.mxu0 0
    %1740 = vmatprep.subr.bf16.mxu0 0
    %1741 = vmatpush1.bf16.msra.mxu0 0
    %1742 = vmatprep.mubr.bf16.mxu0 0
    %1743 = vmatmul.mubr.bf16.gmra.mrb[0].mxu0 %v1705
    %v1744 = vpop.f32.mrb[0].mxu0
    %v1745 = vadd.f32 0.0, %v1744
    %v1746 = vpop.f32.mrb[0].mxu0
    %v1747 = vpop.f32.mrb[0].mxu0
    %v1748 = vpop.f32.mrb[0].mxu0
    %1749 = vdwg.mxu0
    %1751 = vrot.lane.b32.xlu0 %v975, 28
    %v1752 = vpop.permute.xlu0 %1751
    %1753 = vrot.lane.b32.xlu0 %v983, 28
    %v1754 = vpop.permute.xlu0 %1753
    %v1755 = vsel %vm1493, %v1752, %v1754
    %v1757 = vsel %vm1495, %v1485, 0
    %v1760 = vsel %vm332, %v1755, 0
    %1762 = vmatprep.subr.bf16.mxu0 0
    %1763 = vmatpush1.bf16.msra.mxu0 %v1760
    %1764 = vmatprep.subr.bf16.mxu0 0
    %1765 = vmatpush1.bf16.msra.mxu0 0
    %1766 = vmatprep.subr.bf16.mxu0 0
    %1767 = vmatpush1.bf16.msra.mxu0 0
    %1768 = vmatprep.subr.bf16.mxu0 0
    %1769 = vmatpush1.bf16.msra.mxu0 0
    %1770 = vmatprep.subr.bf16.mxu0 0
    %1771 = vmatpush1.bf16.msra.mxu0 0
    %1772 = vmatprep.subr.bf16.mxu0 0
    %1773 = vmatpush1.bf16.msra.mxu0 0
    %1774 = vmatprep.subr.bf16.mxu0 0
    %1775 = vmatpush1.bf16.msra.mxu0 0
    %1776 = vmatprep.subr.bf16.mxu0 0
    %1777 = vmatpush1.bf16.msra.mxu0 0
    %1778 = vmatprep.subr.bf16.mxu0 0
    %1779 = vmatpush1.bf16.msra.mxu0 0
    %1780 = vmatprep.subr.bf16.mxu0 0
    %1781 = vmatpush1.bf16.msra.mxu0 0
    %1782 = vmatprep.subr.bf16.mxu0 0
    %1783 = vmatpush1.bf16.msra.mxu0 0
    %1784 = vmatprep.subr.bf16.mxu0 0
    %1785 = vmatpush1.bf16.msra.mxu0 0
    %1786 = vmatprep.subr.bf16.mxu0 0
    %1787 = vmatpush1.bf16.msra.mxu0 0
    %1788 = vmatprep.subr.bf16.mxu0 0
    %1789 = vmatpush1.bf16.msra.mxu0 0
    %1790 = vmatprep.subr.bf16.mxu0 0
    %1791 = vmatpush1.bf16.msra.mxu0 0
    %1792 = vmatprep.subr.bf16.mxu0 0
    %1793 = vmatpush1.bf16.msra.mxu0 0
    %1794 = vmatprep.mubr.bf16.mxu0 0
    %1795 = vmatmul.mubr.bf16.gmra.mrb[0].mxu0 %v1757
    %v1796 = vpop.f32.mrb[0].mxu0
    %v1797 = vadd.f32 0.0, %v1796
    %v1798 = vpop.f32.mrb[0].mxu0
    %v1799 = vpop.f32.mrb[0].mxu0
    %v1800 = vpop.f32.mrb[0].mxu0
    %1801 = vdwg.mxu0
    %1803 = vrot.lane.b32.xlu0 %v976, 28
    %v1804 = vpop.permute.xlu0 %1803
    %1805 = vrot.lane.b32.xlu0 %v984, 28
    %v1806 = vpop.permute.xlu0 %1805
    %v1807 = vsel %vm1493, %v1804, %v1806
    %v1809 = vsel %vm1495, %v1486, 0
    %v1812 = vsel %vm332, %v1807, 0
    %1814 = vmatprep.subr.bf16.mxu0 0
    %1815 = vmatpush1.bf16.msra.mxu0 %v1812
    %1816 = vmatprep.subr.bf16.mxu0 0
    %1817 = vmatpush1.bf16.msra.mxu0 0
    %1818 = vmatprep.subr.bf16.mxu0 0
    %1819 = vmatpush1.bf16.msra.mxu0 0
    %1820 = vmatprep.subr.bf16.mxu0 0
    %1821 = vmatpush1.bf16.msra.mxu0 0
    %1822 = vmatprep.subr.bf16.mxu0 0
    %1823 = vmatpush1.bf16.msra.mxu0 0
    %1824 = vmatprep.subr.bf16.mxu0 0
    %1825 = vmatpush1.bf16.msra.mxu0 0
    %1826 = vmatprep.subr.bf16.mxu0 0
    %1827 = vmatpush1.bf16.msra.mxu0 0
    %1828 = vmatprep.subr.bf16.mxu0 0
    %1829 = vmatpush1.bf16.msra.mxu0 0
    %1830 = vmatprep.subr.bf16.mxu0 0
    %1831 = vmatpush1.bf16.msra.mxu0 0
    %1832 = vmatprep.subr.bf16.mxu0 0
    %1833 = vmatpush1.bf16.msra.mxu0 0
    %1834 = vmatprep.subr.bf16.mxu0 0
    %1835 = vmatpush1.bf16.msra.mxu0 0
    %1836 = vmatprep.subr.bf16.mxu0 0
    %1837 = vmatpush1.bf16.msra.mxu0 0
    %1838 = vmatprep.subr.bf16.mxu0 0
    %1839 = vmatpush1.bf16.msra.mxu0 0
    %1840 = vmatprep.subr.bf16.mxu0 0
    %1841 = vmatpush1.bf16.msra.mxu0 0
    %1842 = vmatprep.subr.bf16.mxu0 0
    %1843 = vmatpush1.bf16.msra.mxu0 0
    %1844 = vmatprep.subr.bf16.mxu0 0
    %1845 = vmatpush1.bf16.msra.mxu0 0
    %1846 = vmatprep.mubr.bf16.mxu0 0
    %1847 = vmatmul.mubr.bf16.gmra.mrb[0].mxu0 %v1809
    %v1848 = vpop.f32.mrb[0].mxu0
    %v1849 = vadd.f32 0.0, %v1848
    %v1850 = vpop.f32.mrb[0].mxu0
    %v1851 = vpop.f32.mrb[0].mxu0
    %v1852 = vpop.f32.mrb[0].mxu0
    %1853 = vdwg.mxu0
    %1855 = vrot.lane.b32.xlu0 %v977, 28
    %v1856 = vpop.permute.xlu0 %1855
    %1857 = vrot.lane.b32.xlu0 %v985, 28
    %v1858 = vpop.permute.xlu0 %1857
    %v1859 = vsel %vm1493, %v1856, %v1858
    %v1861 = vsel %vm1495, %v1487, 0
    %v1864 = vsel %vm332, %v1859, 0
    %1866 = vmatprep.subr.bf16.mxu0 0
    %1867 = vmatpush1.bf16.msra.mxu0 %v1864
    %1868 = vmatprep.subr.bf16.mxu0 0
    %1869 = vmatpush1.bf16.msra.mxu0 0
    %1870 = vmatprep.subr.bf16.mxu0 0
    %1871 = vmatpush1.bf16.msra.mxu0 0
    %1872 = vmatprep.subr.bf16.mxu0 0
    %1873 = vmatpush1.bf16.msra.mxu0 0
    %1874 = vmatprep.subr.bf16.mxu0 0
    %1875 = vmatpush1.bf16.msra.mxu0 0
    %1876 = vmatprep.subr.bf16.mxu0 0
    %1877 = vmatpush1.bf16.msra.mxu0 0
    %1878 = vmatprep.subr.bf16.mxu0 0
    %1879 = vmatpush1.bf16.msra.mxu0 0
    %1880 = vmatprep.subr.bf16.mxu0 0
    %1881 = vmatpush1.bf16.msra.mxu0 0
    %1882 = vmatprep.subr.bf16.mxu0 0
    %1883 = vmatpush1.bf16.msra.mxu0 0
    %1884 = vmatprep.subr.bf16.mxu0 0
    %1885 = vmatpush1.bf16.msra.mxu0 0
    %1886 = vmatprep.subr.bf16.mxu0 0
    %1887 = vmatpush1.bf16.msra.mxu0 0
    %1888 = vmatprep.subr.bf16.mxu0 0
    %1889 = vmatpush1.bf16.msra.mxu0 0
    %1890 = vmatprep.subr.bf16.mxu0 0
    %1891 = vmatpush1.bf16.msra.mxu0 0
    %1892 = vmatprep.subr.bf16.mxu0 0
    %1893 = vmatpush1.bf16.msra.mxu0 0
    %1894 = vmatprep.subr.bf16.mxu0 0
    %1895 = vmatpush1.bf16.msra.mxu0 0
    %1896 = vmatprep.subr.bf16.mxu0 0
    %1897 = vmatpush1.bf16.msra.mxu0 0
    %1898 = vmatprep.mubr.bf16.mxu0 0
    %1899 = vmatmul.mubr.bf16.gmra.mrb[0].mxu0 %v1861
    %v1900 = vpop.f32.mrb[0].mxu0
    %v1901 = vadd.f32 0.0, %v1900
    %v1902 = vpop.f32.mrb[0].mxu0
    %v1903 = vpop.f32.mrb[0].mxu0
    %v1904 = vpop.f32.mrb[0].mxu0
    %1905 = vdwg.mxu0
    %v1906 = vpack.c.bf16 %v1537, %v1537
    %v1907 = vpack.c.bf16 %v1589, %v1589
    %v1908 = vpack.c.bf16 %v1641, %v1641
    %v1909 = vpack.c.bf16 %v1693, %v1693
    %v1910 = vpack.c.bf16 %v1745, %v1745
    %v1911 = vpack.c.bf16 %v1797, %v1797
    %v1912 = vpack.c.bf16 %v1849, %v1849
    %v1913 = vpack.c.bf16 %v1901, %v1901
    %v1921 = vunpack.c.l.b16 %v100
    %v1922 = vunpack.c.l.b16 %v101
    %v1923 = vunpack.c.l.b16 %v102
    %v1924 = vunpack.c.l.b16 %v103
    %v1925 = vunpack.c.l.b16 %v104
    %v1926 = vunpack.c.l.b16 %v105
    %v1927 = vunpack.c.l.b16 %v106
    %v1928 = vpack.c.b16 %v1922, %v1921
    %v1929 = vpack.c.b16 %v1924, %v1923
    %v1930 = vpack.c.b16 %v1926, %v1925
    %v1931 = vpack.c.b16 %v1927, %v1927
    %v1936 = vsel %vm328, %v1906, 0
    %v1939 = vsel %vm332, %v1931, 0
    %1941 = vmatprep.subr.bf16.mxu0 0
    %1942 = vmatpush1.bf16.msra.mxu0 %v1928
    %1943 = vmatprep.subr.bf16.mxu0 0
    %1944 = vmatpush1.bf16.msra.mxu0 %v1929
    %1945 = vmatprep.subr.bf16.mxu0 0
    %1946 = vmatpush1.bf16.msra.mxu0 %v1930
    %1947 = vmatprep.subr.bf16.mxu0 0
    %1948 = vmatpush1.bf16.msra.mxu0 %v1939
    %1949 = vmatprep.subr.bf16.mxu0 0
    %1950 = vmatpush1.bf16.msra.mxu0 0
    %1951 = vmatprep.subr.bf16.mxu0 0
    %1952 = vmatpush1.bf16.msra.mxu0 0
    %1953 = vmatprep.subr.bf16.mxu0 0
    %1954 = vmatpush1.bf16.msra.mxu0 0
    %1955 = vmatprep.subr.bf16.mxu0 0
    %1956 = vmatpush1.bf16.msra.mxu0 0
    %1957 = vmatprep.subr.bf16.mxu0 0
    %1958 = vmatpush1.bf16.msra.mxu0 0
    %1959 = vmatprep.subr.bf16.mxu0 0
    %1960 = vmatpush1.bf16.msra.mxu0 0
    %1961 = vmatprep.subr.bf16.mxu0 0
    %1962 = vmatpush1.bf16.msra.mxu0 0
    %1963 = vmatprep.subr.bf16.mxu0 0
    %1964 = vmatpush1.bf16.msra.mxu0 0
    %1965 = vmatprep.subr.bf16.mxu0 0
    %1966 = vmatpush1.bf16.msra.mxu0 0
    %1967 = vmatprep.subr.bf16.mxu0 0
    %1968 = vmatpush1.bf16.msra.mxu0 0
    %1969 = vmatprep.subr.bf16.mxu0 0
    %1970 = vmatpush1.bf16.msra.mxu0 0
    %1971 = vmatprep.subr.bf16.mxu0 0
    %1972 = vmatpush1.bf16.msra.mxu0 0
    %1973 = vmatprep.mubr.bf16.mxu0 0
    %1974 = vmatmul.mubr.bf16.gmra.mrb[0].mxu0 %v1936
    %v1975 = vpop.f32.mrb[0].mxu0
    %v1976 = vadd.f32 0.0, %v1975
    %v1977 = vpop.f32.mrb[0].mxu0
    %v1978 = vpop.f32.mrb[0].mxu0
    %v1979 = vpop.f32.mrb[0].mxu0
    %1980 = vdwg.mxu0
    %v1988 = vunpack.c.l.b16 %v107
    %v1989 = vunpack.c.l.b16 %v108
    %v1990 = vunpack.c.l.b16 %v109
    %v1991 = vunpack.c.l.b16 %v110
    %v1992 = vunpack.c.l.b16 %v111
    %v1993 = vunpack.c.l.b16 %v112
    %v1994 = vunpack.c.l.b16 %v113
    %v1995 = vpack.c.b16 %v1989, %v1988
    %v1996 = vpack.c.b16 %v1991, %v1990
    %v1997 = vpack.c.b16 %v1993, %v1992
    %v1998 = vpack.c.b16 %v1994, %v1994
    %v2003 = vsel %vm328, %v1907, 0
    %v2006 = vsel %vm332, %v1998, 0
    %2008 = vmatprep.subr.bf16.mxu0 0
    %2009 = vmatpush1.bf16.msra.mxu0 %v1995
    %2010 = vmatprep.subr.bf16.mxu0 0
    %2011 = vmatpush1.bf16.msra.mxu0 %v1996
    %2012 = vmatprep.subr.bf16.mxu0 0
    %2013 = vmatpush1.bf16.msra.mxu0 %v1997
    %2014 = vmatprep.subr.bf16.mxu0 0
    %2015 = vmatpush1.bf16.msra.mxu0 %v2006
    %2016 = vmatprep.subr.bf16.mxu0 0
    %2017 = vmatpush1.bf16.msra.mxu0 0
    %2018 = vmatprep.subr.bf16.mxu0 0
    %2019 = vmatpush1.bf16.msra.mxu0 0
    %2020 = vmatprep.subr.bf16.mxu0 0
    %2021 = vmatpush1.bf16.msra.mxu0 0
    %2022 = vmatprep.subr.bf16.mxu0 0
    %2023 = vmatpush1.bf16.msra.mxu0 0
    %2024 = vmatprep.subr.bf16.mxu0 0
    %2025 = vmatpush1.bf16.msra.mxu0 0
    %2026 = vmatprep.subr.bf16.mxu0 0
    %2027 = vmatpush1.bf16.msra.mxu0 0
    %2028 = vmatprep.subr.bf16.mxu0 0
    %2029 = vmatpush1.bf16.msra.mxu0 0
    %2030 = vmatprep.subr.bf16.mxu0 0
    %2031 = vmatpush1.bf16.msra.mxu0 0
    %2032 = vmatprep.subr.bf16.mxu0 0
    %2033 = vmatpush1.bf16.msra.mxu0 0
    %2034 = vmatprep.subr.bf16.mxu0 0
    %2035 = vmatpush1.bf16.msra.mxu0 0
    %2036 = vmatprep.subr.bf16.mxu0 0
    %2037 = vmatpush1.bf16.msra.mxu0 0
    %2038 = vmatprep.subr.bf16.mxu0 0
    %2039 = vmatpush1.bf16.msra.mxu0 0
    %2040 = vmatprep.mubr.bf16.mxu0 0
    %2041 = vmatmul.mubr.bf16.gmra.mrb[0].mxu0 %v2003
    %v2042 = vpop.f32.mrb[0].mxu0
    %v2043 = vadd.f32 0.0, %v2042
    %v2044 = vpop.f32.mrb[0].mxu0
    %v2045 = vpop.f32.mrb[0].mxu0
    %v2046 = vpop.f32.mrb[0].mxu0
    %2047 = vdwg.mxu0
    %v2055 = vunpack.c.l.b16 %v114
    %v2056 = vunpack.c.l.b16 %v115
    %v2057 = vunpack.c.l.b16 %v116
    %v2058 = vunpack.c.l.b16 %v117
    %v2059 = vunpack.c.l.b16 %v118
    %v2060 = vunpack.c.l.b16 %v119
    %v2061 = vunpack.c.l.b16 %v120
    %v2062 = vpack.c.b16 %v2056, %v2055
    %v2063 = vpack.c.b16 %v2058, %v2057
    %v2064 = vpack.c.b16 %v2060, %v2059
    %v2065 = vpack.c.b16 %v2061, %v2061
    %v2070 = vsel %vm328, %v1908, 0
    %v2073 = vsel %vm332, %v2065, 0
    %2075 = vmatprep.subr.bf16.mxu0 0
    %2076 = vmatpush1.bf16.msra.mxu0 %v2062
    %2077 = vmatprep.subr.bf16.mxu0 0
    %2078 = vmatpush1.bf16.msra.mxu0 %v2063
    %2079 = vmatprep.subr.bf16.mxu0 0
    %2080 = vmatpush1.bf16.msra.mxu0 %v2064
    %2081 = vmatprep.subr.bf16.mxu0 0
    %2082 = vmatpush1.bf16.msra.mxu0 %v2073
    %2083 = vmatprep.subr.bf16.mxu0 0
    %2084 = vmatpush1.bf16.msra.mxu0 0
    %2085 = vmatprep.subr.bf16.mxu0 0
    %2086 = vmatpush1.bf16.msra.mxu0 0
    %2087 = vmatprep.subr.bf16.mxu0 0
    %2088 = vmatpush1.bf16.msra.mxu0 0
    %2089 = vmatprep.subr.bf16.mxu0 0
    %2090 = vmatpush1.bf16.msra.mxu0 0
    %2091 = vmatprep.subr.bf16.mxu0 0
    %2092 = vmatpush1.bf16.msra.mxu0 0
    %2093 = vmatprep.subr.bf16.mxu0 0
    %2094 = vmatpush1.bf16.msra.mxu0 0
    %2095 = vmatprep.subr.bf16.mxu0 0
    %2096 = vmatpush1.bf16.msra.mxu0 0
    %2097 = vmatprep.subr.bf16.mxu0 0
    %2098 = vmatpush1.bf16.msra.mxu0 0
    %2099 = vmatprep.subr.bf16.mxu0 0
    %2100 = vmatpush1.bf16.msra.mxu0 0
    %2101 = vmatprep.subr.bf16.mxu0 0
    %2102 = vmatpush1.bf16.msra.mxu0 0
    %2103 = vmatprep.subr.bf16.mxu0 0
    %2104 = vmatpush1.bf16.msra.mxu0 0
    %2105 = vmatprep.subr.bf16.mxu0 0
    %2106 = vmatpush1.bf16.msra.mxu0 0
    %2107 = vmatprep.mubr.bf16.mxu0 0
    %2108 = vmatmul.mubr.bf16.gmra.mrb[0].mxu0 %v2070
    %v2109 = vpop.f32.mrb[0].mxu0
    %v2110 = vadd.f32 0.0, %v2109
    %v2111 = vpop.f32.mrb[0].mxu0
    %v2112 = vpop.f32.mrb[0].mxu0
    %v2113 = vpop.f32.mrb[0].mxu0
    %2114 = vdwg.mxu0
    %v2122 = vunpack.c.l.b16 %v121
    %v2123 = vunpack.c.l.b16 %v122
    %v2124 = vunpack.c.l.b16 %v123
    %v2125 = vunpack.c.l.b16 %v124
    %v2126 = vunpack.c.l.b16 %v125
    %v2127 = vunpack.c.l.b16 %v126
    %v2128 = vunpack.c.l.b16 %v127
    %v2129 = vpack.c.b16 %v2123, %v2122
    %v2130 = vpack.c.b16 %v2125, %v2124
    %v2131 = vpack.c.b16 %v2127, %v2126
    %v2132 = vpack.c.b16 %v2128, %v2128
    %v2137 = vsel %vm328, %v1909, 0
    %v2140 = vsel %vm332, %v2132, 0
    %2142 = vmatprep.subr.bf16.mxu0 0
    %2143 = vmatpush1.bf16.msra.mxu0 %v2129
    %2144 = vmatprep.subr.bf16.mxu0 0
    %2145 = vmatpush1.bf16.msra.mxu0 %v2130
    %2146 = vmatprep.subr.bf16.mxu0 0
    %2147 = vmatpush1.bf16.msra.mxu0 %v2131
    %2148 = vmatprep.subr.bf16.mxu0 0
    %2149 = vmatpush1.bf16.msra.mxu0 %v2140
    %2150 = vmatprep.subr.bf16.mxu0 0
    %2151 = vmatpush1.bf16.msra.mxu0 0
    %2152 = vmatprep.subr.bf16.mxu0 0
    %2153 = vmatpush1.bf16.msra.mxu0 0
    %2154 = vmatprep.subr.bf16.mxu0 0
    %2155 = vmatpush1.bf16.msra.mxu0 0
    %2156 = vmatprep.subr.bf16.mxu0 0
    %2157 = vmatpush1.bf16.msra.mxu0 0
    %2158 = vmatprep.subr.bf16.mxu0 0
    %2159 = vmatpush1.bf16.msra.mxu0 0
    %2160 = vmatprep.subr.bf16.mxu0 0
    %2161 = vmatpush1.bf16.msra.mxu0 0
    %2162 = vmatprep.subr.bf16.mxu0 0
    %2163 = vmatpush1.bf16.msra.mxu0 0
    %2164 = vmatprep.subr.bf16.mxu0 0
    %2165 = vmatpush1.bf16.msra.mxu0 0
    %2166 = vmatprep.subr.bf16.mxu0 0
    %2167 = vmatpush1.bf16.msra.mxu0 0
    %2168 = vmatprep.subr.bf16.mxu0 0
    %2169 = vmatpush1.bf16.msra.mxu0 0
    %2170 = vmatprep.subr.bf16.mxu0 0
    %2171 = vmatpush1.bf16.msra.mxu0 0
    %2172 = vmatprep.subr.bf16.mxu0 0
    %2173 = vmatpush1.bf16.msra.mxu0 0
    %2174 = vmatprep.mubr.bf16.mxu0 0
    %2175 = vmatmul.mubr.bf16.gmra.mrb[0].mxu0 %v2137
    %v2176 = vpop.f32.mrb[0].mxu0
    %v2177 = vadd.f32 0.0, %v2176
    %v2178 = vpop.f32.mrb[0].mxu0
    %v2179 = vpop.f32.mrb[0].mxu0
    %v2180 = vpop.f32.mrb[0].mxu0
    %2181 = vdwg.mxu0
    %v2189 = vunpack.c.l.b16 %v128
    %v2190 = vunpack.c.l.b16 %v129
    %v2191 = vunpack.c.l.b16 %v130
    %v2192 = vunpack.c.l.b16 %v131
    %v2193 = vunpack.c.l.b16 %v132
    %v2194 = vunpack.c.l.b16 %v133
    %v2195 = vunpack.c.l.b16 %v134
    %v2196 = vpack.c.b16 %v2190, %v2189
    %v2197 = vpack.c.b16 %v2192, %v2191
    %v2198 = vpack.c.b16 %v2194, %v2193
    %v2199 = vpack.c.b16 %v2195, %v2195
    %v2204 = vsel %vm328, %v1910, 0
    %v2207 = vsel %vm332, %v2199, 0
    %2209 = vmatprep.subr.bf16.mxu0 0
    %2210 = vmatpush1.bf16.msra.mxu0 %v2196
    %2211 = vmatprep.subr.bf16.mxu0 0
    %2212 = vmatpush1.bf16.msra.mxu0 %v2197
    %2213 = vmatprep.subr.bf16.mxu0 0
    %2214 = vmatpush1.bf16.msra.mxu0 %v2198
    %2215 = vmatprep.subr.bf16.mxu0 0
    %2216 = vmatpush1.bf16.msra.mxu0 %v2207
    %2217 = vmatprep.subr.bf16.mxu0 0
    %2218 = vmatpush1.bf16.msra.mxu0 0
    %2219 = vmatprep.subr.bf16.mxu0 0
    %2220 = vmatpush1.bf16.msra.mxu0 0
    %2221 = vmatprep.subr.bf16.mxu0 0
    %2222 = vmatpush1.bf16.msra.mxu0 0
    %2223 = vmatprep.subr.bf16.mxu0 0
    %2224 = vmatpush1.bf16.msra.mxu0 0
    %2225 = vmatprep.subr.bf16.mxu0 0
    %2226 = vmatpush1.bf16.msra.mxu0 0
    %2227 = vmatprep.subr.bf16.mxu0 0
    %2228 = vmatpush1.bf16.msra.mxu0 0
    %2229 = vmatprep.subr.bf16.mxu0 0
    %2230 = vmatpush1.bf16.msra.mxu0 0
    %2231 = vmatprep.subr.bf16.mxu0 0
    %2232 = vmatpush1.bf16.msra.mxu0 0
    %2233 = vmatprep.subr.bf16.mxu0 0
    %2234 = vmatpush1.bf16.msra.mxu0 0
    %2235 = vmatprep.subr.bf16.mxu0 0
    %2236 = vmatpush1.bf16.msra.mxu0 0
    %2237 = vmatprep.subr.bf16.mxu0 0
    %2238 = vmatpush1.bf16.msra.mxu0 0
    %2239 = vmatprep.subr.bf16.mxu0 0
    %2240 = vmatpush1.bf16.msra.mxu0 0
    %2241 = vmatprep.mubr.bf16.mxu0 0
    %2242 = vmatmul.mubr.bf16.gmra.mrb[0].mxu0 %v2204
    %v2243 = vpop.f32.mrb[0].mxu0
    %v2244 = vadd.f32 0.0, %v2243
    %v2245 = vpop.f32.mrb[0].mxu0
    %v2246 = vpop.f32.mrb[0].mxu0
    %v2247 = vpop.f32.mrb[0].mxu0
    %2248 = vdwg.mxu0
    %v2256 = vunpack.c.l.b16 %v135
    %v2257 = vunpack.c.l.b16 %v136
    %v2258 = vunpack.c.l.b16 %v137
    %v2259 = vunpack.c.l.b16 %v138
    %v2260 = vunpack.c.l.b16 %v139
    %v2261 = vunpack.c.l.b16 %v140
    %v2262 = vunpack.c.l.b16 %v141
    %v2263 = vpack.c.b16 %v2257, %v2256
    %v2264 = vpack.c.b16 %v2259, %v2258
    %v2265 = vpack.c.b16 %v2261, %v2260
    %v2266 = vpack.c.b16 %v2262, %v2262
    %v2271 = vsel %vm328, %v1911, 0
    %v2274 = vsel %vm332, %v2266, 0
    %2276 = vmatprep.subr.bf16.mxu0 0
    %2277 = vmatpush1.bf16.msra.mxu0 %v2263
    %2278 = vmatprep.subr.bf16.mxu0 0
    %2279 = vmatpush1.bf16.msra.mxu0 %v2264
    %2280 = vmatprep.subr.bf16.mxu0 0
    %2281 = vmatpush1.bf16.msra.mxu0 %v2265
    %2282 = vmatprep.subr.bf16.mxu0 0
    %2283 = vmatpush1.bf16.msra.mxu0 %v2274
    %2284 = vmatprep.subr.bf16.mxu0 0
    %2285 = vmatpush1.bf16.msra.mxu0 0
    %2286 = vmatprep.subr.bf16.mxu0 0
    %2287 = vmatpush1.bf16.msra.mxu0 0
    %2288 = vmatprep.subr.bf16.mxu0 0
    %2289 = vmatpush1.bf16.msra.mxu0 0
    %2290 = vmatprep.subr.bf16.mxu0 0
    %2291 = vmatpush1.bf16.msra.mxu0 0
    %2292 = vmatprep.subr.bf16.mxu0 0
    %2293 = vmatpush1.bf16.msra.mxu0 0
    %2294 = vmatprep.subr.bf16.mxu0 0
    %2295 = vmatpush1.bf16.msra.mxu0 0
    %2296 = vmatprep.subr.bf16.mxu0 0
    %2297 = vmatpush1.bf16.msra.mxu0 0
    %2298 = vmatprep.subr.bf16.mxu0 0
    %2299 = vmatpush1.bf16.msra.mxu0 0
    %2300 = vmatprep.subr.bf16.mxu0 0
    %2301 = vmatpush1.bf16.msra.mxu0 0
    %2302 = vmatprep.subr.bf16.mxu0 0
    %2303 = vmatpush1.bf16.msra.mxu0 0
    %2304 = vmatprep.subr.bf16.mxu0 0
    %2305 = vmatpush1.bf16.msra.mxu0 0
    %2306 = vmatprep.subr.bf16.mxu0 0
    %2307 = vmatpush1.bf16.msra.mxu0 0
    %2308 = vmatprep.mubr.bf16.mxu0 0
    %2309 = vmatmul.mubr.bf16.gmra.mrb[0].mxu0 %v2271
    %v2310 = vpop.f32.mrb[0].mxu0
    %v2311 = vadd.f32 0.0, %v2310
    %v2312 = vpop.f32.mrb[0].mxu0
    %v2313 = vpop.f32.mrb[0].mxu0
    %v2314 = vpop.f32.mrb[0].mxu0
    %2315 = vdwg.mxu0
    %v2323 = vunpack.c.l.b16 %v142
    %v2324 = vunpack.c.l.b16 %v143
    %v2325 = vunpack.c.l.b16 %v144
    %v2326 = vunpack.c.l.b16 %v145
    %v2327 = vunpack.c.l.b16 %v146
    %v2328 = vunpack.c.l.b16 %v147
    %v2329 = vunpack.c.l.b16 %v148
    %v2330 = vpack.c.b16 %v2324, %v2323
    %v2331 = vpack.c.b16 %v2326, %v2325
    %v2332 = vpack.c.b16 %v2328, %v2327
    %v2333 = vpack.c.b16 %v2329, %v2329
    %v2338 = vsel %vm328, %v1912, 0
    %v2341 = vsel %vm332, %v2333, 0
    %2343 = vmatprep.subr.bf16.mxu0 0
    %2344 = vmatpush1.bf16.msra.mxu0 %v2330
    %2345 = vmatprep.subr.bf16.mxu0 0
    %2346 = vmatpush1.bf16.msra.mxu0 %v2331
    %2347 = vmatprep.subr.bf16.mxu0 0
    %2348 = vmatpush1.bf16.msra.mxu0 %v2332
    %2349 = vmatprep.subr.bf16.mxu0 0
    %2350 = vmatpush1.bf16.msra.mxu0 %v2341
    %2351 = vmatprep.subr.bf16.mxu0 0
    %2352 = vmatpush1.bf16.msra.mxu0 0
    %2353 = vmatprep.subr.bf16.mxu0 0
    %2354 = vmatpush1.bf16.msra.mxu0 0
    %2355 = vmatprep.subr.bf16.mxu0 0
    %2356 = vmatpush1.bf16.msra.mxu0 0
    %2357 = vmatprep.subr.bf16.mxu0 0
    %2358 = vmatpush1.bf16.msra.mxu0 0
    %2359 = vmatprep.subr.bf16.mxu0 0
    %2360 = vmatpush1.bf16.msra.mxu0 0
    %2361 = vmatprep.subr.bf16.mxu0 0
    %2362 = vmatpush1.bf16.msra.mxu0 0
    %2363 = vmatprep.subr.bf16.mxu0 0
    %2364 = vmatpush1.bf16.msra.mxu0 0
    %2365 = vmatprep.subr.bf16.mxu0 0
    %2366 = vmatpush1.bf16.msra.mxu0 0
    %2367 = vmatprep.subr.bf16.mxu0 0
    %2368 = vmatpush1.bf16.msra.mxu0 0
    %2369 = vmatprep.subr.bf16.mxu0 0
    %2370 = vmatpush1.bf16.msra.mxu0 0
    %2371 = vmatprep.subr.bf16.mxu0 0
    %2372 = vmatpush1.bf16.msra.mxu0 0
    %2373 = vmatprep.subr.bf16.mxu0 0
    %2374 = vmatpush1.bf16.msra.mxu0 0
    %2375 = vmatprep.mubr.bf16.mxu0 0
    %2376 = vmatmul.mubr.bf16.gmra.mrb[0].mxu0 %v2338
    %v2377 = vpop.f32.mrb[0].mxu0
    %v2378 = vadd.f32 0.0, %v2377
    %v2379 = vpop.f32.mrb[0].mxu0
    %v2380 = vpop.f32.mrb[0].mxu0
    %v2381 = vpop.f32.mrb[0].mxu0
    %2382 = vdwg.mxu0
    %v2390 = vunpack.c.l.b16 %v149
    %v2391 = vunpack.c.l.b16 %v150
    %v2392 = vunpack.c.l.b16 %v151
    %v2393 = vunpack.c.l.b16 %v152
    %v2394 = vunpack.c.l.b16 %v153
    %v2395 = vunpack.c.l.b16 %v154
    %v2396 = vunpack.c.l.b16 %v155
    %v2397 = vpack.c.b16 %v2391, %v2390
    %v2398 = vpack.c.b16 %v2393, %v2392
    %v2399 = vpack.c.b16 %v2395, %v2394
    %v2400 = vpack.c.b16 %v2396, %v2396
    %v2405 = vsel %vm328, %v1913, 0
    %v2408 = vsel %vm332, %v2400, 0
    %2410 = vmatprep.subr.bf16.mxu0 0
    %2411 = vmatpush1.bf16.msra.mxu0 %v2397
    %2412 = vmatprep.subr.bf16.mxu0 0
    %2413 = vmatpush1.bf16.msra.mxu0 %v2398
    %2414 = vmatprep.subr.bf16.mxu0 0
    %2415 = vmatpush1.bf16.msra.mxu0 %v2399
    %2416 = vmatprep.subr.bf16.mxu0 0
    %2417 = vmatpush1.bf16.msra.mxu0 %v2408
    %2418 = vmatprep.subr.bf16.mxu0 0
    %2419 = vmatpush1.bf16.msra.mxu0 0
    %2420 = vmatprep.subr.bf16.mxu0 0
    %2421 = vmatpush1.bf16.msra.mxu0 0
    %2422 = vmatprep.subr.bf16.mxu0 0
    %2423 = vmatpush1.bf16.msra.mxu0 0
    %2424 = vmatprep.subr.bf16.mxu0 0
    %2425 = vmatpush1.bf16.msra.mxu0 0
    %2426 = vmatprep.subr.bf16.mxu0 0
    %2427 = vmatpush1.bf16.msra.mxu0 0
    %2428 = vmatprep.subr.bf16.mxu0 0
    %2429 = vmatpush1.bf16.msra.mxu0 0
    %2430 = vmatprep.subr.bf16.mxu0 0
    %2431 = vmatpush1.bf16.msra.mxu0 0
    %2432 = vmatprep.subr.bf16.mxu0 0
    %2433 = vmatpush1.bf16.msra.mxu0 0
    %2434 = vmatprep.subr.bf16.mxu0 0
    %2435 = vmatpush1.bf16.msra.mxu0 0
    %2436 = vmatprep.subr.bf16.mxu0 0
    %2437 = vmatpush1.bf16.msra.mxu0 0
    %2438 = vmatprep.subr.bf16.mxu0 0
    %2439 = vmatpush1.bf16.msra.mxu0 0
    %2440 = vmatprep.subr.bf16.mxu0 0
    %2441 = vmatpush1.bf16.msra.mxu0 0
    %2442 = vmatprep.mubr.bf16.mxu0 0
    %2443 = vmatmul.mubr.bf16.gmra.mrb[0].mxu0 %v2405
    %v2444 = vpop.f32.mrb[0].mxu0
    %v2445 = vadd.f32 0.0, %v2444
    %v2446 = vpop.f32.mrb[0].mxu0
    %v2447 = vpop.f32.mrb[0].mxu0
    %v2448 = vpop.f32.mrb[0].mxu0
    %2449 = vdwg.mxu0
    %vm2450 = vcmask 402432
    %v2451 = vsel %vm2450, %v1976, 0.0
    %v2452 = vsel %vm2450, %v2043, 0.0
    %v2453 = vadd.f32 %v2451, %v2452
    %v2454 = vsel %vm2450, %v2110, 0.0
    %v2455 = vadd.f32 %v2453, %v2454
    %v2456 = vsel %vm2450, %v2177, 0.0
    %v2457 = vadd.f32 %v2455, %v2456
    %v2458 = vsel %vm2450, %v2244, 0.0
    %v2459 = vadd.f32 %v2457, %v2458
    %v2460 = vsel %vm2450, %v2311, 0.0
    %v2461 = vadd.f32 %v2459, %v2460
    %v2462 = vsel %vm2450, %v2378, 0.0
    %v2463 = vadd.f32 %v2461, %v2462
    %v2464 = vsel %vm2450, %v2445, 0.0
    %v2465 = vadd.f32 %v2463, %v2464
    %v2466 = vlaneseq
    %v2467 = vshrl.u32 %v2466, 7
    %v2468 = vsub.s32 0, %v2467
    %v2469 = vrot.slane %v39, %v2468
    %v2470 = vadd.f32 %v2465, %v2469
    %v2472 = vrot.slane %v25, 2
    %v2474 = vadd.f32 %v2470, %v2472
    %v2475 = vsel %vm2450, %v2474, 0.0
    %2476 = vadd.xlane.f32.xlu0 %v2475
    %v2477 = vpop.xlane.xlu0 %2476
    %v2478 = vrcp.pop 50.0
    %v2479 = vmul.f32 %v2477, %v2478
    %v2480 = vsub.f32 %v2474, %v2479
    %v2481 = vmul.f32 %v2480, %v2480
    %v2482 = vsel %vm2450, %v2481, 0.0
    %2483 = vadd.xlane.f32.xlu0 %v2482
    %v2484 = vpop.xlane.xlu0 %2483
    %v2485 = vmul.f32 %v2484, %v2478
    %v2486 = vadd.f32 %v2485, 1e-06
    %v2487 = vrsqrt.pop %v2486
    %v2488 = vmul.f32 %v2480, %v2487
    %v2489 = vlaneseq
    %v2490 = vshrl.u32 %v2489, 7
    %v2491 = vsub.s32 1, %v2490
    %v2492 = vrot.slane %v39, %v2491
    %v2493 = vmul.f32 %v2488, %v2492
    %v2494 = vlaneseq
    %v2495 = vshrl.u32 %v2494, 7
    %v2496 = vsub.s32 2, %v2495
    %v2497 = vrot.slane %v39, %v2496
    %v2498 = vadd.f32 %v2493, %v2497
    %v2499 = vld [vmem:[%s3] sm:$0xf]
    %v2500 = vld [vmem:[%s3 + $0x4] sm:$0xf]
    %v2501 = vld [vmem:[%s3 + $0x8] sm:$0xf]
    %v2502 = vld [vmem:[%s3 + $0xc] sm:$0xf]
    %v2503 = vld [vmem:[%s3 + $0x10] sm:$0xf]
    %v2504 = vld [vmem:[%s3 + $0x14] sm:$0xf]
    %v2505 = vld [vmem:[%s3 + $0x18] sm:$0x1]
    %v2506 = vld [vmem:[%s3 + $0x1c] sm:$0xf]
    %v2507 = vld [vmem:[%s3 + $0x20] sm:$0xf]
    %v2508 = vld [vmem:[%s3 + $0x24] sm:$0xf]
    %v2509 = vld [vmem:[%s3 + $0x28] sm:$0xf]
    %v2510 = vld [vmem:[%s3 + $0x2c] sm:$0xf]
    %v2511 = vld [vmem:[%s3 + $0x30] sm:$0xf]
    %v2512 = vld [vmem:[%s3 + $0x34] sm:$0x1]
    %v2513 = vpack.c.bf16 %v2498, %v2498
    %v2514 = vlaneseq
    %v2515 = vshrl.u32 %v2514, 7
    %v2516 = vsub.s32 0, %v2515
    %v2517 = vrot.slane %v40, %v2516
    %v2525 = vunpack.c.l.b16 %v2499
    %v2526 = vunpack.c.l.b16 %v2500
    %v2527 = vunpack.c.l.b16 %v2501
    %v2528 = vunpack.c.l.b16 %v2502
    %v2529 = vunpack.c.l.b16 %v2503
    %v2530 = vunpack.c.l.b16 %v2504
    %v2531 = vunpack.c.l.b16 %v2505
    %v2532 = vpack.c.b16 %v2526, %v2525
    %v2533 = vpack.c.b16 %v2528, %v2527
    %v2534 = vpack.c.b16 %v2530, %v2529
    %v2535 = vpack.c.b16 %v2531, %v2531
    %v2540 = vsel %vm328, %v2513, 0
    %v2543 = vsel %vm332, %v2535, 0
    %2545 = vmatprep.subr.bf16.mxu0 0
    %2546 = vmatpush1.bf16.msra.mxu0 %v2532
    %2547 = vmatprep.subr.bf16.mxu0 0
    %2548 = vmatpush1.bf16.msra.mxu0 %v2533
    %2549 = vmatprep.subr.bf16.mxu0 0
    %2550 = vmatpush1.bf16.msra.mxu0 %v2534
    %2551 = vmatprep.subr.bf16.mxu0 0
    %2552 = vmatpush1.bf16.msra.mxu0 %v2543
    %2553 = vmatprep.subr.bf16.mxu0 0
    %2554 = vmatpush1.bf16.msra.mxu0 0
    %2555 = vmatprep.subr.bf16.mxu0 0
    %2556 = vmatpush1.bf16.msra.mxu0 0
    %2557 = vmatprep.subr.bf16.mxu0 0
    %2558 = vmatpush1.bf16.msra.mxu0 0
    %2559 = vmatprep.subr.bf16.mxu0 0
    %2560 = vmatpush1.bf16.msra.mxu0 0
    %2561 = vmatprep.subr.bf16.mxu0 0
    %2562 = vmatpush1.bf16.msra.mxu0 0
    %2563 = vmatprep.subr.bf16.mxu0 0
    %2564 = vmatpush1.bf16.msra.mxu0 0
    %2565 = vmatprep.subr.bf16.mxu0 0
    %2566 = vmatpush1.bf16.msra.mxu0 0
    %2567 = vmatprep.subr.bf16.mxu0 0
    %2568 = vmatpush1.bf16.msra.mxu0 0
    %2569 = vmatprep.subr.bf16.mxu0 0
    %2570 = vmatpush1.bf16.msra.mxu0 0
    %2571 = vmatprep.subr.bf16.mxu0 0
    %2572 = vmatpush1.bf16.msra.mxu0 0
    %2573 = vmatprep.subr.bf16.mxu0 0
    %2574 = vmatpush1.bf16.msra.mxu0 0
    %2575 = vmatprep.subr.bf16.mxu0 0
    %2576 = vmatpush1.bf16.msra.mxu0 0
    %2577 = vmatprep.mubr.bf16.mxu0 0
    %2578 = vmatmul.mubr.bf16.gmra.mrb[0].mxu0 %v2540
    %v2579 = vpop.f32.mrb[0].mxu0
    %v2580 = vadd.f32 %v2517, %v2579
    %v2581 = vpop.f32.mrb[0].mxu0
    %v2582 = vpop.f32.mrb[0].mxu0
    %v2583 = vpop.f32.mrb[0].mxu0
    %2584 = vdwg.mxu0
    %v2585 = vmax.f32 %v2580, 0.0
    %v2586 = vpack.c.bf16 %v2585, %v2585
    %v2587 = vlaneseq
    %v2588 = vshrl.u32 %v2587, 7
    %v2589 = vsub.s32 1, %v2588
    %v2590 = vrot.slane %v40, %v2589
    %v2598 = vunpack.c.l.b16 %v2506
    %v2599 = vunpack.c.l.b16 %v2507
    %v2600 = vunpack.c.l.b16 %v2508
    %v2601 = vunpack.c.l.b16 %v2509
    %v2602 = vunpack.c.l.b16 %v2510
    %v2603 = vunpack.c.l.b16 %v2511
    %v2604 = vunpack.c.l.b16 %v2512
    %v2605 = vpack.c.b16 %v2599, %v2598
    %v2606 = vpack.c.b16 %v2601, %v2600
    %v2607 = vpack.c.b16 %v2603, %v2602
    %v2608 = vpack.c.b16 %v2604, %v2604
    %v2613 = vsel %vm328, %v2586, 0
    %v2616 = vsel %vm332, %v2608, 0
    %2618 = vmatprep.subr.bf16.mxu0 0
    %2619 = vmatpush1.bf16.msra.mxu0 %v2605
    %2620 = vmatprep.subr.bf16.mxu0 0
    %2621 = vmatpush1.bf16.msra.mxu0 %v2606
    %2622 = vmatprep.subr.bf16.mxu0 0
    %2623 = vmatpush1.bf16.msra.mxu0 %v2607
    %2624 = vmatprep.subr.bf16.mxu0 0
    %2625 = vmatpush1.bf16.msra.mxu0 %v2616
    %2626 = vmatprep.subr.bf16.mxu0 0
    %2627 = vmatpush1.bf16.msra.mxu0 0
    %2628 = vmatprep.subr.bf16.mxu0 0
    %2629 = vmatpush1.bf16.msra.mxu0 0
    %2630 = vmatprep.subr.bf16.mxu0 0
    %2631 = vmatpush1.bf16.msra.mxu0 0
    %2632 = vmatprep.subr.bf16.mxu0 0
    %2633 = vmatpush1.bf16.msra.mxu0 0
    %2634 = vmatprep.subr.bf16.mxu0 0
    %2635 = vmatpush1.bf16.msra.mxu0 0
    %2636 = vmatprep.subr.bf16.mxu0 0
    %2637 = vmatpush1.bf16.msra.mxu0 0
    %2638 = vmatprep.subr.bf16.mxu0 0
    %2639 = vmatpush1.bf16.msra.mxu0 0
    %2640 = vmatprep.subr.bf16.mxu0 0
    %2641 = vmatpush1.bf16.msra.mxu0 0
    %2642 = vmatprep.subr.bf16.mxu0 0
    %2643 = vmatpush1.bf16.msra.mxu0 0
    %2644 = vmatprep.subr.bf16.mxu0 0
    %2645 = vmatpush1.bf16.msra.mxu0 0
    %2646 = vmatprep.subr.bf16.mxu0 0
    %2647 = vmatpush1.bf16.msra.mxu0 0
    %2648 = vmatprep.subr.bf16.mxu0 0
    %2649 = vmatpush1.bf16.msra.mxu0 0
    %2650 = vmatprep.mubr.bf16.mxu0 0
    %2651 = vmatmul.mubr.bf16.gmra.mrb[0].mxu0 %v2613
    %v2652 = vpop.f32.mrb[0].mxu0
    %v2653 = vadd.f32 %v2590, %v2652
    %v2654 = vpop.f32.mrb[0].mxu0
    %v2655 = vpop.f32.mrb[0].mxu0
    %v2656 = vpop.f32.mrb[0].mxu0
    %2657 = vdwg.mxu0
    %v2658 = vadd.f32 %v2653, %v2498
    %v2659 = vsel %vm2450, %v2658, 0.0
    %2660 = vadd.xlane.f32.xlu0 %v2659
    %v2661 = vpop.xlane.xlu0 %2660
    %v2662 = vmul.f32 %v2661, %v2478
    %v2663 = vsub.f32 %v2658, %v2662
    %v2664 = vmul.f32 %v2663, %v2663
    %v2665 = vsel %vm2450, %v2664, 0.0
    %2666 = vadd.xlane.f32.xlu0 %v2665
    %v2667 = vpop.xlane.xlu0 %2666
    %v2668 = vmul.f32 %v2667, %v2478
    %v2669 = vadd.f32 %v2668, 1e-06
    %v2670 = vrsqrt.pop %v2669
    %v2671 = vmul.f32 %v2663, %v2670
    %v2672 = vlaneseq
    %v2673 = vshrl.u32 %v2672, 7
    %v2674 = vsub.s32 2, %v2673
    %v2675 = vrot.slane %v40, %v2674
    %v2676 = vmul.f32 %v2671, %v2675
    %v2677 = vlaneseq
    %v2678 = vshrl.u32 %v2677, 7
    %v2679 = vsub.s32 3, %v2678
    %v2680 = vrot.slane %v40, %v2679
    %v2681 = vadd.f32 %v2676, %v2680
    %s2682 = scalar_lea.vmem %s1, 448
    %v2683 = vld [vmem:[%s2682] sm:$0xff]
    %v2684 = vld [vmem:[%s2682 + $0x8] sm:$0xff]
    %v2685 = vld [vmem:[%s2682 + $0x10] sm:$0xff]
    %v2686 = vld [vmem:[%s2682 + $0x18] sm:$0xff]
    %v2687 = vld [vmem:[%s2682 + $0x20] sm:$0xff]
    %v2688 = vld [vmem:[%s2682 + $0x28] sm:$0xff]
    %v2689 = vld [vmem:[%s2682 + $0x30] sm:$0x11]
    %v2690 = vld [vmem:[%s2682 + $0x38] sm:$0xff]
    %v2691 = vld [vmem:[%s2682 + $0x40] sm:$0xff]
    %v2692 = vld [vmem:[%s2682 + $0x48] sm:$0xff]
    %v2693 = vld [vmem:[%s2682 + $0x50] sm:$0xff]
    %v2694 = vld [vmem:[%s2682 + $0x58] sm:$0xff]
    %v2695 = vld [vmem:[%s2682 + $0x60] sm:$0xff]
    %v2696 = vld [vmem:[%s2682 + $0x68] sm:$0x11]
    %v2697 = vld [vmem:[%s2682 + $0x70] sm:$0xff]
    %v2698 = vld [vmem:[%s2682 + $0x78] sm:$0xff]
    %v2699 = vld [vmem:[%s2682 + $0x80] sm:$0xff]
    %v2700 = vld [vmem:[%s2682 + $0x88] sm:$0xff]
    %v2701 = vld [vmem:[%s2682 + $0x90] sm:$0xff]
    %v2702 = vld [vmem:[%s2682 + $0x98] sm:$0xff]
    %v2703 = vld [vmem:[%s2682 + $0xa0] sm:$0x11]
    %v2704 = vld [vmem:[%s2682 + $0xa8] sm:$0xff]
    %v2705 = vld [vmem:[%s2682 + $0xb0] sm:$0xff]
    %v2706 = vld [vmem:[%s2682 + $0xb8] sm:$0xff]
    %v2707 = vld [vmem:[%s2682 + $0xc0] sm:$0xff]
    %v2708 = vld [vmem:[%s2682 + $0xc8] sm:$0xff]
    %v2709 = vld [vmem:[%s2682 + $0xd0] sm:$0xff]
    %v2710 = vld [vmem:[%s2682 + $0xd8] sm:$0x11]
    %v2711 = vld [vmem:[%s2682 + $0xe0] sm:$0xff]
    %v2712 = vld [vmem:[%s2682 + $0xe8] sm:$0xff]
    %v2713 = vld [vmem:[%s2682 + $0xf0] sm:$0xff]
    %v2714 = vld [vmem:[%s2682 + $0xf8] sm:$0xff]
    %v2715 = vld [vmem:[%s2682 + $0x100] sm:$0xff]
    %v2716 = vld [vmem:[%s2682 + $0x108] sm:$0xff]
    %v2717 = vld [vmem:[%s2682 + $0x110] sm:$0x11]
    %v2718 = vld [vmem:[%s2682 + $0x118] sm:$0xff]
    %v2719 = vld [vmem:[%s2682 + $0x120] sm:$0xff]
    %v2720 = vld [vmem:[%s2682 + $0x128] sm:$0xff]
    %v2721 = vld [vmem:[%s2682 + $0x130] sm:$0xff]
    %v2722 = vld [vmem:[%s2682 + $0x138] sm:$0xff]
    %v2723 = vld [vmem:[%s2682 + $0x140] sm:$0xff]
    %v2724 = vld [vmem:[%s2682 + $0x148] sm:$0x11]
    %v2725 = vld [vmem:[%s2682 + $0x150] sm:$0xff]
    %v2726 = vld [vmem:[%s2682 + $0x158] sm:$0xff]
    %v2727 = vld [vmem:[%s2682 + $0x160] sm:$0xff]
    %v2728 = vld [vmem:[%s2682 + $0x168] sm:$0xff]
    %v2729 = vld [vmem:[%s2682 + $0x170] sm:$0xff]
    %v2730 = vld [vmem:[%s2682 + $0x178] sm:$0xff]
    %v2731 = vld [vmem:[%s2682 + $0x180] sm:$0x11]
    %v2732 = vld [vmem:[%s2682 + $0x188] sm:$0xff]
    %v2733 = vld [vmem:[%s2682 + $0x190] sm:$0xff]
    %v2734 = vld [vmem:[%s2682 + $0x198] sm:$0xff]
    %v2735 = vld [vmem:[%s2682 + $0x1a0] sm:$0xff]
    %v2736 = vld [vmem:[%s2682 + $0x1a8] sm:$0xff]
    %v2737 = vld [vmem:[%s2682 + $0x1b0] sm:$0xff]
    %v2738 = vld [vmem:[%s2682 + $0x1b8] sm:$0x11]
    %s2739 = scalar_lea.vmem %s2, 224
    %v2740 = vld [vmem:[%s2739] sm:$0xf]
    %v2741 = vld [vmem:[%s2739 + $0x4] sm:$0xf]
    %v2742 = vld [vmem:[%s2739 + $0x8] sm:$0xf]
    %v2743 = vld [vmem:[%s2739 + $0xc] sm:$0xf]
    %v2744 = vld [vmem:[%s2739 + $0x10] sm:$0xf]
    %v2745 = vld [vmem:[%s2739 + $0x14] sm:$0xf]
    %v2746 = vld [vmem:[%s2739 + $0x18] sm:$0x1]
    %v2747 = vld [vmem:[%s2739 + $0x1c] sm:$0xf]
    %v2748 = vld [vmem:[%s2739 + $0x20] sm:$0xf]
    %v2749 = vld [vmem:[%s2739 + $0x24] sm:$0xf]
    %v2750 = vld [vmem:[%s2739 + $0x28] sm:$0xf]
    %v2751 = vld [vmem:[%s2739 + $0x2c] sm:$0xf]
    %v2752 = vld [vmem:[%s2739 + $0x30] sm:$0xf]
    %v2753 = vld [vmem:[%s2739 + $0x34] sm:$0x1]
    %v2754 = vld [vmem:[%s2739 + $0x38] sm:$0xf]
    %v2755 = vld [vmem:[%s2739 + $0x3c] sm:$0xf]
    %v2756 = vld [vmem:[%s2739 + $0x40] sm:$0xf]
    %v2757 = vld [vmem:[%s2739 + $0x44] sm:$0xf]
    %v2758 = vld [vmem:[%s2739 + $0x48] sm:$0xf]
    %v2759 = vld [vmem:[%s2739 + $0x4c] sm:$0xf]
    %v2760 = vld [vmem:[%s2739 + $0x50] sm:$0x1]
    %v2761 = vld [vmem:[%s2739 + $0x54] sm:$0xf]
    %v2762 = vld [vmem:[%s2739 + $0x58] sm:$0xf]
    %v2763 = vld [vmem:[%s2739 + $0x5c] sm:$0xf]
    %v2764 = vld [vmem:[%s2739 + $0x60] sm:$0xf]
    %v2765 = vld [vmem:[%s2739 + $0x64] sm:$0xf]
    %v2766 = vld [vmem:[%s2739 + $0x68] sm:$0xf]
    %v2767 = vld [vmem:[%s2739 + $0x6c] sm:$0x1]
    %v2768 = vld [vmem:[%s2739 + $0x70] sm:$0xf]
    %v2769 = vld [vmem:[%s2739 + $0x74] sm:$0xf]
    %v2770 = vld [vmem:[%s2739 + $0x78] sm:$0xf]
    %v2771 = vld [vmem:[%s2739 + $0x7c] sm:$0xf]
    %v2772 = vld [vmem:[%s2739 + $0x80] sm:$0xf]
    %v2773 = vld [vmem:[%s2739 + $0x84] sm:$0xf]
    %v2774 = vld [vmem:[%s2739 + $0x88] sm:$0x1]
    %v2775 = vld [vmem:[%s2739 + $0x8c] sm:$0xf]
    %v2776 = vld [vmem:[%s2739 + $0x90] sm:$0xf]
    %v2777 = vld [vmem:[%s2739 + $0x94] sm:$0xf]
    %v2778 = vld [vmem:[%s2739 + $0x98] sm:$0xf]
    %v2779 = vld [vmem:[%s2739 + $0x9c] sm:$0xf]
    %v2780 = vld [vmem:[%s2739 + $0xa0] sm:$0xf]
    %v2781 = vld [vmem:[%s2739 + $0xa4] sm:$0x1]
    %v2782 = vld [vmem:[%s2739 + $0xa8] sm:$0xf]
    %v2783 = vld [vmem:[%s2739 + $0xac] sm:$0xf]
    %v2784 = vld [vmem:[%s2739 + $0xb0] sm:$0xf]
    %v2785 = vld [vmem:[%s2739 + $0xb4] sm:$0xf]
    %v2786 = vld [vmem:[%s2739 + $0xb8] sm:$0xf]
    %v2787 = vld [vmem:[%s2739 + $0xbc] sm:$0xf]
    %v2788 = vld [vmem:[%s2739 + $0xc0] sm:$0x1]
    %v2789 = vld [vmem:[%s2739 + $0xc4] sm:$0xf]
    %v2790 = vld [vmem:[%s2739 + $0xc8] sm:$0xf]
    %v2791 = vld [vmem:[%s2739 + $0xcc] sm:$0xf]
    %v2792 = vld [vmem:[%s2739 + $0xd0] sm:$0xf]
    %v2793 = vld [vmem:[%s2739 + $0xd4] sm:$0xf]
    %v2794 = vld [vmem:[%s2739 + $0xd8] sm:$0xf]
    %v2795 = vld [vmem:[%s2739 + $0xdc] sm:$0x1]
    %s2796 = scalar_lea.vmem %s4, 16
    %v2797 = vld [vmem:[%s2796] sm:$0xff]
    %v2798 = vld [vmem:[%s2796 + $0x8] sm:$0xff]
    %v2801 = vcombine.low %v2797, %v2798
    %v2802 = vcombine.high %v2797, %v2798
    %v2804 = vunpack.c.l.s4 1966171168
    %v2805 = vunpack.c.0.s8 %v2804
    %v2806 = vlaneseq
    %v2807 = vshrl.u32 %v2806, 7
    %v2808 = vsub.s32 %v2805, %v2807
    %v2809 = vrot.slane %v2801, %v2808
    %v2811 = vunpack.c.l.s4 1966171168
    %v2812 = vunpack.c.0.s8 %v2811
    %v2813 = vlaneseq
    %v2814 = vshrl.u32 %v2813, 7
    %v2815 = vsub.s32 %v2812, %v2814
    %v2816 = vrot.slane %v2802, %v2815
    %v2817 = vcombine.high %v2809, %v2809
    %v2818 = vcombine.high %v2816, %v2816
    %v2820 = vunpack.c.l.s4 1966171168
    %v2821 = vunpack.c.0.s8 %v2820
    %v2822 = vlaneseq
    %v2823 = vshrl.u32 %v2822, 7
    %v2824 = vsub.s32 %v2821, %v2823
    %v2825 = vrot.slane %v2809, %v2824
    %v2827 = vunpack.c.l.s4 1966171168
    %v2828 = vunpack.c.0.s8 %v2827
    %v2829 = vlaneseq
    %v2830 = vshrl.u32 %v2829, 7
    %v2831 = vsub.s32 %v2828, %v2830
    %v2832 = vrot.slane %v2816, %v2831
    %v2834 = vunpack.c.l.s4 1966171168
    %v2835 = vunpack.c.0.s8 %v2834
    %v2836 = vlaneseq
    %v2837 = vshrl.u32 %v2836, 7
    %v2838 = vsub.s32 %v2835, %v2837
    %v2839 = vrot.slane %v2817, %v2838
    %v2841 = vunpack.c.l.s4 1966171168
    %v2842 = vunpack.c.0.s8 %v2841
    %v2843 = vlaneseq
    %v2844 = vshrl.u32 %v2843, 7
    %v2845 = vsub.s32 %v2842, %v2844
    %v2846 = vrot.slane %v2818, %v2845
    %v2847 = vcombine.high %v2825, %v2825
    %v2848 = vcombine.high %v2832, %v2832
    %v2849 = vcombine.high %v2839, %v2839
    %v2850 = vcombine.high %v2846, %v2846
    %v2851 = vlaneseq
    %v2852 = vshrl.u32 %v2851, 7
    %v2853 = vsub.s32 0, %v2852
    %v2854 = vrot.slane %v2825, %v2853
    %v2855 = vlaneseq
    %v2856 = vshrl.u32 %v2855, 7
    %v2857 = vsub.s32 1, %v2856
    %v2858 = vrot.slane %v2825, %v2857
    %v2859 = vlaneseq
    %v2860 = vshrl.u32 %v2859, 7
    %v2861 = vsub.s32 0, %v2860
    %v2862 = vrot.slane %v2839, %v2861
    %v2863 = vlaneseq
    %v2864 = vshrl.u32 %v2863, 7
    %v2865 = vsub.s32 1, %v2864
    %v2866 = vrot.slane %v2839, %v2865
    %v2867 = vlaneseq
    %v2868 = vshrl.u32 %v2867, 7
    %v2869 = vsub.s32 0, %v2868
    %v2870 = vrot.slane %v2847, %v2869
    %v2871 = vlaneseq
    %v2872 = vshrl.u32 %v2871, 7
    %v2873 = vsub.s32 1, %v2872
    %v2874 = vrot.slane %v2847, %v2873
    %v2875 = vlaneseq
    %v2876 = vshrl.u32 %v2875, 7
    %v2877 = vsub.s32 0, %v2876
    %v2878 = vrot.slane %v2849, %v2877
    %v2879 = vlaneseq
    %v2880 = vshrl.u32 %v2879, 7
    %v2881 = vsub.s32 1, %v2880
    %v2882 = vrot.slane %v2849, %v2881
    %v2883 = vlaneseq
    %v2884 = vshrl.u32 %v2883, 7
    %v2885 = vsub.s32 0, %v2884
    %v2886 = vrot.slane %v2832, %v2885
    %v2887 = vlaneseq
    %v2888 = vshrl.u32 %v2887, 7
    %v2889 = vsub.s32 1, %v2888
    %v2890 = vrot.slane %v2832, %v2889
    %v2891 = vlaneseq
    %v2892 = vshrl.u32 %v2891, 7
    %v2893 = vsub.s32 0, %v2892
    %v2894 = vrot.slane %v2846, %v2893
    %v2895 = vlaneseq
    %v2896 = vshrl.u32 %v2895, 7
    %v2897 = vsub.s32 1, %v2896
    %v2898 = vrot.slane %v2846, %v2897
    %v2899 = vlaneseq
    %v2900 = vshrl.u32 %v2899, 7
    %v2901 = vsub.s32 0, %v2900
    %v2902 = vrot.slane %v2848, %v2901
    %v2903 = vlaneseq
    %v2904 = vshrl.u32 %v2903, 7
    %v2905 = vsub.s32 1, %v2904
    %v2906 = vrot.slane %v2848, %v2905
    %v2907 = vlaneseq
    %v2908 = vshrl.u32 %v2907, 7
    %v2909 = vsub.s32 0, %v2908
    %v2910 = vrot.slane %v2850, %v2909
    %v2911 = vlaneseq
    %v2912 = vshrl.u32 %v2911, 7
    %v2913 = vsub.s32 1, %v2912
    %v2914 = vrot.slane %v2850, %v2913
    %v2931 = vrot.slane %v210, 2
    %v2939 = vunpack.c.l.b16 %v2683
    %v2940 = vunpack.c.h.b16 %v2683
    %v2941 = vunpack.c.l.b16 %v2684
    %v2942 = vunpack.c.h.b16 %v2684
    %v2943 = vunpack.c.l.b16 %v2685
    %v2944 = vunpack.c.h.b16 %v2685
    %v2945 = vunpack.c.l.b16 %v2686
    %v2946 = vunpack.c.h.b16 %v2686
    %v2947 = vunpack.c.l.b16 %v2687
    %v2948 = vunpack.c.h.b16 %v2687
    %v2949 = vunpack.c.l.b16 %v2688
    %v2950 = vunpack.c.h.b16 %v2688
    %v2951 = vunpack.c.l.b16 %v2689
    %v2952 = vunpack.c.h.b16 %v2689
    %v2953 = vpack.c.b16 %v2941, %v2939
    %v2954 = vpack.c.b16 %v2942, %v2940
    %v2955 = vpack.c.b16 %v2945, %v2943
    %v2956 = vpack.c.b16 %v2946, %v2944
    %v2957 = vpack.c.b16 %v2949, %v2947
    %v2958 = vpack.c.b16 %v2950, %v2948
    %v2959 = vpack.c.b16 %v2951, %v2951
    %v2960 = vpack.c.b16 %v2952, %v2952
    %v2968 = vsel %vm328, %v2931, 0
    %v2971 = vsel %vm332, %v2959, 0
    %v2974 = vsel %vm332, %v2960, 0
    %2976 = vmatprep.subr.bf16.mxu0 %v2954
    %2977 = vmatpush1.bf16.msra.mxu0 %v2953
    %2978 = vmatprep.subr.bf16.mxu0 %v2956
    %2979 = vmatpush1.bf16.msra.mxu0 %v2955
    %2980 = vmatprep.subr.bf16.mxu0 %v2958
    %2981 = vmatpush1.bf16.msra.mxu0 %v2957
    %2982 = vmatprep.subr.bf16.mxu0 %v2974
    %2983 = vmatpush1.bf16.msra.mxu0 %v2971
    %2984 = vmatprep.subr.bf16.mxu0 0
    %2985 = vmatpush1.bf16.msra.mxu0 0
    %2986 = vmatprep.subr.bf16.mxu0 0
    %2987 = vmatpush1.bf16.msra.mxu0 0
    %2988 = vmatprep.subr.bf16.mxu0 0
    %2989 = vmatpush1.bf16.msra.mxu0 0
    %2990 = vmatprep.subr.bf16.mxu0 0
    %2991 = vmatpush1.bf16.msra.mxu0 0
    %2992 = vmatprep.subr.bf16.mxu0 0
    %2993 = vmatpush1.bf16.msra.mxu0 0
    %2994 = vmatprep.subr.bf16.mxu0 0
    %2995 = vmatpush1.bf16.msra.mxu0 0
    %2996 = vmatprep.subr.bf16.mxu0 0
    %2997 = vmatpush1.bf16.msra.mxu0 0
    %2998 = vmatprep.subr.bf16.mxu0 0
    %2999 = vmatpush1.bf16.msra.mxu0 0
    %3000 = vmatprep.subr.bf16.mxu0 0
    %3001 = vmatpush1.bf16.msra.mxu0 0
    %3002 = vmatprep.subr.bf16.mxu0 0
    %3003 = vmatpush1.bf16.msra.mxu0 0
    %3004 = vmatprep.subr.bf16.mxu0 0
    %3005 = vmatpush1.bf16.msra.mxu0 0
    %3006 = vmatprep.subr.bf16.mxu0 0
    %3007 = vmatpush1.bf16.msra.mxu0 0
    %3008 = vmatprep.mubr.bf16.mxu0 0
    %3009 = vmatmul.mubr.bf16.gmra.mrb[0].mxu0 %v2968
    %v3010 = vpop.f32.mrb[0].mxu0
    %v3011 = vadd.f32 %v2854, %v3010
    %v3012 = vpop.f32.mrb[0].mxu0
    %v3013 = vadd.f32 %v2858, %v3012
    %v3014 = vpop.f32.mrb[0].mxu0
    %v3015 = vpop.f32.mrb[0].mxu0
    %3016 = vdwg.mxu0
    %v3024 = vunpack.c.l.b16 %v2690
    %v3025 = vunpack.c.h.b16 %v2690
    %v3026 = vunpack.c.l.b16 %v2691
    %v3027 = vunpack.c.h.b16 %v2691
    %v3028 = vunpack.c.l.b16 %v2692
    %v3029 = vunpack.c.h.b16 %v2692
    %v3030 = vunpack.c.l.b16 %v2693
    %v3031 = vunpack.c.h.b16 %v2693
    %v3032 = vunpack.c.l.b16 %v2694
    %v3033 = vunpack.c.h.b16 %v2694
    %v3034 = vunpack.c.l.b16 %v2695
    %v3035 = vunpack.c.h.b16 %v2695
    %v3036 = vunpack.c.l.b16 %v2696
    %v3037 = vunpack.c.h.b16 %v2696
    %v3038 = vpack.c.b16 %v3026, %v3024
    %v3039 = vpack.c.b16 %v3027, %v3025
    %v3040 = vpack.c.b16 %v3030, %v3028
    %v3041 = vpack.c.b16 %v3031, %v3029
    %v3042 = vpack.c.b16 %v3034, %v3032
    %v3043 = vpack.c.b16 %v3035, %v3033
    %v3044 = vpack.c.b16 %v3036, %v3036
    %v3045 = vpack.c.b16 %v3037, %v3037
    %v3053 = vsel %vm332, %v3044, 0
    %v3056 = vsel %vm332, %v3045, 0
    %3058 = vmatprep.subr.bf16.mxu0 %v3039
    %3059 = vmatpush1.bf16.msra.mxu0 %v3038
    %3060 = vmatprep.subr.bf16.mxu0 %v3041
    %3061 = vmatpush1.bf16.msra.mxu0 %v3040
    %3062 = vmatprep.subr.bf16.mxu0 %v3043
    %3063 = vmatpush1.bf16.msra.mxu0 %v3042
    %3064 = vmatprep.subr.bf16.mxu0 %v3056
    %3065 = vmatpush1.bf16.msra.mxu0 %v3053
    %3066 = vmatprep.subr.bf16.mxu0 0
    %3067 = vmatpush1.bf16.msra.mxu0 0
    %3068 = vmatprep.subr.bf16.mxu0 0
    %3069 = vmatpush1.bf16.msra.mxu0 0
    %3070 = vmatprep.subr.bf16.mxu0 0
    %3071 = vmatpush1.bf16.msra.mxu0 0
    %3072 = vmatprep.subr.bf16.mxu0 0
    %3073 = vmatpush1.bf16.msra.mxu0 0
    %3074 = vmatprep.subr.bf16.mxu0 0
    %3075 = vmatpush1.bf16.msra.mxu0 0
    %3076 = vmatprep.subr.bf16.mxu0 0
    %3077 = vmatpush1.bf16.msra.mxu0 0
    %3078 = vmatprep.subr.bf16.mxu0 0
    %3079 = vmatpush1.bf16.msra.mxu0 0
    %3080 = vmatprep.subr.bf16.mxu0 0
    %3081 = vmatpush1.bf16.msra.mxu0 0
    %3082 = vmatprep.subr.bf16.mxu0 0
    %3083 = vmatpush1.bf16.msra.mxu0 0
    %3084 = vmatprep.subr.bf16.mxu0 0
    %3085 = vmatpush1.bf16.msra.mxu0 0
    %3086 = vmatprep.subr.bf16.mxu0 0
    %3087 = vmatpush1.bf16.msra.mxu0 0
    %3088 = vmatprep.subr.bf16.mxu0 0
    %3089 = vmatpush1.bf16.msra.mxu0 0
    %3090 = vmatprep.mubr.bf16.mxu0 0
    %3091 = vmatmul.mubr.bf16.gmra.mrb[0].mxu0 %v2968
    %v3092 = vpop.f32.mrb[0].mxu0
    %v3093 = vadd.f32 %v2862, %v3092
    %v3094 = vpop.f32.mrb[0].mxu0
    %v3095 = vadd.f32 %v2866, %v3094
    %v3096 = vpop.f32.mrb[0].mxu0
    %v3097 = vpop.f32.mrb[0].mxu0
    %3098 = vdwg.mxu0
    %v3106 = vunpack.c.l.b16 %v2697
    %v3107 = vunpack.c.h.b16 %v2697
    %v3108 = vunpack.c.l.b16 %v2698
    %v3109 = vunpack.c.h.b16 %v2698
    %v3110 = vunpack.c.l.b16 %v2699
    %v3111 = vunpack.c.h.b16 %v2699
    %v3112 = vunpack.c.l.b16 %v2700
    %v3113 = vunpack.c.h.b16 %v2700
    %v3114 = vunpack.c.l.b16 %v2701
    %v3115 = vunpack.c.h.b16 %v2701
    %v3116 = vunpack.c.l.b16 %v2702
    %v3117 = vunpack.c.h.b16 %v2702
    %v3118 = vunpack.c.l.b16 %v2703
    %v3119 = vunpack.c.h.b16 %v2703
    %v3120 = vpack.c.b16 %v3108, %v3106
    %v3121 = vpack.c.b16 %v3109, %v3107
    %v3122 = vpack.c.b16 %v3112, %v3110
    %v3123 = vpack.c.b16 %v3113, %v3111
    %v3124 = vpack.c.b16 %v3116, %v3114
    %v3125 = vpack.c.b16 %v3117, %v3115
    %v3126 = vpack.c.b16 %v3118, %v3118
    %v3127 = vpack.c.b16 %v3119, %v3119
    %v3135 = vsel %vm332, %v3126, 0
    %v3138 = vsel %vm332, %v3127, 0
    %3140 = vmatprep.subr.bf16.mxu0 %v3121
    %3141 = vmatpush1.bf16.msra.mxu0 %v3120
    %3142 = vmatprep.subr.bf16.mxu0 %v3123
    %3143 = vmatpush1.bf16.msra.mxu0 %v3122
    %3144 = vmatprep.subr.bf16.mxu0 %v3125
    %3145 = vmatpush1.bf16.msra.mxu0 %v3124
    %3146 = vmatprep.subr.bf16.mxu0 %v3138
    %3147 = vmatpush1.bf16.msra.mxu0 %v3135
    %3148 = vmatprep.subr.bf16.mxu0 0
    %3149 = vmatpush1.bf16.msra.mxu0 0
    %3150 = vmatprep.subr.bf16.mxu0 0
    %3151 = vmatpush1.bf16.msra.mxu0 0
    %3152 = vmatprep.subr.bf16.mxu0 0
    %3153 = vmatpush1.bf16.msra.mxu0 0
    %3154 = vmatprep.subr.bf16.mxu0 0
    %3155 = vmatpush1.bf16.msra.mxu0 0
    %3156 = vmatprep.subr.bf16.mxu0 0
    %3157 = vmatpush1.bf16.msra.mxu0 0
    %3158 = vmatprep.subr.bf16.mxu0 0
    %3159 = vmatpush1.bf16.msra.mxu0 0
    %3160 = vmatprep.subr.bf16.mxu0 0
    %3161 = vmatpush1.bf16.msra.mxu0 0
    %3162 = vmatprep.subr.bf16.mxu0 0
    %3163 = vmatpush1.bf16.msra.mxu0 0
    %3164 = vmatprep.subr.bf16.mxu0 0
    %3165 = vmatpush1.bf16.msra.mxu0 0
    %3166 = vmatprep.subr.bf16.mxu0 0
    %3167 = vmatpush1.bf16.msra.mxu0 0
    %3168 = vmatprep.subr.bf16.mxu0 0
    %3169 = vmatpush1.bf16.msra.mxu0 0
    %3170 = vmatprep.subr.bf16.mxu0 0
    %3171 = vmatpush1.bf16.msra.mxu0 0
    %3172 = vmatprep.mubr.bf16.mxu0 0
    %3173 = vmatmul.mubr.bf16.gmra.mrb[0].mxu0 %v2968
    %v3174 = vpop.f32.mrb[0].mxu0
    %v3175 = vadd.f32 %v2870, %v3174
    %v3176 = vpop.f32.mrb[0].mxu0
    %v3177 = vadd.f32 %v2874, %v3176
    %v3178 = vpop.f32.mrb[0].mxu0
    %v3179 = vpop.f32.mrb[0].mxu0
    %3180 = vdwg.mxu0
    %v3188 = vunpack.c.l.b16 %v2704
    %v3189 = vunpack.c.h.b16 %v2704
    %v3190 = vunpack.c.l.b16 %v2705
    %v3191 = vunpack.c.h.b16 %v2705
    %v3192 = vunpack.c.l.b16 %v2706
    %v3193 = vunpack.c.h.b16 %v2706
    %v3194 = vunpack.c.l.b16 %v2707
    %v3195 = vunpack.c.h.b16 %v2707
    %v3196 = vunpack.c.l.b16 %v2708
    %v3197 = vunpack.c.h.b16 %v2708
    %v3198 = vunpack.c.l.b16 %v2709
    %v3199 = vunpack.c.h.b16 %v2709
    %v3200 = vunpack.c.l.b16 %v2710
    %v3201 = vunpack.c.h.b16 %v2710
    %v3202 = vpack.c.b16 %v3190, %v3188
    %v3203 = vpack.c.b16 %v3191, %v3189
    %v3204 = vpack.c.b16 %v3194, %v3192
    %v3205 = vpack.c.b16 %v3195, %v3193
    %v3206 = vpack.c.b16 %v3198, %v3196
    %v3207 = vpack.c.b16 %v3199, %v3197
    %v3208 = vpack.c.b16 %v3200, %v3200
    %v3209 = vpack.c.b16 %v3201, %v3201
    %v3217 = vsel %vm332, %v3208, 0
    %v3220 = vsel %vm332, %v3209, 0
    %3222 = vmatprep.subr.bf16.mxu0 %v3203
    %3223 = vmatpush1.bf16.msra.mxu0 %v3202
    %3224 = vmatprep.subr.bf16.mxu0 %v3205
    %3225 = vmatpush1.bf16.msra.mxu0 %v3204
    %3226 = vmatprep.subr.bf16.mxu0 %v3207
    %3227 = vmatpush1.bf16.msra.mxu0 %v3206
    %3228 = vmatprep.subr.bf16.mxu0 %v3220
    %3229 = vmatpush1.bf16.msra.mxu0 %v3217
    %3230 = vmatprep.subr.bf16.mxu0 0
    %3231 = vmatpush1.bf16.msra.mxu0 0
    %3232 = vmatprep.subr.bf16.mxu0 0
    %3233 = vmatpush1.bf16.msra.mxu0 0
    %3234 = vmatprep.subr.bf16.mxu0 0
    %3235 = vmatpush1.bf16.msra.mxu0 0
    %3236 = vmatprep.subr.bf16.mxu0 0
    %3237 = vmatpush1.bf16.msra.mxu0 0
    %3238 = vmatprep.subr.bf16.mxu0 0
    %3239 = vmatpush1.bf16.msra.mxu0 0
    %3240 = vmatprep.subr.bf16.mxu0 0
    %3241 = vmatpush1.bf16.msra.mxu0 0
    %3242 = vmatprep.subr.bf16.mxu0 0
    %3243 = vmatpush1.bf16.msra.mxu0 0
    %3244 = vmatprep.subr.bf16.mxu0 0
    %3245 = vmatpush1.bf16.msra.mxu0 0
    %3246 = vmatprep.subr.bf16.mxu0 0
    %3247 = vmatpush1.bf16.msra.mxu0 0
    %3248 = vmatprep.subr.bf16.mxu0 0
    %3249 = vmatpush1.bf16.msra.mxu0 0
    %3250 = vmatprep.subr.bf16.mxu0 0
    %3251 = vmatpush1.bf16.msra.mxu0 0
    %3252 = vmatprep.subr.bf16.mxu0 0
    %3253 = vmatpush1.bf16.msra.mxu0 0
    %3254 = vmatprep.mubr.bf16.mxu0 0
    %3255 = vmatmul.mubr.bf16.gmra.mrb[0].mxu0 %v2968
    %v3256 = vpop.f32.mrb[0].mxu0
    %v3257 = vadd.f32 %v2878, %v3256
    %v3258 = vpop.f32.mrb[0].mxu0
    %v3259 = vadd.f32 %v2882, %v3258
    %v3260 = vpop.f32.mrb[0].mxu0
    %v3261 = vpop.f32.mrb[0].mxu0
    %3262 = vdwg.mxu0
    %v3270 = vunpack.c.l.b16 %v2711
    %v3271 = vunpack.c.h.b16 %v2711
    %v3272 = vunpack.c.l.b16 %v2712
    %v3273 = vunpack.c.h.b16 %v2712
    %v3274 = vunpack.c.l.b16 %v2713
    %v3275 = vunpack.c.h.b16 %v2713
    %v3276 = vunpack.c.l.b16 %v2714
    %v3277 = vunpack.c.h.b16 %v2714
    %v3278 = vunpack.c.l.b16 %v2715
    %v3279 = vunpack.c.h.b16 %v2715
    %v3280 = vunpack.c.l.b16 %v2716
    %v3281 = vunpack.c.h.b16 %v2716
    %v3282 = vunpack.c.l.b16 %v2717
    %v3283 = vunpack.c.h.b16 %v2717
    %v3284 = vpack.c.b16 %v3272, %v3270
    %v3285 = vpack.c.b16 %v3273, %v3271
    %v3286 = vpack.c.b16 %v3276, %v3274
    %v3287 = vpack.c.b16 %v3277, %v3275
    %v3288 = vpack.c.b16 %v3280, %v3278
    %v3289 = vpack.c.b16 %v3281, %v3279
    %v3290 = vpack.c.b16 %v3282, %v3282
    %v3291 = vpack.c.b16 %v3283, %v3283
    %v3299 = vsel %vm332, %v3290, 0
    %v3302 = vsel %vm332, %v3291, 0
    %3304 = vmatprep.subr.bf16.mxu0 %v3285
    %3305 = vmatpush1.bf16.msra.mxu0 %v3284
    %3306 = vmatprep.subr.bf16.mxu0 %v3287
    %3307 = vmatpush1.bf16.msra.mxu0 %v3286
    %3308 = vmatprep.subr.bf16.mxu0 %v3289
    %3309 = vmatpush1.bf16.msra.mxu0 %v3288
    %3310 = vmatprep.subr.bf16.mxu0 %v3302
    %3311 = vmatpush1.bf16.msra.mxu0 %v3299
    %3312 = vmatprep.subr.bf16.mxu0 0
    %3313 = vmatpush1.bf16.msra.mxu0 0
    %3314 = vmatprep.subr.bf16.mxu0 0
    %3315 = vmatpush1.bf16.msra.mxu0 0
    %3316 = vmatprep.subr.bf16.mxu0 0
    %3317 = vmatpush1.bf16.msra.mxu0 0
    %3318 = vmatprep.subr.bf16.mxu0 0
    %3319 = vmatpush1.bf16.msra.mxu0 0
    %3320 = vmatprep.subr.bf16.mxu0 0
    %3321 = vmatpush1.bf16.msra.mxu0 0
    %3322 = vmatprep.subr.bf16.mxu0 0
    %3323 = vmatpush1.bf16.msra.mxu0 0
    %3324 = vmatprep.subr.bf16.mxu0 0
    %3325 = vmatpush1.bf16.msra.mxu0 0
    %3326 = vmatprep.subr.bf16.mxu0 0
    %3327 = vmatpush1.bf16.msra.mxu0 0
    %3328 = vmatprep.subr.bf16.mxu0 0
    %3329 = vmatpush1.bf16.msra.mxu0 0
    %3330 = vmatprep.subr.bf16.mxu0 0
    %3331 = vmatpush1.bf16.msra.mxu0 0
    %3332 = vmatprep.subr.bf16.mxu0 0
    %3333 = vmatpush1.bf16.msra.mxu0 0
    %3334 = vmatprep.subr.bf16.mxu0 0
    %3335 = vmatpush1.bf16.msra.mxu0 0
    %3336 = vmatprep.mubr.bf16.mxu0 0
    %3337 = vmatmul.mubr.bf16.gmra.mrb[0].mxu0 %v2968
    %v3338 = vpop.f32.mrb[0].mxu0
    %v3339 = vadd.f32 %v2886, %v3338
    %v3340 = vpop.f32.mrb[0].mxu0
    %v3341 = vadd.f32 %v2890, %v3340
    %v3342 = vpop.f32.mrb[0].mxu0
    %v3343 = vpop.f32.mrb[0].mxu0
    %3344 = vdwg.mxu0
    %v3352 = vunpack.c.l.b16 %v2718
    %v3353 = vunpack.c.h.b16 %v2718
    %v3354 = vunpack.c.l.b16 %v2719
    %v3355 = vunpack.c.h.b16 %v2719
    %v3356 = vunpack.c.l.b16 %v2720
    %v3357 = vunpack.c.h.b16 %v2720
    %v3358 = vunpack.c.l.b16 %v2721
    %v3359 = vunpack.c.h.b16 %v2721
    %v3360 = vunpack.c.l.b16 %v2722
    %v3361 = vunpack.c.h.b16 %v2722
    %v3362 = vunpack.c.l.b16 %v2723
    %v3363 = vunpack.c.h.b16 %v2723
    %v3364 = vunpack.c.l.b16 %v2724
    %v3365 = vunpack.c.h.b16 %v2724
    %v3366 = vpack.c.b16 %v3354, %v3352
    %v3367 = vpack.c.b16 %v3355, %v3353
    %v3368 = vpack.c.b16 %v3358, %v3356
    %v3369 = vpack.c.b16 %v3359, %v3357
    %v3370 = vpack.c.b16 %v3362, %v3360
    %v3371 = vpack.c.b16 %v3363, %v3361
    %v3372 = vpack.c.b16 %v3364, %v3364
    %v3373 = vpack.c.b16 %v3365, %v3365
    %v3381 = vsel %vm332, %v3372, 0
    %v3384 = vsel %vm332, %v3373, 0
    %3386 = vmatprep.subr.bf16.mxu0 %v3367
    %3387 = vmatpush1.bf16.msra.mxu0 %v3366
    %3388 = vmatprep.subr.bf16.mxu0 %v3369
    %3389 = vmatpush1.bf16.msra.mxu0 %v3368
    %3390 = vmatprep.subr.bf16.mxu0 %v3371
    %3391 = vmatpush1.bf16.msra.mxu0 %v3370
    %3392 = vmatprep.subr.bf16.mxu0 %v3384
    %3393 = vmatpush1.bf16.msra.mxu0 %v3381
    %3394 = vmatprep.subr.bf16.mxu0 0
    %3395 = vmatpush1.bf16.msra.mxu0 0
    %3396 = vmatprep.subr.bf16.mxu0 0
    %3397 = vmatpush1.bf16.msra.mxu0 0
    %3398 = vmatprep.subr.bf16.mxu0 0
    %3399 = vmatpush1.bf16.msra.mxu0 0
    %3400 = vmatprep.subr.bf16.mxu0 0
    %3401 = vmatpush1.bf16.msra.mxu0 0
    %3402 = vmatprep.subr.bf16.mxu0 0
    %3403 = vmatpush1.bf16.msra.mxu0 0
    %3404 = vmatprep.subr.bf16.mxu0 0
    %3405 = vmatpush1.bf16.msra.mxu0 0
    %3406 = vmatprep.subr.bf16.mxu0 0
    %3407 = vmatpush1.bf16.msra.mxu0 0
    %3408 = vmatprep.subr.bf16.mxu0 0
    %3409 = vmatpush1.bf16.msra.mxu0 0
    %3410 = vmatprep.subr.bf16.mxu0 0
    %3411 = vmatpush1.bf16.msra.mxu0 0
    %3412 = vmatprep.subr.bf16.mxu0 0
    %3413 = vmatpush1.bf16.msra.mxu0 0
    %3414 = vmatprep.subr.bf16.mxu0 0
    %3415 = vmatpush1.bf16.msra.mxu0 0
    %3416 = vmatprep.subr.bf16.mxu0 0
    %3417 = vmatpush1.bf16.msra.mxu0 0
    %3418 = vmatprep.mubr.bf16.mxu0 0
    %3419 = vmatmul.mubr.bf16.gmra.mrb[0].mxu0 %v2968
    %v3420 = vpop.f32.mrb[0].mxu0
    %v3421 = vadd.f32 %v2894, %v3420
    %v3422 = vpop.f32.mrb[0].mxu0
    %v3423 = vadd.f32 %v2898, %v3422
    %v3424 = vpop.f32.mrb[0].mxu0
    %v3425 = vpop.f32.mrb[0].mxu0
    %3426 = vdwg.mxu0
    %v3434 = vunpack.c.l.b16 %v2725
    %v3435 = vunpack.c.h.b16 %v2725
    %v3436 = vunpack.c.l.b16 %v2726
    %v3437 = vunpack.c.h.b16 %v2726
    %v3438 = vunpack.c.l.b16 %v2727
    %v3439 = vunpack.c.h.b16 %v2727
    %v3440 = vunpack.c.l.b16 %v2728
    %v3441 = vunpack.c.h.b16 %v2728
    %v3442 = vunpack.c.l.b16 %v2729
    %v3443 = vunpack.c.h.b16 %v2729
    %v3444 = vunpack.c.l.b16 %v2730
    %v3445 = vunpack.c.h.b16 %v2730
    %v3446 = vunpack.c.l.b16 %v2731
    %v3447 = vunpack.c.h.b16 %v2731
    %v3448 = vpack.c.b16 %v3436, %v3434
    %v3449 = vpack.c.b16 %v3437, %v3435
    %v3450 = vpack.c.b16 %v3440, %v3438
    %v3451 = vpack.c.b16 %v3441, %v3439
    %v3452 = vpack.c.b16 %v3444, %v3442
    %v3453 = vpack.c.b16 %v3445, %v3443
    %v3454 = vpack.c.b16 %v3446, %v3446
    %v3455 = vpack.c.b16 %v3447, %v3447
    %v3463 = vsel %vm332, %v3454, 0
    %v3466 = vsel %vm332, %v3455, 0
    %3468 = vmatprep.subr.bf16.mxu0 %v3449
    %3469 = vmatpush1.bf16.msra.mxu0 %v3448
    %3470 = vmatprep.subr.bf16.mxu0 %v3451
    %3471 = vmatpush1.bf16.msra.mxu0 %v3450
    %3472 = vmatprep.subr.bf16.mxu0 %v3453
    %3473 = vmatpush1.bf16.msra.mxu0 %v3452
    %3474 = vmatprep.subr.bf16.mxu0 %v3466
    %3475 = vmatpush1.bf16.msra.mxu0 %v3463
    %3476 = vmatprep.subr.bf16.mxu0 0
    %3477 = vmatpush1.bf16.msra.mxu0 0
    %3478 = vmatprep.subr.bf16.mxu0 0
    %3479 = vmatpush1.bf16.msra.mxu0 0
    %3480 = vmatprep.subr.bf16.mxu0 0
    %3481 = vmatpush1.bf16.msra.mxu0 0
    %3482 = vmatprep.subr.bf16.mxu0 0
    %3483 = vmatpush1.bf16.msra.mxu0 0
    %3484 = vmatprep.subr.bf16.mxu0 0
    %3485 = vmatpush1.bf16.msra.mxu0 0
    %3486 = vmatprep.subr.bf16.mxu0 0
    %3487 = vmatpush1.bf16.msra.mxu0 0
    %3488 = vmatprep.subr.bf16.mxu0 0
    %3489 = vmatpush1.bf16.msra.mxu0 0
    %3490 = vmatprep.subr.bf16.mxu0 0
    %3491 = vmatpush1.bf16.msra.mxu0 0
    %3492 = vmatprep.subr.bf16.mxu0 0
    %3493 = vmatpush1.bf16.msra.mxu0 0
    %3494 = vmatprep.subr.bf16.mxu0 0
    %3495 = vmatpush1.bf16.msra.mxu0 0
    %3496 = vmatprep.subr.bf16.mxu0 0
    %3497 = vmatpush1.bf16.msra.mxu0 0
    %3498 = vmatprep.subr.bf16.mxu0 0
    %3499 = vmatpush1.bf16.msra.mxu0 0
    %3500 = vmatprep.mubr.bf16.mxu0 0
    %3501 = vmatmul.mubr.bf16.gmra.mrb[0].mxu0 %v2968
    %v3502 = vpop.f32.mrb[0].mxu0
    %v3503 = vadd.f32 %v2902, %v3502
    %v3504 = vpop.f32.mrb[0].mxu0
    %v3505 = vadd.f32 %v2906, %v3504
    %v3506 = vpop.f32.mrb[0].mxu0
    %v3507 = vpop.f32.mrb[0].mxu0
    %3508 = vdwg.mxu0
    %v3516 = vunpack.c.l.b16 %v2732
    %v3517 = vunpack.c.h.b16 %v2732
    %v3518 = vunpack.c.l.b16 %v2733
    %v3519 = vunpack.c.h.b16 %v2733
    %v3520 = vunpack.c.l.b16 %v2734
    %v3521 = vunpack.c.h.b16 %v2734
    %v3522 = vunpack.c.l.b16 %v2735
    %v3523 = vunpack.c.h.b16 %v2735
    %v3524 = vunpack.c.l.b16 %v2736
    %v3525 = vunpack.c.h.b16 %v2736
    %v3526 = vunpack.c.l.b16 %v2737
    %v3527 = vunpack.c.h.b16 %v2737
    %v3528 = vunpack.c.l.b16 %v2738
    %v3529 = vunpack.c.h.b16 %v2738
    %v3530 = vpack.c.b16 %v3518, %v3516
    %v3531 = vpack.c.b16 %v3519, %v3517
    %v3532 = vpack.c.b16 %v3522, %v3520
    %v3533 = vpack.c.b16 %v3523, %v3521
    %v3534 = vpack.c.b16 %v3526, %v3524
    %v3535 = vpack.c.b16 %v3527, %v3525
    %v3536 = vpack.c.b16 %v3528, %v3528
    %v3537 = vpack.c.b16 %v3529, %v3529
    %v3545 = vsel %vm332, %v3536, 0
    %v3548 = vsel %vm332, %v3537, 0
    %3550 = vmatprep.subr.bf16.mxu0 %v3531
    %3551 = vmatpush1.bf16.msra.mxu0 %v3530
    %3552 = vmatprep.subr.bf16.mxu0 %v3533
    %3553 = vmatpush1.bf16.msra.mxu0 %v3532
    %3554 = vmatprep.subr.bf16.mxu0 %v3535
    %3555 = vmatpush1.bf16.msra.mxu0 %v3534
    %3556 = vmatprep.subr.bf16.mxu0 %v3548
    %3557 = vmatpush1.bf16.msra.mxu0 %v3545
    %3558 = vmatprep.subr.bf16.mxu0 0
    %3559 = vmatpush1.bf16.msra.mxu0 0
    %3560 = vmatprep.subr.bf16.mxu0 0
    %3561 = vmatpush1.bf16.msra.mxu0 0
    %3562 = vmatprep.subr.bf16.mxu0 0
    %3563 = vmatpush1.bf16.msra.mxu0 0
    %3564 = vmatprep.subr.bf16.mxu0 0
    %3565 = vmatpush1.bf16.msra.mxu0 0
    %3566 = vmatprep.subr.bf16.mxu0 0
    %3567 = vmatpush1.bf16.msra.mxu0 0
    %3568 = vmatprep.subr.bf16.mxu0 0
    %3569 = vmatpush1.bf16.msra.mxu0 0
    %3570 = vmatprep.subr.bf16.mxu0 0
    %3571 = vmatpush1.bf16.msra.mxu0 0
    %3572 = vmatprep.subr.bf16.mxu0 0
    %3573 = vmatpush1.bf16.msra.mxu0 0
    %3574 = vmatprep.subr.bf16.mxu0 0
    %3575 = vmatpush1.bf16.msra.mxu0 0
    %3576 = vmatprep.subr.bf16.mxu0 0
    %3577 = vmatpush1.bf16.msra.mxu0 0
    %3578 = vmatprep.subr.bf16.mxu0 0
    %3579 = vmatpush1.bf16.msra.mxu0 0
    %3580 = vmatprep.subr.bf16.mxu0 0
    %3581 = vmatpush1.bf16.msra.mxu0 0
    %3582 = vmatprep.mubr.bf16.mxu0 0
    %3583 = vmatmul.mubr.bf16.gmra.mrb[0].mxu0 %v2968
    %v3584 = vpop.f32.mrb[0].mxu0
    %v3585 = vadd.f32 %v2910, %v3584
    %v3586 = vpop.f32.mrb[0].mxu0
    %v3587 = vadd.f32 %v2914, %v3586
    %v3588 = vpop.f32.mrb[0].mxu0
    %v3589 = vpop.f32.mrb[0].mxu0
    %3590 = vdwg.mxu0
    %v3591 = vmul.f32 %v3011, 0.14142136
    %v3592 = vmul.f32 %v3093, 0.14142136
    %v3593 = vmul.f32 %v3175, 0.14142136
    %v3594 = vmul.f32 %v3257, 0.14142136
    %v3595 = vmul.f32 %v3339, 0.14142136
    %v3596 = vmul.f32 %v3421, 0.14142136
    %v3597 = vmul.f32 %v3503, 0.14142136
    %v3598 = vmul.f32 %v3585, 0.14142136
    %v3599 = vpack.c.bf16 %v3591, %v3591
    %v3600 = vpack.c.bf16 %v3592, %v3592
    %v3601 = vpack.c.bf16 %v3593, %v3593
    %v3602 = vpack.c.bf16 %v3594, %v3594
    %v3603 = vpack.c.bf16 %v3595, %v3595
    %v3604 = vpack.c.bf16 %v3596, %v3596
    %v3605 = vpack.c.bf16 %v3597, %v3597
    %v3606 = vpack.c.bf16 %v3598, %v3598
    %v3607 = vpack.c.bf16 %v3011, %v3011
    %v3608 = vpack.c.bf16 %v3093, %v3093
    %v3609 = vpack.c.bf16 %v3175, %v3175
    %v3610 = vpack.c.bf16 %v3257, %v3257
    %v3611 = vpack.c.bf16 %v3339, %v3339
    %v3612 = vpack.c.bf16 %v3421, %v3421
    %v3613 = vpack.c.bf16 %v3503, %v3503
    %v3614 = vpack.c.bf16 %v3585, %v3585
    %v3615 = vpack.c.bf16 %v3013, %v3013
    %v3616 = vpack.c.bf16 %v3095, %v3095
    %v3617 = vpack.c.bf16 %v3177, %v3177
    %v3618 = vpack.c.bf16 %v3259, %v3259
    %v3619 = vpack.c.bf16 %v3341, %v3341
    %v3620 = vpack.c.bf16 %v3423, %v3423
    %v3621 = vpack.c.bf16 %v3505, %v3505
    %v3622 = vpack.c.bf16 %v3587, %v3587
    %3624 = vrot.lane.b32.xlu0 %v3607, 78
    %v3625 = vpop.permute.xlu0 %3624
    %v3627 = vsel %vm328, %v3599, 0
    %v3630 = vsel %vm328, %v3625, 0
    %3632 = vmatprep.subr.bf16.mxu0 0
    %3633 = vmatpush1.bf16.xpose.msra.mxu0 %v3630
    %3634 = vmatprep.subr.bf16.mxu0 0
    %3635 = vmatpush1.bf16.xpose.msra.mxu0 0
    %3636 = vmatprep.subr.bf16.mxu0 0
    %3637 = vmatpush1.bf16.xpose.msra.mxu0 0
    %3638 = vmatprep.subr.bf16.mxu0 0
    %3639 = vmatpush1.bf16.xpose.msra.mxu0 0
    %3640 = vmatprep.subr.bf16.mxu0 0
    %3641 = vmatpush1.bf16.xpose.msra.mxu0 0
    %3642 = vmatprep.subr.bf16.mxu0 0
    %3643 = vmatpush1.bf16.xpose.msra.mxu0 0
    %3644 = vmatprep.subr.bf16.mxu0 0
    %3645 = vmatpush1.bf16.xpose.msra.mxu0 0
    %3646 = vmatprep.subr.bf16.mxu0 0
    %3647 = vmatpush1.bf16.xpose.msra.mxu0 0
    %3648 = vmatprep.subr.bf16.mxu0 0
    %3649 = vmatpush1.bf16.xpose.msra.mxu0 0
    %3650 = vmatprep.subr.bf16.mxu0 0
    %3651 = vmatpush1.bf16.xpose.msra.mxu0 0
    %3652 = vmatprep.subr.bf16.mxu0 0
    %3653 = vmatpush1.bf16.xpose.msra.mxu0 0
    %3654 = vmatprep.subr.bf16.mxu0 0
    %3655 = vmatpush1.bf16.xpose.msra.mxu0 0
    %3656 = vmatprep.subr.bf16.mxu0 0
    %3657 = vmatpush1.bf16.xpose.msra.mxu0 0
    %3658 = vmatprep.subr.bf16.mxu0 0
    %3659 = vmatpush1.bf16.xpose.msra.mxu0 0
    %3660 = vmatprep.subr.bf16.mxu0 0
    %3661 = vmatpush1.bf16.xpose.msra.mxu0 0
    %3662 = vmatprep.subr.bf16.mxu0 0
    %3663 = vmatpush1.bf16.xpose.msra.mxu0 0
    %3664 = vmatprep.mubr.bf16.mxu0 0
    %3665 = vmatmul.mubr.bf16.gmra.mrb[0].mxu0 %v3627
    %v3666 = vpop.f32.mrb[0].mxu0
    %v3667 = vadd.f32 0.0, %v3666
    %v3668 = vpop.f32.mrb[0].mxu0
    %v3669 = vpop.f32.mrb[0].mxu0
    %v3670 = vpop.f32.mrb[0].mxu0
    %3671 = vdwg.mxu0
    %3673 = vrot.lane.b32.xlu0 %v3608, 78
    %v3674 = vpop.permute.xlu0 %3673
    %v3676 = vsel %vm328, %v3600, 0
    %v3679 = vsel %vm328, %v3674, 0
    %3681 = vmatprep.subr.bf16.mxu0 0
    %3682 = vmatpush1.bf16.xpose.msra.mxu0 %v3679
    %3683 = vmatprep.subr.bf16.mxu0 0
    %3684 = vmatpush1.bf16.xpose.msra.mxu0 0
    %3685 = vmatprep.subr.bf16.mxu0 0
    %3686 = vmatpush1.bf16.xpose.msra.mxu0 0
    %3687 = vmatprep.subr.bf16.mxu0 0
    %3688 = vmatpush1.bf16.xpose.msra.mxu0 0
    %3689 = vmatprep.subr.bf16.mxu0 0
    %3690 = vmatpush1.bf16.xpose.msra.mxu0 0
    %3691 = vmatprep.subr.bf16.mxu0 0
    %3692 = vmatpush1.bf16.xpose.msra.mxu0 0
    %3693 = vmatprep.subr.bf16.mxu0 0
    %3694 = vmatpush1.bf16.xpose.msra.mxu0 0
    %3695 = vmatprep.subr.bf16.mxu0 0
    %3696 = vmatpush1.bf16.xpose.msra.mxu0 0
    %3697 = vmatprep.subr.bf16.mxu0 0
    %3698 = vmatpush1.bf16.xpose.msra.mxu0 0
    %3699 = vmatprep.subr.bf16.mxu0 0
    %3700 = vmatpush1.bf16.xpose.msra.mxu0 0
    %3701 = vmatprep.subr.bf16.mxu0 0
    %3702 = vmatpush1.bf16.xpose.msra.mxu0 0
    %3703 = vmatprep.subr.bf16.mxu0 0
    %3704 = vmatpush1.bf16.xpose.msra.mxu0 0
    %3705 = vmatprep.subr.bf16.mxu0 0
    %3706 = vmatpush1.bf16.xpose.msra.mxu0 0
    %3707 = vmatprep.subr.bf16.mxu0 0
    %3708 = vmatpush1.bf16.xpose.msra.mxu0 0
    %3709 = vmatprep.subr.bf16.mxu0 0
    %3710 = vmatpush1.bf16.xpose.msra.mxu0 0
    %3711 = vmatprep.subr.bf16.mxu0 0
    %3712 = vmatpush1.bf16.xpose.msra.mxu0 0
    %3713 = vmatprep.mubr.bf16.mxu0 0
    %3714 = vmatmul.mubr.bf16.gmra.mrb[0].mxu0 %v3676
    %v3715 = vpop.f32.mrb[0].mxu0
    %v3716 = vadd.f32 0.0, %v3715
    %v3717 = vpop.f32.mrb[0].mxu0
    %v3718 = vpop.f32.mrb[0].mxu0
    %v3719 = vpop.f32.mrb[0].mxu0
    %3720 = vdwg.mxu0
    %3722 = vrot.lane.b32.xlu0 %v3609, 78
    %v3723 = vpop.permute.xlu0 %3722
    %v3725 = vsel %vm328, %v3601, 0
    %v3728 = vsel %vm328, %v3723, 0
    %3730 = vmatprep.subr.bf16.mxu0 0
    %3731 = vmatpush1.bf16.xpose.msra.mxu0 %v3728
    %3732 = vmatprep.subr.bf16.mxu0 0
    %3733 = vmatpush1.bf16.xpose.msra.mxu0 0
    %3734 = vmatprep.subr.bf16.mxu0 0
    %3735 = vmatpush1.bf16.xpose.msra.mxu0 0
    %3736 = vmatprep.subr.bf16.mxu0 0
    %3737 = vmatpush1.bf16.xpose.msra.mxu0 0
    %3738 = vmatprep.subr.bf16.mxu0 0
    %3739 = vmatpush1.bf16.xpose.msra.mxu0 0
    %3740 = vmatprep.subr.bf16.mxu0 0
    %3741 = vmatpush1.bf16.xpose.msra.mxu0 0
    %3742 = vmatprep.subr.bf16.mxu0 0
    %3743 = vmatpush1.bf16.xpose.msra.mxu0 0
    %3744 = vmatprep.subr.bf16.mxu0 0
    %3745 = vmatpush1.bf16.xpose.msra.mxu0 0
    %3746 = vmatprep.subr.bf16.mxu0 0
    %3747 = vmatpush1.bf16.xpose.msra.mxu0 0
    %3748 = vmatprep.subr.bf16.mxu0 0
    %3749 = vmatpush1.bf16.xpose.msra.mxu0 0
    %3750 = vmatprep.subr.bf16.mxu0 0
    %3751 = vmatpush1.bf16.xpose.msra.mxu0 0
    %3752 = vmatprep.subr.bf16.mxu0 0
    %3753 = vmatpush1.bf16.xpose.msra.mxu0 0
    %3754 = vmatprep.subr.bf16.mxu0 0
    %3755 = vmatpush1.bf16.xpose.msra.mxu0 0
    %3756 = vmatprep.subr.bf16.mxu0 0
    %3757 = vmatpush1.bf16.xpose.msra.mxu0 0
    %3758 = vmatprep.subr.bf16.mxu0 0
    %3759 = vmatpush1.bf16.xpose.msra.mxu0 0
    %3760 = vmatprep.subr.bf16.mxu0 0
    %3761 = vmatpush1.bf16.xpose.msra.mxu0 0
    %3762 = vmatprep.mubr.bf16.mxu0 0
    %3763 = vmatmul.mubr.bf16.gmra.mrb[0].mxu0 %v3725
    %v3764 = vpop.f32.mrb[0].mxu0
    %v3765 = vadd.f32 0.0, %v3764
    %v3766 = vpop.f32.mrb[0].mxu0
    %v3767 = vpop.f32.mrb[0].mxu0
    %v3768 = vpop.f32.mrb[0].mxu0
    %3769 = vdwg.mxu0
    %3771 = vrot.lane.b32.xlu0 %v3610, 78
    %v3772 = vpop.permute.xlu0 %3771
    %v3774 = vsel %vm328, %v3602, 0
    %v3777 = vsel %vm328, %v3772, 0
    %3779 = vmatprep.subr.bf16.mxu0 0
    %3780 = vmatpush1.bf16.xpose.msra.mxu0 %v3777
    %3781 = vmatprep.subr.bf16.mxu0 0
    %3782 = vmatpush1.bf16.xpose.msra.mxu0 0
    %3783 = vmatprep.subr.bf16.mxu0 0
    %3784 = vmatpush1.bf16.xpose.msra.mxu0 0
    %3785 = vmatprep.subr.bf16.mxu0 0
    %3786 = vmatpush1.bf16.xpose.msra.mxu0 0
    %3787 = vmatprep.subr.bf16.mxu0 0
    %3788 = vmatpush1.bf16.xpose.msra.mxu0 0
    %3789 = vmatprep.subr.bf16.mxu0 0
    %3790 = vmatpush1.bf16.xpose.msra.mxu0 0
    %3791 = vmatprep.subr.bf16.mxu0 0
    %3792 = vmatpush1.bf16.xpose.msra.mxu0 0
    %3793 = vmatprep.subr.bf16.mxu0 0
    %3794 = vmatpush1.bf16.xpose.msra.mxu0 0
    %3795 = vmatprep.subr.bf16.mxu0 0
    %3796 = vmatpush1.bf16.xpose.msra.mxu0 0
    %3797 = vmatprep.subr.bf16.mxu0 0
    %3798 = vmatpush1.bf16.xpose.msra.mxu0 0
    %3799 = vmatprep.subr.bf16.mxu0 0
    %3800 = vmatpush1.bf16.xpose.msra.mxu0 0
    %3801 = vmatprep.subr.bf16.mxu0 0
    %3802 = vmatpush1.bf16.xpose.msra.mxu0 0
    %3803 = vmatprep.subr.bf16.mxu0 0
    %3804 = vmatpush1.bf16.xpose.msra.mxu0 0
    %3805 = vmatprep.subr.bf16.mxu0 0
    %3806 = vmatpush1.bf16.xpose.msra.mxu0 0
    %3807 = vmatprep.subr.bf16.mxu0 0
    %3808 = vmatpush1.bf16.xpose.msra.mxu0 0
    %3809 = vmatprep.subr.bf16.mxu0 0
    %3810 = vmatpush1.bf16.xpose.msra.mxu0 0
    %3811 = vmatprep.mubr.bf16.mxu0 0
    %3812 = vmatmul.mubr.bf16.gmra.mrb[0].mxu0 %v3774
    %v3813 = vpop.f32.mrb[0].mxu0
    %v3814 = vadd.f32 0.0, %v3813
    %v3815 = vpop.f32.mrb[0].mxu0
    %v3816 = vpop.f32.mrb[0].mxu0
    %v3817 = vpop.f32.mrb[0].mxu0
    %3818 = vdwg.mxu0
    %3820 = vrot.lane.b32.xlu0 %v3611, 78
    %v3821 = vpop.permute.xlu0 %3820
    %v3823 = vsel %vm328, %v3603, 0
    %v3826 = vsel %vm328, %v3821, 0
    %3828 = vmatprep.subr.bf16.mxu0 0
    %3829 = vmatpush1.bf16.xpose.msra.mxu0 %v3826
    %3830 = vmatprep.subr.bf16.mxu0 0
    %3831 = vmatpush1.bf16.xpose.msra.mxu0 0
    %3832 = vmatprep.subr.bf16.mxu0 0
    %3833 = vmatpush1.bf16.xpose.msra.mxu0 0
    %3834 = vmatprep.subr.bf16.mxu0 0
    %3835 = vmatpush1.bf16.xpose.msra.mxu0 0
    %3836 = vmatprep.subr.bf16.mxu0 0
    %3837 = vmatpush1.bf16.xpose.msra.mxu0 0
    %3838 = vmatprep.subr.bf16.mxu0 0
    %3839 = vmatpush1.bf16.xpose.msra.mxu0 0
    %3840 = vmatprep.subr.bf16.mxu0 0
    %3841 = vmatpush1.bf16.xpose.msra.mxu0 0
    %3842 = vmatprep.subr.bf16.mxu0 0
    %3843 = vmatpush1.bf16.xpose.msra.mxu0 0
    %3844 = vmatprep.subr.bf16.mxu0 0
    %3845 = vmatpush1.bf16.xpose.msra.mxu0 0
    %3846 = vmatprep.subr.bf16.mxu0 0
    %3847 = vmatpush1.bf16.xpose.msra.mxu0 0
    %3848 = vmatprep.subr.bf16.mxu0 0
    %3849 = vmatpush1.bf16.xpose.msra.mxu0 0
    %3850 = vmatprep.subr.bf16.mxu0 0
    %3851 = vmatpush1.bf16.xpose.msra.mxu0 0
    %3852 = vmatprep.subr.bf16.mxu0 0
    %3853 = vmatpush1.bf16.xpose.msra.mxu0 0
    %3854 = vmatprep.subr.bf16.mxu0 0
    %3855 = vmatpush1.bf16.xpose.msra.mxu0 0
    %3856 = vmatprep.subr.bf16.mxu0 0
    %3857 = vmatpush1.bf16.xpose.msra.mxu0 0
    %3858 = vmatprep.subr.bf16.mxu0 0
    %3859 = vmatpush1.bf16.xpose.msra.mxu0 0
    %3860 = vmatprep.mubr.bf16.mxu0 0
    %3861 = vmatmul.mubr.bf16.gmra.mrb[0].mxu0 %v3823
    %v3862 = vpop.f32.mrb[0].mxu0
    %v3863 = vadd.f32 0.0, %v3862
    %v3864 = vpop.f32.mrb[0].mxu0
    %v3865 = vpop.f32.mrb[0].mxu0
    %v3866 = vpop.f32.mrb[0].mxu0
    %3867 = vdwg.mxu0
    %3869 = vrot.lane.b32.xlu0 %v3612, 78
    %v3870 = vpop.permute.xlu0 %3869
    %v3872 = vsel %vm328, %v3604, 0
    %v3875 = vsel %vm328, %v3870, 0
    %3877 = vmatprep.subr.bf16.mxu0 0
    %3878 = vmatpush1.bf16.xpose.msra.mxu0 %v3875
    %3879 = vmatprep.subr.bf16.mxu0 0
    %3880 = vmatpush1.bf16.xpose.msra.mxu0 0
    %3881 = vmatprep.subr.bf16.mxu0 0
    %3882 = vmatpush1.bf16.xpose.msra.mxu0 0
    %3883 = vmatprep.subr.bf16.mxu0 0
    %3884 = vmatpush1.bf16.xpose.msra.mxu0 0
    %3885 = vmatprep.subr.bf16.mxu0 0
    %3886 = vmatpush1.bf16.xpose.msra.mxu0 0
    %3887 = vmatprep.subr.bf16.mxu0 0
    %3888 = vmatpush1.bf16.xpose.msra.mxu0 0
    %3889 = vmatprep.subr.bf16.mxu0 0
    %3890 = vmatpush1.bf16.xpose.msra.mxu0 0
    %3891 = vmatprep.subr.bf16.mxu0 0
    %3892 = vmatpush1.bf16.xpose.msra.mxu0 0
    %3893 = vmatprep.subr.bf16.mxu0 0
    %3894 = vmatpush1.bf16.xpose.msra.mxu0 0
    %3895 = vmatprep.subr.bf16.mxu0 0
    %3896 = vmatpush1.bf16.xpose.msra.mxu0 0
    %3897 = vmatprep.subr.bf16.mxu0 0
    %3898 = vmatpush1.bf16.xpose.msra.mxu0 0
    %3899 = vmatprep.subr.bf16.mxu0 0
    %3900 = vmatpush1.bf16.xpose.msra.mxu0 0
    %3901 = vmatprep.subr.bf16.mxu0 0
    %3902 = vmatpush1.bf16.xpose.msra.mxu0 0
    %3903 = vmatprep.subr.bf16.mxu0 0
    %3904 = vmatpush1.bf16.xpose.msra.mxu0 0
    %3905 = vmatprep.subr.bf16.mxu0 0
    %3906 = vmatpush1.bf16.xpose.msra.mxu0 0
    %3907 = vmatprep.subr.bf16.mxu0 0
    %3908 = vmatpush1.bf16.xpose.msra.mxu0 0
    %3909 = vmatprep.mubr.bf16.mxu0 0
    %3910 = vmatmul.mubr.bf16.gmra.mrb[0].mxu0 %v3872
    %v3911 = vpop.f32.mrb[0].mxu0
    %v3912 = vadd.f32 0.0, %v3911
    %v3913 = vpop.f32.mrb[0].mxu0
    %v3914 = vpop.f32.mrb[0].mxu0
    %v3915 = vpop.f32.mrb[0].mxu0
    %3916 = vdwg.mxu0
    %3918 = vrot.lane.b32.xlu0 %v3613, 78
    %v3919 = vpop.permute.xlu0 %3918
    %v3921 = vsel %vm328, %v3605, 0
    %v3924 = vsel %vm328, %v3919, 0
    %3926 = vmatprep.subr.bf16.mxu0 0
    %3927 = vmatpush1.bf16.xpose.msra.mxu0 %v3924
    %3928 = vmatprep.subr.bf16.mxu0 0
    %3929 = vmatpush1.bf16.xpose.msra.mxu0 0
    %3930 = vmatprep.subr.bf16.mxu0 0
    %3931 = vmatpush1.bf16.xpose.msra.mxu0 0
    %3932 = vmatprep.subr.bf16.mxu0 0
    %3933 = vmatpush1.bf16.xpose.msra.mxu0 0
    %3934 = vmatprep.subr.bf16.mxu0 0
    %3935 = vmatpush1.bf16.xpose.msra.mxu0 0
    %3936 = vmatprep.subr.bf16.mxu0 0
    %3937 = vmatpush1.bf16.xpose.msra.mxu0 0
    %3938 = vmatprep.subr.bf16.mxu0 0
    %3939 = vmatpush1.bf16.xpose.msra.mxu0 0
    %3940 = vmatprep.subr.bf16.mxu0 0
    %3941 = vmatpush1.bf16.xpose.msra.mxu0 0
    %3942 = vmatprep.subr.bf16.mxu0 0
    %3943 = vmatpush1.bf16.xpose.msra.mxu0 0
    %3944 = vmatprep.subr.bf16.mxu0 0
    %3945 = vmatpush1.bf16.xpose.msra.mxu0 0
    %3946 = vmatprep.subr.bf16.mxu0 0
    %3947 = vmatpush1.bf16.xpose.msra.mxu0 0
    %3948 = vmatprep.subr.bf16.mxu0 0
    %3949 = vmatpush1.bf16.xpose.msra.mxu0 0
    %3950 = vmatprep.subr.bf16.mxu0 0
    %3951 = vmatpush1.bf16.xpose.msra.mxu0 0
    %3952 = vmatprep.subr.bf16.mxu0 0
    %3953 = vmatpush1.bf16.xpose.msra.mxu0 0
    %3954 = vmatprep.subr.bf16.mxu0 0
    %3955 = vmatpush1.bf16.xpose.msra.mxu0 0
    %3956 = vmatprep.subr.bf16.mxu0 0
    %3957 = vmatpush1.bf16.xpose.msra.mxu0 0
    %3958 = vmatprep.mubr.bf16.mxu0 0
    %3959 = vmatmul.mubr.bf16.gmra.mrb[0].mxu0 %v3921
    %v3960 = vpop.f32.mrb[0].mxu0
    %v3961 = vadd.f32 0.0, %v3960
    %v3962 = vpop.f32.mrb[0].mxu0
    %v3963 = vpop.f32.mrb[0].mxu0
    %v3964 = vpop.f32.mrb[0].mxu0
    %3965 = vdwg.mxu0
    %3967 = vrot.lane.b32.xlu0 %v3614, 78
    %v3968 = vpop.permute.xlu0 %3967
    %v3970 = vsel %vm328, %v3606, 0
    %v3973 = vsel %vm328, %v3968, 0
    %3975 = vmatprep.subr.bf16.mxu0 0
    %3976 = vmatpush1.bf16.xpose.msra.mxu0 %v3973
    %3977 = vmatprep.subr.bf16.mxu0 0
    %3978 = vmatpush1.bf16.xpose.msra.mxu0 0
    %3979 = vmatprep.subr.bf16.mxu0 0
    %3980 = vmatpush1.bf16.xpose.msra.mxu0 0
    %3981 = vmatprep.subr.bf16.mxu0 0
    %3982 = vmatpush1.bf16.xpose.msra.mxu0 0
    %3983 = vmatprep.subr.bf16.mxu0 0
    %3984 = vmatpush1.bf16.xpose.msra.mxu0 0
    %3985 = vmatprep.subr.bf16.mxu0 0
    %3986 = vmatpush1.bf16.xpose.msra.mxu0 0
    %3987 = vmatprep.subr.bf16.mxu0 0
    %3988 = vmatpush1.bf16.xpose.msra.mxu0 0
    %3989 = vmatprep.subr.bf16.mxu0 0
    %3990 = vmatpush1.bf16.xpose.msra.mxu0 0
    %3991 = vmatprep.subr.bf16.mxu0 0
    %3992 = vmatpush1.bf16.xpose.msra.mxu0 0
    %3993 = vmatprep.subr.bf16.mxu0 0
    %3994 = vmatpush1.bf16.xpose.msra.mxu0 0
    %3995 = vmatprep.subr.bf16.mxu0 0
    %3996 = vmatpush1.bf16.xpose.msra.mxu0 0
    %3997 = vmatprep.subr.bf16.mxu0 0
    %3998 = vmatpush1.bf16.xpose.msra.mxu0 0
    %3999 = vmatprep.subr.bf16.mxu0 0
    %4000 = vmatpush1.bf16.xpose.msra.mxu0 0
    %4001 = vmatprep.subr.bf16.mxu0 0
    %4002 = vmatpush1.bf16.xpose.msra.mxu0 0
    %4003 = vmatprep.subr.bf16.mxu0 0
    %4004 = vmatpush1.bf16.xpose.msra.mxu0 0
    %4005 = vmatprep.subr.bf16.mxu0 0
    %4006 = vmatpush1.bf16.xpose.msra.mxu0 0
    %4007 = vmatprep.mubr.bf16.mxu0 0
    %4008 = vmatmul.mubr.bf16.gmra.mrb[0].mxu0 %v3970
    %v4009 = vpop.f32.mrb[0].mxu0
    %v4010 = vadd.f32 0.0, %v4009
    %v4011 = vpop.f32.mrb[0].mxu0
    %v4012 = vpop.f32.mrb[0].mxu0
    %v4013 = vpop.f32.mrb[0].mxu0
    %4014 = vdwg.mxu0
    %v4015 = vsel %vm38, 1, 0
    %vm4016 = vcmp.eq.s32.totalorder %v4015, 1
    %v4017 = vsel %vm4016, %v3667, -1e+09
    %v4018 = vsel %vm4016, %v3716, -1e+09
    %v4019 = vsel %vm4016, %v3765, -1e+09
    %v4020 = vsel %vm4016, %v3814, -1e+09
    %v4021 = vsel %vm4016, %v3863, -1e+09
    %v4022 = vsel %vm4016, %v3912, -1e+09
    %v4023 = vsel %vm4016, %v3961, -1e+09
    %v4024 = vsel %vm4016, %v4010, -1e+09
    %vm4025 = vcmask 18432
    %v4026 = vsel %vm4025, %v4017, -inf
    %4027 = vmax.xlane.f32.xlu0 %v4026
    %v4028 = vpop.xlane.xlu0 %4027
    %v4029 = vsel %vm4025, %v4018, -inf
    %4030 = vmax.xlane.f32.xlu0 %v4029
    %v4031 = vpop.xlane.xlu0 %4030
    %v4032 = vsel %vm4025, %v4019, -inf
    %4033 = vmax.xlane.f32.xlu0 %v4032
    %v4034 = vpop.xlane.xlu0 %4033
    %v4035 = vsel %vm4025, %v4020, -inf
    %4036 = vmax.xlane.f32.xlu0 %v4035
    %v4037 = vpop.xlane.xlu0 %4036
    %v4038 = vsel %vm4025, %v4021, -inf
    %4039 = vmax.xlane.f32.xlu0 %v4038
    %v4040 = vpop.xlane.xlu0 %4039
    %v4041 = vsel %vm4025, %v4022, -inf
    %4042 = vmax.xlane.f32.xlu0 %v4041
    %v4043 = vpop.xlane.xlu0 %4042
    %v4044 = vsel %vm4025, %v4023, -inf
    %4045 = vmax.xlane.f32.xlu0 %v4044
    %v4046 = vpop.xlane.xlu0 %4045
    %v4047 = vsel %vm4025, %v4024, -inf
    %4048 = vmax.xlane.f32.xlu0 %v4047
    %v4049 = vpop.xlane.xlu0 %4048
    %v4050 = vsub.f32 %v4017, %v4028
    %v4051 = vsub.f32 %v4018, %v4031
    %v4052 = vsub.f32 %v4019, %v4034
    %v4053 = vsub.f32 %v4020, %v4037
    %v4054 = vsub.f32 %v4021, %v4040
    %v4055 = vsub.f32 %v4022, %v4043
    %v4056 = vsub.f32 %v4023, %v4046
    %v4057 = vsub.f32 %v4024, %v4049
    %v4058 = vmul.f32 %v4050, 1.442695
    %v4059 = vpow.pop %v4058
    %v4060 = vmul.f32 %v4051, 1.442695
    %v4061 = vpow.pop %v4060
    %v4062 = vmul.f32 %v4052, 1.442695
    %v4063 = vpow.pop %v4062
    %v4064 = vmul.f32 %v4053, 1.442695
    %v4065 = vpow.pop %v4064
    %v4066 = vmul.f32 %v4054, 1.442695
    %v4067 = vpow.pop %v4066
    %v4068 = vmul.f32 %v4055, 1.442695
    %v4069 = vpow.pop %v4068
    %v4070 = vmul.f32 %v4056, 1.442695
    %v4071 = vpow.pop %v4070
    %v4072 = vmul.f32 %v4057, 1.442695
    %v4073 = vpow.pop %v4072
    %v4074 = vsel %vm4025, %v4059, 0.0
    %4075 = vadd.xlane.f32.xlu0 %v4074
    %v4076 = vpop.xlane.xlu0 %4075
    %v4077 = vsel %vm4025, %v4061, 0.0
    %4078 = vadd.xlane.f32.xlu0 %v4077
    %v4079 = vpop.xlane.xlu0 %4078
    %v4080 = vsel %vm4025, %v4063, 0.0
    %4081 = vadd.xlane.f32.xlu0 %v4080
    %v4082 = vpop.xlane.xlu0 %4081
    %v4083 = vsel %vm4025, %v4065, 0.0
    %4084 = vadd.xlane.f32.xlu0 %v4083
    %v4085 = vpop.xlane.xlu0 %4084
    %v4086 = vsel %vm4025, %v4067, 0.0
    %4087 = vadd.xlane.f32.xlu0 %v4086
    %v4088 = vpop.xlane.xlu0 %4087
    %v4089 = vsel %vm4025, %v4069, 0.0
    %4090 = vadd.xlane.f32.xlu0 %v4089
    %v4091 = vpop.xlane.xlu0 %4090
    %v4092 = vsel %vm4025, %v4071, 0.0
    %4093 = vadd.xlane.f32.xlu0 %v4092
    %v4094 = vpop.xlane.xlu0 %4093
    %v4095 = vsel %vm4025, %v4073, 0.0
    %4096 = vadd.xlane.f32.xlu0 %v4095
    %v4097 = vpop.xlane.xlu0 %4096
    %v4098 = vrcp.pop %v4076
    %v4099 = vmul.f32 %v4059, %v4098
    %v4100 = vrcp.pop %v4079
    %v4101 = vmul.f32 %v4061, %v4100
    %v4102 = vrcp.pop %v4082
    %v4103 = vmul.f32 %v4063, %v4102
    %v4104 = vrcp.pop %v4085
    %v4105 = vmul.f32 %v4065, %v4104
    %v4106 = vrcp.pop %v4088
    %v4107 = vmul.f32 %v4067, %v4106
    %v4108 = vrcp.pop %v4091
    %v4109 = vmul.f32 %v4069, %v4108
    %v4110 = vrcp.pop %v4094
    %v4111 = vmul.f32 %v4071, %v4110
    %v4112 = vrcp.pop %v4097
    %v4113 = vmul.f32 %v4073, %v4112
    %v4114 = vpack.c.bf16 %v4099, %v4099
    %v4115 = vpack.c.bf16 %v4101, %v4101
    %v4116 = vpack.c.bf16 %v4103, %v4103
    %v4117 = vpack.c.bf16 %v4105, %v4105
    %v4118 = vpack.c.bf16 %v4107, %v4107
    %v4119 = vpack.c.bf16 %v4109, %v4109
    %v4120 = vpack.c.bf16 %v4111, %v4111
    %v4121 = vpack.c.bf16 %v4113, %v4113
    %4123 = vrot.lane.b32.xlu0 %v3607, 28
    %v4124 = vpop.permute.xlu0 %4123
    %4125 = vrot.lane.b32.xlu0 %v3615, 28
    %v4126 = vpop.permute.xlu0 %4125
    %v4127 = vsel %vm1493, %v4124, %v4126
    %vm4128 = vcmask 23552
    %v4130 = vsel %vm4128, %v4114, 0
    %vm4132 = vcmask 1041408
    %v4133 = vsel %vm332, 4294967295, 65535
    %v4134 = vsel %vm4132, %v4133, 0
    %v4136 = vand.u32 %v4127, %v4134
    %4138 = vmatprep.subr.bf16.mxu0 0
    %4139 = vmatpush1.bf16.msra.mxu0 %v4136
    %4140 = vmatprep.subr.bf16.mxu0 0
    %4141 = vmatpush1.bf16.msra.mxu0 0
    %4142 = vmatprep.subr.bf16.mxu0 0
    %4143 = vmatpush1.bf16.msra.mxu0 0
    %4144 = vmatprep.subr.bf16.mxu0 0
    %4145 = vmatpush1.bf16.msra.mxu0 0
    %4146 = vmatprep.subr.bf16.mxu0 0
    %4147 = vmatpush1.bf16.msra.mxu0 0
    %4148 = vmatprep.subr.bf16.mxu0 0
    %4149 = vmatpush1.bf16.msra.mxu0 0
    %4150 = vmatprep.subr.bf16.mxu0 0
    %4151 = vmatpush1.bf16.msra.mxu0 0
    %4152 = vmatprep.subr.bf16.mxu0 0
    %4153 = vmatpush1.bf16.msra.mxu0 0
    %4154 = vmatprep.subr.bf16.mxu0 0
    %4155 = vmatpush1.bf16.msra.mxu0 0
    %4156 = vmatprep.subr.bf16.mxu0 0
    %4157 = vmatpush1.bf16.msra.mxu0 0
    %4158 = vmatprep.subr.bf16.mxu0 0
    %4159 = vmatpush1.bf16.msra.mxu0 0
    %4160 = vmatprep.subr.bf16.mxu0 0
    %4161 = vmatpush1.bf16.msra.mxu0 0
    %4162 = vmatprep.subr.bf16.mxu0 0
    %4163 = vmatpush1.bf16.msra.mxu0 0
    %4164 = vmatprep.subr.bf16.mxu0 0
    %4165 = vmatpush1.bf16.msra.mxu0 0
    %4166 = vmatprep.subr.bf16.mxu0 0
    %4167 = vmatpush1.bf16.msra.mxu0 0
    %4168 = vmatprep.subr.bf16.mxu0 0
    %4169 = vmatpush1.bf16.msra.mxu0 0
    %4170 = vmatprep.mubr.bf16.mxu0 0
    %4171 = vmatmul.mubr.bf16.gmra.mrb[0].mxu0 %v4130
    %v4172 = vpop.f32.mrb[0].mxu0
    %v4173 = vadd.f32 0.0, %v4172
    %v4174 = vpop.f32.mrb[0].mxu0
    %v4175 = vpop.f32.mrb[0].mxu0
    %v4176 = vpop.f32.mrb[0].mxu0
    %4177 = vdwg.mxu0
    %4179 = vrot.lane.b32.xlu0 %v3608, 28
    %v4180 = vpop.permute.xlu0 %4179
    %4181 = vrot.lane.b32.xlu0 %v3616, 28
    %v4182 = vpop.permute.xlu0 %4181
    %v4183 = vsel %vm1493, %v4180, %v4182
    %v4185 = vsel %vm4128, %v4115, 0
    %v4188 = vand.u32 %v4183, %v4134
    %4190 = vmatprep.subr.bf16.mxu0 0
    %4191 = vmatpush1.bf16.msra.mxu0 %v4188
    %4192 = vmatprep.subr.bf16.mxu0 0
    %4193 = vmatpush1.bf16.msra.mxu0 0
    %4194 = vmatprep.subr.bf16.mxu0 0
    %4195 = vmatpush1.bf16.msra.mxu0 0
    %4196 = vmatprep.subr.bf16.mxu0 0
    %4197 = vmatpush1.bf16.msra.mxu0 0
    %4198 = vmatprep.subr.bf16.mxu0 0
    %4199 = vmatpush1.bf16.msra.mxu0 0
    %4200 = vmatprep.subr.bf16.mxu0 0
    %4201 = vmatpush1.bf16.msra.mxu0 0
    %4202 = vmatprep.subr.bf16.mxu0 0
    %4203 = vmatpush1.bf16.msra.mxu0 0
    %4204 = vmatprep.subr.bf16.mxu0 0
    %4205 = vmatpush1.bf16.msra.mxu0 0
    %4206 = vmatprep.subr.bf16.mxu0 0
    %4207 = vmatpush1.bf16.msra.mxu0 0
    %4208 = vmatprep.subr.bf16.mxu0 0
    %4209 = vmatpush1.bf16.msra.mxu0 0
    %4210 = vmatprep.subr.bf16.mxu0 0
    %4211 = vmatpush1.bf16.msra.mxu0 0
    %4212 = vmatprep.subr.bf16.mxu0 0
    %4213 = vmatpush1.bf16.msra.mxu0 0
    %4214 = vmatprep.subr.bf16.mxu0 0
    %4215 = vmatpush1.bf16.msra.mxu0 0
    %4216 = vmatprep.subr.bf16.mxu0 0
    %4217 = vmatpush1.bf16.msra.mxu0 0
    %4218 = vmatprep.subr.bf16.mxu0 0
    %4219 = vmatpush1.bf16.msra.mxu0 0
    %4220 = vmatprep.subr.bf16.mxu0 0
    %4221 = vmatpush1.bf16.msra.mxu0 0
    %4222 = vmatprep.mubr.bf16.mxu0 0
    %4223 = vmatmul.mubr.bf16.gmra.mrb[0].mxu0 %v4185
    %v4224 = vpop.f32.mrb[0].mxu0
    %v4225 = vadd.f32 0.0, %v4224
    %v4226 = vpop.f32.mrb[0].mxu0
    %v4227 = vpop.f32.mrb[0].mxu0
    %v4228 = vpop.f32.mrb[0].mxu0
    %4229 = vdwg.mxu0
    %4231 = vrot.lane.b32.xlu0 %v3609, 28
    %v4232 = vpop.permute.xlu0 %4231
    %4233 = vrot.lane.b32.xlu0 %v3617, 28
    %v4234 = vpop.permute.xlu0 %4233
    %v4235 = vsel %vm1493, %v4232, %v4234
    %v4237 = vsel %vm4128, %v4116, 0
    %v4240 = vand.u32 %v4235, %v4134
    %4242 = vmatprep.subr.bf16.mxu0 0
    %4243 = vmatpush1.bf16.msra.mxu0 %v4240
    %4244 = vmatprep.subr.bf16.mxu0 0
    %4245 = vmatpush1.bf16.msra.mxu0 0
    %4246 = vmatprep.subr.bf16.mxu0 0
    %4247 = vmatpush1.bf16.msra.mxu0 0
    %4248 = vmatprep.subr.bf16.mxu0 0
    %4249 = vmatpush1.bf16.msra.mxu0 0
    %4250 = vmatprep.subr.bf16.mxu0 0
    %4251 = vmatpush1.bf16.msra.mxu0 0
    %4252 = vmatprep.subr.bf16.mxu0 0
    %4253 = vmatpush1.bf16.msra.mxu0 0
    %4254 = vmatprep.subr.bf16.mxu0 0
    %4255 = vmatpush1.bf16.msra.mxu0 0
    %4256 = vmatprep.subr.bf16.mxu0 0
    %4257 = vmatpush1.bf16.msra.mxu0 0
    %4258 = vmatprep.subr.bf16.mxu0 0
    %4259 = vmatpush1.bf16.msra.mxu0 0
    %4260 = vmatprep.subr.bf16.mxu0 0
    %4261 = vmatpush1.bf16.msra.mxu0 0
    %4262 = vmatprep.subr.bf16.mxu0 0
    %4263 = vmatpush1.bf16.msra.mxu0 0
    %4264 = vmatprep.subr.bf16.mxu0 0
    %4265 = vmatpush1.bf16.msra.mxu0 0
    %4266 = vmatprep.subr.bf16.mxu0 0
    %4267 = vmatpush1.bf16.msra.mxu0 0
    %4268 = vmatprep.subr.bf16.mxu0 0
    %4269 = vmatpush1.bf16.msra.mxu0 0
    %4270 = vmatprep.subr.bf16.mxu0 0
    %4271 = vmatpush1.bf16.msra.mxu0 0
    %4272 = vmatprep.subr.bf16.mxu0 0
    %4273 = vmatpush1.bf16.msra.mxu0 0
    %4274 = vmatprep.mubr.bf16.mxu0 0
    %4275 = vmatmul.mubr.bf16.gmra.mrb[0].mxu0 %v4237
    %v4276 = vpop.f32.mrb[0].mxu0
    %v4277 = vadd.f32 0.0, %v4276
    %v4278 = vpop.f32.mrb[0].mxu0
    %v4279 = vpop.f32.mrb[0].mxu0
    %v4280 = vpop.f32.mrb[0].mxu0
    %4281 = vdwg.mxu0
    %4283 = vrot.lane.b32.xlu0 %v3610, 28
    %v4284 = vpop.permute.xlu0 %4283
    %4285 = vrot.lane.b32.xlu0 %v3618, 28
    %v4286 = vpop.permute.xlu0 %4285
    %v4287 = vsel %vm1493, %v4284, %v4286
    %v4289 = vsel %vm4128, %v4117, 0
    %v4292 = vand.u32 %v4287, %v4134
    %4294 = vmatprep.subr.bf16.mxu0 0
    %4295 = vmatpush1.bf16.msra.mxu0 %v4292
    %4296 = vmatprep.subr.bf16.mxu0 0
    %4297 = vmatpush1.bf16.msra.mxu0 0
    %4298 = vmatprep.subr.bf16.mxu0 0
    %4299 = vmatpush1.bf16.msra.mxu0 0
    %4300 = vmatprep.subr.bf16.mxu0 0
    %4301 = vmatpush1.bf16.msra.mxu0 0
    %4302 = vmatprep.subr.bf16.mxu0 0
    %4303 = vmatpush1.bf16.msra.mxu0 0
    %4304 = vmatprep.subr.bf16.mxu0 0
    %4305 = vmatpush1.bf16.msra.mxu0 0
    %4306 = vmatprep.subr.bf16.mxu0 0
    %4307 = vmatpush1.bf16.msra.mxu0 0
    %4308 = vmatprep.subr.bf16.mxu0 0
    %4309 = vmatpush1.bf16.msra.mxu0 0
    %4310 = vmatprep.subr.bf16.mxu0 0
    %4311 = vmatpush1.bf16.msra.mxu0 0
    %4312 = vmatprep.subr.bf16.mxu0 0
    %4313 = vmatpush1.bf16.msra.mxu0 0
    %4314 = vmatprep.subr.bf16.mxu0 0
    %4315 = vmatpush1.bf16.msra.mxu0 0
    %4316 = vmatprep.subr.bf16.mxu0 0
    %4317 = vmatpush1.bf16.msra.mxu0 0
    %4318 = vmatprep.subr.bf16.mxu0 0
    %4319 = vmatpush1.bf16.msra.mxu0 0
    %4320 = vmatprep.subr.bf16.mxu0 0
    %4321 = vmatpush1.bf16.msra.mxu0 0
    %4322 = vmatprep.subr.bf16.mxu0 0
    %4323 = vmatpush1.bf16.msra.mxu0 0
    %4324 = vmatprep.subr.bf16.mxu0 0
    %4325 = vmatpush1.bf16.msra.mxu0 0
    %4326 = vmatprep.mubr.bf16.mxu0 0
    %4327 = vmatmul.mubr.bf16.gmra.mrb[0].mxu0 %v4289
    %v4328 = vpop.f32.mrb[0].mxu0
    %v4329 = vadd.f32 0.0, %v4328
    %v4330 = vpop.f32.mrb[0].mxu0
    %v4331 = vpop.f32.mrb[0].mxu0
    %v4332 = vpop.f32.mrb[0].mxu0
    %4333 = vdwg.mxu0
    %4335 = vrot.lane.b32.xlu0 %v3611, 28
    %v4336 = vpop.permute.xlu0 %4335
    %4337 = vrot.lane.b32.xlu0 %v3619, 28
    %v4338 = vpop.permute.xlu0 %4337
    %v4339 = vsel %vm1493, %v4336, %v4338
    %v4341 = vsel %vm4128, %v4118, 0
    %v4344 = vand.u32 %v4339, %v4134
    %4346 = vmatprep.subr.bf16.mxu0 0
    %4347 = vmatpush1.bf16.msra.mxu0 %v4344
    %4348 = vmatprep.subr.bf16.mxu0 0
    %4349 = vmatpush1.bf16.msra.mxu0 0
    %4350 = vmatprep.subr.bf16.mxu0 0
    %4351 = vmatpush1.bf16.msra.mxu0 0
    %4352 = vmatprep.subr.bf16.mxu0 0
    %4353 = vmatpush1.bf16.msra.mxu0 0
    %4354 = vmatprep.subr.bf16.mxu0 0
    %4355 = vmatpush1.bf16.msra.mxu0 0
    %4356 = vmatprep.subr.bf16.mxu0 0
    %4357 = vmatpush1.bf16.msra.mxu0 0
    %4358 = vmatprep.subr.bf16.mxu0 0
    %4359 = vmatpush1.bf16.msra.mxu0 0
    %4360 = vmatprep.subr.bf16.mxu0 0
    %4361 = vmatpush1.bf16.msra.mxu0 0
    %4362 = vmatprep.subr.bf16.mxu0 0
    %4363 = vmatpush1.bf16.msra.mxu0 0
    %4364 = vmatprep.subr.bf16.mxu0 0
    %4365 = vmatpush1.bf16.msra.mxu0 0
    %4366 = vmatprep.subr.bf16.mxu0 0
    %4367 = vmatpush1.bf16.msra.mxu0 0
    %4368 = vmatprep.subr.bf16.mxu0 0
    %4369 = vmatpush1.bf16.msra.mxu0 0
    %4370 = vmatprep.subr.bf16.mxu0 0
    %4371 = vmatpush1.bf16.msra.mxu0 0
    %4372 = vmatprep.subr.bf16.mxu0 0
    %4373 = vmatpush1.bf16.msra.mxu0 0
    %4374 = vmatprep.subr.bf16.mxu0 0
    %4375 = vmatpush1.bf16.msra.mxu0 0
    %4376 = vmatprep.subr.bf16.mxu0 0
    %4377 = vmatpush1.bf16.msra.mxu0 0
    %4378 = vmatprep.mubr.bf16.mxu0 0
    %4379 = vmatmul.mubr.bf16.gmra.mrb[0].mxu0 %v4341
    %v4380 = vpop.f32.mrb[0].mxu0
    %v4381 = vadd.f32 0.0, %v4380
    %v4382 = vpop.f32.mrb[0].mxu0
    %v4383 = vpop.f32.mrb[0].mxu0
    %v4384 = vpop.f32.mrb[0].mxu0
    %4385 = vdwg.mxu0
    %4387 = vrot.lane.b32.xlu0 %v3612, 28
    %v4388 = vpop.permute.xlu0 %4387
    %4389 = vrot.lane.b32.xlu0 %v3620, 28
    %v4390 = vpop.permute.xlu0 %4389
    %v4391 = vsel %vm1493, %v4388, %v4390
    %v4393 = vsel %vm4128, %v4119, 0
    %v4396 = vand.u32 %v4391, %v4134
    %4398 = vmatprep.subr.bf16.mxu0 0
    %4399 = vmatpush1.bf16.msra.mxu0 %v4396
    %4400 = vmatprep.subr.bf16.mxu0 0
    %4401 = vmatpush1.bf16.msra.mxu0 0
    %4402 = vmatprep.subr.bf16.mxu0 0
    %4403 = vmatpush1.bf16.msra.mxu0 0
    %4404 = vmatprep.subr.bf16.mxu0 0
    %4405 = vmatpush1.bf16.msra.mxu0 0
    %4406 = vmatprep.subr.bf16.mxu0 0
    %4407 = vmatpush1.bf16.msra.mxu0 0
    %4408 = vmatprep.subr.bf16.mxu0 0
    %4409 = vmatpush1.bf16.msra.mxu0 0
    %4410 = vmatprep.subr.bf16.mxu0 0
    %4411 = vmatpush1.bf16.msra.mxu0 0
    %4412 = vmatprep.subr.bf16.mxu0 0
    %4413 = vmatpush1.bf16.msra.mxu0 0
    %4414 = vmatprep.subr.bf16.mxu0 0
    %4415 = vmatpush1.bf16.msra.mxu0 0
    %4416 = vmatprep.subr.bf16.mxu0 0
    %4417 = vmatpush1.bf16.msra.mxu0 0
    %4418 = vmatprep.subr.bf16.mxu0 0
    %4419 = vmatpush1.bf16.msra.mxu0 0
    %4420 = vmatprep.subr.bf16.mxu0 0
    %4421 = vmatpush1.bf16.msra.mxu0 0
    %4422 = vmatprep.subr.bf16.mxu0 0
    %4423 = vmatpush1.bf16.msra.mxu0 0
    %4424 = vmatprep.subr.bf16.mxu0 0
    %4425 = vmatpush1.bf16.msra.mxu0 0
    %4426 = vmatprep.subr.bf16.mxu0 0
    %4427 = vmatpush1.bf16.msra.mxu0 0
    %4428 = vmatprep.subr.bf16.mxu0 0
    %4429 = vmatpush1.bf16.msra.mxu0 0
    %4430 = vmatprep.mubr.bf16.mxu0 0
    %4431 = vmatmul.mubr.bf16.gmra.mrb[0].mxu0 %v4393
    %v4432 = vpop.f32.mrb[0].mxu0
    %v4433 = vadd.f32 0.0, %v4432
    %v4434 = vpop.f32.mrb[0].mxu0
    %v4435 = vpop.f32.mrb[0].mxu0
    %v4436 = vpop.f32.mrb[0].mxu0
    %4437 = vdwg.mxu0
    %4439 = vrot.lane.b32.xlu0 %v3613, 28
    %v4440 = vpop.permute.xlu0 %4439
    %4441 = vrot.lane.b32.xlu0 %v3621, 28
    %v4442 = vpop.permute.xlu0 %4441
    %v4443 = vsel %vm1493, %v4440, %v4442
    %v4445 = vsel %vm4128, %v4120, 0
    %v4448 = vand.u32 %v4443, %v4134
    %4450 = vmatprep.subr.bf16.mxu0 0
    %4451 = vmatpush1.bf16.msra.mxu0 %v4448
    %4452 = vmatprep.subr.bf16.mxu0 0
    %4453 = vmatpush1.bf16.msra.mxu0 0
    %4454 = vmatprep.subr.bf16.mxu0 0
    %4455 = vmatpush1.bf16.msra.mxu0 0
    %4456 = vmatprep.subr.bf16.mxu0 0
    %4457 = vmatpush1.bf16.msra.mxu0 0
    %4458 = vmatprep.subr.bf16.mxu0 0
    %4459 = vmatpush1.bf16.msra.mxu0 0
    %4460 = vmatprep.subr.bf16.mxu0 0
    %4461 = vmatpush1.bf16.msra.mxu0 0
    %4462 = vmatprep.subr.bf16.mxu0 0
    %4463 = vmatpush1.bf16.msra.mxu0 0
    %4464 = vmatprep.subr.bf16.mxu0 0
    %4465 = vmatpush1.bf16.msra.mxu0 0
    %4466 = vmatprep.subr.bf16.mxu0 0
    %4467 = vmatpush1.bf16.msra.mxu0 0
    %4468 = vmatprep.subr.bf16.mxu0 0
    %4469 = vmatpush1.bf16.msra.mxu0 0
    %4470 = vmatprep.subr.bf16.mxu0 0
    %4471 = vmatpush1.bf16.msra.mxu0 0
    %4472 = vmatprep.subr.bf16.mxu0 0
    %4473 = vmatpush1.bf16.msra.mxu0 0
    %4474 = vmatprep.subr.bf16.mxu0 0
    %4475 = vmatpush1.bf16.msra.mxu0 0
    %4476 = vmatprep.subr.bf16.mxu0 0
    %4477 = vmatpush1.bf16.msra.mxu0 0
    %4478 = vmatprep.subr.bf16.mxu0 0
    %4479 = vmatpush1.bf16.msra.mxu0 0
    %4480 = vmatprep.subr.bf16.mxu0 0
    %4481 = vmatpush1.bf16.msra.mxu0 0
    %4482 = vmatprep.mubr.bf16.mxu0 0
    %4483 = vmatmul.mubr.bf16.gmra.mrb[0].mxu0 %v4445
    %v4484 = vpop.f32.mrb[0].mxu0
    %v4485 = vadd.f32 0.0, %v4484
    %v4486 = vpop.f32.mrb[0].mxu0
    %v4487 = vpop.f32.mrb[0].mxu0
    %v4488 = vpop.f32.mrb[0].mxu0
    %4489 = vdwg.mxu0
    %4491 = vrot.lane.b32.xlu0 %v3614, 28
    %v4492 = vpop.permute.xlu0 %4491
    %4493 = vrot.lane.b32.xlu0 %v3622, 28
    %v4494 = vpop.permute.xlu0 %4493
    %v4495 = vsel %vm1493, %v4492, %v4494
    %v4497 = vsel %vm4128, %v4121, 0
    %v4500 = vand.u32 %v4495, %v4134
    %4502 = vmatprep.subr.bf16.mxu0 0
    %4503 = vmatpush1.bf16.msra.mxu0 %v4500
    %4504 = vmatprep.subr.bf16.mxu0 0
    %4505 = vmatpush1.bf16.msra.mxu0 0
    %4506 = vmatprep.subr.bf16.mxu0 0
    %4507 = vmatpush1.bf16.msra.mxu0 0
    %4508 = vmatprep.subr.bf16.mxu0 0
    %4509 = vmatpush1.bf16.msra.mxu0 0
    %4510 = vmatprep.subr.bf16.mxu0 0
    %4511 = vmatpush1.bf16.msra.mxu0 0
    %4512 = vmatprep.subr.bf16.mxu0 0
    %4513 = vmatpush1.bf16.msra.mxu0 0
    %4514 = vmatprep.subr.bf16.mxu0 0
    %4515 = vmatpush1.bf16.msra.mxu0 0
    %4516 = vmatprep.subr.bf16.mxu0 0
    %4517 = vmatpush1.bf16.msra.mxu0 0
    %4518 = vmatprep.subr.bf16.mxu0 0
    %4519 = vmatpush1.bf16.msra.mxu0 0
    %4520 = vmatprep.subr.bf16.mxu0 0
    %4521 = vmatpush1.bf16.msra.mxu0 0
    %4522 = vmatprep.subr.bf16.mxu0 0
    %4523 = vmatpush1.bf16.msra.mxu0 0
    %4524 = vmatprep.subr.bf16.mxu0 0
    %4525 = vmatpush1.bf16.msra.mxu0 0
    %4526 = vmatprep.subr.bf16.mxu0 0
    %4527 = vmatpush1.bf16.msra.mxu0 0
    %4528 = vmatprep.subr.bf16.mxu0 0
    %4529 = vmatpush1.bf16.msra.mxu0 0
    %4530 = vmatprep.subr.bf16.mxu0 0
    %4531 = vmatpush1.bf16.msra.mxu0 0
    %4532 = vmatprep.subr.bf16.mxu0 0
    %4533 = vmatpush1.bf16.msra.mxu0 0
    %4534 = vmatprep.mubr.bf16.mxu0 0
    %4535 = vmatmul.mubr.bf16.gmra.mrb[0].mxu0 %v4497
    %v4536 = vpop.f32.mrb[0].mxu0
    %v4537 = vadd.f32 0.0, %v4536
    %v4538 = vpop.f32.mrb[0].mxu0
    %v4539 = vpop.f32.mrb[0].mxu0
    %v4540 = vpop.f32.mrb[0].mxu0
    %4541 = vdwg.mxu0
    %v4542 = vpack.c.bf16 %v4173, %v4173
    %v4543 = vpack.c.bf16 %v4225, %v4225
    %v4544 = vpack.c.bf16 %v4277, %v4277
    %v4545 = vpack.c.bf16 %v4329, %v4329
    %v4546 = vpack.c.bf16 %v4381, %v4381
    %v4547 = vpack.c.bf16 %v4433, %v4433
    %v4548 = vpack.c.bf16 %v4485, %v4485
    %v4549 = vpack.c.bf16 %v4537, %v4537
    %v4557 = vunpack.c.l.b16 %v2740
    %v4558 = vunpack.c.l.b16 %v2741
    %v4559 = vunpack.c.l.b16 %v2742
    %v4560 = vunpack.c.l.b16 %v2743
    %v4561 = vunpack.c.l.b16 %v2744
    %v4562 = vunpack.c.l.b16 %v2745
    %v4563 = vunpack.c.l.b16 %v2746
    %v4564 = vpack.c.b16 %v4558, %v4557
    %v4565 = vpack.c.b16 %v4560, %v4559
    %v4566 = vpack.c.b16 %v4562, %v4561
    %v4567 = vpack.c.b16 %v4563, %v4563
    %v4572 = vsel %vm328, %v4542, 0
    %v4575 = vsel %vm332, %v4567, 0
    %4577 = vmatprep.subr.bf16.mxu0 0
    %4578 = vmatpush1.bf16.msra.mxu0 %v4564
    %4579 = vmatprep.subr.bf16.mxu0 0
    %4580 = vmatpush1.bf16.msra.mxu0 %v4565
    %4581 = vmatprep.subr.bf16.mxu0 0
    %4582 = vmatpush1.bf16.msra.mxu0 %v4566
    %4583 = vmatprep.subr.bf16.mxu0 0
    %4584 = vmatpush1.bf16.msra.mxu0 %v4575
    %4585 = vmatprep.subr.bf16.mxu0 0
    %4586 = vmatpush1.bf16.msra.mxu0 0
    %4587 = vmatprep.subr.bf16.mxu0 0
    %4588 = vmatpush1.bf16.msra.mxu0 0
    %4589 = vmatprep.subr.bf16.mxu0 0
    %4590 = vmatpush1.bf16.msra.mxu0 0
    %4591 = vmatprep.subr.bf16.mxu0 0
    %4592 = vmatpush1.bf16.msra.mxu0 0
    %4593 = vmatprep.subr.bf16.mxu0 0
    %4594 = vmatpush1.bf16.msra.mxu0 0
    %4595 = vmatprep.subr.bf16.mxu0 0
    %4596 = vmatpush1.bf16.msra.mxu0 0
    %4597 = vmatprep.subr.bf16.mxu0 0
    %4598 = vmatpush1.bf16.msra.mxu0 0
    %4599 = vmatprep.subr.bf16.mxu0 0
    %4600 = vmatpush1.bf16.msra.mxu0 0
    %4601 = vmatprep.subr.bf16.mxu0 0
    %4602 = vmatpush1.bf16.msra.mxu0 0
    %4603 = vmatprep.subr.bf16.mxu0 0
    %4604 = vmatpush1.bf16.msra.mxu0 0
    %4605 = vmatprep.subr.bf16.mxu0 0
    %4606 = vmatpush1.bf16.msra.mxu0 0
    %4607 = vmatprep.subr.bf16.mxu0 0
    %4608 = vmatpush1.bf16.msra.mxu0 0
    %4609 = vmatprep.mubr.bf16.mxu0 0
    %4610 = vmatmul.mubr.bf16.gmra.mrb[0].mxu0 %v4572
    %v4611 = vpop.f32.mrb[0].mxu0
    %v4612 = vadd.f32 0.0, %v4611
    %v4613 = vpop.f32.mrb[0].mxu0
    %v4614 = vpop.f32.mrb[0].mxu0
    %v4615 = vpop.f32.mrb[0].mxu0
    %4616 = vdwg.mxu0
    %v4624 = vunpack.c.l.b16 %v2747
    %v4625 = vunpack.c.l.b16 %v2748
    %v4626 = vunpack.c.l.b16 %v2749
    %v4627 = vunpack.c.l.b16 %v2750
    %v4628 = vunpack.c.l.b16 %v2751
    %v4629 = vunpack.c.l.b16 %v2752
    %v4630 = vunpack.c.l.b16 %v2753
    %v4631 = vpack.c.b16 %v4625, %v4624
    %v4632 = vpack.c.b16 %v4627, %v4626
    %v4633 = vpack.c.b16 %v4629, %v4628
    %v4634 = vpack.c.b16 %v4630, %v4630
    %v4639 = vsel %vm328, %v4543, 0
    %v4642 = vsel %vm332, %v4634, 0
    %4644 = vmatprep.subr.bf16.mxu0 0
    %4645 = vmatpush1.bf16.msra.mxu0 %v4631
    %4646 = vmatprep.subr.bf16.mxu0 0
    %4647 = vmatpush1.bf16.msra.mxu0 %v4632
    %4648 = vmatprep.subr.bf16.mxu0 0
    %4649 = vmatpush1.bf16.msra.mxu0 %v4633
    %4650 = vmatprep.subr.bf16.mxu0 0
    %4651 = vmatpush1.bf16.msra.mxu0 %v4642
    %4652 = vmatprep.subr.bf16.mxu0 0
    %4653 = vmatpush1.bf16.msra.mxu0 0
    %4654 = vmatprep.subr.bf16.mxu0 0
    %4655 = vmatpush1.bf16.msra.mxu0 0
    %4656 = vmatprep.subr.bf16.mxu0 0
    %4657 = vmatpush1.bf16.msra.mxu0 0
    %4658 = vmatprep.subr.bf16.mxu0 0
    %4659 = vmatpush1.bf16.msra.mxu0 0
    %4660 = vmatprep.subr.bf16.mxu0 0
    %4661 = vmatpush1.bf16.msra.mxu0 0
    %4662 = vmatprep.subr.bf16.mxu0 0
    %4663 = vmatpush1.bf16.msra.mxu0 0
    %4664 = vmatprep.subr.bf16.mxu0 0
    %4665 = vmatpush1.bf16.msra.mxu0 0
    %4666 = vmatprep.subr.bf16.mxu0 0
    %4667 = vmatpush1.bf16.msra.mxu0 0
    %4668 = vmatprep.subr.bf16.mxu0 0
    %4669 = vmatpush1.bf16.msra.mxu0 0
    %4670 = vmatprep.subr.bf16.mxu0 0
    %4671 = vmatpush1.bf16.msra.mxu0 0
    %4672 = vmatprep.subr.bf16.mxu0 0
    %4673 = vmatpush1.bf16.msra.mxu0 0
    %4674 = vmatprep.subr.bf16.mxu0 0
    %4675 = vmatpush1.bf16.msra.mxu0 0
    %4676 = vmatprep.mubr.bf16.mxu0 0
    %4677 = vmatmul.mubr.bf16.gmra.mrb[0].mxu0 %v4639
    %v4678 = vpop.f32.mrb[0].mxu0
    %v4679 = vadd.f32 0.0, %v4678
    %v4680 = vpop.f32.mrb[0].mxu0
    %v4681 = vpop.f32.mrb[0].mxu0
    %v4682 = vpop.f32.mrb[0].mxu0
    %4683 = vdwg.mxu0
    %v4691 = vunpack.c.l.b16 %v2754
    %v4692 = vunpack.c.l.b16 %v2755
    %v4693 = vunpack.c.l.b16 %v2756
    %v4694 = vunpack.c.l.b16 %v2757
    %v4695 = vunpack.c.l.b16 %v2758
    %v4696 = vunpack.c.l.b16 %v2759
    %v4697 = vunpack.c.l.b16 %v2760
    %v4698 = vpack.c.b16 %v4692, %v4691
    %v4699 = vpack.c.b16 %v4694, %v4693
    %v4700 = vpack.c.b16 %v4696, %v4695
    %v4701 = vpack.c.b16 %v4697, %v4697
    %v4706 = vsel %vm328, %v4544, 0
    %v4709 = vsel %vm332, %v4701, 0
    %4711 = vmatprep.subr.bf16.mxu0 0
    %4712 = vmatpush1.bf16.msra.mxu0 %v4698
    %4713 = vmatprep.subr.bf16.mxu0 0
    %4714 = vmatpush1.bf16.msra.mxu0 %v4699
    %4715 = vmatprep.subr.bf16.mxu0 0
    %4716 = vmatpush1.bf16.msra.mxu0 %v4700
    %4717 = vmatprep.subr.bf16.mxu0 0
    %4718 = vmatpush1.bf16.msra.mxu0 %v4709
    %4719 = vmatprep.subr.bf16.mxu0 0
    %4720 = vmatpush1.bf16.msra.mxu0 0
    %4721 = vmatprep.subr.bf16.mxu0 0
    %4722 = vmatpush1.bf16.msra.mxu0 0
    %4723 = vmatprep.subr.bf16.mxu0 0
    %4724 = vmatpush1.bf16.msra.mxu0 0
    %4725 = vmatprep.subr.bf16.mxu0 0
    %4726 = vmatpush1.bf16.msra.mxu0 0
    %4727 = vmatprep.subr.bf16.mxu0 0
    %4728 = vmatpush1.bf16.msra.mxu0 0
    %4729 = vmatprep.subr.bf16.mxu0 0
    %4730 = vmatpush1.bf16.msra.mxu0 0
    %4731 = vmatprep.subr.bf16.mxu0 0
    %4732 = vmatpush1.bf16.msra.mxu0 0
    %4733 = vmatprep.subr.bf16.mxu0 0
    %4734 = vmatpush1.bf16.msra.mxu0 0
    %4735 = vmatprep.subr.bf16.mxu0 0
    %4736 = vmatpush1.bf16.msra.mxu0 0
    %4737 = vmatprep.subr.bf16.mxu0 0
    %4738 = vmatpush1.bf16.msra.mxu0 0
    %4739 = vmatprep.subr.bf16.mxu0 0
    %4740 = vmatpush1.bf16.msra.mxu0 0
    %4741 = vmatprep.subr.bf16.mxu0 0
    %4742 = vmatpush1.bf16.msra.mxu0 0
    %4743 = vmatprep.mubr.bf16.mxu0 0
    %4744 = vmatmul.mubr.bf16.gmra.mrb[0].mxu0 %v4706
    %v4745 = vpop.f32.mrb[0].mxu0
    %v4746 = vadd.f32 0.0, %v4745
    %v4747 = vpop.f32.mrb[0].mxu0
    %v4748 = vpop.f32.mrb[0].mxu0
    %v4749 = vpop.f32.mrb[0].mxu0
    %4750 = vdwg.mxu0
    %v4758 = vunpack.c.l.b16 %v2761
    %v4759 = vunpack.c.l.b16 %v2762
    %v4760 = vunpack.c.l.b16 %v2763
    %v4761 = vunpack.c.l.b16 %v2764
    %v4762 = vunpack.c.l.b16 %v2765
    %v4763 = vunpack.c.l.b16 %v2766
    %v4764 = vunpack.c.l.b16 %v2767
    %v4765 = vpack.c.b16 %v4759, %v4758
    %v4766 = vpack.c.b16 %v4761, %v4760
    %v4767 = vpack.c.b16 %v4763, %v4762
    %v4768 = vpack.c.b16 %v4764, %v4764
    %v4773 = vsel %vm328, %v4545, 0
    %v4776 = vsel %vm332, %v4768, 0
    %4778 = vmatprep.subr.bf16.mxu0 0
    %4779 = vmatpush1.bf16.msra.mxu0 %v4765
    %4780 = vmatprep.subr.bf16.mxu0 0
    %4781 = vmatpush1.bf16.msra.mxu0 %v4766
    %4782 = vmatprep.subr.bf16.mxu0 0
    %4783 = vmatpush1.bf16.msra.mxu0 %v4767
    %4784 = vmatprep.subr.bf16.mxu0 0
    %4785 = vmatpush1.bf16.msra.mxu0 %v4776
    %4786 = vmatprep.subr.bf16.mxu0 0
    %4787 = vmatpush1.bf16.msra.mxu0 0
    %4788 = vmatprep.subr.bf16.mxu0 0
    %4789 = vmatpush1.bf16.msra.mxu0 0
    %4790 = vmatprep.subr.bf16.mxu0 0
    %4791 = vmatpush1.bf16.msra.mxu0 0
    %4792 = vmatprep.subr.bf16.mxu0 0
    %4793 = vmatpush1.bf16.msra.mxu0 0
    %4794 = vmatprep.subr.bf16.mxu0 0
    %4795 = vmatpush1.bf16.msra.mxu0 0
    %4796 = vmatprep.subr.bf16.mxu0 0
    %4797 = vmatpush1.bf16.msra.mxu0 0
    %4798 = vmatprep.subr.bf16.mxu0 0
    %4799 = vmatpush1.bf16.msra.mxu0 0
    %4800 = vmatprep.subr.bf16.mxu0 0
    %4801 = vmatpush1.bf16.msra.mxu0 0
    %4802 = vmatprep.subr.bf16.mxu0 0
    %4803 = vmatpush1.bf16.msra.mxu0 0
    %4804 = vmatprep.subr.bf16.mxu0 0
    %4805 = vmatpush1.bf16.msra.mxu0 0
    %4806 = vmatprep.subr.bf16.mxu0 0
    %4807 = vmatpush1.bf16.msra.mxu0 0
    %4808 = vmatprep.subr.bf16.mxu0 0
    %4809 = vmatpush1.bf16.msra.mxu0 0
    %4810 = vmatprep.mubr.bf16.mxu0 0
    %4811 = vmatmul.mubr.bf16.gmra.mrb[0].mxu0 %v4773
    %v4812 = vpop.f32.mrb[0].mxu0
    %v4813 = vadd.f32 0.0, %v4812
    %v4814 = vpop.f32.mrb[0].mxu0
    %v4815 = vpop.f32.mrb[0].mxu0
    %v4816 = vpop.f32.mrb[0].mxu0
    %4817 = vdwg.mxu0
    %v4825 = vunpack.c.l.b16 %v2768
    %v4826 = vunpack.c.l.b16 %v2769
    %v4827 = vunpack.c.l.b16 %v2770
    %v4828 = vunpack.c.l.b16 %v2771
    %v4829 = vunpack.c.l.b16 %v2772
    %v4830 = vunpack.c.l.b16 %v2773
    %v4831 = vunpack.c.l.b16 %v2774
    %v4832 = vpack.c.b16 %v4826, %v4825
    %v4833 = vpack.c.b16 %v4828, %v4827
    %v4834 = vpack.c.b16 %v4830, %v4829
    %v4835 = vpack.c.b16 %v4831, %v4831
    %v4840 = vsel %vm328, %v4546, 0
    %v4843 = vsel %vm332, %v4835, 0
    %4845 = vmatprep.subr.bf16.mxu0 0
    %4846 = vmatpush1.bf16.msra.mxu0 %v4832
    %4847 = vmatprep.subr.bf16.mxu0 0
    %4848 = vmatpush1.bf16.msra.mxu0 %v4833
    %4849 = vmatprep.subr.bf16.mxu0 0
    %4850 = vmatpush1.bf16.msra.mxu0 %v4834
    %4851 = vmatprep.subr.bf16.mxu0 0
    %4852 = vmatpush1.bf16.msra.mxu0 %v4843
    %4853 = vmatprep.subr.bf16.mxu0 0
    %4854 = vmatpush1.bf16.msra.mxu0 0
    %4855 = vmatprep.subr.bf16.mxu0 0
    %4856 = vmatpush1.bf16.msra.mxu0 0
    %4857 = vmatprep.subr.bf16.mxu0 0
    %4858 = vmatpush1.bf16.msra.mxu0 0
    %4859 = vmatprep.subr.bf16.mxu0 0
    %4860 = vmatpush1.bf16.msra.mxu0 0
    %4861 = vmatprep.subr.bf16.mxu0 0
    %4862 = vmatpush1.bf16.msra.mxu0 0
    %4863 = vmatprep.subr.bf16.mxu0 0
    %4864 = vmatpush1.bf16.msra.mxu0 0
    %4865 = vmatprep.subr.bf16.mxu0 0
    %4866 = vmatpush1.bf16.msra.mxu0 0
    %4867 = vmatprep.subr.bf16.mxu0 0
    %4868 = vmatpush1.bf16.msra.mxu0 0
    %4869 = vmatprep.subr.bf16.mxu0 0
    %4870 = vmatpush1.bf16.msra.mxu0 0
    %4871 = vmatprep.subr.bf16.mxu0 0
    %4872 = vmatpush1.bf16.msra.mxu0 0
    %4873 = vmatprep.subr.bf16.mxu0 0
    %4874 = vmatpush1.bf16.msra.mxu0 0
    %4875 = vmatprep.subr.bf16.mxu0 0
    %4876 = vmatpush1.bf16.msra.mxu0 0
    %4877 = vmatprep.mubr.bf16.mxu0 0
    %4878 = vmatmul.mubr.bf16.gmra.mrb[0].mxu0 %v4840
    %v4879 = vpop.f32.mrb[0].mxu0
    %v4880 = vadd.f32 0.0, %v4879
    %v4881 = vpop.f32.mrb[0].mxu0
    %v4882 = vpop.f32.mrb[0].mxu0
    %v4883 = vpop.f32.mrb[0].mxu0
    %4884 = vdwg.mxu0
    %v4892 = vunpack.c.l.b16 %v2775
    %v4893 = vunpack.c.l.b16 %v2776
    %v4894 = vunpack.c.l.b16 %v2777
    %v4895 = vunpack.c.l.b16 %v2778
    %v4896 = vunpack.c.l.b16 %v2779
    %v4897 = vunpack.c.l.b16 %v2780
    %v4898 = vunpack.c.l.b16 %v2781
    %v4899 = vpack.c.b16 %v4893, %v4892
    %v4900 = vpack.c.b16 %v4895, %v4894
    %v4901 = vpack.c.b16 %v4897, %v4896
    %v4902 = vpack.c.b16 %v4898, %v4898
    %v4907 = vsel %vm328, %v4547, 0
    %v4910 = vsel %vm332, %v4902, 0
    %4912 = vmatprep.subr.bf16.mxu0 0
    %4913 = vmatpush1.bf16.msra.mxu0 %v4899
    %4914 = vmatprep.subr.bf16.mxu0 0
    %4915 = vmatpush1.bf16.msra.mxu0 %v4900
    %4916 = vmatprep.subr.bf16.mxu0 0
    %4917 = vmatpush1.bf16.msra.mxu0 %v4901
    %4918 = vmatprep.subr.bf16.mxu0 0
    %4919 = vmatpush1.bf16.msra.mxu0 %v4910
    %4920 = vmatprep.subr.bf16.mxu0 0
    %4921 = vmatpush1.bf16.msra.mxu0 0
    %4922 = vmatprep.subr.bf16.mxu0 0
    %4923 = vmatpush1.bf16.msra.mxu0 0
    %4924 = vmatprep.subr.bf16.mxu0 0
    %4925 = vmatpush1.bf16.msra.mxu0 0
    %4926 = vmatprep.subr.bf16.mxu0 0
    %4927 = vmatpush1.bf16.msra.mxu0 0
    %4928 = vmatprep.subr.bf16.mxu0 0
    %4929 = vmatpush1.bf16.msra.mxu0 0
    %4930 = vmatprep.subr.bf16.mxu0 0
    %4931 = vmatpush1.bf16.msra.mxu0 0
    %4932 = vmatprep.subr.bf16.mxu0 0
    %4933 = vmatpush1.bf16.msra.mxu0 0
    %4934 = vmatprep.subr.bf16.mxu0 0
    %4935 = vmatpush1.bf16.msra.mxu0 0
    %4936 = vmatprep.subr.bf16.mxu0 0
    %4937 = vmatpush1.bf16.msra.mxu0 0
    %4938 = vmatprep.subr.bf16.mxu0 0
    %4939 = vmatpush1.bf16.msra.mxu0 0
    %4940 = vmatprep.subr.bf16.mxu0 0
    %4941 = vmatpush1.bf16.msra.mxu0 0
    %4942 = vmatprep.subr.bf16.mxu0 0
    %4943 = vmatpush1.bf16.msra.mxu0 0
    %4944 = vmatprep.mubr.bf16.mxu0 0
    %4945 = vmatmul.mubr.bf16.gmra.mrb[0].mxu0 %v4907
    %v4946 = vpop.f32.mrb[0].mxu0
    %v4947 = vadd.f32 0.0, %v4946
    %v4948 = vpop.f32.mrb[0].mxu0
    %v4949 = vpop.f32.mrb[0].mxu0
    %v4950 = vpop.f32.mrb[0].mxu0
    %4951 = vdwg.mxu0
    %v4959 = vunpack.c.l.b16 %v2782
    %v4960 = vunpack.c.l.b16 %v2783
    %v4961 = vunpack.c.l.b16 %v2784
    %v4962 = vunpack.c.l.b16 %v2785
    %v4963 = vunpack.c.l.b16 %v2786
    %v4964 = vunpack.c.l.b16 %v2787
    %v4965 = vunpack.c.l.b16 %v2788
    %v4966 = vpack.c.b16 %v4960, %v4959
    %v4967 = vpack.c.b16 %v4962, %v4961
    %v4968 = vpack.c.b16 %v4964, %v4963
    %v4969 = vpack.c.b16 %v4965, %v4965
    %v4974 = vsel %vm328, %v4548, 0
    %v4977 = vsel %vm332, %v4969, 0
    %4979 = vmatprep.subr.bf16.mxu0 0
    %4980 = vmatpush1.bf16.msra.mxu0 %v4966
    %4981 = vmatprep.subr.bf16.mxu0 0
    %4982 = vmatpush1.bf16.msra.mxu0 %v4967
    %4983 = vmatprep.subr.bf16.mxu0 0
    %4984 = vmatpush1.bf16.msra.mxu0 %v4968
    %4985 = vmatprep.subr.bf16.mxu0 0
    %4986 = vmatpush1.bf16.msra.mxu0 %v4977
    %4987 = vmatprep.subr.bf16.mxu0 0
    %4988 = vmatpush1.bf16.msra.mxu0 0
    %4989 = vmatprep.subr.bf16.mxu0 0
    %4990 = vmatpush1.bf16.msra.mxu0 0
    %4991 = vmatprep.subr.bf16.mxu0 0
    %4992 = vmatpush1.bf16.msra.mxu0 0
    %4993 = vmatprep.subr.bf16.mxu0 0
    %4994 = vmatpush1.bf16.msra.mxu0 0
    %4995 = vmatprep.subr.bf16.mxu0 0
    %4996 = vmatpush1.bf16.msra.mxu0 0
    %4997 = vmatprep.subr.bf16.mxu0 0
    %4998 = vmatpush1.bf16.msra.mxu0 0
    %4999 = vmatprep.subr.bf16.mxu0 0
    %5000 = vmatpush1.bf16.msra.mxu0 0
    %5001 = vmatprep.subr.bf16.mxu0 0
    %5002 = vmatpush1.bf16.msra.mxu0 0
    %5003 = vmatprep.subr.bf16.mxu0 0
    %5004 = vmatpush1.bf16.msra.mxu0 0
    %5005 = vmatprep.subr.bf16.mxu0 0
    %5006 = vmatpush1.bf16.msra.mxu0 0
    %5007 = vmatprep.subr.bf16.mxu0 0
    %5008 = vmatpush1.bf16.msra.mxu0 0
    %5009 = vmatprep.subr.bf16.mxu0 0
    %5010 = vmatpush1.bf16.msra.mxu0 0
    %5011 = vmatprep.mubr.bf16.mxu0 0
    %5012 = vmatmul.mubr.bf16.gmra.mrb[0].mxu0 %v4974
    %v5013 = vpop.f32.mrb[0].mxu0
    %v5014 = vadd.f32 0.0, %v5013
    %v5015 = vpop.f32.mrb[0].mxu0
    %v5016 = vpop.f32.mrb[0].mxu0
    %v5017 = vpop.f32.mrb[0].mxu0
    %5018 = vdwg.mxu0
    %v5026 = vunpack.c.l.b16 %v2789
    %v5027 = vunpack.c.l.b16 %v2790
    %v5028 = vunpack.c.l.b16 %v2791
    %v5029 = vunpack.c.l.b16 %v2792
    %v5030 = vunpack.c.l.b16 %v2793
    %v5031 = vunpack.c.l.b16 %v2794
    %v5032 = vunpack.c.l.b16 %v2795
    %v5033 = vpack.c.b16 %v5027, %v5026
    %v5034 = vpack.c.b16 %v5029, %v5028
    %v5035 = vpack.c.b16 %v5031, %v5030
    %v5036 = vpack.c.b16 %v5032, %v5032
    %v5041 = vsel %vm328, %v4549, 0
    %v5044 = vsel %vm332, %v5036, 0
    %5046 = vmatprep.subr.bf16.mxu0 0
    %5047 = vmatpush1.bf16.msra.mxu0 %v5033
    %5048 = vmatprep.subr.bf16.mxu0 0
    %5049 = vmatpush1.bf16.msra.mxu0 %v5034
    %5050 = vmatprep.subr.bf16.mxu0 0
    %5051 = vmatpush1.bf16.msra.mxu0 %v5035
    %5052 = vmatprep.subr.bf16.mxu0 0
    %5053 = vmatpush1.bf16.msra.mxu0 %v5044
    %5054 = vmatprep.subr.bf16.mxu0 0
    %5055 = vmatpush1.bf16.msra.mxu0 0
    %5056 = vmatprep.subr.bf16.mxu0 0
    %5057 = vmatpush1.bf16.msra.mxu0 0
    %5058 = vmatprep.subr.bf16.mxu0 0
    %5059 = vmatpush1.bf16.msra.mxu0 0
    %5060 = vmatprep.subr.bf16.mxu0 0
    %5061 = vmatpush1.bf16.msra.mxu0 0
    %5062 = vmatprep.subr.bf16.mxu0 0
    %5063 = vmatpush1.bf16.msra.mxu0 0
    %5064 = vmatprep.subr.bf16.mxu0 0
    %5065 = vmatpush1.bf16.msra.mxu0 0
    %5066 = vmatprep.subr.bf16.mxu0 0
    %5067 = vmatpush1.bf16.msra.mxu0 0
    %5068 = vmatprep.subr.bf16.mxu0 0
    %5069 = vmatpush1.bf16.msra.mxu0 0
    %5070 = vmatprep.subr.bf16.mxu0 0
    %5071 = vmatpush1.bf16.msra.mxu0 0
    %5072 = vmatprep.subr.bf16.mxu0 0
    %5073 = vmatpush1.bf16.msra.mxu0 0
    %5074 = vmatprep.subr.bf16.mxu0 0
    %5075 = vmatpush1.bf16.msra.mxu0 0
    %5076 = vmatprep.subr.bf16.mxu0 0
    %5077 = vmatpush1.bf16.msra.mxu0 0
    %5078 = vmatprep.mubr.bf16.mxu0 0
    %5079 = vmatmul.mubr.bf16.gmra.mrb[0].mxu0 %v5041
    %v5080 = vpop.f32.mrb[0].mxu0
    %v5081 = vadd.f32 0.0, %v5080
    %v5082 = vpop.f32.mrb[0].mxu0
    %v5083 = vpop.f32.mrb[0].mxu0
    %v5084 = vpop.f32.mrb[0].mxu0
    %5085 = vdwg.mxu0
    %vm5086 = vcmask 403456
    %v5087 = vsel %vm5086, %v4612, 0.0
    %v5088 = vsel %vm5086, %v4679, 0.0
    %v5089 = vadd.f32 %v5087, %v5088
    %v5090 = vsel %vm5086, %v4746, 0.0
    %v5091 = vadd.f32 %v5089, %v5090
    %v5092 = vsel %vm5086, %v4813, 0.0
    %v5093 = vadd.f32 %v5091, %v5092
    %v5094 = vsel %vm5086, %v4880, 0.0
    %v5095 = vadd.f32 %v5093, %v5094
    %v5096 = vsel %vm5086, %v4947, 0.0
    %v5097 = vadd.f32 %v5095, %v5096
    %v5098 = vsel %vm5086, %v5014, 0.0
    %v5099 = vadd.f32 %v5097, %v5098
    %v5100 = vsel %vm5086, %v5081, 0.0
    %v5101 = vadd.f32 %v5099, %v5100
    %v5102 = vlaneseq
    %v5103 = vshrl.u32 %v5102, 7
    %v5104 = vsub.s32 0, %v5103
    %v5105 = vrot.slane %v41, %v5104
    %v5106 = vadd.f32 %v5101, %v5105
    %v5107 = vrot.slane %v25, 4
    %v5109 = vadd.f32 %v5106, %v5107
    %v5110 = vsel %vm5086, %v5109, 0.0
    %5111 = vadd.xlane.f32.xlu0 %v5110
    %v5112 = vpop.xlane.xlu0 %5111
    %v5113 = vmul.f32 %v5112, %v2478
    %v5114 = vsub.f32 %v5109, %v5113
    %v5115 = vmul.f32 %v5114, %v5114
    %v5116 = vsel %vm5086, %v5115, 0.0
    %5117 = vadd.xlane.f32.xlu0 %v5116
    %v5118 = vpop.xlane.xlu0 %5117
    %v5119 = vmul.f32 %v5118, %v2478
    %v5120 = vadd.f32 %v5119, 1e-06
    %v5121 = vrsqrt.pop %v5120
    %v5122 = vmul.f32 %v5114, %v5121
    %v5123 = vlaneseq
    %v5124 = vshrl.u32 %v5123, 7
    %v5125 = vsub.s32 1, %v5124
    %v5126 = vrot.slane %v41, %v5125
    %v5127 = vmul.f32 %v5122, %v5126
    %v5128 = vlaneseq
    %v5129 = vshrl.u32 %v5128, 7
    %v5130 = vsub.s32 2, %v5129
    %v5131 = vrot.slane %v41, %v5130
    %v5132 = vadd.f32 %v5127, %v5131
    %s5133 = scalar_lea.vmem %s1, 896
    %v5134 = vld [vmem:[%s5133] sm:$0xff]
    %v5135 = vld [vmem:[%s5133 + $0x8] sm:$0xff]
    %v5136 = vld [vmem:[%s5133 + $0x10] sm:$0xff]
    %v5137 = vld [vmem:[%s5133 + $0x18] sm:$0xff]
    %v5138 = vld [vmem:[%s5133 + $0x20] sm:$0xff]
    %v5139 = vld [vmem:[%s5133 + $0x28] sm:$0xff]
    %v5140 = vld [vmem:[%s5133 + $0x30] sm:$0x11]
    %v5141 = vld [vmem:[%s5133 + $0x38] sm:$0xff]
    %v5142 = vld [vmem:[%s5133 + $0x40] sm:$0xff]
    %v5143 = vld [vmem:[%s5133 + $0x48] sm:$0xff]
    %v5144 = vld [vmem:[%s5133 + $0x50] sm:$0xff]
    %v5145 = vld [vmem:[%s5133 + $0x58] sm:$0xff]
    %v5146 = vld [vmem:[%s5133 + $0x60] sm:$0xff]
    %v5147 = vld [vmem:[%s5133 + $0x68] sm:$0x11]
    %v5148 = vld [vmem:[%s5133 + $0x70] sm:$0xff]
    %v5149 = vld [vmem:[%s5133 + $0x78] sm:$0xff]
    %v5150 = vld [vmem:[%s5133 + $0x80] sm:$0xff]
    %v5151 = vld [vmem:[%s5133 + $0x88] sm:$0xff]
    %v5152 = vld [vmem:[%s5133 + $0x90] sm:$0xff]
    %v5153 = vld [vmem:[%s5133 + $0x98] sm:$0xff]
    %v5154 = vld [vmem:[%s5133 + $0xa0] sm:$0x11]
    %v5155 = vld [vmem:[%s5133 + $0xa8] sm:$0xff]
    %v5156 = vld [vmem:[%s5133 + $0xb0] sm:$0xff]
    %v5157 = vld [vmem:[%s5133 + $0xb8] sm:$0xff]
    %v5158 = vld [vmem:[%s5133 + $0xc0] sm:$0xff]
    %v5159 = vld [vmem:[%s5133 + $0xc8] sm:$0xff]
    %v5160 = vld [vmem:[%s5133 + $0xd0] sm:$0xff]
    %v5161 = vld [vmem:[%s5133 + $0xd8] sm:$0x11]
    %v5162 = vld [vmem:[%s5133 + $0xe0] sm:$0xff]
    %v5163 = vld [vmem:[%s5133 + $0xe8] sm:$0xff]
    %v5164 = vld [vmem:[%s5133 + $0xf0] sm:$0xff]
    %v5165 = vld [vmem:[%s5133 + $0xf8] sm:$0xff]
    %v5166 = vld [vmem:[%s5133 + $0x100] sm:$0xff]
    %v5167 = vld [vmem:[%s5133 + $0x108] sm:$0xff]
    %v5168 = vld [vmem:[%s5133 + $0x110] sm:$0x11]
    %v5169 = vld [vmem:[%s5133 + $0x118] sm:$0xff]
    %v5170 = vld [vmem:[%s5133 + $0x120] sm:$0xff]
    %v5171 = vld [vmem:[%s5133 + $0x128] sm:$0xff]
    %v5172 = vld [vmem:[%s5133 + $0x130] sm:$0xff]
    %v5173 = vld [vmem:[%s5133 + $0x138] sm:$0xff]
    %v5174 = vld [vmem:[%s5133 + $0x140] sm:$0xff]
    %v5175 = vld [vmem:[%s5133 + $0x148] sm:$0x11]
    %v5176 = vld [vmem:[%s5133 + $0x150] sm:$0xff]
    %v5177 = vld [vmem:[%s5133 + $0x158] sm:$0xff]
    %v5178 = vld [vmem:[%s5133 + $0x160] sm:$0xff]
    %v5179 = vld [vmem:[%s5133 + $0x168] sm:$0xff]
    %v5180 = vld [vmem:[%s5133 + $0x170] sm:$0xff]
    %v5181 = vld [vmem:[%s5133 + $0x178] sm:$0xff]
    %v5182 = vld [vmem:[%s5133 + $0x180] sm:$0x11]
    %v5183 = vld [vmem:[%s5133 + $0x188] sm:$0xff]
    %v5184 = vld [vmem:[%s5133 + $0x190] sm:$0xff]
    %v5185 = vld [vmem:[%s5133 + $0x198] sm:$0xff]
    %v5186 = vld [vmem:[%s5133 + $0x1a0] sm:$0xff]
    %v5187 = vld [vmem:[%s5133 + $0x1a8] sm:$0xff]
    %v5188 = vld [vmem:[%s5133 + $0x1b0] sm:$0xff]
    %v5189 = vld [vmem:[%s5133 + $0x1b8] sm:$0x11]
    %s5190 = scalar_lea.vmem %s2, 448
    %v5191 = vld [vmem:[%s5190] sm:$0xf]
    %v5192 = vld [vmem:[%s5190 + $0x4] sm:$0xf]
    %v5193 = vld [vmem:[%s5190 + $0x8] sm:$0xf]
    %v5194 = vld [vmem:[%s5190 + $0xc] sm:$0xf]
    %v5195 = vld [vmem:[%s5190 + $0x10] sm:$0xf]
    %v5196 = vld [vmem:[%s5190 + $0x14] sm:$0xf]
    %v5197 = vld [vmem:[%s5190 + $0x18] sm:$0x1]
    %v5198 = vld [vmem:[%s5190 + $0x1c] sm:$0xf]
    %v5199 = vld [vmem:[%s5190 + $0x20] sm:$0xf]
    %v5200 = vld [vmem:[%s5190 + $0x24] sm:$0xf]
    %v5201 = vld [vmem:[%s5190 + $0x28] sm:$0xf]
    %v5202 = vld [vmem:[%s5190 + $0x2c] sm:$0xf]
    %v5203 = vld [vmem:[%s5190 + $0x30] sm:$0xf]
    %v5204 = vld [vmem:[%s5190 + $0x34] sm:$0x1]
    %v5205 = vld [vmem:[%s5190 + $0x38] sm:$0xf]
    %v5206 = vld [vmem:[%s5190 + $0x3c] sm:$0xf]
    %v5207 = vld [vmem:[%s5190 + $0x40] sm:$0xf]
    %v5208 = vld [vmem:[%s5190 + $0x44] sm:$0xf]
    %v5209 = vld [vmem:[%s5190 + $0x48] sm:$0xf]
    %v5210 = vld [vmem:[%s5190 + $0x4c] sm:$0xf]
    %v5211 = vld [vmem:[%s5190 + $0x50] sm:$0x1]
    %v5212 = vld [vmem:[%s5190 + $0x54] sm:$0xf]
    %v5213 = vld [vmem:[%s5190 + $0x58] sm:$0xf]
    %v5214 = vld [vmem:[%s5190 + $0x5c] sm:$0xf]
    %v5215 = vld [vmem:[%s5190 + $0x60] sm:$0xf]
    %v5216 = vld [vmem:[%s5190 + $0x64] sm:$0xf]
    %v5217 = vld [vmem:[%s5190 + $0x68] sm:$0xf]
    %v5218 = vld [vmem:[%s5190 + $0x6c] sm:$0x1]
    %v5219 = vld [vmem:[%s5190 + $0x70] sm:$0xf]
    %v5220 = vld [vmem:[%s5190 + $0x74] sm:$0xf]
    %v5221 = vld [vmem:[%s5190 + $0x78] sm:$0xf]
    %v5222 = vld [vmem:[%s5190 + $0x7c] sm:$0xf]
    %v5223 = vld [vmem:[%s5190 + $0x80] sm:$0xf]
    %v5224 = vld [vmem:[%s5190 + $0x84] sm:$0xf]
    %v5225 = vld [vmem:[%s5190 + $0x88] sm:$0x1]
    %v5226 = vld [vmem:[%s5190 + $0x8c] sm:$0xf]
    %v5227 = vld [vmem:[%s5190 + $0x90] sm:$0xf]
    %v5228 = vld [vmem:[%s5190 + $0x94] sm:$0xf]
    %v5229 = vld [vmem:[%s5190 + $0x98] sm:$0xf]
    %v5230 = vld [vmem:[%s5190 + $0x9c] sm:$0xf]
    %v5231 = vld [vmem:[%s5190 + $0xa0] sm:$0xf]
    %v5232 = vld [vmem:[%s5190 + $0xa4] sm:$0x1]
    %v5233 = vld [vmem:[%s5190 + $0xa8] sm:$0xf]
    %v5234 = vld [vmem:[%s5190 + $0xac] sm:$0xf]
    %v5235 = vld [vmem:[%s5190 + $0xb0] sm:$0xf]
    %v5236 = vld [vmem:[%s5190 + $0xb4] sm:$0xf]
    %v5237 = vld [vmem:[%s5190 + $0xb8] sm:$0xf]
    %v5238 = vld [vmem:[%s5190 + $0xbc] sm:$0xf]
    %v5239 = vld [vmem:[%s5190 + $0xc0] sm:$0x1]
    %v5240 = vld [vmem:[%s5190 + $0xc4] sm:$0xf]
    %v5241 = vld [vmem:[%s5190 + $0xc8] sm:$0xf]
    %v5242 = vld [vmem:[%s5190 + $0xcc] sm:$0xf]
    %v5243 = vld [vmem:[%s5190 + $0xd0] sm:$0xf]
    %v5244 = vld [vmem:[%s5190 + $0xd4] sm:$0xf]
    %v5245 = vld [vmem:[%s5190 + $0xd8] sm:$0xf]
    %v5246 = vld [vmem:[%s5190 + $0xdc] sm:$0x1]
    %s5247 = scalar_lea.vmem %s4, 32
    %v5248 = vld [vmem:[%s5247] sm:$0xff]
    %v5249 = vld [vmem:[%s5247 + $0x8] sm:$0xff]
    %v5252 = vcombine.low %v5248, %v5249
    %v5253 = vcombine.high %v5248, %v5249
    %v5255 = vunpack.c.l.s4 1966171168
    %v5256 = vunpack.c.0.s8 %v5255
    %v5257 = vlaneseq
    %v5258 = vshrl.u32 %v5257, 7
    %v5259 = vsub.s32 %v5256, %v5258
    %v5260 = vrot.slane %v5252, %v5259
    %v5262 = vunpack.c.l.s4 1966171168
    %v5263 = vunpack.c.0.s8 %v5262
    %v5264 = vlaneseq
    %v5265 = vshrl.u32 %v5264, 7
    %v5266 = vsub.s32 %v5263, %v5265
    %v5267 = vrot.slane %v5253, %v5266
    %v5268 = vcombine.high %v5260, %v5260
    %v5269 = vcombine.high %v5267, %v5267
    %v5271 = vunpack.c.l.s4 1966171168
    %v5272 = vunpack.c.0.s8 %v5271
    %v5273 = vlaneseq
    %v5274 = vshrl.u32 %v5273, 7
    %v5275 = vsub.s32 %v5272, %v5274
    %v5276 = vrot.slane %v5260, %v5275
    %v5278 = vunpack.c.l.s4 1966171168
    %v5279 = vunpack.c.0.s8 %v5278
    %v5280 = vlaneseq
    %v5281 = vshrl.u32 %v5280, 7
    %v5282 = vsub.s32 %v5279, %v5281
    %v5283 = vrot.slane %v5267, %v5282
    %v5285 = vunpack.c.l.s4 1966171168
    %v5286 = vunpack.c.0.s8 %v5285
    %v5287 = vlaneseq
    %v5288 = vshrl.u32 %v5287, 7
    %v5289 = vsub.s32 %v5286, %v5288
    %v5290 = vrot.slane %v5268, %v5289
    %v5292 = vunpack.c.l.s4 1966171168
    %v5293 = vunpack.c.0.s8 %v5292
    %v5294 = vlaneseq
    %v5295 = vshrl.u32 %v5294, 7
    %v5296 = vsub.s32 %v5293, %v5295
    %v5297 = vrot.slane %v5269, %v5296
    %v5298 = vcombine.high %v5276, %v5276
    %v5299 = vcombine.high %v5283, %v5283
    %v5300 = vcombine.high %v5290, %v5290
    %v5301 = vcombine.high %v5297, %v5297
    %v5302 = vpack.c.bf16 %v5132, %v5132
    %v5303 = vpack.c.bf16 %v2681, %v2681
    %v5304 = vlaneseq
    %v5305 = vshrl.u32 %v5304, 7
    %v5306 = vsub.s32 0, %v5305
    %v5307 = vrot.slane %v5276, %v5306
    %v5308 = vlaneseq
    %v5309 = vshrl.u32 %v5308, 7
    %v5310 = vsub.s32 0, %v5309
    %v5311 = vrot.slane %v5290, %v5310
    %v5312 = vlaneseq
    %v5313 = vshrl.u32 %v5312, 7
    %v5314 = vsub.s32 0, %v5313
    %v5315 = vrot.slane %v5298, %v5314
    %v5316 = vlaneseq
    %v5317 = vshrl.u32 %v5316, 7
    %v5318 = vsub.s32 0, %v5317
    %v5319 = vrot.slane %v5300, %v5318
    %v5320 = vlaneseq
    %v5321 = vshrl.u32 %v5320, 7
    %v5322 = vsub.s32 0, %v5321
    %v5323 = vrot.slane %v5283, %v5322
    %v5324 = vlaneseq
    %v5325 = vshrl.u32 %v5324, 7
    %v5326 = vsub.s32 0, %v5325
    %v5327 = vrot.slane %v5297, %v5326
    %v5328 = vlaneseq
    %v5329 = vshrl.u32 %v5328, 7
    %v5330 = vsub.s32 0, %v5329
    %v5331 = vrot.slane %v5299, %v5330
    %v5332 = vlaneseq
    %v5333 = vshrl.u32 %v5332, 7
    %v5334 = vsub.s32 0, %v5333
    %v5335 = vrot.slane %v5301, %v5334
    %v5351 = vunpack.c.l.b16 %v5134
    %v5352 = vunpack.c.l.b16 %v5135
    %v5353 = vunpack.c.l.b16 %v5136
    %v5354 = vunpack.c.l.b16 %v5137
    %v5355 = vunpack.c.l.b16 %v5138
    %v5356 = vunpack.c.l.b16 %v5139
    %v5357 = vunpack.c.l.b16 %v5140
    %v5358 = vpack.c.b16 %v5352, %v5351
    %v5359 = vpack.c.b16 %v5354, %v5353
    %v5360 = vpack.c.b16 %v5356, %v5355
    %v5361 = vpack.c.b16 %v5357, %v5357
    %v5366 = vsel %vm328, %v5302, 0
    %v5369 = vsel %vm332, %v5361, 0
    %5371 = vmatprep.subr.bf16.mxu0 0
    %5372 = vmatpush1.bf16.msra.mxu0 %v5358
    %5373 = vmatprep.subr.bf16.mxu0 0
    %5374 = vmatpush1.bf16.msra.mxu0 %v5359
    %5375 = vmatprep.subr.bf16.mxu0 0
    %5376 = vmatpush1.bf16.msra.mxu0 %v5360
    %5377 = vmatprep.subr.bf16.mxu0 0
    %5378 = vmatpush1.bf16.msra.mxu0 %v5369
    %5379 = vmatprep.subr.bf16.mxu0 0
    %5380 = vmatpush1.bf16.msra.mxu0 0
    %5381 = vmatprep.subr.bf16.mxu0 0
    %5382 = vmatpush1.bf16.msra.mxu0 0
    %5383 = vmatprep.subr.bf16.mxu0 0
    %5384 = vmatpush1.bf16.msra.mxu0 0
    %5385 = vmatprep.subr.bf16.mxu0 0
    %5386 = vmatpush1.bf16.msra.mxu0 0
    %5387 = vmatprep.subr.bf16.mxu0 0
    %5388 = vmatpush1.bf16.msra.mxu0 0
    %5389 = vmatprep.subr.bf16.mxu0 0
    %5390 = vmatpush1.bf16.msra.mxu0 0
    %5391 = vmatprep.subr.bf16.mxu0 0
    %5392 = vmatpush1.bf16.msra.mxu0 0
    %5393 = vmatprep.subr.bf16.mxu0 0
    %5394 = vmatpush1.bf16.msra.mxu0 0
    %5395 = vmatprep.subr.bf16.mxu0 0
    %5396 = vmatpush1.bf16.msra.mxu0 0
    %5397 = vmatprep.subr.bf16.mxu0 0
    %5398 = vmatpush1.bf16.msra.mxu0 0
    %5399 = vmatprep.subr.bf16.mxu0 0
    %5400 = vmatpush1.bf16.msra.mxu0 0
    %5401 = vmatprep.subr.bf16.mxu0 0
    %5402 = vmatpush1.bf16.msra.mxu0 0
    %5403 = vmatprep.mubr.bf16.mxu0 0
    %5404 = vmatmul.mubr.bf16.gmra.mrb[0].mxu0 %v5366
    %v5405 = vpop.f32.mrb[0].mxu0
    %v5406 = vadd.f32 %v5307, %v5405
    %v5407 = vpop.f32.mrb[0].mxu0
    %v5408 = vpop.f32.mrb[0].mxu0
    %v5409 = vpop.f32.mrb[0].mxu0
    %5410 = vdwg.mxu0
    %v5418 = vunpack.c.l.b16 %v5141
    %v5419 = vunpack.c.l.b16 %v5142
    %v5420 = vunpack.c.l.b16 %v5143
    %v5421 = vunpack.c.l.b16 %v5144
    %v5422 = vunpack.c.l.b16 %v5145
    %v5423 = vunpack.c.l.b16 %v5146
    %v5424 = vunpack.c.l.b16 %v5147
    %v5425 = vpack.c.b16 %v5419, %v5418
    %v5426 = vpack.c.b16 %v5421, %v5420
    %v5427 = vpack.c.b16 %v5423, %v5422
    %v5428 = vpack.c.b16 %v5424, %v5424
    %v5433 = vsel %vm332, %v5428, 0
    %5435 = vmatprep.subr.bf16.mxu0 0
    %5436 = vmatpush1.bf16.msra.mxu0 %v5425
    %5437 = vmatprep.subr.bf16.mxu0 0
    %5438 = vmatpush1.bf16.msra.mxu0 %v5426
    %5439 = vmatprep.subr.bf16.mxu0 0
    %5440 = vmatpush1.bf16.msra.mxu0 %v5427
    %5441 = vmatprep.subr.bf16.mxu0 0
    %5442 = vmatpush1.bf16.msra.mxu0 %v5433
    %5443 = vmatprep.subr.bf16.mxu0 0
    %5444 = vmatpush1.bf16.msra.mxu0 0
    %5445 = vmatprep.subr.bf16.mxu0 0
    %5446 = vmatpush1.bf16.msra.mxu0 0
    %5447 = vmatprep.subr.bf16.mxu0 0
    %5448 = vmatpush1.bf16.msra.mxu0 0
    %5449 = vmatprep.subr.bf16.mxu0 0
    %5450 = vmatpush1.bf16.msra.mxu0 0
    %5451 = vmatprep.subr.bf16.mxu0 0
    %5452 = vmatpush1.bf16.msra.mxu0 0
    %5453 = vmatprep.subr.bf16.mxu0 0
    %5454 = vmatpush1.bf16.msra.mxu0 0
    %5455 = vmatprep.subr.bf16.mxu0 0
    %5456 = vmatpush1.bf16.msra.mxu0 0
    %5457 = vmatprep.subr.bf16.mxu0 0
    %5458 = vmatpush1.bf16.msra.mxu0 0
    %5459 = vmatprep.subr.bf16.mxu0 0
    %5460 = vmatpush1.bf16.msra.mxu0 0
    %5461 = vmatprep.subr.bf16.mxu0 0
    %5462 = vmatpush1.bf16.msra.mxu0 0
    %5463 = vmatprep.subr.bf16.mxu0 0
    %5464 = vmatpush1.bf16.msra.mxu0 0
    %5465 = vmatprep.subr.bf16.mxu0 0
    %5466 = vmatpush1.bf16.msra.mxu0 0
    %5467 = vmatprep.mubr.bf16.mxu0 0
    %5468 = vmatmul.mubr.bf16.gmra.mrb[0].mxu0 %v5366
    %v5469 = vpop.f32.mrb[0].mxu0
    %v5470 = vadd.f32 %v5311, %v5469
    %v5471 = vpop.f32.mrb[0].mxu0
    %v5472 = vpop.f32.mrb[0].mxu0
    %v5473 = vpop.f32.mrb[0].mxu0
    %5474 = vdwg.mxu0
    %v5482 = vunpack.c.l.b16 %v5148
    %v5483 = vunpack.c.l.b16 %v5149
    %v5484 = vunpack.c.l.b16 %v5150
    %v5485 = vunpack.c.l.b16 %v5151
    %v5486 = vunpack.c.l.b16 %v5152
    %v5487 = vunpack.c.l.b16 %v5153
    %v5488 = vunpack.c.l.b16 %v5154
    %v5489 = vpack.c.b16 %v5483, %v5482
    %v5490 = vpack.c.b16 %v5485, %v5484
    %v5491 = vpack.c.b16 %v5487, %v5486
    %v5492 = vpack.c.b16 %v5488, %v5488
    %v5497 = vsel %vm332, %v5492, 0
    %5499 = vmatprep.subr.bf16.mxu0 0
    %5500 = vmatpush1.bf16.msra.mxu0 %v5489
    %5501 = vmatprep.subr.bf16.mxu0 0
    %5502 = vmatpush1.bf16.msra.mxu0 %v5490
    %5503 = vmatprep.subr.bf16.mxu0 0
    %5504 = vmatpush1.bf16.msra.mxu0 %v5491
    %5505 = vmatprep.subr.bf16.mxu0 0
    %5506 = vmatpush1.bf16.msra.mxu0 %v5497
    %5507 = vmatprep.subr.bf16.mxu0 0
    %5508 = vmatpush1.bf16.msra.mxu0 0
    %5509 = vmatprep.subr.bf16.mxu0 0
    %5510 = vmatpush1.bf16.msra.mxu0 0
    %5511 = vmatprep.subr.bf16.mxu0 0
    %5512 = vmatpush1.bf16.msra.mxu0 0
    %5513 = vmatprep.subr.bf16.mxu0 0
    %5514 = vmatpush1.bf16.msra.mxu0 0
    %5515 = vmatprep.subr.bf16.mxu0 0
    %5516 = vmatpush1.bf16.msra.mxu0 0
    %5517 = vmatprep.subr.bf16.mxu0 0
    %5518 = vmatpush1.bf16.msra.mxu0 0
    %5519 = vmatprep.subr.bf16.mxu0 0
    %5520 = vmatpush1.bf16.msra.mxu0 0
    %5521 = vmatprep.subr.bf16.mxu0 0
    %5522 = vmatpush1.bf16.msra.mxu0 0
    %5523 = vmatprep.subr.bf16.mxu0 0
    %5524 = vmatpush1.bf16.msra.mxu0 0
    %5525 = vmatprep.subr.bf16.mxu0 0
    %5526 = vmatpush1.bf16.msra.mxu0 0
    %5527 = vmatprep.subr.bf16.mxu0 0
    %5528 = vmatpush1.bf16.msra.mxu0 0
    %5529 = vmatprep.subr.bf16.mxu0 0
    %5530 = vmatpush1.bf16.msra.mxu0 0
    %5531 = vmatprep.mubr.bf16.mxu0 0
    %5532 = vmatmul.mubr.bf16.gmra.mrb[0].mxu0 %v5366
    %v5533 = vpop.f32.mrb[0].mxu0
    %v5534 = vadd.f32 %v5315, %v5533
    %v5535 = vpop.f32.mrb[0].mxu0
    %v5536 = vpop.f32.mrb[0].mxu0
    %v5537 = vpop.f32.mrb[0].mxu0
    %5538 = vdwg.mxu0
    %v5546 = vunpack.c.l.b16 %v5155
    %v5547 = vunpack.c.l.b16 %v5156
    %v5548 = vunpack.c.l.b16 %v5157
    %v5549 = vunpack.c.l.b16 %v5158
    %v5550 = vunpack.c.l.b16 %v5159
    %v5551 = vunpack.c.l.b16 %v5160
    %v5552 = vunpack.c.l.b16 %v5161
    %v5553 = vpack.c.b16 %v5547, %v5546
    %v5554 = vpack.c.b16 %v5549, %v5548
    %v5555 = vpack.c.b16 %v5551, %v5550
    %v5556 = vpack.c.b16 %v5552, %v5552
    %v5561 = vsel %vm332, %v5556, 0
    %5563 = vmatprep.subr.bf16.mxu0 0
    %5564 = vmatpush1.bf16.msra.mxu0 %v5553
    %5565 = vmatprep.subr.bf16.mxu0 0
    %5566 = vmatpush1.bf16.msra.mxu0 %v5554
    %5567 = vmatprep.subr.bf16.mxu0 0
    %5568 = vmatpush1.bf16.msra.mxu0 %v5555
    %5569 = vmatprep.subr.bf16.mxu0 0
    %5570 = vmatpush1.bf16.msra.mxu0 %v5561
    %5571 = vmatprep.subr.bf16.mxu0 0
    %5572 = vmatpush1.bf16.msra.mxu0 0
    %5573 = vmatprep.subr.bf16.mxu0 0
    %5574 = vmatpush1.bf16.msra.mxu0 0
    %5575 = vmatprep.subr.bf16.mxu0 0
    %5576 = vmatpush1.bf16.msra.mxu0 0
    %5577 = vmatprep.subr.bf16.mxu0 0
    %5578 = vmatpush1.bf16.msra.mxu0 0
    %5579 = vmatprep.subr.bf16.mxu0 0
    %5580 = vmatpush1.bf16.msra.mxu0 0
    %5581 = vmatprep.subr.bf16.mxu0 0
    %5582 = vmatpush1.bf16.msra.mxu0 0
    %5583 = vmatprep.subr.bf16.mxu0 0
    %5584 = vmatpush1.bf16.msra.mxu0 0
    %5585 = vmatprep.subr.bf16.mxu0 0
    %5586 = vmatpush1.bf16.msra.mxu0 0
    %5587 = vmatprep.subr.bf16.mxu0 0
    %5588 = vmatpush1.bf16.msra.mxu0 0
    %5589 = vmatprep.subr.bf16.mxu0 0
    %5590 = vmatpush1.bf16.msra.mxu0 0
    %5591 = vmatprep.subr.bf16.mxu0 0
    %5592 = vmatpush1.bf16.msra.mxu0 0
    %5593 = vmatprep.subr.bf16.mxu0 0
    %5594 = vmatpush1.bf16.msra.mxu0 0
    %5595 = vmatprep.mubr.bf16.mxu0 0
    %5596 = vmatmul.mubr.bf16.gmra.mrb[0].mxu0 %v5366
    %v5597 = vpop.f32.mrb[0].mxu0
    %v5598 = vadd.f32 %v5319, %v5597
    %v5599 = vpop.f32.mrb[0].mxu0
    %v5600 = vpop.f32.mrb[0].mxu0
    %v5601 = vpop.f32.mrb[0].mxu0
    %5602 = vdwg.mxu0
    %v5610 = vunpack.c.l.b16 %v5162
    %v5611 = vunpack.c.l.b16 %v5163
    %v5612 = vunpack.c.l.b16 %v5164
    %v5613 = vunpack.c.l.b16 %v5165
    %v5614 = vunpack.c.l.b16 %v5166
    %v5615 = vunpack.c.l.b16 %v5167
    %v5616 = vunpack.c.l.b16 %v5168
    %v5617 = vpack.c.b16 %v5611, %v5610
    %v5618 = vpack.c.b16 %v5613, %v5612
    %v5619 = vpack.c.b16 %v5615, %v5614
    %v5620 = vpack.c.b16 %v5616, %v5616
    %v5625 = vsel %vm332, %v5620, 0
    %5627 = vmatprep.subr.bf16.mxu0 0
    %5628 = vmatpush1.bf16.msra.mxu0 %v5617
    %5629 = vmatprep.subr.bf16.mxu0 0
    %5630 = vmatpush1.bf16.msra.mxu0 %v5618
    %5631 = vmatprep.subr.bf16.mxu0 0
    %5632 = vmatpush1.bf16.msra.mxu0 %v5619
    %5633 = vmatprep.subr.bf16.mxu0 0
    %5634 = vmatpush1.bf16.msra.mxu0 %v5625
    %5635 = vmatprep.subr.bf16.mxu0 0
    %5636 = vmatpush1.bf16.msra.mxu0 0
    %5637 = vmatprep.subr.bf16.mxu0 0
    %5638 = vmatpush1.bf16.msra.mxu0 0
    %5639 = vmatprep.subr.bf16.mxu0 0
    %5640 = vmatpush1.bf16.msra.mxu0 0
    %5641 = vmatprep.subr.bf16.mxu0 0
    %5642 = vmatpush1.bf16.msra.mxu0 0
    %5643 = vmatprep.subr.bf16.mxu0 0
    %5644 = vmatpush1.bf16.msra.mxu0 0
    %5645 = vmatprep.subr.bf16.mxu0 0
    %5646 = vmatpush1.bf16.msra.mxu0 0
    %5647 = vmatprep.subr.bf16.mxu0 0
    %5648 = vmatpush1.bf16.msra.mxu0 0
    %5649 = vmatprep.subr.bf16.mxu0 0
    %5650 = vmatpush1.bf16.msra.mxu0 0
    %5651 = vmatprep.subr.bf16.mxu0 0
    %5652 = vmatpush1.bf16.msra.mxu0 0
    %5653 = vmatprep.subr.bf16.mxu0 0
    %5654 = vmatpush1.bf16.msra.mxu0 0
    %5655 = vmatprep.subr.bf16.mxu0 0
    %5656 = vmatpush1.bf16.msra.mxu0 0
    %5657 = vmatprep.subr.bf16.mxu0 0
    %5658 = vmatpush1.bf16.msra.mxu0 0
    %5659 = vmatprep.mubr.bf16.mxu0 0
    %5660 = vmatmul.mubr.bf16.gmra.mrb[0].mxu0 %v5366
    %v5661 = vpop.f32.mrb[0].mxu0
    %v5662 = vadd.f32 %v5323, %v5661
    %v5663 = vpop.f32.mrb[0].mxu0
    %v5664 = vpop.f32.mrb[0].mxu0
    %v5665 = vpop.f32.mrb[0].mxu0
    %5666 = vdwg.mxu0
    %v5674 = vunpack.c.l.b16 %v5169
    %v5675 = vunpack.c.l.b16 %v5170
    %v5676 = vunpack.c.l.b16 %v5171
    %v5677 = vunpack.c.l.b16 %v5172
    %v5678 = vunpack.c.l.b16 %v5173
    %v5679 = vunpack.c.l.b16 %v5174
    %v5680 = vunpack.c.l.b16 %v5175
    %v5681 = vpack.c.b16 %v5675, %v5674
    %v5682 = vpack.c.b16 %v5677, %v5676
    %v5683 = vpack.c.b16 %v5679, %v5678
    %v5684 = vpack.c.b16 %v5680, %v5680
    %v5689 = vsel %vm332, %v5684, 0
    %5691 = vmatprep.subr.bf16.mxu0 0
    %5692 = vmatpush1.bf16.msra.mxu0 %v5681
    %5693 = vmatprep.subr.bf16.mxu0 0
    %5694 = vmatpush1.bf16.msra.mxu0 %v5682
    %5695 = vmatprep.subr.bf16.mxu0 0
    %5696 = vmatpush1.bf16.msra.mxu0 %v5683
    %5697 = vmatprep.subr.bf16.mxu0 0
    %5698 = vmatpush1.bf16.msra.mxu0 %v5689
    %5699 = vmatprep.subr.bf16.mxu0 0
    %5700 = vmatpush1.bf16.msra.mxu0 0
    %5701 = vmatprep.subr.bf16.mxu0 0
    %5702 = vmatpush1.bf16.msra.mxu0 0
    %5703 = vmatprep.subr.bf16.mxu0 0
    %5704 = vmatpush1.bf16.msra.mxu0 0
    %5705 = vmatprep.subr.bf16.mxu0 0
    %5706 = vmatpush1.bf16.msra.mxu0 0
    %5707 = vmatprep.subr.bf16.mxu0 0
    %5708 = vmatpush1.bf16.msra.mxu0 0
    %5709 = vmatprep.subr.bf16.mxu0 0
    %5710 = vmatpush1.bf16.msra.mxu0 0
    %5711 = vmatprep.subr.bf16.mxu0 0
    %5712 = vmatpush1.bf16.msra.mxu0 0
    %5713 = vmatprep.subr.bf16.mxu0 0
    %5714 = vmatpush1.bf16.msra.mxu0 0
    %5715 = vmatprep.subr.bf16.mxu0 0
    %5716 = vmatpush1.bf16.msra.mxu0 0
    %5717 = vmatprep.subr.bf16.mxu0 0
    %5718 = vmatpush1.bf16.msra.mxu0 0
    %5719 = vmatprep.subr.bf16.mxu0 0
    %5720 = vmatpush1.bf16.msra.mxu0 0
    %5721 = vmatprep.subr.bf16.mxu0 0
    %5722 = vmatpush1.bf16.msra.mxu0 0
    %5723 = vmatprep.mubr.bf16.mxu0 0
    %5724 = vmatmul.mubr.bf16.gmra.mrb[0].mxu0 %v5366
    %v5725 = vpop.f32.mrb[0].mxu0
    %v5726 = vadd.f32 %v5327, %v5725
    %v5727 = vpop.f32.mrb[0].mxu0
    %v5728 = vpop.f32.mrb[0].mxu0
    %v5729 = vpop.f32.mrb[0].mxu0
    %5730 = vdwg.mxu0
    %v5738 = vunpack.c.l.b16 %v5176
    %v5739 = vunpack.c.l.b16 %v5177
    %v5740 = vunpack.c.l.b16 %v5178
    %v5741 = vunpack.c.l.b16 %v5179
    %v5742 = vunpack.c.l.b16 %v5180
    %v5743 = vunpack.c.l.b16 %v5181
    %v5744 = vunpack.c.l.b16 %v5182
    %v5745 = vpack.c.b16 %v5739, %v5738
    %v5746 = vpack.c.b16 %v5741, %v5740
    %v5747 = vpack.c.b16 %v5743, %v5742
    %v5748 = vpack.c.b16 %v5744, %v5744
    %v5753 = vsel %vm332, %v5748, 0
    %5755 = vmatprep.subr.bf16.mxu0 0
    %5756 = vmatpush1.bf16.msra.mxu0 %v5745
    %5757 = vmatprep.subr.bf16.mxu0 0
    %5758 = vmatpush1.bf16.msra.mxu0 %v5746
    %5759 = vmatprep.subr.bf16.mxu0 0
    %5760 = vmatpush1.bf16.msra.mxu0 %v5747
    %5761 = vmatprep.subr.bf16.mxu0 0
    %5762 = vmatpush1.bf16.msra.mxu0 %v5753
    %5763 = vmatprep.subr.bf16.mxu0 0
    %5764 = vmatpush1.bf16.msra.mxu0 0
    %5765 = vmatprep.subr.bf16.mxu0 0
    %5766 = vmatpush1.bf16.msra.mxu0 0
    %5767 = vmatprep.subr.bf16.mxu0 0
    %5768 = vmatpush1.bf16.msra.mxu0 0
    %5769 = vmatprep.subr.bf16.mxu0 0
    %5770 = vmatpush1.bf16.msra.mxu0 0
    %5771 = vmatprep.subr.bf16.mxu0 0
    %5772 = vmatpush1.bf16.msra.mxu0 0
    %5773 = vmatprep.subr.bf16.mxu0 0
    %5774 = vmatpush1.bf16.msra.mxu0 0
    %5775 = vmatprep.subr.bf16.mxu0 0
    %5776 = vmatpush1.bf16.msra.mxu0 0
    %5777 = vmatprep.subr.bf16.mxu0 0
    %5778 = vmatpush1.bf16.msra.mxu0 0
    %5779 = vmatprep.subr.bf16.mxu0 0
    %5780 = vmatpush1.bf16.msra.mxu0 0
    %5781 = vmatprep.subr.bf16.mxu0 0
    %5782 = vmatpush1.bf16.msra.mxu0 0
    %5783 = vmatprep.subr.bf16.mxu0 0
    %5784 = vmatpush1.bf16.msra.mxu0 0
    %5785 = vmatprep.subr.bf16.mxu0 0
    %5786 = vmatpush1.bf16.msra.mxu0 0
    %5787 = vmatprep.mubr.bf16.mxu0 0
    %5788 = vmatmul.mubr.bf16.gmra.mrb[0].mxu0 %v5366
    %v5789 = vpop.f32.mrb[0].mxu0
    %v5790 = vadd.f32 %v5331, %v5789
    %v5791 = vpop.f32.mrb[0].mxu0
    %v5792 = vpop.f32.mrb[0].mxu0
    %v5793 = vpop.f32.mrb[0].mxu0
    %5794 = vdwg.mxu0
    %v5802 = vunpack.c.l.b16 %v5183
    %v5803 = vunpack.c.l.b16 %v5184
    %v5804 = vunpack.c.l.b16 %v5185
    %v5805 = vunpack.c.l.b16 %v5186
    %v5806 = vunpack.c.l.b16 %v5187
    %v5807 = vunpack.c.l.b16 %v5188
    %v5808 = vunpack.c.l.b16 %v5189
    %v5809 = vpack.c.b16 %v5803, %v5802
    %v5810 = vpack.c.b16 %v5805, %v5804
    %v5811 = vpack.c.b16 %v5807, %v5806
    %v5812 = vpack.c.b16 %v5808, %v5808
    %v5817 = vsel %vm332, %v5812, 0
    %5819 = vmatprep.subr.bf16.mxu0 0
    %5820 = vmatpush1.bf16.msra.mxu0 %v5809
    %5821 = vmatprep.subr.bf16.mxu0 0
    %5822 = vmatpush1.bf16.msra.mxu0 %v5810
    %5823 = vmatprep.subr.bf16.mxu0 0
    %5824 = vmatpush1.bf16.msra.mxu0 %v5811
    %5825 = vmatprep.subr.bf16.mxu0 0
    %5826 = vmatpush1.bf16.msra.mxu0 %v5817
    %5827 = vmatprep.subr.bf16.mxu0 0
    %5828 = vmatpush1.bf16.msra.mxu0 0
    %5829 = vmatprep.subr.bf16.mxu0 0
    %5830 = vmatpush1.bf16.msra.mxu0 0
    %5831 = vmatprep.subr.bf16.mxu0 0
    %5832 = vmatpush1.bf16.msra.mxu0 0
    %5833 = vmatprep.subr.bf16.mxu0 0
    %5834 = vmatpush1.bf16.msra.mxu0 0
    %5835 = vmatprep.subr.bf16.mxu0 0
    %5836 = vmatpush1.bf16.msra.mxu0 0
    %5837 = vmatprep.subr.bf16.mxu0 0
    %5838 = vmatpush1.bf16.msra.mxu0 0
    %5839 = vmatprep.subr.bf16.mxu0 0
    %5840 = vmatpush1.bf16.msra.mxu0 0
    %5841 = vmatprep.subr.bf16.mxu0 0
    %5842 = vmatpush1.bf16.msra.mxu0 0
    %5843 = vmatprep.subr.bf16.mxu0 0
    %5844 = vmatpush1.bf16.msra.mxu0 0
    %5845 = vmatprep.subr.bf16.mxu0 0
    %5846 = vmatpush1.bf16.msra.mxu0 0
    %5847 = vmatprep.subr.bf16.mxu0 0
    %5848 = vmatpush1.bf16.msra.mxu0 0
    %5849 = vmatprep.subr.bf16.mxu0 0
    %5850 = vmatpush1.bf16.msra.mxu0 0
    %5851 = vmatprep.mubr.bf16.mxu0 0
    %5852 = vmatmul.mubr.bf16.gmra.mrb[0].mxu0 %v5366
    %v5853 = vpop.f32.mrb[0].mxu0
    %v5854 = vadd.f32 %v5335, %v5853
    %v5855 = vpop.f32.mrb[0].mxu0
    %v5856 = vpop.f32.mrb[0].mxu0
    %v5857 = vpop.f32.mrb[0].mxu0
    %5858 = vdwg.mxu0
    %v5859 = vlaneseq
    %v5860 = vshrl.u32 %v5859, 7
    %v5861 = vsub.s32 1, %v5860
    %v5862 = vrot.slane %v5276, %v5861
    %v5863 = vlaneseq
    %v5864 = vshrl.u32 %v5863, 7
    %v5865 = vsub.s32 1, %v5864
    %v5866 = vrot.slane %v5290, %v5865
    %v5867 = vlaneseq
    %v5868 = vshrl.u32 %v5867, 7
    %v5869 = vsub.s32 1, %v5868
    %v5870 = vrot.slane %v5298, %v5869
    %v5871 = vlaneseq
    %v5872 = vshrl.u32 %v5871, 7
    %v5873 = vsub.s32 1, %v5872
    %v5874 = vrot.slane %v5300, %v5873
    %v5875 = vlaneseq
    %v5876 = vshrl.u32 %v5875, 7
    %v5877 = vsub.s32 1, %v5876
    %v5878 = vrot.slane %v5283, %v5877
    %v5879 = vlaneseq
    %v5880 = vshrl.u32 %v5879, 7
    %v5881 = vsub.s32 1, %v5880
    %v5882 = vrot.slane %v5297, %v5881
    %v5883 = vlaneseq
    %v5884 = vshrl.u32 %v5883, 7
    %v5885 = vsub.s32 1, %v5884
    %v5886 = vrot.slane %v5299, %v5885
    %v5887 = vlaneseq
    %v5888 = vshrl.u32 %v5887, 7
    %v5889 = vsub.s32 1, %v5888
    %v5890 = vrot.slane %v5301, %v5889
    %v5891 = vunpack.c.h.b16 %v5134
    %v5892 = vunpack.c.h.b16 %v5135
    %v5893 = vunpack.c.h.b16 %v5136
    %v5894 = vunpack.c.h.b16 %v5137
    %v5895 = vunpack.c.h.b16 %v5138
    %v5896 = vunpack.c.h.b16 %v5139
    %v5897 = vunpack.c.h.b16 %v5140
    %v5898 = vpack.c.b16 %v5892, %v5891
    %v5899 = vpack.c.b16 %v5894, %v5893
    %v5900 = vpack.c.b16 %v5896, %v5895
    %v5901 = vpack.c.b16 %v5897, %v5897
    %5902 = vrot.lane.b32.xlu0 %v5358, 78
    %v5903 = vpop.permute.xlu0 %5902
    %5904 = vrot.lane.b32.xlu0 %v5898, 78
    %v5905 = vpop.permute.xlu0 %5904
    %5906 = vrot.lane.b32.xlu0 %v5359, 78
    %v5907 = vpop.permute.xlu0 %5906
    %5908 = vrot.lane.b32.xlu0 %v5899, 78
    %v5909 = vpop.permute.xlu0 %5908
    %5910 = vrot.lane.b32.xlu0 %v5360, 78
    %v5911 = vpop.permute.xlu0 %5910
    %5912 = vrot.lane.b32.xlu0 %v5900, 78
    %v5913 = vpop.permute.xlu0 %5912
    %5914 = vrot.lane.b32.xlu0 %v5361, 78
    %v5915 = vpop.permute.xlu0 %5914
    %5916 = vrot.lane.b32.xlu0 %v5901, 78
    %v5917 = vpop.permute.xlu0 %5916
    %vm5918 = vcmask 637952
    %v5919 = vsel %vm5918, %v5903, %v5905
    %v5920 = vsel %vm5918, %v5907, %v5909
    %v5921 = vsel %vm5918, %v5911, %v5913
    %v5922 = vsel %vm5918, %v5915, %v5917
    %5926 = vrot.lane.b32.xlu0 %v5307, 78
    %v5927 = vpop.permute.xlu0 %5926
    %5928 = vrot.lane.b32.xlu0 %v5862, 78
    %v5929 = vpop.permute.xlu0 %5928
    %vm5930 = vcmask 637952
    %v5931 = vsel %vm5930, %v5927, %v5929
    %v5934 = vsel %vm328, %v5303, 0
    %v5937 = vsel %vm332, %v5922, 0
    %5939 = vmatprep.subr.bf16.mxu0 0
    %5940 = vmatpush1.bf16.msra.mxu0 %v5919
    %5941 = vmatprep.subr.bf16.mxu0 0
    %5942 = vmatpush1.bf16.msra.mxu0 %v5920
    %5943 = vmatprep.subr.bf16.mxu0 0
    %5944 = vmatpush1.bf16.msra.mxu0 %v5921
    %5945 = vmatprep.subr.bf16.mxu0 0
    %5946 = vmatpush1.bf16.msra.mxu0 %v5937
    %5947 = vmatprep.subr.bf16.mxu0 0
    %5948 = vmatpush1.bf16.msra.mxu0 0
    %5949 = vmatprep.subr.bf16.mxu0 0
    %5950 = vmatpush1.bf16.msra.mxu0 0
    %5951 = vmatprep.subr.bf16.mxu0 0
    %5952 = vmatpush1.bf16.msra.mxu0 0
    %5953 = vmatprep.subr.bf16.mxu0 0
    %5954 = vmatpush1.bf16.msra.mxu0 0
    %5955 = vmatprep.subr.bf16.mxu0 0
    %5956 = vmatpush1.bf16.msra.mxu0 0
    %5957 = vmatprep.subr.bf16.mxu0 0
    %5958 = vmatpush1.bf16.msra.mxu0 0
    %5959 = vmatprep.subr.bf16.mxu0 0
    %5960 = vmatpush1.bf16.msra.mxu0 0
    %5961 = vmatprep.subr.bf16.mxu0 0
    %5962 = vmatpush1.bf16.msra.mxu0 0
    %5963 = vmatprep.subr.bf16.mxu0 0
    %5964 = vmatpush1.bf16.msra.mxu0 0
    %5965 = vmatprep.subr.bf16.mxu0 0
    %5966 = vmatpush1.bf16.msra.mxu0 0
    %5967 = vmatprep.subr.bf16.mxu0 0
    %5968 = vmatpush1.bf16.msra.mxu0 0
    %5969 = vmatprep.subr.bf16.mxu0 0
    %5970 = vmatpush1.bf16.msra.mxu0 0
    %5971 = vmatprep.mubr.bf16.mxu0 0
    %5972 = vmatmul.mubr.bf16.gmra.mrb[0].mxu0 %v5934
    %v5973 = vpop.f32.mrb[0].mxu0
    %v5974 = vadd.f32 %v5931, %v5973
    %v5975 = vpop.f32.mrb[0].mxu0
    %v5976 = vpop.f32.mrb[0].mxu0
    %v5977 = vpop.f32.mrb[0].mxu0
    %5978 = vdwg.mxu0
    %v5979 = vunpack.c.h.b16 %v5141
    %v5980 = vunpack.c.h.b16 %v5142
    %v5981 = vunpack.c.h.b16 %v5143
    %v5982 = vunpack.c.h.b16 %v5144
    %v5983 = vunpack.c.h.b16 %v5145
    %v5984 = vunpack.c.h.b16 %v5146
    %v5985 = vunpack.c.h.b16 %v5147
    %v5986 = vpack.c.b16 %v5980, %v5979
    %v5987 = vpack.c.b16 %v5982, %v5981
    %v5988 = vpack.c.b16 %v5984, %v5983
    %v5989 = vpack.c.b16 %v5985, %v5985
    %5990 = vrot.lane.b32.xlu0 %v5425, 78
    %v5991 = vpop.permute.xlu0 %5990
    %5992 = vrot.lane.b32.xlu0 %v5986, 78
    %v5993 = vpop.permute.xlu0 %5992
    %5994 = vrot.lane.b32.xlu0 %v5426, 78
    %v5995 = vpop.permute.xlu0 %5994
    %5996 = vrot.lane.b32.xlu0 %v5987, 78
    %v5997 = vpop.permute.xlu0 %5996
    %5998 = vrot.lane.b32.xlu0 %v5427, 78
    %v5999 = vpop.permute.xlu0 %5998
    %6000 = vrot.lane.b32.xlu0 %v5988, 78
    %v6001 = vpop.permute.xlu0 %6000
    %6002 = vrot.lane.b32.xlu0 %v5428, 78
    %v6003 = vpop.permute.xlu0 %6002
    %6004 = vrot.lane.b32.xlu0 %v5989, 78
    %v6005 = vpop.permute.xlu0 %6004
    %v6006 = vsel %vm5918, %v5991, %v5993
    %v6007 = vsel %vm5918, %v5995, %v5997
    %v6008 = vsel %vm5918, %v5999, %v6001
    %v6009 = vsel %vm5918, %v6003, %v6005
    %6013 = vrot.lane.b32.xlu0 %v5311, 78
    %v6014 = vpop.permute.xlu0 %6013
    %6015 = vrot.lane.b32.xlu0 %v5866, 78
    %v6016 = vpop.permute.xlu0 %6015
    %v6017 = vsel %vm5930, %v6014, %v6016
    %v6020 = vsel %vm332, %v6009, 0
    %6022 = vmatprep.subr.bf16.mxu0 0
    %6023 = vmatpush1.bf16.msra.mxu0 %v6006
    %6024 = vmatprep.subr.bf16.mxu0 0
    %6025 = vmatpush1.bf16.msra.mxu0 %v6007
    %6026 = vmatprep.subr.bf16.mxu0 0
    %6027 = vmatpush1.bf16.msra.mxu0 %v6008
    %6028 = vmatprep.subr.bf16.mxu0 0
    %6029 = vmatpush1.bf16.msra.mxu0 %v6020
    %6030 = vmatprep.subr.bf16.mxu0 0
    %6031 = vmatpush1.bf16.msra.mxu0 0
    %6032 = vmatprep.subr.bf16.mxu0 0
    %6033 = vmatpush1.bf16.msra.mxu0 0
    %6034 = vmatprep.subr.bf16.mxu0 0
    %6035 = vmatpush1.bf16.msra.mxu0 0
    %6036 = vmatprep.subr.bf16.mxu0 0
    %6037 = vmatpush1.bf16.msra.mxu0 0
    %6038 = vmatprep.subr.bf16.mxu0 0
    %6039 = vmatpush1.bf16.msra.mxu0 0
    %6040 = vmatprep.subr.bf16.mxu0 0
    %6041 = vmatpush1.bf16.msra.mxu0 0
    %6042 = vmatprep.subr.bf16.mxu0 0
    %6043 = vmatpush1.bf16.msra.mxu0 0
    %6044 = vmatprep.subr.bf16.mxu0 0
    %6045 = vmatpush1.bf16.msra.mxu0 0
    %6046 = vmatprep.subr.bf16.mxu0 0
    %6047 = vmatpush1.bf16.msra.mxu0 0
    %6048 = vmatprep.subr.bf16.mxu0 0
    %6049 = vmatpush1.bf16.msra.mxu0 0
    %6050 = vmatprep.subr.bf16.mxu0 0
    %6051 = vmatpush1.bf16.msra.mxu0 0
    %6052 = vmatprep.subr.bf16.mxu0 0
    %6053 = vmatpush1.bf16.msra.mxu0 0
    %6054 = vmatprep.mubr.bf16.mxu0 0
    %6055 = vmatmul.mubr.bf16.gmra.mrb[0].mxu0 %v5934
    %v6056 = vpop.f32.mrb[0].mxu0
    %v6057 = vadd.f32 %v6017, %v6056
    %v6058 = vpop.f32.mrb[0].mxu0
    %v6059 = vpop.f32.mrb[0].mxu0
    %v6060 = vpop.f32.mrb[0].mxu0
    %6061 = vdwg.mxu0
    %v6062 = vunpack.c.h.b16 %v5148
    %v6063 = vunpack.c.h.b16 %v5149
    %v6064 = vunpack.c.h.b16 %v5150
    %v6065 = vunpack.c.h.b16 %v5151
    %v6066 = vunpack.c.h.b16 %v5152
    %v6067 = vunpack.c.h.b16 %v5153
    %v6068 = vunpack.c.h.b16 %v5154
    %v6069 = vpack.c.b16 %v6063, %v6062
    %v6070 = vpack.c.b16 %v6065, %v6064
    %v6071 = vpack.c.b16 %v6067, %v6066
    %v6072 = vpack.c.b16 %v6068, %v6068
    %6073 = vrot.lane.b32.xlu0 %v5489, 78
    %v6074 = vpop.permute.xlu0 %6073
    %6075 = vrot.lane.b32.xlu0 %v6069, 78
    %v6076 = vpop.permute.xlu0 %6075
    %6077 = vrot.lane.b32.xlu0 %v5490, 78
    %v6078 = vpop.permute.xlu0 %6077
    %6079 = vrot.lane.b32.xlu0 %v6070, 78
    %v6080 = vpop.permute.xlu0 %6079
    %6081 = vrot.lane.b32.xlu0 %v5491, 78
    %v6082 = vpop.permute.xlu0 %6081
    %6083 = vrot.lane.b32.xlu0 %v6071, 78
    %v6084 = vpop.permute.xlu0 %6083
    %6085 = vrot.lane.b32.xlu0 %v5492, 78
    %v6086 = vpop.permute.xlu0 %6085
    %6087 = vrot.lane.b32.xlu0 %v6072, 78
    %v6088 = vpop.permute.xlu0 %6087
    %v6089 = vsel %vm5918, %v6074, %v6076
    %v6090 = vsel %vm5918, %v6078, %v6080
    %v6091 = vsel %vm5918, %v6082, %v6084
    %v6092 = vsel %vm5918, %v6086, %v6088
    %6096 = vrot.lane.b32.xlu0 %v5315, 78
    %v6097 = vpop.permute.xlu0 %6096
    %6098 = vrot.lane.b32.xlu0 %v5870, 78
    %v6099 = vpop.permute.xlu0 %6098
    %v6100 = vsel %vm5930, %v6097, %v6099
    %v6103 = vsel %vm332, %v6092, 0
    %6105 = vmatprep.subr.bf16.mxu0 0
    %6106 = vmatpush1.bf16.msra.mxu0 %v6089
    %6107 = vmatprep.subr.bf16.mxu0 0
    %6108 = vmatpush1.bf16.msra.mxu0 %v6090
    %6109 = vmatprep.subr.bf16.mxu0 0
    %6110 = vmatpush1.bf16.msra.mxu0 %v6091
    %6111 = vmatprep.subr.bf16.mxu0 0
    %6112 = vmatpush1.bf16.msra.mxu0 %v6103
    %6113 = vmatprep.subr.bf16.mxu0 0
    %6114 = vmatpush1.bf16.msra.mxu0 0
    %6115 = vmatprep.subr.bf16.mxu0 0
    %6116 = vmatpush1.bf16.msra.mxu0 0
    %6117 = vmatprep.subr.bf16.mxu0 0
    %6118 = vmatpush1.bf16.msra.mxu0 0
    %6119 = vmatprep.subr.bf16.mxu0 0
    %6120 = vmatpush1.bf16.msra.mxu0 0
    %6121 = vmatprep.subr.bf16.mxu0 0
    %6122 = vmatpush1.bf16.msra.mxu0 0
    %6123 = vmatprep.subr.bf16.mxu0 0
    %6124 = vmatpush1.bf16.msra.mxu0 0
    %6125 = vmatprep.subr.bf16.mxu0 0
    %6126 = vmatpush1.bf16.msra.mxu0 0
    %6127 = vmatprep.subr.bf16.mxu0 0
    %6128 = vmatpush1.bf16.msra.mxu0 0
    %6129 = vmatprep.subr.bf16.mxu0 0
    %6130 = vmatpush1.bf16.msra.mxu0 0
    %6131 = vmatprep.subr.bf16.mxu0 0
    %6132 = vmatpush1.bf16.msra.mxu0 0
    %6133 = vmatprep.subr.bf16.mxu0 0
    %6134 = vmatpush1.bf16.msra.mxu0 0
    %6135 = vmatprep.subr.bf16.mxu0 0
    %6136 = vmatpush1.bf16.msra.mxu0 0
    %6137 = vmatprep.mubr.bf16.mxu0 0
    %6138 = vmatmul.mubr.bf16.gmra.mrb[0].mxu0 %v5934
    %v6139 = vpop.f32.mrb[0].mxu0
    %v6140 = vadd.f32 %v6100, %v6139
    %v6141 = vpop.f32.mrb[0].mxu0
    %v6142 = vpop.f32.mrb[0].mxu0
    %v6143 = vpop.f32.mrb[0].mxu0
    %6144 = vdwg.mxu0
    %v6145 = vunpack.c.h.b16 %v5155
    %v6146 = vunpack.c.h.b16 %v5156
    %v6147 = vunpack.c.h.b16 %v5157
    %v6148 = vunpack.c.h.b16 %v5158
    %v6149 = vunpack.c.h.b16 %v5159
    %v6150 = vunpack.c.h.b16 %v5160
    %v6151 = vunpack.c.h.b16 %v5161
    %v6152 = vpack.c.b16 %v6146, %v6145
    %v6153 = vpack.c.b16 %v6148, %v6147
    %v6154 = vpack.c.b16 %v6150, %v6149
    %v6155 = vpack.c.b16 %v6151, %v6151
    %6156 = vrot.lane.b32.xlu0 %v5553, 78
    %v6157 = vpop.permute.xlu0 %6156
    %6158 = vrot.lane.b32.xlu0 %v6152, 78
    %v6159 = vpop.permute.xlu0 %6158
    %6160 = vrot.lane.b32.xlu0 %v5554, 78
    %v6161 = vpop.permute.xlu0 %6160
    %6162 = vrot.lane.b32.xlu0 %v6153, 78
    %v6163 = vpop.permute.xlu0 %6162
    %6164 = vrot.lane.b32.xlu0 %v5555, 78
    %v6165 = vpop.permute.xlu0 %6164
    %6166 = vrot.lane.b32.xlu0 %v6154, 78
    %v6167 = vpop.permute.xlu0 %6166
    %6168 = vrot.lane.b32.xlu0 %v5556, 78
    %v6169 = vpop.permute.xlu0 %6168
    %6170 = vrot.lane.b32.xlu0 %v6155, 78
    %v6171 = vpop.permute.xlu0 %6170
    %v6172 = vsel %vm5918, %v6157, %v6159
    %v6173 = vsel %vm5918, %v6161, %v6163
    %v6174 = vsel %vm5918, %v6165, %v6167
    %v6175 = vsel %vm5918, %v6169, %v6171
    %6179 = vrot.lane.b32.xlu0 %v5319, 78
    %v6180 = vpop.permute.xlu0 %6179
    %6181 = vrot.lane.b32.xlu0 %v5874, 78
    %v6182 = vpop.permute.xlu0 %6181
    %v6183 = vsel %vm5930, %v6180, %v6182
    %v6186 = vsel %vm332, %v6175, 0
    %6188 = vmatprep.subr.bf16.mxu0 0
    %6189 = vmatpush1.bf16.msra.mxu0 %v6172
    %6190 = vmatprep.subr.bf16.mxu0 0
    %6191 = vmatpush1.bf16.msra.mxu0 %v6173
    %6192 = vmatprep.subr.bf16.mxu0 0
    %6193 = vmatpush1.bf16.msra.mxu0 %v6174
    %6194 = vmatprep.subr.bf16.mxu0 0
    %6195 = vmatpush1.bf16.msra.mxu0 %v6186
    %6196 = vmatprep.subr.bf16.mxu0 0
    %6197 = vmatpush1.bf16.msra.mxu0 0
    %6198 = vmatprep.subr.bf16.mxu0 0
    %6199 = vmatpush1.bf16.msra.mxu0 0
    %6200 = vmatprep.subr.bf16.mxu0 0
    %6201 = vmatpush1.bf16.msra.mxu0 0
    %6202 = vmatprep.subr.bf16.mxu0 0
    %6203 = vmatpush1.bf16.msra.mxu0 0
    %6204 = vmatprep.subr.bf16.mxu0 0
    %6205 = vmatpush1.bf16.msra.mxu0 0
    %6206 = vmatprep.subr.bf16.mxu0 0
    %6207 = vmatpush1.bf16.msra.mxu0 0
    %6208 = vmatprep.subr.bf16.mxu0 0
    %6209 = vmatpush1.bf16.msra.mxu0 0
    %6210 = vmatprep.subr.bf16.mxu0 0
    %6211 = vmatpush1.bf16.msra.mxu0 0
    %6212 = vmatprep.subr.bf16.mxu0 0
    %6213 = vmatpush1.bf16.msra.mxu0 0
    %6214 = vmatprep.subr.bf16.mxu0 0
    %6215 = vmatpush1.bf16.msra.mxu0 0
    %6216 = vmatprep.subr.bf16.mxu0 0
    %6217 = vmatpush1.bf16.msra.mxu0 0
    %6218 = vmatprep.subr.bf16.mxu0 0
    %6219 = vmatpush1.bf16.msra.mxu0 0
    %6220 = vmatprep.mubr.bf16.mxu0 0
    %6221 = vmatmul.mubr.bf16.gmra.mrb[0].mxu0 %v5934
    %v6222 = vpop.f32.mrb[0].mxu0
    %v6223 = vadd.f32 %v6183, %v6222
    %v6224 = vpop.f32.mrb[0].mxu0
    %v6225 = vpop.f32.mrb[0].mxu0
    %v6226 = vpop.f32.mrb[0].mxu0
    %6227 = vdwg.mxu0
    %v6228 = vunpack.c.h.b16 %v5162
    %v6229 = vunpack.c.h.b16 %v5163
    %v6230 = vunpack.c.h.b16 %v5164
    %v6231 = vunpack.c.h.b16 %v5165
    %v6232 = vunpack.c.h.b16 %v5166
    %v6233 = vunpack.c.h.b16 %v5167
    %v6234 = vunpack.c.h.b16 %v5168
    %v6235 = vpack.c.b16 %v6229, %v6228
    %v6236 = vpack.c.b16 %v6231, %v6230
    %v6237 = vpack.c.b16 %v6233, %v6232
    %v6238 = vpack.c.b16 %v6234, %v6234
    %6239 = vrot.lane.b32.xlu0 %v5617, 78
    %v6240 = vpop.permute.xlu0 %6239
    %6241 = vrot.lane.b32.xlu0 %v6235, 78
    %v6242 = vpop.permute.xlu0 %6241
    %6243 = vrot.lane.b32.xlu0 %v5618, 78
    %v6244 = vpop.permute.xlu0 %6243
    %6245 = vrot.lane.b32.xlu0 %v6236, 78
    %v6246 = vpop.permute.xlu0 %6245
    %6247 = vrot.lane.b32.xlu0 %v5619, 78
    %v6248 = vpop.permute.xlu0 %6247
    %6249 = vrot.lane.b32.xlu0 %v6237, 78
    %v6250 = vpop.permute.xlu0 %6249
    %6251 = vrot.lane.b32.xlu0 %v5620, 78
    %v6252 = vpop.permute.xlu0 %6251
    %6253 = vrot.lane.b32.xlu0 %v6238, 78
    %v6254 = vpop.permute.xlu0 %6253
    %v6255 = vsel %vm5918, %v6240, %v6242
    %v6256 = vsel %vm5918, %v6244, %v6246
    %v6257 = vsel %vm5918, %v6248, %v6250
    %v6258 = vsel %vm5918, %v6252, %v6254
    %6262 = vrot.lane.b32.xlu0 %v5323, 78
    %v6263 = vpop.permute.xlu0 %6262
    %6264 = vrot.lane.b32.xlu0 %v5878, 78
    %v6265 = vpop.permute.xlu0 %6264
    %v6266 = vsel %vm5930, %v6263, %v6265
    %v6269 = vsel %vm332, %v6258, 0
    %6271 = vmatprep.subr.bf16.mxu0 0
    %6272 = vmatpush1.bf16.msra.mxu0 %v6255
    %6273 = vmatprep.subr.bf16.mxu0 0
    %6274 = vmatpush1.bf16.msra.mxu0 %v6256
    %6275 = vmatprep.subr.bf16.mxu0 0
    %6276 = vmatpush1.bf16.msra.mxu0 %v6257
    %6277 = vmatprep.subr.bf16.mxu0 0
    %6278 = vmatpush1.bf16.msra.mxu0 %v6269
    %6279 = vmatprep.subr.bf16.mxu0 0
    %6280 = vmatpush1.bf16.msra.mxu0 0
    %6281 = vmatprep.subr.bf16.mxu0 0
    %6282 = vmatpush1.bf16.msra.mxu0 0
    %6283 = vmatprep.subr.bf16.mxu0 0
    %6284 = vmatpush1.bf16.msra.mxu0 0
    %6285 = vmatprep.subr.bf16.mxu0 0
    %6286 = vmatpush1.bf16.msra.mxu0 0
    %6287 = vmatprep.subr.bf16.mxu0 0
    %6288 = vmatpush1.bf16.msra.mxu0 0
    %6289 = vmatprep.subr.bf16.mxu0 0
    %6290 = vmatpush1.bf16.msra.mxu0 0
    %6291 = vmatprep.subr.bf16.mxu0 0
    %6292 = vmatpush1.bf16.msra.mxu0 0
    %6293 = vmatprep.subr.bf16.mxu0 0
    %6294 = vmatpush1.bf16.msra.mxu0 0
    %6295 = vmatprep.subr.bf16.mxu0 0
    %6296 = vmatpush1.bf16.msra.mxu0 0
    %6297 = vmatprep.subr.bf16.mxu0 0
    %6298 = vmatpush1.bf16.msra.mxu0 0
    %6299 = vmatprep.subr.bf16.mxu0 0
    %6300 = vmatpush1.bf16.msra.mxu0 0
    %6301 = vmatprep.subr.bf16.mxu0 0
    %6302 = vmatpush1.bf16.msra.mxu0 0
    %6303 = vmatprep.mubr.bf16.mxu0 0
    %6304 = vmatmul.mubr.bf16.gmra.mrb[0].mxu0 %v5934
    %v6305 = vpop.f32.mrb[0].mxu0
    %v6306 = vadd.f32 %v6266, %v6305
    %v6307 = vpop.f32.mrb[0].mxu0
    %v6308 = vpop.f32.mrb[0].mxu0
    %v6309 = vpop.f32.mrb[0].mxu0
    %6310 = vdwg.mxu0
    %v6311 = vunpack.c.h.b16 %v5169
    %v6312 = vunpack.c.h.b16 %v5170
    %v6313 = vunpack.c.h.b16 %v5171
    %v6314 = vunpack.c.h.b16 %v5172
    %v6315 = vunpack.c.h.b16 %v5173
    %v6316 = vunpack.c.h.b16 %v5174
    %v6317 = vunpack.c.h.b16 %v5175
    %v6318 = vpack.c.b16 %v6312, %v6311
    %v6319 = vpack.c.b16 %v6314, %v6313
    %v6320 = vpack.c.b16 %v6316, %v6315
    %v6321 = vpack.c.b16 %v6317, %v6317
    %6322 = vrot.lane.b32.xlu0 %v5681, 78
    %v6323 = vpop.permute.xlu0 %6322
    %6324 = vrot.lane.b32.xlu0 %v6318, 78
    %v6325 = vpop.permute.xlu0 %6324
    %6326 = vrot.lane.b32.xlu0 %v5682, 78
    %v6327 = vpop.permute.xlu0 %6326
    %6328 = vrot.lane.b32.xlu0 %v6319, 78
    %v6329 = vpop.permute.xlu0 %6328
    %6330 = vrot.lane.b32.xlu0 %v5683, 78
    %v6331 = vpop.permute.xlu0 %6330
    %6332 = vrot.lane.b32.xlu0 %v6320, 78
    %v6333 = vpop.permute.xlu0 %6332
    %6334 = vrot.lane.b32.xlu0 %v5684, 78
    %v6335 = vpop.permute.xlu0 %6334
    %6336 = vrot.lane.b32.xlu0 %v6321, 78
    %v6337 = vpop.permute.xlu0 %6336
    %v6338 = vsel %vm5918, %v6323, %v6325
    %v6339 = vsel %vm5918, %v6327, %v6329
    %v6340 = vsel %vm5918, %v6331, %v6333
    %v6341 = vsel %vm5918, %v6335, %v6337
    %6345 = vrot.lane.b32.xlu0 %v5327, 78
    %v6346 = vpop.permute.xlu0 %6345
    %6347 = vrot.lane.b32.xlu0 %v5882, 78
    %v6348 = vpop.permute.xlu0 %6347
    %v6349 = vsel %vm5930, %v6346, %v6348
    %v6352 = vsel %vm332, %v6341, 0
    %6354 = vmatprep.subr.bf16.mxu0 0
    %6355 = vmatpush1.bf16.msra.mxu0 %v6338
    %6356 = vmatprep.subr.bf16.mxu0 0
    %6357 = vmatpush1.bf16.msra.mxu0 %v6339
    %6358 = vmatprep.subr.bf16.mxu0 0
    %6359 = vmatpush1.bf16.msra.mxu0 %v6340
    %6360 = vmatprep.subr.bf16.mxu0 0
    %6361 = vmatpush1.bf16.msra.mxu0 %v6352
    %6362 = vmatprep.subr.bf16.mxu0 0
    %6363 = vmatpush1.bf16.msra.mxu0 0
    %6364 = vmatprep.subr.bf16.mxu0 0
    %6365 = vmatpush1.bf16.msra.mxu0 0
    %6366 = vmatprep.subr.bf16.mxu0 0
    %6367 = vmatpush1.bf16.msra.mxu0 0
    %6368 = vmatprep.subr.bf16.mxu0 0
    %6369 = vmatpush1.bf16.msra.mxu0 0
    %6370 = vmatprep.subr.bf16.mxu0 0
    %6371 = vmatpush1.bf16.msra.mxu0 0
    %6372 = vmatprep.subr.bf16.mxu0 0
    %6373 = vmatpush1.bf16.msra.mxu0 0
    %6374 = vmatprep.subr.bf16.mxu0 0
    %6375 = vmatpush1.bf16.msra.mxu0 0
    %6376 = vmatprep.subr.bf16.mxu0 0
    %6377 = vmatpush1.bf16.msra.mxu0 0
    %6378 = vmatprep.subr.bf16.mxu0 0
    %6379 = vmatpush1.bf16.msra.mxu0 0
    %6380 = vmatprep.subr.bf16.mxu0 0
    %6381 = vmatpush1.bf16.msra.mxu0 0
    %6382 = vmatprep.subr.bf16.mxu0 0
    %6383 = vmatpush1.bf16.msra.mxu0 0
    %6384 = vmatprep.subr.bf16.mxu0 0
    %6385 = vmatpush1.bf16.msra.mxu0 0
    %6386 = vmatprep.mubr.bf16.mxu0 0
    %6387 = vmatmul.mubr.bf16.gmra.mrb[0].mxu0 %v5934
    %v6388 = vpop.f32.mrb[0].mxu0
    %v6389 = vadd.f32 %v6349, %v6388
    %v6390 = vpop.f32.mrb[0].mxu0
    %v6391 = vpop.f32.mrb[0].mxu0
    %v6392 = vpop.f32.mrb[0].mxu0
    %6393 = vdwg.mxu0
    %v6394 = vunpack.c.h.b16 %v5176
    %v6395 = vunpack.c.h.b16 %v5177
    %v6396 = vunpack.c.h.b16 %v5178
    %v6397 = vunpack.c.h.b16 %v5179
    %v6398 = vunpack.c.h.b16 %v5180
    %v6399 = vunpack.c.h.b16 %v5181
    %v6400 = vunpack.c.h.b16 %v5182
    %v6401 = vpack.c.b16 %v6395, %v6394
    %v6402 = vpack.c.b16 %v6397, %v6396
    %v6403 = vpack.c.b16 %v6399, %v6398
    %v6404 = vpack.c.b16 %v6400, %v6400
    %6405 = vrot.lane.b32.xlu0 %v5745, 78
    %v6406 = vpop.permute.xlu0 %6405
    %6407 = vrot.lane.b32.xlu0 %v6401, 78
    %v6408 = vpop.permute.xlu0 %6407
    %6409 = vrot.lane.b32.xlu0 %v5746, 78
    %v6410 = vpop.permute.xlu0 %6409
    %6411 = vrot.lane.b32.xlu0 %v6402, 78
    %v6412 = vpop.permute.xlu0 %6411
    %6413 = vrot.lane.b32.xlu0 %v5747, 78
    %v6414 = vpop.permute.xlu0 %6413
    %6415 = vrot.lane.b32.xlu0 %v6403, 78
    %v6416 = vpop.permute.xlu0 %6415
    %6417 = vrot.lane.b32.xlu0 %v5748, 78
    %v6418 = vpop.permute.xlu0 %6417
    %6419 = vrot.lane.b32.xlu0 %v6404, 78
    %v6420 = vpop.permute.xlu0 %6419
    %v6421 = vsel %vm5918, %v6406, %v6408
    %v6422 = vsel %vm5918, %v6410, %v6412
    %v6423 = vsel %vm5918, %v6414, %v6416
    %v6424 = vsel %vm5918, %v6418, %v6420
    %6428 = vrot.lane.b32.xlu0 %v5331, 78
    %v6429 = vpop.permute.xlu0 %6428
    %6430 = vrot.lane.b32.xlu0 %v5886, 78
    %v6431 = vpop.permute.xlu0 %6430
    %v6432 = vsel %vm5930, %v6429, %v6431
    %v6435 = vsel %vm332, %v6424, 0
    %6437 = vmatprep.subr.bf16.mxu0 0
    %6438 = vmatpush1.bf16.msra.mxu0 %v6421
    %6439 = vmatprep.subr.bf16.mxu0 0
    %6440 = vmatpush1.bf16.msra.mxu0 %v6422
    %6441 = vmatprep.subr.bf16.mxu0 0
    %6442 = vmatpush1.bf16.msra.mxu0 %v6423
    %6443 = vmatprep.subr.bf16.mxu0 0
    %6444 = vmatpush1.bf16.msra.mxu0 %v6435
    %6445 = vmatprep.subr.bf16.mxu0 0
    %6446 = vmatpush1.bf16.msra.mxu0 0
    %6447 = vmatprep.subr.bf16.mxu0 0
    %6448 = vmatpush1.bf16.msra.mxu0 0
    %6449 = vmatprep.subr.bf16.mxu0 0
    %6450 = vmatpush1.bf16.msra.mxu0 0
    %6451 = vmatprep.subr.bf16.mxu0 0
    %6452 = vmatpush1.bf16.msra.mxu0 0
    %6453 = vmatprep.subr.bf16.mxu0 0
    %6454 = vmatpush1.bf16.msra.mxu0 0
    %6455 = vmatprep.subr.bf16.mxu0 0
    %6456 = vmatpush1.bf16.msra.mxu0 0
    %6457 = vmatprep.subr.bf16.mxu0 0
    %6458 = vmatpush1.bf16.msra.mxu0 0
    %6459 = vmatprep.subr.bf16.mxu0 0
    %6460 = vmatpush1.bf16.msra.mxu0 0
    %6461 = vmatprep.subr.bf16.mxu0 0
    %6462 = vmatpush1.bf16.msra.mxu0 0
    %6463 = vmatprep.subr.bf16.mxu0 0
    %6464 = vmatpush1.bf16.msra.mxu0 0
    %6465 = vmatprep.subr.bf16.mxu0 0
    %6466 = vmatpush1.bf16.msra.mxu0 0
    %6467 = vmatprep.subr.bf16.mxu0 0
    %6468 = vmatpush1.bf16.msra.mxu0 0
    %6469 = vmatprep.mubr.bf16.mxu0 0
    %6470 = vmatmul.mubr.bf16.gmra.mrb[0].mxu0 %v5934
    %v6471 = vpop.f32.mrb[0].mxu0
    %v6472 = vadd.f32 %v6432, %v6471
    %v6473 = vpop.f32.mrb[0].mxu0
    %v6474 = vpop.f32.mrb[0].mxu0
    %v6475 = vpop.f32.mrb[0].mxu0
    %6476 = vdwg.mxu0
    %v6477 = vunpack.c.h.b16 %v5183
    %v6478 = vunpack.c.h.b16 %v5184
    %v6479 = vunpack.c.h.b16 %v5185
    %v6480 = vunpack.c.h.b16 %v5186
    %v6481 = vunpack.c.h.b16 %v5187
    %v6482 = vunpack.c.h.b16 %v5188
    %v6483 = vunpack.c.h.b16 %v5189
    %v6484 = vpack.c.b16 %v6478, %v6477
    %v6485 = vpack.c.b16 %v6480, %v6479
    %v6486 = vpack.c.b16 %v6482, %v6481
    %v6487 = vpack.c.b16 %v6483, %v6483
    %6488 = vrot.lane.b32.xlu0 %v5809, 78
    %v6489 = vpop.permute.xlu0 %6488
    %6490 = vrot.lane.b32.xlu0 %v6484, 78
    %v6491 = vpop.permute.xlu0 %6490
    %6492 = vrot.lane.b32.xlu0 %v5810, 78
    %v6493 = vpop.permute.xlu0 %6492
    %6494 = vrot.lane.b32.xlu0 %v6485, 78
    %v6495 = vpop.permute.xlu0 %6494
    %6496 = vrot.lane.b32.xlu0 %v5811, 78
    %v6497 = vpop.permute.xlu0 %6496
    %6498 = vrot.lane.b32.xlu0 %v6486, 78
    %v6499 = vpop.permute.xlu0 %6498
    %6500 = vrot.lane.b32.xlu0 %v5812, 78
    %v6501 = vpop.permute.xlu0 %6500
    %6502 = vrot.lane.b32.xlu0 %v6487, 78
    %v6503 = vpop.permute.xlu0 %6502
    %v6504 = vsel %vm5918, %v6489, %v6491
    %v6505 = vsel %vm5918, %v6493, %v6495
    %v6506 = vsel %vm5918, %v6497, %v6499
    %v6507 = vsel %vm5918, %v6501, %v6503
    %6511 = vrot.lane.b32.xlu0 %v5335, 78
    %v6512 = vpop.permute.xlu0 %6511
    %6513 = vrot.lane.b32.xlu0 %v5890, 78
    %v6514 = vpop.permute.xlu0 %6513
    %v6515 = vsel %vm5930, %v6512, %v6514
    %v6518 = vsel %vm332, %v6507, 0
    %6520 = vmatprep.subr.bf16.mxu0 0
    %6521 = vmatpush1.bf16.msra.mxu0 %v6504
    %6522 = vmatprep.subr.bf16.mxu0 0
    %6523 = vmatpush1.bf16.msra.mxu0 %v6505
    %6524 = vmatprep.subr.bf16.mxu0 0
    %6525 = vmatpush1.bf16.msra.mxu0 %v6506
    %6526 = vmatprep.subr.bf16.mxu0 0
    %6527 = vmatpush1.bf16.msra.mxu0 %v6518
    %6528 = vmatprep.subr.bf16.mxu0 0
    %6529 = vmatpush1.bf16.msra.mxu0 0
    %6530 = vmatprep.subr.bf16.mxu0 0
    %6531 = vmatpush1.bf16.msra.mxu0 0
    %6532 = vmatprep.subr.bf16.mxu0 0
    %6533 = vmatpush1.bf16.msra.mxu0 0
    %6534 = vmatprep.subr.bf16.mxu0 0
    %6535 = vmatpush1.bf16.msra.mxu0 0
    %6536 = vmatprep.subr.bf16.mxu0 0
    %6537 = vmatpush1.bf16.msra.mxu0 0
    %6538 = vmatprep.subr.bf16.mxu0 0
    %6539 = vmatpush1.bf16.msra.mxu0 0
    %6540 = vmatprep.subr.bf16.mxu0 0
    %6541 = vmatpush1.bf16.msra.mxu0 0
    %6542 = vmatprep.subr.bf16.mxu0 0
    %6543 = vmatpush1.bf16.msra.mxu0 0
    %6544 = vmatprep.subr.bf16.mxu0 0
    %6545 = vmatpush1.bf16.msra.mxu0 0
    %6546 = vmatprep.subr.bf16.mxu0 0
    %6547 = vmatpush1.bf16.msra.mxu0 0
    %6548 = vmatprep.subr.bf16.mxu0 0
    %6549 = vmatpush1.bf16.msra.mxu0 0
    %6550 = vmatprep.subr.bf16.mxu0 0
    %6551 = vmatpush1.bf16.msra.mxu0 0
    %6552 = vmatprep.mubr.bf16.mxu0 0
    %6553 = vmatmul.mubr.bf16.gmra.mrb[0].mxu0 %v5934
    %v6554 = vpop.f32.mrb[0].mxu0
    %v6555 = vadd.f32 %v6515, %v6554
    %v6556 = vpop.f32.mrb[0].mxu0
    %v6557 = vpop.f32.mrb[0].mxu0
    %v6558 = vpop.f32.mrb[0].mxu0
    %6559 = vdwg.mxu0
    %v6560 = vmul.f32 %v5406, 0.14142136
    %v6561 = vmul.f32 %v5470, 0.14142136
    %v6562 = vmul.f32 %v5534, 0.14142136
    %v6563 = vmul.f32 %v5598, 0.14142136
    %v6564 = vmul.f32 %v5662, 0.14142136
    %v6565 = vmul.f32 %v5726, 0.14142136
    %v6566 = vmul.f32 %v5790, 0.14142136
    %v6567 = vmul.f32 %v5854, 0.14142136
    %v6568 = vpack.c.bf16 %v6560, %v6560
    %v6569 = vpack.c.bf16 %v6561, %v6561
    %v6570 = vpack.c.bf16 %v6562, %v6562
    %v6571 = vpack.c.bf16 %v6563, %v6563
    %v6572 = vpack.c.bf16 %v6564, %v6564
    %v6573 = vpack.c.bf16 %v6565, %v6565
    %v6574 = vpack.c.bf16 %v6566, %v6566
    %v6575 = vpack.c.bf16 %v6567, %v6567
    %v6576 = vpack.c.bf16 %v5974, %v5974
    %v6577 = vpack.c.bf16 %v6057, %v6057
    %v6578 = vpack.c.bf16 %v6140, %v6140
    %v6579 = vpack.c.bf16 %v6223, %v6223
    %v6580 = vpack.c.bf16 %v6306, %v6306
    %v6581 = vpack.c.bf16 %v6389, %v6389
    %v6582 = vpack.c.bf16 %v6472, %v6472
    %v6583 = vpack.c.bf16 %v6555, %v6555
    %v6585 = vsel %vm328, %v6568, 0
    %v6588 = vsel %vm328, %v6576, 0
    %6590 = vmatprep.subr.bf16.mxu0 0
    %6591 = vmatpush1.bf16.xpose.msra.mxu0 %v6588
    %6592 = vmatprep.subr.bf16.mxu0 0
    %6593 = vmatpush1.bf16.xpose.msra.mxu0 0
    %6594 = vmatprep.subr.bf16.mxu0 0
    %6595 = vmatpush1.bf16.xpose.msra.mxu0 0
    %6596 = vmatprep.subr.bf16.mxu0 0
    %6597 = vmatpush1.bf16.xpose.msra.mxu0 0
    %6598 = vmatprep.subr.bf16.mxu0 0
    %6599 = vmatpush1.bf16.xpose.msra.mxu0 0
    %6600 = vmatprep.subr.bf16.mxu0 0
    %6601 = vmatpush1.bf16.xpose.msra.mxu0 0
    %6602 = vmatprep.subr.bf16.mxu0 0
    %6603 = vmatpush1.bf16.xpose.msra.mxu0 0
    %6604 = vmatprep.subr.bf16.mxu0 0
    %6605 = vmatpush1.bf16.xpose.msra.mxu0 0
    %6606 = vmatprep.subr.bf16.mxu0 0
    %6607 = vmatpush1.bf16.xpose.msra.mxu0 0
    %6608 = vmatprep.subr.bf16.mxu0 0
    %6609 = vmatpush1.bf16.xpose.msra.mxu0 0
    %6610 = vmatprep.subr.bf16.mxu0 0
    %6611 = vmatpush1.bf16.xpose.msra.mxu0 0
    %6612 = vmatprep.subr.bf16.mxu0 0
    %6613 = vmatpush1.bf16.xpose.msra.mxu0 0
    %6614 = vmatprep.subr.bf16.mxu0 0
    %6615 = vmatpush1.bf16.xpose.msra.mxu0 0
    %6616 = vmatprep.subr.bf16.mxu0 0
    %6617 = vmatpush1.bf16.xpose.msra.mxu0 0
    %6618 = vmatprep.subr.bf16.mxu0 0
    %6619 = vmatpush1.bf16.xpose.msra.mxu0 0
    %6620 = vmatprep.subr.bf16.mxu0 0
    %6621 = vmatpush1.bf16.xpose.msra.mxu0 0
    %6622 = vmatprep.mubr.bf16.mxu0 0
    %6623 = vmatmul.mubr.bf16.gmra.mrb[0].mxu0 %v6585
    %v6624 = vpop.f32.mrb[0].mxu0
    %v6625 = vadd.f32 0.0, %v6624
    %v6626 = vpop.f32.mrb[0].mxu0
    %v6627 = vpop.f32.mrb[0].mxu0
    %v6628 = vpop.f32.mrb[0].mxu0
    %6629 = vdwg.mxu0
    %v6631 = vsel %vm328, %v6569, 0
    %v6634 = vsel %vm328, %v6577, 0
    %6636 = vmatprep.subr.bf16.mxu0 0
    %6637 = vmatpush1.bf16.xpose.msra.mxu0 %v6634
    %6638 = vmatprep.subr.bf16.mxu0 0
    %6639 = vmatpush1.bf16.xpose.msra.mxu0 0
    %6640 = vmatprep.subr.bf16.mxu0 0
    %6641 = vmatpush1.bf16.xpose.msra.mxu0 0
    %6642 = vmatprep.subr.bf16.mxu0 0
    %6643 = vmatpush1.bf16.xpose.msra.mxu0 0
    %6644 = vmatprep.subr.bf16.mxu0 0
    %6645 = vmatpush1.bf16.xpose.msra.mxu0 0
    %6646 = vmatprep.subr.bf16.mxu0 0
    %6647 = vmatpush1.bf16.xpose.msra.mxu0 0
    %6648 = vmatprep.subr.bf16.mxu0 0
    %6649 = vmatpush1.bf16.xpose.msra.mxu0 0
    %6650 = vmatprep.subr.bf16.mxu0 0
    %6651 = vmatpush1.bf16.xpose.msra.mxu0 0
    %6652 = vmatprep.subr.bf16.mxu0 0
    %6653 = vmatpush1.bf16.xpose.msra.mxu0 0
    %6654 = vmatprep.subr.bf16.mxu0 0
    %6655 = vmatpush1.bf16.xpose.msra.mxu0 0
    %6656 = vmatprep.subr.bf16.mxu0 0
    %6657 = vmatpush1.bf16.xpose.msra.mxu0 0
    %6658 = vmatprep.subr.bf16.mxu0 0
    %6659 = vmatpush1.bf16.xpose.msra.mxu0 0
    %6660 = vmatprep.subr.bf16.mxu0 0
    %6661 = vmatpush1.bf16.xpose.msra.mxu0 0
    %6662 = vmatprep.subr.bf16.mxu0 0
    %6663 = vmatpush1.bf16.xpose.msra.mxu0 0
    %6664 = vmatprep.subr.bf16.mxu0 0
    %6665 = vmatpush1.bf16.xpose.msra.mxu0 0
    %6666 = vmatprep.subr.bf16.mxu0 0
    %6667 = vmatpush1.bf16.xpose.msra.mxu0 0
    %6668 = vmatprep.mubr.bf16.mxu0 0
    %6669 = vmatmul.mubr.bf16.gmra.mrb[0].mxu0 %v6631
    %v6670 = vpop.f32.mrb[0].mxu0
    %v6671 = vadd.f32 0.0, %v6670
    %v6672 = vpop.f32.mrb[0].mxu0
    %v6673 = vpop.f32.mrb[0].mxu0
    %v6674 = vpop.f32.mrb[0].mxu0
    %6675 = vdwg.mxu0
    %v6677 = vsel %vm328, %v6570, 0
    %v6680 = vsel %vm328, %v6578, 0
    %6682 = vmatprep.subr.bf16.mxu0 0
    %6683 = vmatpush1.bf16.xpose.msra.mxu0 %v6680
    %6684 = vmatprep.subr.bf16.mxu0 0
    %6685 = vmatpush1.bf16.xpose.msra.mxu0 0
    %6686 = vmatprep.subr.bf16.mxu0 0
    %6687 = vmatpush1.bf16.xpose.msra.mxu0 0
    %6688 = vmatprep.subr.bf16.mxu0 0
    %6689 = vmatpush1.bf16.xpose.msra.mxu0 0
    %6690 = vmatprep.subr.bf16.mxu0 0
    %6691 = vmatpush1.bf16.xpose.msra.mxu0 0
    %6692 = vmatprep.subr.bf16.mxu0 0
    %6693 = vmatpush1.bf16.xpose.msra.mxu0 0
    %6694 = vmatprep.subr.bf16.mxu0 0
    %6695 = vmatpush1.bf16.xpose.msra.mxu0 0
    %6696 = vmatprep.subr.bf16.mxu0 0
    %6697 = vmatpush1.bf16.xpose.msra.mxu0 0
    %6698 = vmatprep.subr.bf16.mxu0 0
    %6699 = vmatpush1.bf16.xpose.msra.mxu0 0
    %6700 = vmatprep.subr.bf16.mxu0 0
    %6701 = vmatpush1.bf16.xpose.msra.mxu0 0
    %6702 = vmatprep.subr.bf16.mxu0 0
    %6703 = vmatpush1.bf16.xpose.msra.mxu0 0
    %6704 = vmatprep.subr.bf16.mxu0 0
    %6705 = vmatpush1.bf16.xpose.msra.mxu0 0
    %6706 = vmatprep.subr.bf16.mxu0 0
    %6707 = vmatpush1.bf16.xpose.msra.mxu0 0
    %6708 = vmatprep.subr.bf16.mxu0 0
    %6709 = vmatpush1.bf16.xpose.msra.mxu0 0
    %6710 = vmatprep.subr.bf16.mxu0 0
    %6711 = vmatpush1.bf16.xpose.msra.mxu0 0
    %6712 = vmatprep.subr.bf16.mxu0 0
    %6713 = vmatpush1.bf16.xpose.msra.mxu0 0
    %6714 = vmatprep.mubr.bf16.mxu0 0
    %6715 = vmatmul.mubr.bf16.gmra.mrb[0].mxu0 %v6677
    %v6716 = vpop.f32.mrb[0].mxu0
    %v6717 = vadd.f32 0.0, %v6716
    %v6718 = vpop.f32.mrb[0].mxu0
    %v6719 = vpop.f32.mrb[0].mxu0
    %v6720 = vpop.f32.mrb[0].mxu0
    %6721 = vdwg.mxu0
    %v6723 = vsel %vm328, %v6571, 0
    %v6726 = vsel %vm328, %v6579, 0
    %6728 = vmatprep.subr.bf16.mxu0 0
    %6729 = vmatpush1.bf16.xpose.msra.mxu0 %v6726
    %6730 = vmatprep.subr.bf16.mxu0 0
    %6731 = vmatpush1.bf16.xpose.msra.mxu0 0
    %6732 = vmatprep.subr.bf16.mxu0 0
    %6733 = vmatpush1.bf16.xpose.msra.mxu0 0
    %6734 = vmatprep.subr.bf16.mxu0 0
    %6735 = vmatpush1.bf16.xpose.msra.mxu0 0
    %6736 = vmatprep.subr.bf16.mxu0 0
    %6737 = vmatpush1.bf16.xpose.msra.mxu0 0
    %6738 = vmatprep.subr.bf16.mxu0 0
    %6739 = vmatpush1.bf16.xpose.msra.mxu0 0
    %6740 = vmatprep.subr.bf16.mxu0 0
    %6741 = vmatpush1.bf16.xpose.msra.mxu0 0
    %6742 = vmatprep.subr.bf16.mxu0 0
    %6743 = vmatpush1.bf16.xpose.msra.mxu0 0
    %6744 = vmatprep.subr.bf16.mxu0 0
    %6745 = vmatpush1.bf16.xpose.msra.mxu0 0
    %6746 = vmatprep.subr.bf16.mxu0 0
    %6747 = vmatpush1.bf16.xpose.msra.mxu0 0
    %6748 = vmatprep.subr.bf16.mxu0 0
    %6749 = vmatpush1.bf16.xpose.msra.mxu0 0
    %6750 = vmatprep.subr.bf16.mxu0 0
    %6751 = vmatpush1.bf16.xpose.msra.mxu0 0
    %6752 = vmatprep.subr.bf16.mxu0 0
    %6753 = vmatpush1.bf16.xpose.msra.mxu0 0
    %6754 = vmatprep.subr.bf16.mxu0 0
    %6755 = vmatpush1.bf16.xpose.msra.mxu0 0
    %6756 = vmatprep.subr.bf16.mxu0 0
    %6757 = vmatpush1.bf16.xpose.msra.mxu0 0
    %6758 = vmatprep.subr.bf16.mxu0 0
    %6759 = vmatpush1.bf16.xpose.msra.mxu0 0
    %6760 = vmatprep.mubr.bf16.mxu0 0
    %6761 = vmatmul.mubr.bf16.gmra.mrb[0].mxu0 %v6723
    %v6762 = vpop.f32.mrb[0].mxu0
    %v6763 = vadd.f32 0.0, %v6762
    %v6764 = vpop.f32.mrb[0].mxu0
    %v6765 = vpop.f32.mrb[0].mxu0
    %v6766 = vpop.f32.mrb[0].mxu0
    %6767 = vdwg.mxu0
    %v6769 = vsel %vm328, %v6572, 0
    %v6772 = vsel %vm328, %v6580, 0
    %6774 = vmatprep.subr.bf16.mxu0 0
    %6775 = vmatpush1.bf16.xpose.msra.mxu0 %v6772
    %6776 = vmatprep.subr.bf16.mxu0 0
    %6777 = vmatpush1.bf16.xpose.msra.mxu0 0
    %6778 = vmatprep.subr.bf16.mxu0 0
    %6779 = vmatpush1.bf16.xpose.msra.mxu0 0
    %6780 = vmatprep.subr.bf16.mxu0 0
    %6781 = vmatpush1.bf16.xpose.msra.mxu0 0
    %6782 = vmatprep.subr.bf16.mxu0 0
    %6783 = vmatpush1.bf16.xpose.msra.mxu0 0
    %6784 = vmatprep.subr.bf16.mxu0 0
    %6785 = vmatpush1.bf16.xpose.msra.mxu0 0
    %6786 = vmatprep.subr.bf16.mxu0 0
    %6787 = vmatpush1.bf16.xpose.msra.mxu0 0
    %6788 = vmatprep.subr.bf16.mxu0 0
    %6789 = vmatpush1.bf16.xpose.msra.mxu0 0
    %6790 = vmatprep.subr.bf16.mxu0 0
    %6791 = vmatpush1.bf16.xpose.msra.mxu0 0
    %6792 = vmatprep.subr.bf16.mxu0 0
    %6793 = vmatpush1.bf16.xpose.msra.mxu0 0
    %6794 = vmatprep.subr.bf16.mxu0 0
    %6795 = vmatpush1.bf16.xpose.msra.mxu0 0
    %6796 = vmatprep.subr.bf16.mxu0 0
    %6797 = vmatpush1.bf16.xpose.msra.mxu0 0
    %6798 = vmatprep.subr.bf16.mxu0 0
    %6799 = vmatpush1.bf16.xpose.msra.mxu0 0
    %6800 = vmatprep.subr.bf16.mxu0 0
    %6801 = vmatpush1.bf16.xpose.msra.mxu0 0
    %6802 = vmatprep.subr.bf16.mxu0 0
    %6803 = vmatpush1.bf16.xpose.msra.mxu0 0
    %6804 = vmatprep.subr.bf16.mxu0 0
    %6805 = vmatpush1.bf16.xpose.msra.mxu0 0
    %6806 = vmatprep.mubr.bf16.mxu0 0
    %6807 = vmatmul.mubr.bf16.gmra.mrb[0].mxu0 %v6769
    %v6808 = vpop.f32.mrb[0].mxu0
    %v6809 = vadd.f32 0.0, %v6808
    %v6810 = vpop.f32.mrb[0].mxu0
    %v6811 = vpop.f32.mrb[0].mxu0
    %v6812 = vpop.f32.mrb[0].mxu0
    %6813 = vdwg.mxu0
    %v6815 = vsel %vm328, %v6573, 0
    %v6818 = vsel %vm328, %v6581, 0
    %6820 = vmatprep.subr.bf16.mxu0 0
    %6821 = vmatpush1.bf16.xpose.msra.mxu0 %v6818
    %6822 = vmatprep.subr.bf16.mxu0 0
    %6823 = vmatpush1.bf16.xpose.msra.mxu0 0
    %6824 = vmatprep.subr.bf16.mxu0 0
    %6825 = vmatpush1.bf16.xpose.msra.mxu0 0
    %6826 = vmatprep.subr.bf16.mxu0 0
    %6827 = vmatpush1.bf16.xpose.msra.mxu0 0
    %6828 = vmatprep.subr.bf16.mxu0 0
    %6829 = vmatpush1.bf16.xpose.msra.mxu0 0
    %6830 = vmatprep.subr.bf16.mxu0 0
    %6831 = vmatpush1.bf16.xpose.msra.mxu0 0
    %6832 = vmatprep.subr.bf16.mxu0 0
    %6833 = vmatpush1.bf16.xpose.msra.mxu0 0
    %6834 = vmatprep.subr.bf16.mxu0 0
    %6835 = vmatpush1.bf16.xpose.msra.mxu0 0
    %6836 = vmatprep.subr.bf16.mxu0 0
    %6837 = vmatpush1.bf16.xpose.msra.mxu0 0
    %6838 = vmatprep.subr.bf16.mxu0 0
    %6839 = vmatpush1.bf16.xpose.msra.mxu0 0
    %6840 = vmatprep.subr.bf16.mxu0 0
    %6841 = vmatpush1.bf16.xpose.msra.mxu0 0
    %6842 = vmatprep.subr.bf16.mxu0 0
    %6843 = vmatpush1.bf16.xpose.msra.mxu0 0
    %6844 = vmatprep.subr.bf16.mxu0 0
    %6845 = vmatpush1.bf16.xpose.msra.mxu0 0
    %6846 = vmatprep.subr.bf16.mxu0 0
    %6847 = vmatpush1.bf16.xpose.msra.mxu0 0
    %6848 = vmatprep.subr.bf16.mxu0 0
    %6849 = vmatpush1.bf16.xpose.msra.mxu0 0
    %6850 = vmatprep.subr.bf16.mxu0 0
    %6851 = vmatpush1.bf16.xpose.msra.mxu0 0
    %6852 = vmatprep.mubr.bf16.mxu0 0
    %6853 = vmatmul.mubr.bf16.gmra.mrb[0].mxu0 %v6815
    %v6854 = vpop.f32.mrb[0].mxu0
    %v6855 = vadd.f32 0.0, %v6854
    %v6856 = vpop.f32.mrb[0].mxu0
    %v6857 = vpop.f32.mrb[0].mxu0
    %v6858 = vpop.f32.mrb[0].mxu0
    %6859 = vdwg.mxu0
    %v6861 = vsel %vm328, %v6574, 0
    %v6864 = vsel %vm328, %v6582, 0
    %6866 = vmatprep.subr.bf16.mxu0 0
    %6867 = vmatpush1.bf16.xpose.msra.mxu0 %v6864
    %6868 = vmatprep.subr.bf16.mxu0 0
    %6869 = vmatpush1.bf16.xpose.msra.mxu0 0
    %6870 = vmatprep.subr.bf16.mxu0 0
    %6871 = vmatpush1.bf16.xpose.msra.mxu0 0
    %6872 = vmatprep.subr.bf16.mxu0 0
    %6873 = vmatpush1.bf16.xpose.msra.mxu0 0
    %6874 = vmatprep.subr.bf16.mxu0 0
    %6875 = vmatpush1.bf16.xpose.msra.mxu0 0
    %6876 = vmatprep.subr.bf16.mxu0 0
    %6877 = vmatpush1.bf16.xpose.msra.mxu0 0
    %6878 = vmatprep.subr.bf16.mxu0 0
    %6879 = vmatpush1.bf16.xpose.msra.mxu0 0
    %6880 = vmatprep.subr.bf16.mxu0 0
    %6881 = vmatpush1.bf16.xpose.msra.mxu0 0
    %6882 = vmatprep.subr.bf16.mxu0 0
    %6883 = vmatpush1.bf16.xpose.msra.mxu0 0
    %6884 = vmatprep.subr.bf16.mxu0 0
    %6885 = vmatpush1.bf16.xpose.msra.mxu0 0
    %6886 = vmatprep.subr.bf16.mxu0 0
    %6887 = vmatpush1.bf16.xpose.msra.mxu0 0
    %6888 = vmatprep.subr.bf16.mxu0 0
    %6889 = vmatpush1.bf16.xpose.msra.mxu0 0
    %6890 = vmatprep.subr.bf16.mxu0 0
    %6891 = vmatpush1.bf16.xpose.msra.mxu0 0
    %6892 = vmatprep.subr.bf16.mxu0 0
    %6893 = vmatpush1.bf16.xpose.msra.mxu0 0
    %6894 = vmatprep.subr.bf16.mxu0 0
    %6895 = vmatpush1.bf16.xpose.msra.mxu0 0
    %6896 = vmatprep.subr.bf16.mxu0 0
    %6897 = vmatpush1.bf16.xpose.msra.mxu0 0
    %6898 = vmatprep.mubr.bf16.mxu0 0
    %6899 = vmatmul.mubr.bf16.gmra.mrb[0].mxu0 %v6861
    %v6900 = vpop.f32.mrb[0].mxu0
    %v6901 = vadd.f32 0.0, %v6900
    %v6902 = vpop.f32.mrb[0].mxu0
    %v6903 = vpop.f32.mrb[0].mxu0
    %v6904 = vpop.f32.mrb[0].mxu0
    %6905 = vdwg.mxu0
    %v6907 = vsel %vm328, %v6575, 0
    %v6910 = vsel %vm328, %v6583, 0
    %6912 = vmatprep.subr.bf16.mxu0 0
    %6913 = vmatpush1.bf16.xpose.msra.mxu0 %v6910
    %6914 = vmatprep.subr.bf16.mxu0 0
    %6915 = vmatpush1.bf16.xpose.msra.mxu0 0
    %6916 = vmatprep.subr.bf16.mxu0 0
    %6917 = vmatpush1.bf16.xpose.msra.mxu0 0
    %6918 = vmatprep.subr.bf16.mxu0 0
    %6919 = vmatpush1.bf16.xpose.msra.mxu0 0
    %6920 = vmatprep.subr.bf16.mxu0 0
    %6921 = vmatpush1.bf16.xpose.msra.mxu0 0
    %6922 = vmatprep.subr.bf16.mxu0 0
    %6923 = vmatpush1.bf16.xpose.msra.mxu0 0
    %6924 = vmatprep.subr.bf16.mxu0 0
    %6925 = vmatpush1.bf16.xpose.msra.mxu0 0
    %6926 = vmatprep.subr.bf16.mxu0 0
    %6927 = vmatpush1.bf16.xpose.msra.mxu0 0
    %6928 = vmatprep.subr.bf16.mxu0 0
    %6929 = vmatpush1.bf16.xpose.msra.mxu0 0
    %6930 = vmatprep.subr.bf16.mxu0 0
    %6931 = vmatpush1.bf16.xpose.msra.mxu0 0
    %6932 = vmatprep.subr.bf16.mxu0 0
    %6933 = vmatpush1.bf16.xpose.msra.mxu0 0
    %6934 = vmatprep.subr.bf16.mxu0 0
    %6935 = vmatpush1.bf16.xpose.msra.mxu0 0
    %6936 = vmatprep.subr.bf16.mxu0 0
    %6937 = vmatpush1.bf16.xpose.msra.mxu0 0
    %6938 = vmatprep.subr.bf16.mxu0 0
    %6939 = vmatpush1.bf16.xpose.msra.mxu0 0
    %6940 = vmatprep.subr.bf16.mxu0 0
    %6941 = vmatpush1.bf16.xpose.msra.mxu0 0
    %6942 = vmatprep.subr.bf16.mxu0 0
    %6943 = vmatpush1.bf16.xpose.msra.mxu0 0
    %6944 = vmatprep.mubr.bf16.mxu0 0
    %6945 = vmatmul.mubr.bf16.gmra.mrb[0].mxu0 %v6907
    %v6946 = vpop.f32.mrb[0].mxu0
    %v6947 = vadd.f32 0.0, %v6946
    %v6948 = vpop.f32.mrb[0].mxu0
    %v6949 = vpop.f32.mrb[0].mxu0
    %v6950 = vpop.f32.mrb[0].mxu0
    %6951 = vdwg.mxu0
    %v6952 = vsel %vm1382, %v6625, -1e+09
    %v6953 = vsel %vm1382, %v6671, -1e+09
    %v6954 = vsel %vm1382, %v6717, -1e+09
    %v6955 = vsel %vm1382, %v6763, -1e+09
    %v6956 = vsel %vm1382, %v6809, -1e+09
    %v6957 = vsel %vm1382, %v6855, -1e+09
    %v6958 = vsel %vm1382, %v6901, -1e+09
    %v6959 = vsel %vm1382, %v6947, -1e+09
    %vm6960 = vcmask 10240
    %v6961 = vsel %vm6960, %v6952, -inf
    %6962 = vmax.xlane.f32.xlu0 %v6961
    %v6963 = vpop.xlane.xlu0 %6962
    %v6964 = vsel %vm6960, %v6953, -inf
    %6965 = vmax.xlane.f32.xlu0 %v6964
    %v6966 = vpop.xlane.xlu0 %6965
    %v6967 = vsel %vm6960, %v6954, -inf
    %6968 = vmax.xlane.f32.xlu0 %v6967
    %v6969 = vpop.xlane.xlu0 %6968
    %v6970 = vsel %vm6960, %v6955, -inf
    %6971 = vmax.xlane.f32.xlu0 %v6970
    %v6972 = vpop.xlane.xlu0 %6971
    %v6973 = vsel %vm6960, %v6956, -inf
    %6974 = vmax.xlane.f32.xlu0 %v6973
    %v6975 = vpop.xlane.xlu0 %6974
    %v6976 = vsel %vm6960, %v6957, -inf
    %6977 = vmax.xlane.f32.xlu0 %v6976
    %v6978 = vpop.xlane.xlu0 %6977
    %v6979 = vsel %vm6960, %v6958, -inf
    %6980 = vmax.xlane.f32.xlu0 %v6979
    %v6981 = vpop.xlane.xlu0 %6980
    %v6982 = vsel %vm6960, %v6959, -inf
    %6983 = vmax.xlane.f32.xlu0 %v6982
    %v6984 = vpop.xlane.xlu0 %6983
    %v6985 = vsub.f32 %v6952, %v6963
    %v6986 = vsub.f32 %v6953, %v6966
    %v6987 = vsub.f32 %v6954, %v6969
    %v6988 = vsub.f32 %v6955, %v6972
    %v6989 = vsub.f32 %v6956, %v6975
    %v6990 = vsub.f32 %v6957, %v6978
    %v6991 = vsub.f32 %v6958, %v6981
    %v6992 = vsub.f32 %v6959, %v6984
    %v6993 = vmul.f32 %v6985, 1.442695
    %v6994 = vpow.pop %v6993
    %v6995 = vmul.f32 %v6986, 1.442695
    %v6996 = vpow.pop %v6995
    %v6997 = vmul.f32 %v6987, 1.442695
    %v6998 = vpow.pop %v6997
    %v6999 = vmul.f32 %v6988, 1.442695
    %v7000 = vpow.pop %v6999
    %v7001 = vmul.f32 %v6989, 1.442695
    %v7002 = vpow.pop %v7001
    %v7003 = vmul.f32 %v6990, 1.442695
    %v7004 = vpow.pop %v7003
    %v7005 = vmul.f32 %v6991, 1.442695
    %v7006 = vpow.pop %v7005
    %v7007 = vmul.f32 %v6992, 1.442695
    %v7008 = vpow.pop %v7007
    %v7009 = vsel %vm6960, %v6994, 0.0
    %7010 = vadd.xlane.f32.xlu0 %v7009
    %v7011 = vpop.xlane.xlu0 %7010
    %v7012 = vsel %vm6960, %v6996, 0.0
    %7013 = vadd.xlane.f32.xlu0 %v7012
    %v7014 = vpop.xlane.xlu0 %7013
    %v7015 = vsel %vm6960, %v6998, 0.0
    %7016 = vadd.xlane.f32.xlu0 %v7015
    %v7017 = vpop.xlane.xlu0 %7016
    %v7018 = vsel %vm6960, %v7000, 0.0
    %7019 = vadd.xlane.f32.xlu0 %v7018
    %v7020 = vpop.xlane.xlu0 %7019
    %v7021 = vsel %vm6960, %v7002, 0.0
    %7022 = vadd.xlane.f32.xlu0 %v7021
    %v7023 = vpop.xlane.xlu0 %7022
    %v7024 = vsel %vm6960, %v7004, 0.0
    %7025 = vadd.xlane.f32.xlu0 %v7024
    %v7026 = vpop.xlane.xlu0 %7025
    %v7027 = vsel %vm6960, %v7006, 0.0
    %7028 = vadd.xlane.f32.xlu0 %v7027
    %v7029 = vpop.xlane.xlu0 %7028
    %v7030 = vsel %vm6960, %v7008, 0.0
    %7031 = vadd.xlane.f32.xlu0 %v7030
    %v7032 = vpop.xlane.xlu0 %7031
    %v7033 = vrcp.pop %v7011
    %v7034 = vmul.f32 %v6994, %v7033
    %v7035 = vrcp.pop %v7014
    %v7036 = vmul.f32 %v6996, %v7035
    %v7037 = vrcp.pop %v7017
    %v7038 = vmul.f32 %v6998, %v7037
    %v7039 = vrcp.pop %v7020
    %v7040 = vmul.f32 %v7000, %v7039
    %v7041 = vrcp.pop %v7023
    %v7042 = vmul.f32 %v7002, %v7041
    %v7043 = vrcp.pop %v7026
    %v7044 = vmul.f32 %v7004, %v7043
    %v7045 = vrcp.pop %v7029
    %v7046 = vmul.f32 %v7006, %v7045
    %v7047 = vrcp.pop %v7032
    %v7048 = vmul.f32 %v7008, %v7047
    %v7049 = vpack.c.bf16 %v7034, %v7034
    %v7050 = vpack.c.bf16 %v7036, %v7036
    %v7051 = vpack.c.bf16 %v7038, %v7038
    %v7052 = vpack.c.bf16 %v7040, %v7040
    %v7053 = vpack.c.bf16 %v7042, %v7042
    %v7054 = vpack.c.bf16 %v7044, %v7044
    %v7055 = vpack.c.bf16 %v7046, %v7046
    %v7056 = vpack.c.bf16 %v7048, %v7048
    %7058 = vrot.lane.b32.xlu0 %v6576, 78
    %v7059 = vpop.permute.xlu0 %7058
    %v7061 = vsel %vm1495, %v7049, 0
    %v7064 = vsel %vm332, %v7059, 0
    %7066 = vmatprep.subr.bf16.mxu0 0
    %7067 = vmatpush1.bf16.msra.mxu0 %v7064
    %7068 = vmatprep.subr.bf16.mxu0 0
    %7069 = vmatpush1.bf16.msra.mxu0 0
    %7070 = vmatprep.subr.bf16.mxu0 0
    %7071 = vmatpush1.bf16.msra.mxu0 0
    %7072 = vmatprep.subr.bf16.mxu0 0
    %7073 = vmatpush1.bf16.msra.mxu0 0
    %7074 = vmatprep.subr.bf16.mxu0 0
    %7075 = vmatpush1.bf16.msra.mxu0 0
    %7076 = vmatprep.subr.bf16.mxu0 0
    %7077 = vmatpush1.bf16.msra.mxu0 0
    %7078 = vmatprep.subr.bf16.mxu0 0
    %7079 = vmatpush1.bf16.msra.mxu0 0
    %7080 = vmatprep.subr.bf16.mxu0 0
    %7081 = vmatpush1.bf16.msra.mxu0 0
    %7082 = vmatprep.subr.bf16.mxu0 0
    %7083 = vmatpush1.bf16.msra.mxu0 0
    %7084 = vmatprep.subr.bf16.mxu0 0
    %7085 = vmatpush1.bf16.msra.mxu0 0
    %7086 = vmatprep.subr.bf16.mxu0 0
    %7087 = vmatpush1.bf16.msra.mxu0 0
    %7088 = vmatprep.subr.bf16.mxu0 0
    %7089 = vmatpush1.bf16.msra.mxu0 0
    %7090 = vmatprep.subr.bf16.mxu0 0
    %7091 = vmatpush1.bf16.msra.mxu0 0
    %7092 = vmatprep.subr.bf16.mxu0 0
    %7093 = vmatpush1.bf16.msra.mxu0 0
    %7094 = vmatprep.subr.bf16.mxu0 0
    %7095 = vmatpush1.bf16.msra.mxu0 0
    %7096 = vmatprep.subr.bf16.mxu0 0
    %7097 = vmatpush1.bf16.msra.mxu0 0
    %7098 = vmatprep.mubr.bf16.mxu0 0
    %7099 = vmatmul.mubr.bf16.gmra.mrb[0].mxu0 %v7061
    %v7100 = vpop.f32.mrb[0].mxu0
    %v7101 = vadd.f32 0.0, %v7100
    %v7102 = vpop.f32.mrb[0].mxu0
    %v7103 = vpop.f32.mrb[0].mxu0
    %v7104 = vpop.f32.mrb[0].mxu0
    %7105 = vdwg.mxu0
    %7107 = vrot.lane.b32.xlu0 %v6577, 78
    %v7108 = vpop.permute.xlu0 %7107
    %v7110 = vsel %vm1495, %v7050, 0
    %v7113 = vsel %vm332, %v7108, 0
    %7115 = vmatprep.subr.bf16.mxu0 0
    %7116 = vmatpush1.bf16.msra.mxu0 %v7113
    %7117 = vmatprep.subr.bf16.mxu0 0
    %7118 = vmatpush1.bf16.msra.mxu0 0
    %7119 = vmatprep.subr.bf16.mxu0 0
    %7120 = vmatpush1.bf16.msra.mxu0 0
    %7121 = vmatprep.subr.bf16.mxu0 0
    %7122 = vmatpush1.bf16.msra.mxu0 0
    %7123 = vmatprep.subr.bf16.mxu0 0
    %7124 = vmatpush1.bf16.msra.mxu0 0
    %7125 = vmatprep.subr.bf16.mxu0 0
    %7126 = vmatpush1.bf16.msra.mxu0 0
    %7127 = vmatprep.subr.bf16.mxu0 0
    %7128 = vmatpush1.bf16.msra.mxu0 0
    %7129 = vmatprep.subr.bf16.mxu0 0
    %7130 = vmatpush1.bf16.msra.mxu0 0
    %7131 = vmatprep.subr.bf16.mxu0 0
    %7132 = vmatpush1.bf16.msra.mxu0 0
    %7133 = vmatprep.subr.bf16.mxu0 0
    %7134 = vmatpush1.bf16.msra.mxu0 0
    %7135 = vmatprep.subr.bf16.mxu0 0
    %7136 = vmatpush1.bf16.msra.mxu0 0
    %7137 = vmatprep.subr.bf16.mxu0 0
    %7138 = vmatpush1.bf16.msra.mxu0 0
    %7139 = vmatprep.subr.bf16.mxu0 0
    %7140 = vmatpush1.bf16.msra.mxu0 0
    %7141 = vmatprep.subr.bf16.mxu0 0
    %7142 = vmatpush1.bf16.msra.mxu0 0
    %7143 = vmatprep.subr.bf16.mxu0 0
    %7144 = vmatpush1.bf16.msra.mxu0 0
    %7145 = vmatprep.subr.bf16.mxu0 0
    %7146 = vmatpush1.bf16.msra.mxu0 0
    %7147 = vmatprep.mubr.bf16.mxu0 0
    %7148 = vmatmul.mubr.bf16.gmra.mrb[0].mxu0 %v7110
    %v7149 = vpop.f32.mrb[0].mxu0
    %v7150 = vadd.f32 0.0, %v7149
    %v7151 = vpop.f32.mrb[0].mxu0
    %v7152 = vpop.f32.mrb[0].mxu0
    %v7153 = vpop.f32.mrb[0].mxu0
    %7154 = vdwg.mxu0
    %7156 = vrot.lane.b32.xlu0 %v6578, 78
    %v7157 = vpop.permute.xlu0 %7156
    %v7159 = vsel %vm1495, %v7051, 0
    %v7162 = vsel %vm332, %v7157, 0
    %7164 = vmatprep.subr.bf16.mxu0 0
    %7165 = vmatpush1.bf16.msra.mxu0 %v7162
    %7166 = vmatprep.subr.bf16.mxu0 0
    %7167 = vmatpush1.bf16.msra.mxu0 0
    %7168 = vmatprep.subr.bf16.mxu0 0
    %7169 = vmatpush1.bf16.msra.mxu0 0
    %7170 = vmatprep.subr.bf16.mxu0 0
    %7171 = vmatpush1.bf16.msra.mxu0 0
    %7172 = vmatprep.subr.bf16.mxu0 0
    %7173 = vmatpush1.bf16.msra.mxu0 0
    %7174 = vmatprep.subr.bf16.mxu0 0
    %7175 = vmatpush1.bf16.msra.mxu0 0
    %7176 = vmatprep.subr.bf16.mxu0 0
    %7177 = vmatpush1.bf16.msra.mxu0 0
    %7178 = vmatprep.subr.bf16.mxu0 0
    %7179 = vmatpush1.bf16.msra.mxu0 0
    %7180 = vmatprep.subr.bf16.mxu0 0
    %7181 = vmatpush1.bf16.msra.mxu0 0
    %7182 = vmatprep.subr.bf16.mxu0 0
    %7183 = vmatpush1.bf16.msra.mxu0 0
    %7184 = vmatprep.subr.bf16.mxu0 0
    %7185 = vmatpush1.bf16.msra.mxu0 0
    %7186 = vmatprep.subr.bf16.mxu0 0
    %7187 = vmatpush1.bf16.msra.mxu0 0
    %7188 = vmatprep.subr.bf16.mxu0 0
    %7189 = vmatpush1.bf16.msra.mxu0 0
    %7190 = vmatprep.subr.bf16.mxu0 0
    %7191 = vmatpush1.bf16.msra.mxu0 0
    %7192 = vmatprep.subr.bf16.mxu0 0
    %7193 = vmatpush1.bf16.msra.mxu0 0
    %7194 = vmatprep.subr.bf16.mxu0 0
    %7195 = vmatpush1.bf16.msra.mxu0 0
    %7196 = vmatprep.mubr.bf16.mxu0 0
    %7197 = vmatmul.mubr.bf16.gmra.mrb[0].mxu0 %v7159
    %v7198 = vpop.f32.mrb[0].mxu0
    %v7199 = vadd.f32 0.0, %v7198
    %v7200 = vpop.f32.mrb[0].mxu0
    %v7201 = vpop.f32.mrb[0].mxu0
    %v7202 = vpop.f32.mrb[0].mxu0
    %7203 = vdwg.mxu0
    %7205 = vrot.lane.b32.xlu0 %v6579, 78
    %v7206 = vpop.permute.xlu0 %7205
    %v7208 = vsel %vm1495, %v7052, 0
    %v7211 = vsel %vm332, %v7206, 0
    %7213 = vmatprep.subr.bf16.mxu0 0
    %7214 = vmatpush1.bf16.msra.mxu0 %v7211
    %7215 = vmatprep.subr.bf16.mxu0 0
    %7216 = vmatpush1.bf16.msra.mxu0 0
    %7217 = vmatprep.subr.bf16.mxu0 0
    %7218 = vmatpush1.bf16.msra.mxu0 0
    %7219 = vmatprep.subr.bf16.mxu0 0
    %7220 = vmatpush1.bf16.msra.mxu0 0
    %7221 = vmatprep.subr.bf16.mxu0 0
    %7222 = vmatpush1.bf16.msra.mxu0 0
    %7223 = vmatprep.subr.bf16.mxu0 0
    %7224 = vmatpush1.bf16.msra.mxu0 0
    %7225 = vmatprep.subr.bf16.mxu0 0
    %7226 = vmatpush1.bf16.msra.mxu0 0
    %7227 = vmatprep.subr.bf16.mxu0 0
    %7228 = vmatpush1.bf16.msra.mxu0 0
    %7229 = vmatprep.subr.bf16.mxu0 0
    %7230 = vmatpush1.bf16.msra.mxu0 0
    %7231 = vmatprep.subr.bf16.mxu0 0
    %7232 = vmatpush1.bf16.msra.mxu0 0
    %7233 = vmatprep.subr.bf16.mxu0 0
    %7234 = vmatpush1.bf16.msra.mxu0 0
    %7235 = vmatprep.subr.bf16.mxu0 0
    %7236 = vmatpush1.bf16.msra.mxu0 0
    %7237 = vmatprep.subr.bf16.mxu0 0
    %7238 = vmatpush1.bf16.msra.mxu0 0
    %7239 = vmatprep.subr.bf16.mxu0 0
    %7240 = vmatpush1.bf16.msra.mxu0 0
    %7241 = vmatprep.subr.bf16.mxu0 0
    %7242 = vmatpush1.bf16.msra.mxu0 0
    %7243 = vmatprep.subr.bf16.mxu0 0
    %7244 = vmatpush1.bf16.msra.mxu0 0
    %7245 = vmatprep.mubr.bf16.mxu0 0
    %7246 = vmatmul.mubr.bf16.gmra.mrb[0].mxu0 %v7208
    %v7247 = vpop.f32.mrb[0].mxu0
    %v7248 = vadd.f32 0.0, %v7247
    %v7249 = vpop.f32.mrb[0].mxu0
    %v7250 = vpop.f32.mrb[0].mxu0
    %v7251 = vpop.f32.mrb[0].mxu0
    %7252 = vdwg.mxu0
    %7254 = vrot.lane.b32.xlu0 %v6580, 78
    %v7255 = vpop.permute.xlu0 %7254
    %v7257 = vsel %vm1495, %v7053, 0
    %v7260 = vsel %vm332, %v7255, 0
    %7262 = vmatprep.subr.bf16.mxu0 0
    %7263 = vmatpush1.bf16.msra.mxu0 %v7260
    %7264 = vmatprep.subr.bf16.mxu0 0
    %7265 = vmatpush1.bf16.msra.mxu0 0
    %7266 = vmatprep.subr.bf16.mxu0 0
    %7267 = vmatpush1.bf16.msra.mxu0 0
    %7268 = vmatprep.subr.bf16.mxu0 0
    %7269 = vmatpush1.bf16.msra.mxu0 0
    %7270 = vmatprep.subr.bf16.mxu0 0
    %7271 = vmatpush1.bf16.msra.mxu0 0
    %7272 = vmatprep.subr.bf16.mxu0 0
    %7273 = vmatpush1.bf16.msra.mxu0 0
    %7274 = vmatprep.subr.bf16.mxu0 0
    %7275 = vmatpush1.bf16.msra.mxu0 0
    %7276 = vmatprep.subr.bf16.mxu0 0
    %7277 = vmatpush1.bf16.msra.mxu0 0
    %7278 = vmatprep.subr.bf16.mxu0 0
    %7279 = vmatpush1.bf16.msra.mxu0 0
    %7280 = vmatprep.subr.bf16.mxu0 0
    %7281 = vmatpush1.bf16.msra.mxu0 0
    %7282 = vmatprep.subr.bf16.mxu0 0
    %7283 = vmatpush1.bf16.msra.mxu0 0
    %7284 = vmatprep.subr.bf16.mxu0 0
    %7285 = vmatpush1.bf16.msra.mxu0 0
    %7286 = vmatprep.subr.bf16.mxu0 0
    %7287 = vmatpush1.bf16.msra.mxu0 0
    %7288 = vmatprep.subr.bf16.mxu0 0
    %7289 = vmatpush1.bf16.msra.mxu0 0
    %7290 = vmatprep.subr.bf16.mxu0 0
    %7291 = vmatpush1.bf16.msra.mxu0 0
    %7292 = vmatprep.subr.bf16.mxu0 0
    %7293 = vmatpush1.bf16.msra.mxu0 0
    %7294 = vmatprep.mubr.bf16.mxu0 0
    %7295 = vmatmul.mubr.bf16.gmra.mrb[0].mxu0 %v7257
    %v7296 = vpop.f32.mrb[0].mxu0
    %v7297 = vadd.f32 0.0, %v7296
    %v7298 = vpop.f32.mrb[0].mxu0
    %v7299 = vpop.f32.mrb[0].mxu0
    %v7300 = vpop.f32.mrb[0].mxu0
    %7301 = vdwg.mxu0
    %7303 = vrot.lane.b32.xlu0 %v6581, 78
    %v7304 = vpop.permute.xlu0 %7303
    %v7306 = vsel %vm1495, %v7054, 0
    %v7309 = vsel %vm332, %v7304, 0
    %7311 = vmatprep.subr.bf16.mxu0 0
    %7312 = vmatpush1.bf16.msra.mxu0 %v7309
    %7313 = vmatprep.subr.bf16.mxu0 0
    %7314 = vmatpush1.bf16.msra.mxu0 0
    %7315 = vmatprep.subr.bf16.mxu0 0
    %7316 = vmatpush1.bf16.msra.mxu0 0
    %7317 = vmatprep.subr.bf16.mxu0 0
    %7318 = vmatpush1.bf16.msra.mxu0 0
    %7319 = vmatprep.subr.bf16.mxu0 0
    %7320 = vmatpush1.bf16.msra.mxu0 0
    %7321 = vmatprep.subr.bf16.mxu0 0
    %7322 = vmatpush1.bf16.msra.mxu0 0
    %7323 = vmatprep.subr.bf16.mxu0 0
    %7324 = vmatpush1.bf16.msra.mxu0 0
    %7325 = vmatprep.subr.bf16.mxu0 0
    %7326 = vmatpush1.bf16.msra.mxu0 0
    %7327 = vmatprep.subr.bf16.mxu0 0
    %7328 = vmatpush1.bf16.msra.mxu0 0
    %7329 = vmatprep.subr.bf16.mxu0 0
    %7330 = vmatpush1.bf16.msra.mxu0 0
    %7331 = vmatprep.subr.bf16.mxu0 0
    %7332 = vmatpush1.bf16.msra.mxu0 0
    %7333 = vmatprep.subr.bf16.mxu0 0
    %7334 = vmatpush1.bf16.msra.mxu0 0
    %7335 = vmatprep.subr.bf16.mxu0 0
    %7336 = vmatpush1.bf16.msra.mxu0 0
    %7337 = vmatprep.subr.bf16.mxu0 0
    %7338 = vmatpush1.bf16.msra.mxu0 0
    %7339 = vmatprep.subr.bf16.mxu0 0
    %7340 = vmatpush1.bf16.msra.mxu0 0
    %7341 = vmatprep.subr.bf16.mxu0 0
    %7342 = vmatpush1.bf16.msra.mxu0 0
    %7343 = vmatprep.mubr.bf16.mxu0 0
    %7344 = vmatmul.mubr.bf16.gmra.mrb[0].mxu0 %v7306
    %v7345 = vpop.f32.mrb[0].mxu0
    %v7346 = vadd.f32 0.0, %v7345
    %v7347 = vpop.f32.mrb[0].mxu0
    %v7348 = vpop.f32.mrb[0].mxu0
    %v7349 = vpop.f32.mrb[0].mxu0
    %7350 = vdwg.mxu0
    %7352 = vrot.lane.b32.xlu0 %v6582, 78
    %v7353 = vpop.permute.xlu0 %7352
    %v7355 = vsel %vm1495, %v7055, 0
    %v7358 = vsel %vm332, %v7353, 0
    %7360 = vmatprep.subr.bf16.mxu0 0
    %7361 = vmatpush1.bf16.msra.mxu0 %v7358
    %7362 = vmatprep.subr.bf16.mxu0 0
    %7363 = vmatpush1.bf16.msra.mxu0 0
    %7364 = vmatprep.subr.bf16.mxu0 0
    %7365 = vmatpush1.bf16.msra.mxu0 0
    %7366 = vmatprep.subr.bf16.mxu0 0
    %7367 = vmatpush1.bf16.msra.mxu0 0
    %7368 = vmatprep.subr.bf16.mxu0 0
    %7369 = vmatpush1.bf16.msra.mxu0 0
    %7370 = vmatprep.subr.bf16.mxu0 0
    %7371 = vmatpush1.bf16.msra.mxu0 0
    %7372 = vmatprep.subr.bf16.mxu0 0
    %7373 = vmatpush1.bf16.msra.mxu0 0
    %7374 = vmatprep.subr.bf16.mxu0 0
    %7375 = vmatpush1.bf16.msra.mxu0 0
    %7376 = vmatprep.subr.bf16.mxu0 0
    %7377 = vmatpush1.bf16.msra.mxu0 0
    %7378 = vmatprep.subr.bf16.mxu0 0
    %7379 = vmatpush1.bf16.msra.mxu0 0
    %7380 = vmatprep.subr.bf16.mxu0 0
    %7381 = vmatpush1.bf16.msra.mxu0 0
    %7382 = vmatprep.subr.bf16.mxu0 0
    %7383 = vmatpush1.bf16.msra.mxu0 0
    %7384 = vmatprep.subr.bf16.mxu0 0
    %7385 = vmatpush1.bf16.msra.mxu0 0
    %7386 = vmatprep.subr.bf16.mxu0 0
    %7387 = vmatpush1.bf16.msra.mxu0 0
    %7388 = vmatprep.subr.bf16.mxu0 0
    %7389 = vmatpush1.bf16.msra.mxu0 0
    %7390 = vmatprep.subr.bf16.mxu0 0
    %7391 = vmatpush1.bf16.msra.mxu0 0
    %7392 = vmatprep.mubr.bf16.mxu0 0
    %7393 = vmatmul.mubr.bf16.gmra.mrb[0].mxu0 %v7355
    %v7394 = vpop.f32.mrb[0].mxu0
    %v7395 = vadd.f32 0.0, %v7394
    %v7396 = vpop.f32.mrb[0].mxu0
    %v7397 = vpop.f32.mrb[0].mxu0
    %v7398 = vpop.f32.mrb[0].mxu0
    %7399 = vdwg.mxu0
    %7401 = vrot.lane.b32.xlu0 %v6583, 78
    %v7402 = vpop.permute.xlu0 %7401
    %v7404 = vsel %vm1495, %v7056, 0
    %v7407 = vsel %vm332, %v7402, 0
    %7409 = vmatprep.subr.bf16.mxu0 0
    %7410 = vmatpush1.bf16.msra.mxu0 %v7407
    %7411 = vmatprep.subr.bf16.mxu0 0
    %7412 = vmatpush1.bf16.msra.mxu0 0
    %7413 = vmatprep.subr.bf16.mxu0 0
    %7414 = vmatpush1.bf16.msra.mxu0 0
    %7415 = vmatprep.subr.bf16.mxu0 0
    %7416 = vmatpush1.bf16.msra.mxu0 0
    %7417 = vmatprep.subr.bf16.mxu0 0
    %7418 = vmatpush1.bf16.msra.mxu0 0
    %7419 = vmatprep.subr.bf16.mxu0 0
    %7420 = vmatpush1.bf16.msra.mxu0 0
    %7421 = vmatprep.subr.bf16.mxu0 0
    %7422 = vmatpush1.bf16.msra.mxu0 0
    %7423 = vmatprep.subr.bf16.mxu0 0
    %7424 = vmatpush1.bf16.msra.mxu0 0
    %7425 = vmatprep.subr.bf16.mxu0 0
    %7426 = vmatpush1.bf16.msra.mxu0 0
    %7427 = vmatprep.subr.bf16.mxu0 0
    %7428 = vmatpush1.bf16.msra.mxu0 0
    %7429 = vmatprep.subr.bf16.mxu0 0
    %7430 = vmatpush1.bf16.msra.mxu0 0
    %7431 = vmatprep.subr.bf16.mxu0 0
    %7432 = vmatpush1.bf16.msra.mxu0 0
    %7433 = vmatprep.subr.bf16.mxu0 0
    %7434 = vmatpush1.bf16.msra.mxu0 0
    %7435 = vmatprep.subr.bf16.mxu0 0
    %7436 = vmatpush1.bf16.msra.mxu0 0
    %7437 = vmatprep.subr.bf16.mxu0 0
    %7438 = vmatpush1.bf16.msra.mxu0 0
    %7439 = vmatprep.subr.bf16.mxu0 0
    %7440 = vmatpush1.bf16.msra.mxu0 0
    %7441 = vmatprep.mubr.bf16.mxu0 0
    %7442 = vmatmul.mubr.bf16.gmra.mrb[0].mxu0 %v7404
    %v7443 = vpop.f32.mrb[0].mxu0
    %v7444 = vadd.f32 0.0, %v7443
    %v7445 = vpop.f32.mrb[0].mxu0
    %v7446 = vpop.f32.mrb[0].mxu0
    %v7447 = vpop.f32.mrb[0].mxu0
    %7448 = vdwg.mxu0
    %v7449 = vpack.c.bf16 %v7101, %v7101
    %v7450 = vpack.c.bf16 %v7150, %v7150
    %v7451 = vpack.c.bf16 %v7199, %v7199
    %v7452 = vpack.c.bf16 %v7248, %v7248
    %v7453 = vpack.c.bf16 %v7297, %v7297
    %v7454 = vpack.c.bf16 %v7346, %v7346
    %v7455 = vpack.c.bf16 %v7395, %v7395
    %v7456 = vpack.c.bf16 %v7444, %v7444
    %v7464 = vunpack.c.l.b16 %v5191
    %v7465 = vunpack.c.l.b16 %v5192
    %v7466 = vunpack.c.l.b16 %v5193
    %v7467 = vunpack.c.l.b16 %v5194
    %v7468 = vunpack.c.l.b16 %v5195
    %v7469 = vunpack.c.l.b16 %v5196
    %v7470 = vunpack.c.l.b16 %v5197
    %v7471 = vpack.c.b16 %v7465, %v7464
    %v7472 = vpack.c.b16 %v7467, %v7466
    %v7473 = vpack.c.b16 %v7469, %v7468
    %v7474 = vpack.c.b16 %v7470, %v7470
    %v7479 = vsel %vm328, %v7449, 0
    %v7482 = vsel %vm332, %v7474, 0
    %7484 = vmatprep.subr.bf16.mxu0 0
    %7485 = vmatpush1.bf16.msra.mxu0 %v7471
    %7486 = vmatprep.subr.bf16.mxu0 0
    %7487 = vmatpush1.bf16.msra.mxu0 %v7472
    %7488 = vmatprep.subr.bf16.mxu0 0
    %7489 = vmatpush1.bf16.msra.mxu0 %v7473
    %7490 = vmatprep.subr.bf16.mxu0 0
    %7491 = vmatpush1.bf16.msra.mxu0 %v7482
    %7492 = vmatprep.subr.bf16.mxu0 0
    %7493 = vmatpush1.bf16.msra.mxu0 0
    %7494 = vmatprep.subr.bf16.mxu0 0
    %7495 = vmatpush1.bf16.msra.mxu0 0
    %7496 = vmatprep.subr.bf16.mxu0 0
    %7497 = vmatpush1.bf16.msra.mxu0 0
    %7498 = vmatprep.subr.bf16.mxu0 0
    %7499 = vmatpush1.bf16.msra.mxu0 0
    %7500 = vmatprep.subr.bf16.mxu0 0
    %7501 = vmatpush1.bf16.msra.mxu0 0
    %7502 = vmatprep.subr.bf16.mxu0 0
    %7503 = vmatpush1.bf16.msra.mxu0 0
    %7504 = vmatprep.subr.bf16.mxu0 0
    %7505 = vmatpush1.bf16.msra.mxu0 0
    %7506 = vmatprep.subr.bf16.mxu0 0
    %7507 = vmatpush1.bf16.msra.mxu0 0
    %7508 = vmatprep.subr.bf16.mxu0 0
    %7509 = vmatpush1.bf16.msra.mxu0 0
    %7510 = vmatprep.subr.bf16.mxu0 0
    %7511 = vmatpush1.bf16.msra.mxu0 0
    %7512 = vmatprep.subr.bf16.mxu0 0
    %7513 = vmatpush1.bf16.msra.mxu0 0
    %7514 = vmatprep.subr.bf16.mxu0 0
    %7515 = vmatpush1.bf16.msra.mxu0 0
    %7516 = vmatprep.mubr.bf16.mxu0 0
    %7517 = vmatmul.mubr.bf16.gmra.mrb[0].mxu0 %v7479
    %v7518 = vpop.f32.mrb[0].mxu0
    %v7519 = vadd.f32 0.0, %v7518
    %v7520 = vpop.f32.mrb[0].mxu0
    %v7521 = vpop.f32.mrb[0].mxu0
    %v7522 = vpop.f32.mrb[0].mxu0
    %7523 = vdwg.mxu0
    %v7531 = vunpack.c.l.b16 %v5198
    %v7532 = vunpack.c.l.b16 %v5199
    %v7533 = vunpack.c.l.b16 %v5200
    %v7534 = vunpack.c.l.b16 %v5201
    %v7535 = vunpack.c.l.b16 %v5202
    %v7536 = vunpack.c.l.b16 %v5203
    %v7537 = vunpack.c.l.b16 %v5204
    %v7538 = vpack.c.b16 %v7532, %v7531
    %v7539 = vpack.c.b16 %v7534, %v7533
    %v7540 = vpack.c.b16 %v7536, %v7535
    %v7541 = vpack.c.b16 %v7537, %v7537
    %v7546 = vsel %vm328, %v7450, 0
    %v7549 = vsel %vm332, %v7541, 0
    %7551 = vmatprep.subr.bf16.mxu0 0
    %7552 = vmatpush1.bf16.msra.mxu0 %v7538
    %7553 = vmatprep.subr.bf16.mxu0 0
    %7554 = vmatpush1.bf16.msra.mxu0 %v7539
    %7555 = vmatprep.subr.bf16.mxu0 0
    %7556 = vmatpush1.bf16.msra.mxu0 %v7540
    %7557 = vmatprep.subr.bf16.mxu0 0
    %7558 = vmatpush1.bf16.msra.mxu0 %v7549
    %7559 = vmatprep.subr.bf16.mxu0 0
    %7560 = vmatpush1.bf16.msra.mxu0 0
    %7561 = vmatprep.subr.bf16.mxu0 0
    %7562 = vmatpush1.bf16.msra.mxu0 0
    %7563 = vmatprep.subr.bf16.mxu0 0
    %7564 = vmatpush1.bf16.msra.mxu0 0
    %7565 = vmatprep.subr.bf16.mxu0 0
    %7566 = vmatpush1.bf16.msra.mxu0 0
    %7567 = vmatprep.subr.bf16.mxu0 0
    %7568 = vmatpush1.bf16.msra.mxu0 0
    %7569 = vmatprep.subr.bf16.mxu0 0
    %7570 = vmatpush1.bf16.msra.mxu0 0
    %7571 = vmatprep.subr.bf16.mxu0 0
    %7572 = vmatpush1.bf16.msra.mxu0 0
    %7573 = vmatprep.subr.bf16.mxu0 0
    %7574 = vmatpush1.bf16.msra.mxu0 0
    %7575 = vmatprep.subr.bf16.mxu0 0
    %7576 = vmatpush1.bf16.msra.mxu0 0
    %7577 = vmatprep.subr.bf16.mxu0 0
    %7578 = vmatpush1.bf16.msra.mxu0 0
    %7579 = vmatprep.subr.bf16.mxu0 0
    %7580 = vmatpush1.bf16.msra.mxu0 0
    %7581 = vmatprep.subr.bf16.mxu0 0
    %7582 = vmatpush1.bf16.msra.mxu0 0
    %7583 = vmatprep.mubr.bf16.mxu0 0
    %7584 = vmatmul.mubr.bf16.gmra.mrb[0].mxu0 %v7546
    %v7585 = vpop.f32.mrb[0].mxu0
    %v7586 = vadd.f32 0.0, %v7585
    %v7587 = vpop.f32.mrb[0].mxu0
    %v7588 = vpop.f32.mrb[0].mxu0
    %v7589 = vpop.f32.mrb[0].mxu0
    %7590 = vdwg.mxu0
    %v7598 = vunpack.c.l.b16 %v5205
    %v7599 = vunpack.c.l.b16 %v5206
    %v7600 = vunpack.c.l.b16 %v5207
    %v7601 = vunpack.c.l.b16 %v5208
    %v7602 = vunpack.c.l.b16 %v5209
    %v7603 = vunpack.c.l.b16 %v5210
    %v7604 = vunpack.c.l.b16 %v5211
    %v7605 = vpack.c.b16 %v7599, %v7598
    %v7606 = vpack.c.b16 %v7601, %v7600
    %v7607 = vpack.c.b16 %v7603, %v7602
    %v7608 = vpack.c.b16 %v7604, %v7604
    %v7613 = vsel %vm328, %v7451, 0
    %v7616 = vsel %vm332, %v7608, 0
    %7618 = vmatprep.subr.bf16.mxu0 0
    %7619 = vmatpush1.bf16.msra.mxu0 %v7605
    %7620 = vmatprep.subr.bf16.mxu0 0
    %7621 = vmatpush1.bf16.msra.mxu0 %v7606
    %7622 = vmatprep.subr.bf16.mxu0 0
    %7623 = vmatpush1.bf16.msra.mxu0 %v7607
    %7624 = vmatprep.subr.bf16.mxu0 0
    %7625 = vmatpush1.bf16.msra.mxu0 %v7616
    %7626 = vmatprep.subr.bf16.mxu0 0
    %7627 = vmatpush1.bf16.msra.mxu0 0
    %7628 = vmatprep.subr.bf16.mxu0 0
    %7629 = vmatpush1.bf16.msra.mxu0 0
    %7630 = vmatprep.subr.bf16.mxu0 0
    %7631 = vmatpush1.bf16.msra.mxu0 0
    %7632 = vmatprep.subr.bf16.mxu0 0
    %7633 = vmatpush1.bf16.msra.mxu0 0
    %7634 = vmatprep.subr.bf16.mxu0 0
    %7635 = vmatpush1.bf16.msra.mxu0 0
    %7636 = vmatprep.subr.bf16.mxu0 0
    %7637 = vmatpush1.bf16.msra.mxu0 0
    %7638 = vmatprep.subr.bf16.mxu0 0
    %7639 = vmatpush1.bf16.msra.mxu0 0
    %7640 = vmatprep.subr.bf16.mxu0 0
    %7641 = vmatpush1.bf16.msra.mxu0 0
    %7642 = vmatprep.subr.bf16.mxu0 0
    %7643 = vmatpush1.bf16.msra.mxu0 0
    %7644 = vmatprep.subr.bf16.mxu0 0
    %7645 = vmatpush1.bf16.msra.mxu0 0
    %7646 = vmatprep.subr.bf16.mxu0 0
    %7647 = vmatpush1.bf16.msra.mxu0 0
    %7648 = vmatprep.subr.bf16.mxu0 0
    %7649 = vmatpush1.bf16.msra.mxu0 0
    %7650 = vmatprep.mubr.bf16.mxu0 0
    %7651 = vmatmul.mubr.bf16.gmra.mrb[0].mxu0 %v7613
    %v7652 = vpop.f32.mrb[0].mxu0
    %v7653 = vadd.f32 0.0, %v7652
    %v7654 = vpop.f32.mrb[0].mxu0
    %v7655 = vpop.f32.mrb[0].mxu0
    %v7656 = vpop.f32.mrb[0].mxu0
    %7657 = vdwg.mxu0
    %v7665 = vunpack.c.l.b16 %v5212
    %v7666 = vunpack.c.l.b16 %v5213
    %v7667 = vunpack.c.l.b16 %v5214
    %v7668 = vunpack.c.l.b16 %v5215
    %v7669 = vunpack.c.l.b16 %v5216
    %v7670 = vunpack.c.l.b16 %v5217
    %v7671 = vunpack.c.l.b16 %v5218
    %v7672 = vpack.c.b16 %v7666, %v7665
    %v7673 = vpack.c.b16 %v7668, %v7667
    %v7674 = vpack.c.b16 %v7670, %v7669
    %v7675 = vpack.c.b16 %v7671, %v7671
    %v7680 = vsel %vm328, %v7452, 0
    %v7683 = vsel %vm332, %v7675, 0
    %7685 = vmatprep.subr.bf16.mxu0 0
    %7686 = vmatpush1.bf16.msra.mxu0 %v7672
    %7687 = vmatprep.subr.bf16.mxu0 0
    %7688 = vmatpush1.bf16.msra.mxu0 %v7673
    %7689 = vmatprep.subr.bf16.mxu0 0
    %7690 = vmatpush1.bf16.msra.mxu0 %v7674
    %7691 = vmatprep.subr.bf16.mxu0 0
    %7692 = vmatpush1.bf16.msra.mxu0 %v7683
    %7693 = vmatprep.subr.bf16.mxu0 0
    %7694 = vmatpush1.bf16.msra.mxu0 0
    %7695 = vmatprep.subr.bf16.mxu0 0
    %7696 = vmatpush1.bf16.msra.mxu0 0
    %7697 = vmatprep.subr.bf16.mxu0 0
    %7698 = vmatpush1.bf16.msra.mxu0 0
    %7699 = vmatprep.subr.bf16.mxu0 0
    %7700 = vmatpush1.bf16.msra.mxu0 0
    %7701 = vmatprep.subr.bf16.mxu0 0
    %7702 = vmatpush1.bf16.msra.mxu0 0
    %7703 = vmatprep.subr.bf16.mxu0 0
    %7704 = vmatpush1.bf16.msra.mxu0 0
    %7705 = vmatprep.subr.bf16.mxu0 0
    %7706 = vmatpush1.bf16.msra.mxu0 0
    %7707 = vmatprep.subr.bf16.mxu0 0
    %7708 = vmatpush1.bf16.msra.mxu0 0
    %7709 = vmatprep.subr.bf16.mxu0 0
    %7710 = vmatpush1.bf16.msra.mxu0 0
    %7711 = vmatprep.subr.bf16.mxu0 0
    %7712 = vmatpush1.bf16.msra.mxu0 0
    %7713 = vmatprep.subr.bf16.mxu0 0
    %7714 = vmatpush1.bf16.msra.mxu0 0
    %7715 = vmatprep.subr.bf16.mxu0 0
    %7716 = vmatpush1.bf16.msra.mxu0 0
    %7717 = vmatprep.mubr.bf16.mxu0 0
    %7718 = vmatmul.mubr.bf16.gmra.mrb[0].mxu0 %v7680
    %v7719 = vpop.f32.mrb[0].mxu0
    %v7720 = vadd.f32 0.0, %v7719
    %v7721 = vpop.f32.mrb[0].mxu0
    %v7722 = vpop.f32.mrb[0].mxu0
    %v7723 = vpop.f32.mrb[0].mxu0
    %7724 = vdwg.mxu0
    %v7732 = vunpack.c.l.b16 %v5219
    %v7733 = vunpack.c.l.b16 %v5220
    %v7734 = vunpack.c.l.b16 %v5221
    %v7735 = vunpack.c.l.b16 %v5222
    %v7736 = vunpack.c.l.b16 %v5223
    %v7737 = vunpack.c.l.b16 %v5224
    %v7738 = vunpack.c.l.b16 %v5225
    %v7739 = vpack.c.b16 %v7733, %v7732
    %v7740 = vpack.c.b16 %v7735, %v7734
    %v7741 = vpack.c.b16 %v7737, %v7736
    %v7742 = vpack.c.b16 %v7738, %v7738
    %v7747 = vsel %vm328, %v7453, 0
    %v7750 = vsel %vm332, %v7742, 0
    %7752 = vmatprep.subr.bf16.mxu0 0
    %7753 = vmatpush1.bf16.msra.mxu0 %v7739
    %7754 = vmatprep.subr.bf16.mxu0 0
    %7755 = vmatpush1.bf16.msra.mxu0 %v7740
    %7756 = vmatprep.subr.bf16.mxu0 0
    %7757 = vmatpush1.bf16.msra.mxu0 %v7741
    %7758 = vmatprep.subr.bf16.mxu0 0
    %7759 = vmatpush1.bf16.msra.mxu0 %v7750
    %7760 = vmatprep.subr.bf16.mxu0 0
    %7761 = vmatpush1.bf16.msra.mxu0 0
    %7762 = vmatprep.subr.bf16.mxu0 0
    %7763 = vmatpush1.bf16.msra.mxu0 0
    %7764 = vmatprep.subr.bf16.mxu0 0
    %7765 = vmatpush1.bf16.msra.mxu0 0
    %7766 = vmatprep.subr.bf16.mxu0 0
    %7767 = vmatpush1.bf16.msra.mxu0 0
    %7768 = vmatprep.subr.bf16.mxu0 0
    %7769 = vmatpush1.bf16.msra.mxu0 0
    %7770 = vmatprep.subr.bf16.mxu0 0
    %7771 = vmatpush1.bf16.msra.mxu0 0
    %7772 = vmatprep.subr.bf16.mxu0 0
    %7773 = vmatpush1.bf16.msra.mxu0 0
    %7774 = vmatprep.subr.bf16.mxu0 0
    %7775 = vmatpush1.bf16.msra.mxu0 0
    %7776 = vmatprep.subr.bf16.mxu0 0
    %7777 = vmatpush1.bf16.msra.mxu0 0
    %7778 = vmatprep.subr.bf16.mxu0 0
    %7779 = vmatpush1.bf16.msra.mxu0 0
    %7780 = vmatprep.subr.bf16.mxu0 0
    %7781 = vmatpush1.bf16.msra.mxu0 0
    %7782 = vmatprep.subr.bf16.mxu0 0
    %7783 = vmatpush1.bf16.msra.mxu0 0
    %7784 = vmatprep.mubr.bf16.mxu0 0
    %7785 = vmatmul.mubr.bf16.gmra.mrb[0].mxu0 %v7747
    %v7786 = vpop.f32.mrb[0].mxu0
    %v7787 = vadd.f32 0.0, %v7786
    %v7788 = vpop.f32.mrb[0].mxu0
    %v7789 = vpop.f32.mrb[0].mxu0
    %v7790 = vpop.f32.mrb[0].mxu0
    %7791 = vdwg.mxu0
    %v7799 = vunpack.c.l.b16 %v5226
    %v7800 = vunpack.c.l.b16 %v5227
    %v7801 = vunpack.c.l.b16 %v5228
    %v7802 = vunpack.c.l.b16 %v5229
    %v7803 = vunpack.c.l.b16 %v5230
    %v7804 = vunpack.c.l.b16 %v5231
    %v7805 = vunpack.c.l.b16 %v5232
    %v7806 = vpack.c.b16 %v7800, %v7799
    %v7807 = vpack.c.b16 %v7802, %v7801
    %v7808 = vpack.c.b16 %v7804, %v7803
    %v7809 = vpack.c.b16 %v7805, %v7805
    %v7814 = vsel %vm328, %v7454, 0
    %v7817 = vsel %vm332, %v7809, 0
    %7819 = vmatprep.subr.bf16.mxu0 0
    %7820 = vmatpush1.bf16.msra.mxu0 %v7806
    %7821 = vmatprep.subr.bf16.mxu0 0
    %7822 = vmatpush1.bf16.msra.mxu0 %v7807
    %7823 = vmatprep.subr.bf16.mxu0 0
    %7824 = vmatpush1.bf16.msra.mxu0 %v7808
    %7825 = vmatprep.subr.bf16.mxu0 0
    %7826 = vmatpush1.bf16.msra.mxu0 %v7817
    %7827 = vmatprep.subr.bf16.mxu0 0
    %7828 = vmatpush1.bf16.msra.mxu0 0
    %7829 = vmatprep.subr.bf16.mxu0 0
    %7830 = vmatpush1.bf16.msra.mxu0 0
    %7831 = vmatprep.subr.bf16.mxu0 0
    %7832 = vmatpush1.bf16.msra.mxu0 0
    %7833 = vmatprep.subr.bf16.mxu0 0
    %7834 = vmatpush1.bf16.msra.mxu0 0
    %7835 = vmatprep.subr.bf16.mxu0 0
    %7836 = vmatpush1.bf16.msra.mxu0 0
    %7837 = vmatprep.subr.bf16.mxu0 0
    %7838 = vmatpush1.bf16.msra.mxu0 0
    %7839 = vmatprep.subr.bf16.mxu0 0
    %7840 = vmatpush1.bf16.msra.mxu0 0
    %7841 = vmatprep.subr.bf16.mxu0 0
    %7842 = vmatpush1.bf16.msra.mxu0 0
    %7843 = vmatprep.subr.bf16.mxu0 0
    %7844 = vmatpush1.bf16.msra.mxu0 0
    %7845 = vmatprep.subr.bf16.mxu0 0
    %7846 = vmatpush1.bf16.msra.mxu0 0
    %7847 = vmatprep.subr.bf16.mxu0 0
    %7848 = vmatpush1.bf16.msra.mxu0 0
    %7849 = vmatprep.subr.bf16.mxu0 0
    %7850 = vmatpush1.bf16.msra.mxu0 0
    %7851 = vmatprep.mubr.bf16.mxu0 0
    %7852 = vmatmul.mubr.bf16.gmra.mrb[0].mxu0 %v7814
    %v7853 = vpop.f32.mrb[0].mxu0
    %v7854 = vadd.f32 0.0, %v7853
    %v7855 = vpop.f32.mrb[0].mxu0
    %v7856 = vpop.f32.mrb[0].mxu0
    %v7857 = vpop.f32.mrb[0].mxu0
    %7858 = vdwg.mxu0
    %v7866 = vunpack.c.l.b16 %v5233
    %v7867 = vunpack.c.l.b16 %v5234
    %v7868 = vunpack.c.l.b16 %v5235
    %v7869 = vunpack.c.l.b16 %v5236
    %v7870 = vunpack.c.l.b16 %v5237
    %v7871 = vunpack.c.l.b16 %v5238
    %v7872 = vunpack.c.l.b16 %v5239
    %v7873 = vpack.c.b16 %v7867, %v7866
    %v7874 = vpack.c.b16 %v7869, %v7868
    %v7875 = vpack.c.b16 %v7871, %v7870
    %v7876 = vpack.c.b16 %v7872, %v7872
    %v7881 = vsel %vm328, %v7455, 0
    %v7884 = vsel %vm332, %v7876, 0
    %7886 = vmatprep.subr.bf16.mxu0 0
    %7887 = vmatpush1.bf16.msra.mxu0 %v7873
    %7888 = vmatprep.subr.bf16.mxu0 0
    %7889 = vmatpush1.bf16.msra.mxu0 %v7874
    %7890 = vmatprep.subr.bf16.mxu0 0
    %7891 = vmatpush1.bf16.msra.mxu0 %v7875
    %7892 = vmatprep.subr.bf16.mxu0 0
    %7893 = vmatpush1.bf16.msra.mxu0 %v7884
    %7894 = vmatprep.subr.bf16.mxu0 0
    %7895 = vmatpush1.bf16.msra.mxu0 0
    %7896 = vmatprep.subr.bf16.mxu0 0
    %7897 = vmatpush1.bf16.msra.mxu0 0
    %7898 = vmatprep.subr.bf16.mxu0 0
    %7899 = vmatpush1.bf16.msra.mxu0 0
    %7900 = vmatprep.subr.bf16.mxu0 0
    %7901 = vmatpush1.bf16.msra.mxu0 0
    %7902 = vmatprep.subr.bf16.mxu0 0
    %7903 = vmatpush1.bf16.msra.mxu0 0
    %7904 = vmatprep.subr.bf16.mxu0 0
    %7905 = vmatpush1.bf16.msra.mxu0 0
    %7906 = vmatprep.subr.bf16.mxu0 0
    %7907 = vmatpush1.bf16.msra.mxu0 0
    %7908 = vmatprep.subr.bf16.mxu0 0
    %7909 = vmatpush1.bf16.msra.mxu0 0
    %7910 = vmatprep.subr.bf16.mxu0 0
    %7911 = vmatpush1.bf16.msra.mxu0 0
    %7912 = vmatprep.subr.bf16.mxu0 0
    %7913 = vmatpush1.bf16.msra.mxu0 0
    %7914 = vmatprep.subr.bf16.mxu0 0
    %7915 = vmatpush1.bf16.msra.mxu0 0
    %7916 = vmatprep.subr.bf16.mxu0 0
    %7917 = vmatpush1.bf16.msra.mxu0 0
    %7918 = vmatprep.mubr.bf16.mxu0 0
    %7919 = vmatmul.mubr.bf16.gmra.mrb[0].mxu0 %v7881
    %v7920 = vpop.f32.mrb[0].mxu0
    %v7921 = vadd.f32 0.0, %v7920
    %v7922 = vpop.f32.mrb[0].mxu0
    %v7923 = vpop.f32.mrb[0].mxu0
    %v7924 = vpop.f32.mrb[0].mxu0
    %7925 = vdwg.mxu0
    %v7933 = vunpack.c.l.b16 %v5240
    %v7934 = vunpack.c.l.b16 %v5241
    %v7935 = vunpack.c.l.b16 %v5242
    %v7936 = vunpack.c.l.b16 %v5243
    %v7937 = vunpack.c.l.b16 %v5244
    %v7938 = vunpack.c.l.b16 %v5245
    %v7939 = vunpack.c.l.b16 %v5246
    %v7940 = vpack.c.b16 %v7934, %v7933
    %v7941 = vpack.c.b16 %v7936, %v7935
    %v7942 = vpack.c.b16 %v7938, %v7937
    %v7943 = vpack.c.b16 %v7939, %v7939
    %v7948 = vsel %vm328, %v7456, 0
    %v7951 = vsel %vm332, %v7943, 0
    %7953 = vmatprep.subr.bf16.mxu0 0
    %7954 = vmatpush1.bf16.msra.mxu0 %v7940
    %7955 = vmatprep.subr.bf16.mxu0 0
    %7956 = vmatpush1.bf16.msra.mxu0 %v7941
    %7957 = vmatprep.subr.bf16.mxu0 0
    %7958 = vmatpush1.bf16.msra.mxu0 %v7942
    %7959 = vmatprep.subr.bf16.mxu0 0
    %7960 = vmatpush1.bf16.msra.mxu0 %v7951
    %7961 = vmatprep.subr.bf16.mxu0 0
    %7962 = vmatpush1.bf16.msra.mxu0 0
    %7963 = vmatprep.subr.bf16.mxu0 0
    %7964 = vmatpush1.bf16.msra.mxu0 0
    %7965 = vmatprep.subr.bf16.mxu0 0
    %7966 = vmatpush1.bf16.msra.mxu0 0
    %7967 = vmatprep.subr.bf16.mxu0 0
    %7968 = vmatpush1.bf16.msra.mxu0 0
    %7969 = vmatprep.subr.bf16.mxu0 0
    %7970 = vmatpush1.bf16.msra.mxu0 0
    %7971 = vmatprep.subr.bf16.mxu0 0
    %7972 = vmatpush1.bf16.msra.mxu0 0
    %7973 = vmatprep.subr.bf16.mxu0 0
    %7974 = vmatpush1.bf16.msra.mxu0 0
    %7975 = vmatprep.subr.bf16.mxu0 0
    %7976 = vmatpush1.bf16.msra.mxu0 0
    %7977 = vmatprep.subr.bf16.mxu0 0
    %7978 = vmatpush1.bf16.msra.mxu0 0
    %7979 = vmatprep.subr.bf16.mxu0 0
    %7980 = vmatpush1.bf16.msra.mxu0 0
    %7981 = vmatprep.subr.bf16.mxu0 0
    %7982 = vmatpush1.bf16.msra.mxu0 0
    %7983 = vmatprep.subr.bf16.mxu0 0
    %7984 = vmatpush1.bf16.msra.mxu0 0
    %7985 = vmatprep.mubr.bf16.mxu0 0
    %7986 = vmatmul.mubr.bf16.gmra.mrb[0].mxu0 %v7948
    %v7987 = vpop.f32.mrb[0].mxu0
    %v7988 = vadd.f32 0.0, %v7987
    %v7989 = vpop.f32.mrb[0].mxu0
    %v7990 = vpop.f32.mrb[0].mxu0
    %v7991 = vpop.f32.mrb[0].mxu0
    %7992 = vdwg.mxu0
    %v7993 = vsel %vm5086, %v7519, 0.0
    %v7994 = vsel %vm5086, %v7586, 0.0
    %v7995 = vadd.f32 %v7993, %v7994
    %v7996 = vsel %vm5086, %v7653, 0.0
    %v7997 = vadd.f32 %v7995, %v7996
    %v7998 = vsel %vm5086, %v7720, 0.0
    %v7999 = vadd.f32 %v7997, %v7998
    %v8000 = vsel %vm5086, %v7787, 0.0
    %v8001 = vadd.f32 %v7999, %v8000
    %v8002 = vsel %vm5086, %v7854, 0.0
    %v8003 = vadd.f32 %v8001, %v8002
    %v8004 = vsel %vm5086, %v7921, 0.0
    %v8005 = vadd.f32 %v8003, %v8004
    %v8006 = vsel %vm5086, %v7988, 0.0
    %v8007 = vadd.f32 %v8005, %v8006
    %v8008 = vlaneseq
    %v8009 = vshrl.u32 %v8008, 7
    %v8010 = vsub.s32 0, %v8009
    %v8011 = vrot.slane %v42, %v8010
    %v8012 = vadd.f32 %v8007, %v8011
    %v8013 = vadd.f32 %v8012, %v5132
    %v8014 = vsel %vm5086, %v8013, 0.0
    %8015 = vadd.xlane.f32.xlu0 %v8014
    %v8016 = vpop.xlane.xlu0 %8015
    %v8017 = vmul.f32 %v8016, %v2478
    %v8018 = vsub.f32 %v8013, %v8017
    %v8019 = vmul.f32 %v8018, %v8018
    %v8020 = vsel %vm5086, %v8019, 0.0
    %8021 = vadd.xlane.f32.xlu0 %v8020
    %v8022 = vpop.xlane.xlu0 %8021
    %v8023 = vmul.f32 %v8022, %v2478
    %v8024 = vadd.f32 %v8023, 1e-06
    %v8025 = vrsqrt.pop %v8024
    %v8026 = vmul.f32 %v8018, %v8025
    %v8027 = vlaneseq
    %v8028 = vshrl.u32 %v8027, 7
    %v8029 = vsub.s32 1, %v8028
    %v8030 = vrot.slane %v42, %v8029
    %v8031 = vmul.f32 %v8026, %v8030
    %v8032 = vlaneseq
    %v8033 = vshrl.u32 %v8032, 7
    %v8034 = vsub.s32 2, %v8033
    %v8035 = vrot.slane %v42, %v8034
    %v8036 = vadd.f32 %v8031, %v8035
    %s8037 = scalar_lea.vmem %s3, 56
    %v8038 = vld [vmem:[%s8037] sm:$0xf]
    %v8039 = vld [vmem:[%s8037 + $0x4] sm:$0xf]
    %v8040 = vld [vmem:[%s8037 + $0x8] sm:$0xf]
    %v8041 = vld [vmem:[%s8037 + $0xc] sm:$0xf]
    %v8042 = vld [vmem:[%s8037 + $0x10] sm:$0xf]
    %v8043 = vld [vmem:[%s8037 + $0x14] sm:$0xf]
    %v8044 = vld [vmem:[%s8037 + $0x18] sm:$0x1]
    %v8045 = vld [vmem:[%s8037 + $0x1c] sm:$0xf]
    %v8046 = vld [vmem:[%s8037 + $0x20] sm:$0xf]
    %v8047 = vld [vmem:[%s8037 + $0x24] sm:$0xf]
    %v8048 = vld [vmem:[%s8037 + $0x28] sm:$0xf]
    %v8049 = vld [vmem:[%s8037 + $0x2c] sm:$0xf]
    %v8050 = vld [vmem:[%s8037 + $0x30] sm:$0xf]
    %v8051 = vld [vmem:[%s8037 + $0x34] sm:$0x1]
    %v8052 = vpack.c.bf16 %v8036, %v8036
    %v8053 = vlaneseq
    %v8054 = vshrl.u32 %v8053, 7
    %v8055 = vsub.s32 0, %v8054
    %v8056 = vrot.slane %v43, %v8055
    %v8064 = vunpack.c.l.b16 %v8038
    %v8065 = vunpack.c.l.b16 %v8039
    %v8066 = vunpack.c.l.b16 %v8040
    %v8067 = vunpack.c.l.b16 %v8041
    %v8068 = vunpack.c.l.b16 %v8042
    %v8069 = vunpack.c.l.b16 %v8043
    %v8070 = vunpack.c.l.b16 %v8044
    %v8071 = vpack.c.b16 %v8065, %v8064
    %v8072 = vpack.c.b16 %v8067, %v8066
    %v8073 = vpack.c.b16 %v8069, %v8068
    %v8074 = vpack.c.b16 %v8070, %v8070
    %v8079 = vsel %vm328, %v8052, 0
    %v8082 = vsel %vm332, %v8074, 0
    %8084 = vmatprep.subr.bf16.mxu0 0
    %8085 = vmatpush1.bf16.msra.mxu0 %v8071
    %8086 = vmatprep.subr.bf16.mxu0 0
    %8087 = vmatpush1.bf16.msra.mxu0 %v8072
    %8088 = vmatprep.subr.bf16.mxu0 0
    %8089 = vmatpush1.bf16.msra.mxu0 %v8073
    %8090 = vmatprep.subr.bf16.mxu0 0
    %8091 = vmatpush1.bf16.msra.mxu0 %v8082
    %8092 = vmatprep.subr.bf16.mxu0 0
    %8093 = vmatpush1.bf16.msra.mxu0 0
    %8094 = vmatprep.subr.bf16.mxu0 0
    %8095 = vmatpush1.bf16.msra.mxu0 0
    %8096 = vmatprep.subr.bf16.mxu0 0
    %8097 = vmatpush1.bf16.msra.mxu0 0
    %8098 = vmatprep.subr.bf16.mxu0 0
    %8099 = vmatpush1.bf16.msra.mxu0 0
    %8100 = vmatprep.subr.bf16.mxu0 0
    %8101 = vmatpush1.bf16.msra.mxu0 0
    %8102 = vmatprep.subr.bf16.mxu0 0
    %8103 = vmatpush1.bf16.msra.mxu0 0
    %8104 = vmatprep.subr.bf16.mxu0 0
    %8105 = vmatpush1.bf16.msra.mxu0 0
    %8106 = vmatprep.subr.bf16.mxu0 0
    %8107 = vmatpush1.bf16.msra.mxu0 0
    %8108 = vmatprep.subr.bf16.mxu0 0
    %8109 = vmatpush1.bf16.msra.mxu0 0
    %8110 = vmatprep.subr.bf16.mxu0 0
    %8111 = vmatpush1.bf16.msra.mxu0 0
    %8112 = vmatprep.subr.bf16.mxu0 0
    %8113 = vmatpush1.bf16.msra.mxu0 0
    %8114 = vmatprep.subr.bf16.mxu0 0
    %8115 = vmatpush1.bf16.msra.mxu0 0
    %8116 = vmatprep.mubr.bf16.mxu0 0
    %8117 = vmatmul.mubr.bf16.gmra.mrb[0].mxu0 %v8079
    %v8118 = vpop.f32.mrb[0].mxu0
    %v8119 = vadd.f32 %v8056, %v8118
    %v8120 = vpop.f32.mrb[0].mxu0
    %v8121 = vpop.f32.mrb[0].mxu0
    %v8122 = vpop.f32.mrb[0].mxu0
    %8123 = vdwg.mxu0
    %v8124 = vmax.f32 %v8119, 0.0
    %v8125 = vpack.c.bf16 %v8124, %v8124
    %v8126 = vlaneseq
    %v8127 = vshrl.u32 %v8126, 7
    %v8128 = vsub.s32 1, %v8127
    %v8129 = vrot.slane %v43, %v8128
    %v8137 = vunpack.c.l.b16 %v8045
    %v8138 = vunpack.c.l.b16 %v8046
    %v8139 = vunpack.c.l.b16 %v8047
    %v8140 = vunpack.c.l.b16 %v8048
    %v8141 = vunpack.c.l.b16 %v8049
    %v8142 = vunpack.c.l.b16 %v8050
    %v8143 = vunpack.c.l.b16 %v8051
    %v8144 = vpack.c.b16 %v8138, %v8137
    %v8145 = vpack.c.b16 %v8140, %v8139
    %v8146 = vpack.c.b16 %v8142, %v8141
    %v8147 = vpack.c.b16 %v8143, %v8143
    %v8152 = vsel %vm328, %v8125, 0
    %v8155 = vsel %vm332, %v8147, 0
    %8157 = vmatprep.subr.bf16.mxu0 0
    %8158 = vmatpush1.bf16.msra.mxu0 %v8144
    %8159 = vmatprep.subr.bf16.mxu0 0
    %8160 = vmatpush1.bf16.msra.mxu0 %v8145
    %8161 = vmatprep.subr.bf16.mxu0 0
    %8162 = vmatpush1.bf16.msra.mxu0 %v8146
    %8163 = vmatprep.subr.bf16.mxu0 0
    %8164 = vmatpush1.bf16.msra.mxu0 %v8155
    %8165 = vmatprep.subr.bf16.mxu0 0
    %8166 = vmatpush1.bf16.msra.mxu0 0
    %8167 = vmatprep.subr.bf16.mxu0 0
    %8168 = vmatpush1.bf16.msra.mxu0 0
    %8169 = vmatprep.subr.bf16.mxu0 0
    %8170 = vmatpush1.bf16.msra.mxu0 0
    %8171 = vmatprep.subr.bf16.mxu0 0
    %8172 = vmatpush1.bf16.msra.mxu0 0
    %8173 = vmatprep.subr.bf16.mxu0 0
    %8174 = vmatpush1.bf16.msra.mxu0 0
    %8175 = vmatprep.subr.bf16.mxu0 0
    %8176 = vmatpush1.bf16.msra.mxu0 0
    %8177 = vmatprep.subr.bf16.mxu0 0
    %8178 = vmatpush1.bf16.msra.mxu0 0
    %8179 = vmatprep.subr.bf16.mxu0 0
    %8180 = vmatpush1.bf16.msra.mxu0 0
    %8181 = vmatprep.subr.bf16.mxu0 0
    %8182 = vmatpush1.bf16.msra.mxu0 0
    %8183 = vmatprep.subr.bf16.mxu0 0
    %8184 = vmatpush1.bf16.msra.mxu0 0
    %8185 = vmatprep.subr.bf16.mxu0 0
    %8186 = vmatpush1.bf16.msra.mxu0 0
    %8187 = vmatprep.subr.bf16.mxu0 0
    %8188 = vmatpush1.bf16.msra.mxu0 0
    %8189 = vmatprep.mubr.bf16.mxu0 0
    %8190 = vmatmul.mubr.bf16.gmra.mrb[0].mxu0 %v8152
    %v8191 = vpop.f32.mrb[0].mxu0
    %v8192 = vadd.f32 %v8129, %v8191
    %v8193 = vpop.f32.mrb[0].mxu0
    %v8194 = vpop.f32.mrb[0].mxu0
    %v8195 = vpop.f32.mrb[0].mxu0
    %8196 = vdwg.mxu0
    %v8197 = vadd.f32 %v8192, %v8036
    %v8198 = vsel %vm5086, %v8197, 0.0
    %8199 = vadd.xlane.f32.xlu0 %v8198
    %v8200 = vpop.xlane.xlu0 %8199
    %v8201 = vmul.f32 %v8200, %v2478
    %v8202 = vsub.f32 %v8197, %v8201
    %v8203 = vmul.f32 %v8202, %v8202
    %v8204 = vsel %vm5086, %v8203, 0.0
    %8205 = vadd.xlane.f32.xlu0 %v8204
    %v8206 = vpop.xlane.xlu0 %8205
    %v8207 = vmul.f32 %v8206, %v2478
    %v8208 = vadd.f32 %v8207, 1e-06
    %v8209 = vrsqrt.pop %v8208
    %v8210 = vmul.f32 %v8202, %v8209
    %v8211 = vlaneseq
    %v8212 = vshrl.u32 %v8211, 7
    %v8213 = vsub.s32 2, %v8212
    %v8214 = vrot.slane %v43, %v8213
    %v8215 = vmul.f32 %v8210, %v8214
    %v8216 = vlaneseq
    %v8217 = vshrl.u32 %v8216, 7
    %v8218 = vsub.s32 3, %v8217
    %v8219 = vrot.slane %v43, %v8218
    %v8220 = vadd.f32 %v8215, %v8219
    %8221 = vst.msk [vmem:[#allocation2] sm:$0x7] %vm5086, %v8220
    // Predicated region
    $region26: #{tpu_custom_call.1} parent=1 // pred_check
      _
    $region27: #{tpu_custom_call.1} parent=1 // pred_check_branch
      %8223 = sbr.rel (0) target = $region29
    $region28: #{tpu_custom_call.1} parent=1 // pred_region
      %s8225 = ssub.s32 64, 64
      %8226 = vsyncadd [#allocation3], %s8225
      %s8228 = sshll.u32 [#allocation2], 4
      %s8229 = int_to_ptr.vmem [resolvable:$true] %s8228
      %8231 = dma.vmem_to_hbm [thread:$0]  %s8229, 64, %s6, [#allocation3]
    $region29: #{tpu_custom_call.1} parent=1 // pred_fallthru
      _
    // Predicated region
    $region30: #{tpu_custom_call.1} parent=1 // pred_check
      _
    $region31: #{tpu_custom_call.1} parent=1 // pred_check_branch
      %8233 = sbr.rel (0) target = $region33
    $region32: #{tpu_custom_call.1} parent=1 // pred_region
      %8234 = dma.done [#allocation3], 64
    $region33: #{tpu_custom_call.1} parent=1 // pred_fallthru
      _
    %8235 = vsyncpa [#allocation3], 1

</llo_original>
